<compile_context>
chip_gen: v7x
topology: tpu7x:2x2x1
jax: 0.10.0
libtpu: 0.0.40
codegen_flags: <defaults>
</compile_context>

<pallas_src>
import math
import numpy as np

import jax
import jax.numpy as jnp
from jax import lax
from jax.experimental import pallas as pl
from jax.experimental.pallas import tpu as pltpu

# ----------------------------- configuration --------------------------------
B, S, SE = 2, 8, 16            # batch, decoder seq len, encoder seq len
D, H, F = 32, 4, 2048          # hidden dim, n_heads, FFN intermediate dim
HD = D // H                    # head dim
L = 2                          # n_layers
V = 50                         # vocab size
EPS = 1e-6                     # python float only — never a jnp constant


# ------------------------------ kernel helpers -------------------------------
def _bf16(x):
    return x.astype(jnp.bfloat16)


def _layer_norm(x, alpha, beta):
    # torch ref: alpha * (x - mean) / (std + eps) + beta, Bessel (n-1) std.
    # 1/(std + eps) ≈ rsqrt(var + eps^2) for eps=1e-6 → EUP rsqrt, no divide.
    mean = jnp.mean(x, axis=-1, keepdims=True)
    var = jnp.sum((x - mean) ** 2, axis=-1, keepdims=True) * (1.0 / (x.shape[-1] - 1))
    inv = lax.rsqrt(var + EPS * EPS)
    return alpha * ((x - mean) * inv) + beta


def _attn_core(q, k, v, bias, sq, sk):
    # q: (B*sq, D) f32 (scale already folded), k/v: (B*sk, D) f32,
    # bias: (B, sq, sk) additive mask (0 / -1e9).  Returns context (B*sq, D).
    def split(t, s):
        # merged-rows layout -> (B*H, s, HD) per-(batch, head) stack
        return jnp.stack([t[b * s:(b + 1) * s, h * HD:(h + 1) * HD]
                          for b in range(B) for h in range(H)], axis=0)

    qh = _bf16(split(q, sq))
    kh = _bf16(split(k, sk))
    vh = _bf16(split(v, sk))
    bias_bh = jnp.stack([bias[b] for b in range(B) for _ in range(H)], axis=0)

    logits = jnp.einsum('nqd,nkd->nqk', qh, kh,
                        preferred_element_type=jnp.float32) + bias_bh
    m = jnp.max(logits, axis=-1, keepdims=True)
    e = jnp.exp(logits - m)
    p = e * pl.reciprocal(jnp.sum(e, axis=-1, keepdims=True), approx=True)
    ctx = jnp.einsum('nqk,nkd->nqd', _bf16(p), vh,
                     preferred_element_type=jnp.float32)        # (B*H, sq, HD)

    # re-assemble heads -> merged-rows (B*sq, D) for the full-width out proj
    rows = jnp.concatenate(
        [jnp.concatenate([ctx[b * H + h] for h in range(H)], axis=-1)
         for b in range(B)], axis=0)
    return rows


def _ffn(x, w1, b1, w2, b2):
    hid = jnp.maximum(
        jnp.dot(_bf16(x), w1, preferred_element_type=jnp.float32) + b1, 0.0)
    return jnp.dot(_bf16(hid), w2, preferred_element_type=jnp.float32) + b2


# --------------------------------- kernel ------------------------------------
def decoder_kernel(x_ref, enc_ref, sbias_ref, cbias_ref,
                   swqkv, sbqkv, swo, sbo,
                   cwq, cbq, cwkv, cbkv, cwo, cbo,
                   w1, b1, w2, b2,
                   n1a, n1b, n2a, n2b, n3a, n3b,
                   fa, fb,
                   out_ref):
    # Single grid step handles all batches and all L layers.
    x = x_ref[...]                        # (B*S, D) f32
    sbias = sbias_ref[...]                # (B, S, S)  additive self-attn mask
    cbias = cbias_ref[...]                # (B, S, SE) additive cross-attn mask
    enc_bf = _bf16(enc_ref[...])          # (B*SE, D) — reused by all layers

    for l in range(L):                    # L is tiny & static: fully unrolled
        # ---- self attention -------------------------------------------------
        h1 = _layer_norm(x, n1a[l], n1b[l])
        qkv = jnp.dot(_bf16(h1), swqkv[l],
                      preferred_element_type=jnp.float32) + sbqkv[l]   # (B*S, 3D)
        ctx = _attn_core(qkv[:, 0:D], qkv[:, D:2 * D], qkv[:, 2 * D:3 * D],
                         sbias, S, S)
        x = x + (jnp.dot(_bf16(ctx), swo[l],
                         preferred_element_type=jnp.float32) + sbo[l])

        # ---- cross attention ------------------------------------------------
        h2 = _layer_norm(x, n2a[l], n2b[l])
        q = jnp.dot(_bf16(h2), cwq[l],
                    preferred_element_type=jnp.float32) + cbq[l]       # (B*S, D)
        kv = jnp.dot(enc_bf, cwkv[l],
                     preferred_element_type=jnp.float32) + cbkv[l]     # (B*SE, 2D)
        ctx = _attn_core(q, kv[:, 0:D], kv[:, D:2 * D], cbias, S, SE)
        x = x + (jnp.dot(_bf16(ctx), cwo[l],
                         preferred_element_type=jnp.float32) + cbo[l])

        # ---- feed forward ---------------------------------------------------
        h3 = _layer_norm(x, n3a[l], n3b[l])
        x = x + _ffn(h3, w1[l], b1[l], w2[l], b2[l])

    out_ref[...] = _layer_norm(x, fa[...], fb[...])


# ------------------------------- wrapper --------------------------------------
def transformer_decoder_pallas(x_emb, enc, smask, cmask, params):
    # masks -> additive biases (0 where visible, -1e9 where masked)
    sbias = (smask - 1.0) * 1e9           # (B, S, S)
    cbias = (cmask - 1.0) * 1e9           # (B, S, SE)

    x2 = x_emb.reshape(B * S, D)          # merge batch into matmul M dim
    e2 = enc.reshape(B * SE, D)

    def full_spec(a):
        nd = a.ndim
        return pl.BlockSpec(tuple(a.shape), lambda i, _n=nd: (0,) * _n)

    in_arrays = [x2, e2, sbias, cbias] + list(params)
    in_specs = [full_spec(a) for a in in_arrays]

    grid_spec = pltpu.PrefetchScalarGridSpec(
        num_scalar_prefetch=0,
        grid=(1,),                                    # single kernel invocation
        in_specs=in_specs,
        out_specs=pl.BlockSpec((B * S, D), lambda i: (0, 0)),
    )
    out = pl.pallas_call(
        decoder_kernel,
        out_shape=jax.ShapeDtypeStruct((B * S, D), jnp.float32),
        grid_spec=grid_spec,
        compiler_params=pltpu.CompilerParams(
            dimension_semantics=("arbitrary",)),
    )(*in_arrays)
    return out.reshape(B, S, D)


# ------------------------ params, packing, pos-encoding -----------------------
def init_params(key):
    keys = iter(jax.random.split(key, 256))

    def lin(din, dout, scale=0.05):
        w = scale * jax.random.normal(next(keys), (din, dout), jnp.float32)
        b = scale * jax.random.normal(next(keys), (dout,), jnp.float32)
        return w, b

    layers = []
    for _ in range(L):
        p = {}
        for pref in ('s', 'c'):                      # self / cross attention
            for name in ('q', 'k', 'v', 'o'):
                w, b = lin(D, D)
                p[f'{pref}w{name}'] = w
                p[f'{pref}b{name}'] = b
        p['w1'], p['b1'] = lin(D, F)
        p['w2'], p['b2'] = lin(F, D)
        for i in (1, 2, 3):
            p[f'n{i}a'] = 1.0 + 0.1 * jax.random.normal(next(keys), (D,), jnp.float32)
            p[f'n{i}b'] = 0.1 * jax.random.normal(next(keys), (D,), jnp.float32)
        layers.append(p)
    fa = 1.0 + 0.1 * jax.random.normal(next(keys), (D,), jnp.float32)
    fb = 0.1 * jax.random.normal(next(keys), (D,), jnp.float32)
    emb = jax.random.normal(next(keys), (V, D), jnp.float32)
    return layers, fa, fb, emb


PARAM_ORDER = ('swqkv', 'sbqkv', 'swo', 'sbo',
               'cwq', 'cbq', 'cwkv', 'cbkv', 'cwo', 'cbo',
               'w1', 'b1', 'w2', 'b2',
               'n1a', 'n1b', 'n2a', 'n2b', 'n3a', 'n3b')
BF16_KEYS = ('swqkv', 'swo', 'cwq', 'cwkv', 'cwo', 'w1', 'w2')


def pack_params(layers, fa, fb):
    """Full-width fused, scale-folded, lane-dense, bf16 weight stacks."""
    scale = 1.0 / math.sqrt(HD)

    acc = {k: [] for k in PARAM_ORDER}
    for p in layers:
        # self-attn: fused (D, 3D) QKV, scale folded into Q columns/bias
        acc['swqkv'].append(jnp.concatenate(
            [p['swq'] * scale, p['swk'], p['swv']], axis=-1))
        acc['sbqkv'].append(jnp.concatenate(
            [p['sbq'] * scale, p['sbk'], p['sbv']], axis=-1)[None, :])
        acc['swo'].append(p['swo'])
        acc['sbo'].append(p['sbo'][None, :])

        # cross-attn: (D, D) Q (scaled), fused (D, 2D) KV
        acc['cwq'].append(p['cwq'] * scale)
        acc['cbq'].append(p['cbq'][None, :] * scale)
        acc['cwkv'].append(jnp.concatenate([p['cwk'], p['cwv']], axis=-1))
        acc['cbkv'].append(jnp.concatenate([p['cbk'], p['cbv']], axis=-1)[None, :])
        acc['cwo'].append(p['cwo'])
        acc['cbo'].append(p['cbo'][None, :])

        acc['w1'].append(p['w1'])
        acc['b1'].append(p['b1'][None, :])
        acc['w2'].append(p['w2'])
        acc['b2'].append(p['b2'][None, :])
        for i in (1, 2, 3):
            acc[f'n{i}a'].append(p[f'n{i}a'][None, :])
            acc[f'n{i}b'].append(p[f'n{i}b'][None, :])

    stacked = {k: jnp.stack(v, 0) for k, v in acc.items()}
    for k in BF16_KEYS:
        stacked[k] = stacked[k].astype(jnp.bfloat16)

    return [stacked[k] for k in PARAM_ORDER] + [fa[None, :], fb[None, :]]


def make_pos_encoding(max_seq_len=80, hidden_dim=D):
    pe = np.zeros((max_seq_len, hidden_dim), np.float32)
    for pos in range(max_seq_len):
        for i in range(0, hidden_dim, 2):
            pe[pos, i] = math.sin(pos / 10000 ** (2 * i / hidden_dim))
            pe[pos, i + 1] = math.cos(pos / 10000 ** (2 * (i + 1) / hidden_dim))
    return jnp.asarray(pe)


# ---------------------------- pure-JAX reference ------------------------------
def layer_norm_ref(x, a, b):
    mean = x.mean(-1, keepdims=True)
    std = jnp.sqrt(((x - mean) ** 2).sum(-1, keepdims=True) / (x.shape[-1] - 1))
    return a * (x - mean) / (std + EPS) + b


def mha_ref(q_in, kv_in, mask, wq, bq, wk, bk, wv, bv, wo, bo):
    q = q_in @ wq + bq
    k = kv_in @ wk + bk
    v = kv_in @ wv + bv
    b_, sq = q.shape[0], q.shape[1]
    sk = k.shape[1]
    qh = q.reshape(b_, sq, H, HD).transpose(0, 2, 1, 3)
    kh = k.reshape(b_, sk, H, HD).transpose(0, 2, 1, 3)
    vh = v.reshape(b_, sk, H, HD).transpose(0, 2, 1, 3)
    logits = jnp.einsum('bhqd,bhkd->bhqk', qh, kh) / math.sqrt(HD)
    logits = jnp.where(mask[:, None] == 0.0, -1e9, logits)
    att = jax.nn.softmax(logits, axis=-1)
    ctx = jnp.einsum('bhqk,bhkd->bhqd', att, vh)
    ctx = ctx.transpose(0, 2, 1, 3).reshape(b_, sq, D)
    return ctx @ wo + bo


def decoder_ref(x, enc, smask, cmask, layers, fa, fb):
    for p in layers:
        h1 = layer_norm_ref(x, p['n1a'], p['n1b'])
        x = x + mha_ref(h1, h1, smask, p['swq'], p['sbq'], p['swk'], p['sbk'],
                        p['swv'], p['sbv'], p['swo'], p['sbo'])
        h2 = layer_norm_ref(x, p['n2a'], p['n2b'])
        x = x + mha_ref(h2, enc, cmask, p['cwq'], p['cbq'], p['cwk'], p['cbk'],
                        p['cwv'], p['cbv'], p['cwo'], p['cbo'])
        h3 = layer_norm_ref(x, p['n3a'], p['n3b'])
        hid = jnp.maximum(h3 @ p['w1'] + p['b1'], 0.0)
        x = x + hid @ p['w2'] + p['b2']
    return layer_norm_ref(x, fa, fb)


# --------------------------------- main ---------------------------------------
if __name__ == "__main__":
    key = jax.random.PRNGKey(0)
    k_param, k_inp, k_enc = jax.random.split(key, 3)

    layers, fa, fb, emb = init_params(k_param)
    packed = pack_params(layers, fa, fb)

    # inputs (token ids, encoder output, masks)
    inp = jax.random.randint(k_inp, (B, S), 0, V)
    enc = jax.random.normal(k_enc, (B, SE, D), jnp.float32)
    smask = jnp.broadcast_to(jnp.tril(jnp.ones((S, S), jnp.float32)), (B, S, S))
    cmask = jnp.ones((B, S, SE), jnp.float32)
    cmask = cmask.at[1, :, SE - 4:].set(0.0)    # padded encoder positions, batch 1

    # glue: embedding gather + positional encoding (outside the kernel)
    # TODO(synk): dropout layers are identity (inference/eval semantics).
    pe = make_pos_encoding()
    x_emb = emb[inp] * math.sqrt(D) + pe[None, :S, :]

    out = transformer_decoder_pallas(x_emb, enc, smask, cmask, packed)
    out = jax.block_until_ready(out)

    ref = decoder_ref(x_emb, enc, smask, cmask, layers, fa, fb)
    assert out.shape == (B, S, D)
    max_diff = float(jnp.max(jnp.abs(out - ref)))
    assert max_diff < 5e-2, f"mismatch vs reference: {max_diff}"
    print("KERNEL_OK")
</pallas_src>

<mosaic_0001>
module attributes {stable_mosaic.version = 11 : i64} {
  func.func @decoder_kernel(%arg0: i32, %arg1: memref<16x32xf32, #tpu.memory_space<vmem>>, %arg2: memref<32x32xf32, #tpu.memory_space<vmem>>, %arg3: memref<2x8x8xf32, #tpu.memory_space<vmem>>, %arg4: memref<2x8x16xf32, #tpu.memory_space<vmem>>, %arg5: memref<2x32x96xbf16, #tpu.memory_space<vmem>>, %arg6: memref<2x1x96xf32, #tpu.memory_space<vmem>>, %arg7: memref<2x32x32xbf16, #tpu.memory_space<vmem>>, %arg8: memref<2x1x32xf32, #tpu.memory_space<vmem>>, %arg9: memref<2x32x32xbf16, #tpu.memory_space<vmem>>, %arg10: memref<2x1x32xf32, #tpu.memory_space<vmem>>, %arg11: memref<2x32x64xbf16, #tpu.memory_space<vmem>>, %arg12: memref<2x1x64xf32, #tpu.memory_space<vmem>>, %arg13: memref<2x32x32xbf16, #tpu.memory_space<vmem>>, %arg14: memref<2x1x32xf32, #tpu.memory_space<vmem>>, %arg15: memref<2x32x2048xbf16, #tpu.memory_space<vmem>>, %arg16: memref<2x1x2048xf32, #tpu.memory_space<vmem>>, %arg17: memref<2x2048x32xbf16, #tpu.memory_space<vmem>>, %arg18: memref<2x1x32xf32, #tpu.memory_space<vmem>>, %arg19: memref<2x1x32xf32, #tpu.memory_space<vmem>>, %arg20: memref<2x1x32xf32, #tpu.memory_space<vmem>>, %arg21: memref<2x1x32xf32, #tpu.memory_space<vmem>>, %arg22: memref<2x1x32xf32, #tpu.memory_space<vmem>>, %arg23: memref<2x1x32xf32, #tpu.memory_space<vmem>>, %arg24: memref<2x1x32xf32, #tpu.memory_space<vmem>>, %arg25: memref<1x32xf32, #tpu.memory_space<vmem>>, %arg26: memref<1x32xf32, #tpu.memory_space<vmem>>, %arg27: memref<16x32xf32, #tpu.memory_space<vmem>>) attributes {dimension_semantics = [#tpu.dimension_semantics<arbitrary>], iteration_bounds = array<i64: 1>, scalar_prefetch = 0 : i64, scratch_operands = 0 : i64, tpu.core_type = #tpu.core_type<tc>, window_params = [{pipeline_mode = #tpu.pipeline_mode<synchronous>, transform_indices = @transform_0, window_bounds = array<i64: 16, 32>}, {pipeline_mode = #tpu.pipeline_mode<synchronous>, transform_indices = @transform_1, window_bounds = array<i64: 32, 32>}, {pipeline_mode = #tpu.pipeline_mode<synchronous>, transform_indices = @transform_2, window_bounds = array<i64: 2, 8, 8>}, {pipeline_mode = #tpu.pipeline_mode<synchronous>, transform_indices = @transform_3, window_bounds = array<i64: 2, 8, 16>}, {pipeline_mode = #tpu.pipeline_mode<synchronous>, transform_indices = @transform_4, window_bounds = array<i64: 2, 32, 96>}, {pipeline_mode = #tpu.pipeline_mode<synchronous>, transform_indices = @transform_5, window_bounds = array<i64: 2, 1, 96>}, {pipeline_mode = #tpu.pipeline_mode<synchronous>, transform_indices = @transform_6, window_bounds = array<i64: 2, 32, 32>}, {pipeline_mode = #tpu.pipeline_mode<synchronous>, transform_indices = @transform_7, window_bounds = array<i64: 2, 1, 32>}, {pipeline_mode = #tpu.pipeline_mode<synchronous>, transform_indices = @transform_8, window_bounds = array<i64: 2, 32, 32>}, {pipeline_mode = #tpu.pipeline_mode<synchronous>, transform_indices = @transform_9, window_bounds = array<i64: 2, 1, 32>}, {pipeline_mode = #tpu.pipeline_mode<synchronous>, transform_indices = @transform_10, window_bounds = array<i64: 2, 32, 64>}, {pipeline_mode = #tpu.pipeline_mode<synchronous>, transform_indices = @transform_11, window_bounds = array<i64: 2, 1, 64>}, {pipeline_mode = #tpu.pipeline_mode<synchronous>, transform_indices = @transform_12, window_bounds = array<i64: 2, 32, 32>}, {pipeline_mode = #tpu.pipeline_mode<synchronous>, transform_indices = @transform_13, window_bounds = array<i64: 2, 1, 32>}, {pipeline_mode = #tpu.pipeline_mode<synchronous>, transform_indices = @transform_14, window_bounds = array<i64: 2, 32, 2048>}, {pipeline_mode = #tpu.pipeline_mode<synchronous>, transform_indices = @transform_15, window_bounds = array<i64: 2, 1, 2048>}, {pipeline_mode = #tpu.pipeline_mode<synchronous>, transform_indices = @transform_16, window_bounds = array<i64: 2, 2048, 32>}, {pipeline_mode = #tpu.pipeline_mode<synchronous>, transform_indices = @transform_17, window_bounds = array<i64: 2, 1, 32>}, {pipeline_mode = #tpu.pipeline_mode<synchronous>, transform_indices = @transform_18, window_bounds = array<i64: 2, 1, 32>}, {pipeline_mode = #tpu.pipeline_mode<synchronous>, transform_indices = @transform_19, window_bounds = array<i64: 2, 1, 32>}, {pipeline_mode = #tpu.pipeline_mode<synchronous>, transform_indices = @transform_20, window_bounds = array<i64: 2, 1, 32>}, {pipeline_mode = #tpu.pipeline_mode<synchronous>, transform_indices = @transform_21, window_bounds = array<i64: 2, 1, 32>}, {pipeline_mode = #tpu.pipeline_mode<synchronous>, transform_indices = @transform_22, window_bounds = array<i64: 2, 1, 32>}, {pipeline_mode = #tpu.pipeline_mode<synchronous>, transform_indices = @transform_23, window_bounds = array<i64: 2, 1, 32>}, {pipeline_mode = #tpu.pipeline_mode<synchronous>, transform_indices = @transform_24, window_bounds = array<i64: 1, 32>}, {pipeline_mode = #tpu.pipeline_mode<synchronous>, transform_indices = @transform_25, window_bounds = array<i64: 1, 32>}, {pipeline_mode = #tpu.pipeline_mode<synchronous>, transform_indices = @transform_26, window_bounds = array<i64: 16, 32>}]} {
    %c0 = arith.constant 0 : index
    %c0_0 = arith.constant 0 : index
    %0 = vector.load %arg1[%c0, %c0_0] : memref<16x32xf32, #tpu.memory_space<vmem>>, vector<16x32xf32>
    %c0_1 = arith.constant 0 : index
    %c0_2 = arith.constant 0 : index
    %c0_3 = arith.constant 0 : index
    %1 = vector.load %arg3[%c0_1, %c0_2, %c0_3] : memref<2x8x8xf32, #tpu.memory_space<vmem>>, vector<2x8x8xf32>
    %c0_4 = arith.constant 0 : index
    %c0_5 = arith.constant 0 : index
    %c0_6 = arith.constant 0 : index
    %2 = vector.load %arg4[%c0_4, %c0_5, %c0_6] : memref<2x8x16xf32, #tpu.memory_space<vmem>>, vector<2x8x16xf32>
    %c0_7 = arith.constant 0 : index
    %c0_8 = arith.constant 0 : index
    %3 = vector.load %arg2[%c0_7, %c0_8] : memref<32x32xf32, #tpu.memory_space<vmem>>, vector<32x32xf32>
    %4 = arith.truncf %3 : vector<32x32xf32> to vector<32x32xbf16>
    %c0_9 = arith.constant 0 : index
    %c0_10 = arith.constant 0 : index
    %c0_11 = arith.constant 0 : index
    %5 = vector.load %arg19[%c0_9, %c0_10, %c0_11] : memref<2x1x32xf32, #tpu.memory_space<vmem>>, vector<1x1x32xf32>
    %6 = vector.shape_cast %5 : vector<1x1x32xf32> to vector<1x32xf32>
    %c0_12 = arith.constant 0 : index
    %c0_13 = arith.constant 0 : index
    %c0_14 = arith.constant 0 : index
    %7 = vector.load %arg20[%c0_12, %c0_13, %c0_14] : memref<2x1x32xf32, #tpu.memory_space<vmem>>, vector<1x1x32xf32>
    %8 = vector.shape_cast %7 : vector<1x1x32xf32> to vector<1x32xf32>
    %cst = arith.constant dense<0.000000e+00> : vector<16xf32>
    %9 = vector.multi_reduction <add>, %0, %cst [1] : vector<16x32xf32> to vector<16xf32>
    %10 = vector.shape_cast %9 : vector<16xf32> to vector<16x1xf32>
    %cst_15 = arith.constant 3.200000e+01 : f32
    %11 = vector.broadcast %cst_15 : f32 to vector<16x1xf32>
    %12 = arith.divf %10, %11 : vector<16x1xf32>
    %13 = vector.broadcast %12 : vector<16x1xf32> to vector<16x32xf32>
    %14 = arith.subf %0, %13 : vector<16x32xf32>
    %15 = arith.mulf %14, %14 : vector<16x32xf32>
    %cst_16 = arith.constant dense<0.000000e+00> : vector<16xf32>
    %16 = vector.multi_reduction <add>, %15, %cst_16 [1] : vector<16x32xf32> to vector<16xf32>
    %17 = vector.shape_cast %16 : vector<16xf32> to vector<16x1xf32>
    %cst_17 = arith.constant 0.0322580636 : f32
    %18 = vector.broadcast %cst_17 : f32 to vector<16x1xf32>
    %19 = arith.mulf %17, %18 : vector<16x1xf32>
    %cst_18 = arith.constant 9.99999996E-13 : f32
    %20 = vector.broadcast %cst_18 : f32 to vector<16x1xf32>
    %21 = arith.addf %19, %20 : vector<16x1xf32>
    %22 = math.rsqrt %21 : vector<16x1xf32>
    %23 = vector.broadcast %12 : vector<16x1xf32> to vector<16x32xf32>
    %24 = arith.subf %0, %23 : vector<16x32xf32>
    %25 = vector.broadcast %22 : vector<16x1xf32> to vector<16x32xf32>
    %26 = arith.mulf %24, %25 : vector<16x32xf32>
    %27 = vector.broadcast %6 : vector<1x32xf32> to vector<16x32xf32>
    %28 = arith.mulf %27, %26 : vector<16x32xf32>
    %29 = vector.broadcast %8 : vector<1x32xf32> to vector<16x32xf32>
    %30 = arith.addf %28, %29 : vector<16x32xf32>
    %31 = arith.truncf %30 : vector<16x32xf32> to vector<16x32xbf16>
    %c0_19 = arith.constant 0 : index
    %c0_20 = arith.constant 0 : index
    %c0_21 = arith.constant 0 : index
    %32 = vector.load %arg5[%c0_19, %c0_20, %c0_21] : memref<2x32x96xbf16, #tpu.memory_space<vmem>>, vector<1x32x96xbf16>
    %33 = vector.shape_cast %32 : vector<1x32x96xbf16> to vector<32x96xbf16>
    %cst_22 = arith.constant dense<0.000000e+00> : vector<16x96xf32>
    %34 = tpu.matmul %31, %33, %cst_22 {dimension_numbers = #tpu.dot_dimension_numbers<[1], [0], [0], [1], [0, 0, 1, 1], [], []>} : vector<16x32xbf16>, vector<32x96xbf16>, vector<16x96xf32> -> vector<16x96xf32>
    %c0_23 = arith.constant 0 : index
    %c0_24 = arith.constant 0 : index
    %c0_25 = arith.constant 0 : index
    %35 = vector.load %arg6[%c0_23, %c0_24, %c0_25] : memref<2x1x96xf32, #tpu.memory_space<vmem>>, vector<1x1x96xf32>
    %36 = vector.shape_cast %35 : vector<1x1x96xf32> to vector<1x96xf32>
    %37 = vector.broadcast %36 : vector<1x96xf32> to vector<16x96xf32>
    %38 = arith.addf %34, %37 : vector<16x96xf32>
    %39 = vector.extract_strided_slice %38 {offsets = [0, 0], sizes = [16, 32], strides = [1, 1]} : vector<16x96xf32> to vector<16x32xf32>
    %40 = vector.extract_strided_slice %38 {offsets = [0, 32], sizes = [16, 32], strides = [1, 1]} : vector<16x96xf32> to vector<16x32xf32>
    %41 = vector.extract_strided_slice %38 {offsets = [0, 64], sizes = [16, 32], strides = [1, 1]} : vector<16x96xf32> to vector<16x32xf32>
    %42 = vector.extract_strided_slice %39 {offsets = [0, 0], sizes = [8, 8], strides = [1, 1]} : vector<16x32xf32> to vector<8x8xf32>
    %43 = vector.extract_strided_slice %39 {offsets = [0, 8], sizes = [8, 8], strides = [1, 1]} : vector<16x32xf32> to vector<8x8xf32>
    %44 = vector.extract_strided_slice %39 {offsets = [0, 16], sizes = [8, 8], strides = [1, 1]} : vector<16x32xf32> to vector<8x8xf32>
    %45 = vector.extract_strided_slice %39 {offsets = [0, 24], sizes = [8, 8], strides = [1, 1]} : vector<16x32xf32> to vector<8x8xf32>
    %46 = vector.extract_strided_slice %39 {offsets = [8, 0], sizes = [8, 8], strides = [1, 1]} : vector<16x32xf32> to vector<8x8xf32>
    %47 = vector.extract_strided_slice %39 {offsets = [8, 8], sizes = [8, 8], strides = [1, 1]} : vector<16x32xf32> to vector<8x8xf32>
    %48 = vector.extract_strided_slice %39 {offsets = [8, 16], sizes = [8, 8], strides = [1, 1]} : vector<16x32xf32> to vector<8x8xf32>
    %49 = vector.extract_strided_slice %39 {offsets = [8, 24], sizes = [8, 8], strides = [1, 1]} : vector<16x32xf32> to vector<8x8xf32>
    %50 = vector.shape_cast %42 : vector<8x8xf32> to vector<1x8x8xf32>
    %51 = vector.shape_cast %43 : vector<8x8xf32> to vector<1x8x8xf32>
    %52 = vector.shape_cast %44 : vector<8x8xf32> to vector<1x8x8xf32>
    %53 = vector.shape_cast %45 : vector<8x8xf32> to vector<1x8x8xf32>
    %54 = vector.shape_cast %46 : vector<8x8xf32> to vector<1x8x8xf32>
    %55 = vector.shape_cast %47 : vector<8x8xf32> to vector<1x8x8xf32>
    %56 = vector.shape_cast %48 : vector<8x8xf32> to vector<1x8x8xf32>
    %57 = vector.shape_cast %49 : vector<8x8xf32> to vector<1x8x8xf32>
    %58 = tpu.concatenate %50, %51, %52, %53, %54, %55, %56, %57 in 0 : vector<1x8x8xf32>, vector<1x8x8xf32>, vector<1x8x8xf32>, vector<1x8x8xf32>, vector<1x8x8xf32>, vector<1x8x8xf32>, vector<1x8x8xf32>, vector<1x8x8xf32> -> vector<8x8x8xf32>
    %59 = arith.truncf %58 : vector<8x8x8xf32> to vector<8x8x8xbf16>
    %60 = vector.extract_strided_slice %40 {offsets = [0, 0], sizes = [8, 8], strides = [1, 1]} : vector<16x32xf32> to vector<8x8xf32>
    %61 = vector.extract_strided_slice %40 {offsets = [0, 8], sizes = [8, 8], strides = [1, 1]} : vector<16x32xf32> to vector<8x8xf32>
    %62 = vector.extract_strided_slice %40 {offsets = [0, 16], sizes = [8, 8], strides = [1, 1]} : vector<16x32xf32> to vector<8x8xf32>
    %63 = vector.extract_strided_slice %40 {offsets = [0, 24], sizes = [8, 8], strides = [1, 1]} : vector<16x32xf32> to vector<8x8xf32>
    %64 = vector.extract_strided_slice %40 {offsets = [8, 0], sizes = [8, 8], strides = [1, 1]} : vector<16x32xf32> to vector<8x8xf32>
    %65 = vector.extract_strided_slice %40 {offsets = [8, 8], sizes = [8, 8], strides = [1, 1]} : vector<16x32xf32> to vector<8x8xf32>
    %66 = vector.extract_strided_slice %40 {offsets = [8, 16], sizes = [8, 8], strides = [1, 1]} : vector<16x32xf32> to vector<8x8xf32>
    %67 = vector.extract_strided_slice %40 {offsets = [8, 24], sizes = [8, 8], strides = [1, 1]} : vector<16x32xf32> to vector<8x8xf32>
    %68 = vector.shape_cast %60 : vector<8x8xf32> to vector<1x8x8xf32>
    %69 = vector.shape_cast %61 : vector<8x8xf32> to vector<1x8x8xf32>
    %70 = vector.shape_cast %62 : vector<8x8xf32> to vector<1x8x8xf32>
    %71 = vector.shape_cast %63 : vector<8x8xf32> to vector<1x8x8xf32>
    %72 = vector.shape_cast %64 : vector<8x8xf32> to vector<1x8x8xf32>
    %73 = vector.shape_cast %65 : vector<8x8xf32> to vector<1x8x8xf32>
    %74 = vector.shape_cast %66 : vector<8x8xf32> to vector<1x8x8xf32>
    %75 = vector.shape_cast %67 : vector<8x8xf32> to vector<1x8x8xf32>
    %76 = tpu.concatenate %68, %69, %70, %71, %72, %73, %74, %75 in 0 : vector<1x8x8xf32>, vector<1x8x8xf32>, vector<1x8x8xf32>, vector<1x8x8xf32>, vector<1x8x8xf32>, vector<1x8x8xf32>, vector<1x8x8xf32>, vector<1x8x8xf32> -> vector<8x8x8xf32>
    %77 = arith.truncf %76 : vector<8x8x8xf32> to vector<8x8x8xbf16>
    %78 = vector.extract_strided_slice %41 {offsets = [0, 0], sizes = [8, 8], strides = [1, 1]} : vector<16x32xf32> to vector<8x8xf32>
    %79 = vector.extract_strided_slice %41 {offsets = [0, 8], sizes = [8, 8], strides = [1, 1]} : vector<16x32xf32> to vector<8x8xf32>
    %80 = vector.extract_strided_slice %41 {offsets = [0, 16], sizes = [8, 8], strides = [1, 1]} : vector<16x32xf32> to vector<8x8xf32>
    %81 = vector.extract_strided_slice %41 {offsets = [0, 24], sizes = [8, 8], strides = [1, 1]} : vector<16x32xf32> to vector<8x8xf32>
    %82 = vector.extract_strided_slice %41 {offsets = [8, 0], sizes = [8, 8], strides = [1, 1]} : vector<16x32xf32> to vector<8x8xf32>
    %83 = vector.extract_strided_slice %41 {offsets = [8, 8], sizes = [8, 8], strides = [1, 1]} : vector<16x32xf32> to vector<8x8xf32>
    %84 = vector.extract_strided_slice %41 {offsets = [8, 16], sizes = [8, 8], strides = [1, 1]} : vector<16x32xf32> to vector<8x8xf32>
    %85 = vector.extract_strided_slice %41 {offsets = [8, 24], sizes = [8, 8], strides = [1, 1]} : vector<16x32xf32> to vector<8x8xf32>
    %86 = vector.shape_cast %78 : vector<8x8xf32> to vector<1x8x8xf32>
    %87 = vector.shape_cast %79 : vector<8x8xf32> to vector<1x8x8xf32>
    %88 = vector.shape_cast %80 : vector<8x8xf32> to vector<1x8x8xf32>
    %89 = vector.shape_cast %81 : vector<8x8xf32> to vector<1x8x8xf32>
    %90 = vector.shape_cast %82 : vector<8x8xf32> to vector<1x8x8xf32>
    %91 = vector.shape_cast %83 : vector<8x8xf32> to vector<1x8x8xf32>
    %92 = vector.shape_cast %84 : vector<8x8xf32> to vector<1x8x8xf32>
    %93 = vector.shape_cast %85 : vector<8x8xf32> to vector<1x8x8xf32>
    %94 = tpu.concatenate %86, %87, %88, %89, %90, %91, %92, %93 in 0 : vector<1x8x8xf32>, vector<1x8x8xf32>, vector<1x8x8xf32>, vector<1x8x8xf32>, vector<1x8x8xf32>, vector<1x8x8xf32>, vector<1x8x8xf32>, vector<1x8x8xf32> -> vector<8x8x8xf32>
    %95 = arith.truncf %94 : vector<8x8x8xf32> to vector<8x8x8xbf16>
    %96 = vector.extract_strided_slice %1 {offsets = [0, 0, 0], sizes = [1, 8, 8], strides = [1, 1, 1]} : vector<2x8x8xf32> to vector<1x8x8xf32>
    %97 = vector.shape_cast %96 : vector<1x8x8xf32> to vector<8x8xf32>
    %98 = vector.extract_strided_slice %1 {offsets = [0, 0, 0], sizes = [1, 8, 8], strides = [1, 1, 1]} : vector<2x8x8xf32> to vector<1x8x8xf32>
    %99 = vector.shape_cast %98 : vector<1x8x8xf32> to vector<8x8xf32>
    %100 = vector.extract_strided_slice %1 {offsets = [0, 0, 0], sizes = [1, 8, 8], strides = [1, 1, 1]} : vector<2x8x8xf32> to vector<1x8x8xf32>
    %101 = vector.shape_cast %100 : vector<1x8x8xf32> to vector<8x8xf32>
    %102 = vector.extract_strided_slice %1 {offsets = [0, 0, 0], sizes = [1, 8, 8], strides = [1, 1, 1]} : vector<2x8x8xf32> to vector<1x8x8xf32>
    %103 = vector.shape_cast %102 : vector<1x8x8xf32> to vector<8x8xf32>
    %104 = vector.extract_strided_slice %1 {offsets = [1, 0, 0], sizes = [1, 8, 8], strides = [1, 1, 1]} : vector<2x8x8xf32> to vector<1x8x8xf32>
    %105 = vector.shape_cast %104 : vector<1x8x8xf32> to vector<8x8xf32>
    %106 = vector.extract_strided_slice %1 {offsets = [1, 0, 0], sizes = [1, 8, 8], strides = [1, 1, 1]} : vector<2x8x8xf32> to vector<1x8x8xf32>
    %107 = vector.shape_cast %106 : vector<1x8x8xf32> to vector<8x8xf32>
    %108 = vector.extract_strided_slice %1 {offsets = [1, 0, 0], sizes = [1, 8, 8], strides = [1, 1, 1]} : vector<2x8x8xf32> to vector<1x8x8xf32>
    %109 = vector.shape_cast %108 : vector<1x8x8xf32> to vector<8x8xf32>
    %110 = vector.extract_strided_slice %1 {offsets = [1, 0, 0], sizes = [1, 8, 8], strides = [1, 1, 1]} : vector<2x8x8xf32> to vector<1x8x8xf32>
    %111 = vector.shape_cast %110 : vector<1x8x8xf32> to vector<8x8xf32>
    %112 = vector.shape_cast %97 : vector<8x8xf32> to vector<1x8x8xf32>
    %113 = vector.shape_cast %99 : vector<8x8xf32> to vector<1x8x8xf32>
    %114 = vector.shape_cast %101 : vector<8x8xf32> to vector<1x8x8xf32>
    %115 = vector.shape_cast %103 : vector<8x8xf32> to vector<1x8x8xf32>
    %116 = vector.shape_cast %105 : vector<8x8xf32> to vector<1x8x8xf32>
    %117 = vector.shape_cast %107 : vector<8x8xf32> to vector<1x8x8xf32>
    %118 = vector.shape_cast %109 : vector<8x8xf32> to vector<1x8x8xf32>
    %119 = vector.shape_cast %111 : vector<8x8xf32> to vector<1x8x8xf32>
    %120 = tpu.concatenate %112, %113, %114, %115, %116, %117, %118, %119 in 0 : vector<1x8x8xf32>, vector<1x8x8xf32>, vector<1x8x8xf32>, vector<1x8x8xf32>, vector<1x8x8xf32>, vector<1x8x8xf32>, vector<1x8x8xf32>, vector<1x8x8xf32> -> vector<8x8x8xf32>
    "tpu.trace_start"() <{level = 10 : i32, message = "nqd,nkd->nqk"}> : () -> ()
    %cst_26 = arith.constant dense<0.000000e+00> : vector<8x8x8xf32>
    %121 = tpu.matmul %59, %77, %cst_26 {dimension_numbers = #tpu.dot_dimension_numbers<[2], [2], [1], [1], [0, 0, 0, 1, 1, 1], [0], [0]>} : vector<8x8x8xbf16>, vector<8x8x8xbf16>, vector<8x8x8xf32> -> vector<8x8x8xf32>
    "tpu.trace_stop"() : () -> ()
    %122 = arith.addf %121, %120 : vector<8x8x8xf32>
    %cst_27 = arith.constant dense<0xFF800000> : vector<8x8xf32>
    %123 = vector.multi_reduction <maximumf>, %122, %cst_27 [2] : vector<8x8x8xf32> to vector<8x8xf32>
    %124 = vector.shape_cast %123 : vector<8x8xf32> to vector<8x8x1xf32>
    %125 = vector.broadcast %124 : vector<8x8x1xf32> to vector<8x8x8xf32>
    %126 = arith.subf %122, %125 : vector<8x8x8xf32>
    %127 = math.exp %126 : vector<8x8x8xf32>
    %cst_28 = arith.constant dense<0.000000e+00> : vector<8x8xf32>
    %128 = vector.multi_reduction <add>, %127, %cst_28 [2] : vector<8x8x8xf32> to vector<8x8xf32>
    %129 = vector.shape_cast %128 : vector<8x8xf32> to vector<8x8x1xf32>
    %130 = tpu.reciprocal %129 {approx = true} : vector<8x8x1xf32> -> vector<8x8x1xf32>
    %131 = vector.broadcast %130 : vector<8x8x1xf32> to vector<8x8x8xf32>
    %132 = arith.mulf %127, %131 : vector<8x8x8xf32>
    %133 = arith.truncf %132 : vector<8x8x8xf32> to vector<8x8x8xbf16>
    "tpu.trace_start"() <{level = 10 : i32, message = "nqk,nkd->nqd"}> : () -> ()
    %cst_29 = arith.constant dense<0.000000e+00> : vector<8x8x8xf32>
    %134 = tpu.matmul %133, %95, %cst_29 {dimension_numbers = #tpu.dot_dimension_numbers<[2], [1], [1], [2], [0, 0, 0, 1, 1, 2], [0], [0]>} : vector<8x8x8xbf16>, vector<8x8x8xbf16>, vector<8x8x8xf32> -> vector<8x8x8xf32>
    "tpu.trace_stop"() : () -> ()
    %135 = vector.extract_strided_slice %134 {offsets = [0, 0, 0], sizes = [1, 8, 8], strides = [1, 1, 1]} : vector<8x8x8xf32> to vector<1x8x8xf32>
    %136 = vector.shape_cast %135 : vector<1x8x8xf32> to vector<8x8xf32>
    %137 = vector.extract_strided_slice %134 {offsets = [1, 0, 0], sizes = [1, 8, 8], strides = [1, 1, 1]} : vector<8x8x8xf32> to vector<1x8x8xf32>
    %138 = vector.shape_cast %137 : vector<1x8x8xf32> to vector<8x8xf32>
    %139 = vector.extract_strided_slice %134 {offsets = [2, 0, 0], sizes = [1, 8, 8], strides = [1, 1, 1]} : vector<8x8x8xf32> to vector<1x8x8xf32>
    %140 = vector.shape_cast %139 : vector<1x8x8xf32> to vector<8x8xf32>
    %141 = vector.extract_strided_slice %134 {offsets = [3, 0, 0], sizes = [1, 8, 8], strides = [1, 1, 1]} : vector<8x8x8xf32> to vector<1x8x8xf32>
    %142 = vector.shape_cast %141 : vector<1x8x8xf32> to vector<8x8xf32>
    %143 = tpu.concatenate %136, %138, %140, %142 in 1 : vector<8x8xf32>, vector<8x8xf32>, vector<8x8xf32>, vector<8x8xf32> -> vector<8x32xf32>
    %144 = vector.extract_strided_slice %134 {offsets = [4, 0, 0], sizes = [1, 8, 8], strides = [1, 1, 1]} : vector<8x8x8xf32> to vector<1x8x8xf32>
    %145 = vector.shape_cast %144 : vector<1x8x8xf32> to vector<8x8xf32>
    %146 = vector.extract_strided_slice %134 {offsets = [5, 0, 0], sizes = [1, 8, 8], strides = [1, 1, 1]} : vector<8x8x8xf32> to vector<1x8x8xf32>
    %147 = vector.shape_cast %146 : vector<1x8x8xf32> to vector<8x8xf32>
    %148 = vector.extract_strided_slice %134 {offsets = [6, 0, 0], sizes = [1, 8, 8], strides = [1, 1, 1]} : vector<8x8x8xf32> to vector<1x8x8xf32>
    %149 = vector.shape_cast %148 : vector<1x8x8xf32> to vector<8x8xf32>
    %150 = vector.extract_strided_slice %134 {offsets = [7, 0, 0], sizes = [1, 8, 8], strides = [1, 1, 1]} : vector<8x8x8xf32> to vector<1x8x8xf32>
    %151 = vector.shape_cast %150 : vector<1x8x8xf32> to vector<8x8xf32>
    %152 = tpu.concatenate %145, %147, %149, %151 in 1 : vector<8x8xf32>, vector<8x8xf32>, vector<8x8xf32>, vector<8x8xf32> -> vector<8x32xf32>
    %153 = tpu.concatenate %143, %152 in 0 : vector<8x32xf32>, vector<8x32xf32> -> vector<16x32xf32>
    %154 = arith.truncf %153 : vector<16x32xf32> to vector<16x32xbf16>
    %c0_30 = arith.constant 0 : index
    %c0_31 = arith.constant 0 : index
    %c0_32 = arith.constant 0 : index
    %155 = vector.load %arg7[%c0_30, %c0_31, %c0_32] : memref<2x32x32xbf16, #tpu.memory_space<vmem>>, vector<1x32x32xbf16>
    %156 = vector.shape_cast %155 : vector<1x32x32xbf16> to vector<32x32xbf16>
    %cst_33 = arith.constant dense<0.000000e+00> : vector<16x32xf32>
    %157 = tpu.matmul %154, %156, %cst_33 {dimension_numbers = #tpu.dot_dimension_numbers<[1], [0], [0], [1], [0, 0, 1, 1], [], []>} : vector<16x32xbf16>, vector<32x32xbf16>, vector<16x32xf32> -> vector<16x32xf32>
    %c0_34 = arith.constant 0 : index
    %c0_35 = arith.constant 0 : index
    %c0_36 = arith.constant 0 : index
    %158 = vector.load %arg8[%c0_34, %c0_35, %c0_36] : memref<2x1x32xf32, #tpu.memory_space<vmem>>, vector<1x1x32xf32>
    %159 = vector.shape_cast %158 : vector<1x1x32xf32> to vector<1x32xf32>
    %160 = vector.broadcast %159 : vector<1x32xf32> to vector<16x32xf32>
    %161 = arith.addf %157, %160 : vector<16x32xf32>
    %162 = arith.addf %0, %161 : vector<16x32xf32>
    %c0_37 = arith.constant 0 : index
    %c0_38 = arith.constant 0 : index
    %c0_39 = arith.constant 0 : index
    %163 = vector.load %arg21[%c0_37, %c0_38, %c0_39] : memref<2x1x32xf32, #tpu.memory_space<vmem>>, vector<1x1x32xf32>
    %164 = vector.shape_cast %163 : vector<1x1x32xf32> to vector<1x32xf32>
    %c0_40 = arith.constant 0 : index
    %c0_41 = arith.constant 0 : index
    %c0_42 = arith.constant 0 : index
    %165 = vector.load %arg22[%c0_40, %c0_41, %c0_42] : memref<2x1x32xf32, #tpu.memory_space<vmem>>, vector<1x1x32xf32>
    %166 = vector.shape_cast %165 : vector<1x1x32xf32> to vector<1x32xf32>
    %cst_43 = arith.constant dense<0.000000e+00> : vector<16xf32>
    %167 = vector.multi_reduction <add>, %162, %cst_43 [1] : vector<16x32xf32> to vector<16xf32>
    %168 = vector.shape_cast %167 : vector<16xf32> to vector<16x1xf32>
    %cst_44 = arith.constant 3.200000e+01 : f32
    %169 = vector.broadcast %cst_44 : f32 to vector<16x1xf32>
    %170 = arith.divf %168, %169 : vector<16x1xf32>
    %171 = vector.broadcast %170 : vector<16x1xf32> to vector<16x32xf32>
    %172 = arith.subf %162, %171 : vector<16x32xf32>
    %173 = arith.mulf %172, %172 : vector<16x32xf32>
    %cst_45 = arith.constant dense<0.000000e+00> : vector<16xf32>
    %174 = vector.multi_reduction <add>, %173, %cst_45 [1] : vector<16x32xf32> to vector<16xf32>
    %175 = vector.shape_cast %174 : vector<16xf32> to vector<16x1xf32>
    %cst_46 = arith.constant 0.0322580636 : f32
    %176 = vector.broadcast %cst_46 : f32 to vector<16x1xf32>
    %177 = arith.mulf %175, %176 : vector<16x1xf32>
    %cst_47 = arith.constant 9.99999996E-13 : f32
    %178 = vector.broadcast %cst_47 : f32 to vector<16x1xf32>
    %179 = arith.addf %177, %178 : vector<16x1xf32>
    %180 = math.rsqrt %179 : vector<16x1xf32>
    %181 = vector.broadcast %170 : vector<16x1xf32> to vector<16x32xf32>
    %182 = arith.subf %162, %181 : vector<16x32xf32>
    %183 = vector.broadcast %180 : vector<16x1xf32> to vector<16x32xf32>
    %184 = arith.mulf %182, %183 : vector<16x32xf32>
    %185 = vector.broadcast %164 : vector<1x32xf32> to vector<16x32xf32>
    %186 = arith.mulf %185, %184 : vector<16x32xf32>
    %187 = vector.broadcast %166 : vector<1x32xf32> to vector<16x32xf32>
    %188 = arith.addf %186, %187 : vector<16x32xf32>
    %189 = arith.truncf %188 : vector<16x32xf32> to vector<16x32xbf16>
    %c0_48 = arith.constant 0 : index
    %c0_49 = arith.constant 0 : index
    %c0_50 = arith.constant 0 : index
    %190 = vector.load %arg9[%c0_48, %c0_49, %c0_50] : memref<2x32x32xbf16, #tpu.memory_space<vmem>>, vector<1x32x32xbf16>
    %191 = vector.shape_cast %190 : vector<1x32x32xbf16> to vector<32x32xbf16>
    %cst_51 = arith.constant dense<0.000000e+00> : vector<16x32xf32>
    %192 = tpu.matmul %189, %191, %cst_51 {dimension_numbers = #tpu.dot_dimension_numbers<[1], [0], [0], [1], [0, 0, 1, 1], [], []>} : vector<16x32xbf16>, vector<32x32xbf16>, vector<16x32xf32> -> vector<16x32xf32>
    %c0_52 = arith.constant 0 : index
    %c0_53 = arith.constant 0 : index
    %c0_54 = arith.constant 0 : index
    %193 = vector.load %arg10[%c0_52, %c0_53, %c0_54] : memref<2x1x32xf32, #tpu.memory_space<vmem>>, vector<1x1x32xf32>
    %194 = vector.shape_cast %193 : vector<1x1x32xf32> to vector<1x32xf32>
    %195 = vector.broadcast %194 : vector<1x32xf32> to vector<16x32xf32>
    %196 = arith.addf %192, %195 : vector<16x32xf32>
    %c0_55 = arith.constant 0 : index
    %c0_56 = arith.constant 0 : index
    %c0_57 = arith.constant 0 : index
    %197 = vector.load %arg11[%c0_55, %c0_56, %c0_57] : memref<2x32x64xbf16, #tpu.memory_space<vmem>>, vector<1x32x64xbf16>
    %198 = vector.shape_cast %197 : vector<1x32x64xbf16> to vector<32x64xbf16>
    %cst_58 = arith.constant dense<0.000000e+00> : vector<32x64xf32>
    %199 = tpu.matmul %4, %198, %cst_58 {dimension_numbers = #tpu.dot_dimension_numbers<[1], [0], [0], [1], [0, 0, 1, 1], [], []>} : vector<32x32xbf16>, vector<32x64xbf16>, vector<32x64xf32> -> vector<32x64xf32>
    %c0_59 = arith.constant 0 : index
    %c0_60 = arith.constant 0 : index
    %c0_61 = arith.constant 0 : index
    %200 = vector.load %arg12[%c0_59, %c0_60, %c0_61] : memref<2x1x64xf32, #tpu.memory_space<vmem>>, vector<1x1x64xf32>
    %201 = vector.shape_cast %200 : vector<1x1x64xf32> to vector<1x64xf32>
    %202 = vector.broadcast %201 : vector<1x64xf32> to vector<32x64xf32>
    %203 = arith.addf %199, %202 : vector<32x64xf32>
    %204 = vector.extract_strided_slice %203 {offsets = [0, 0], sizes = [32, 32], strides = [1, 1]} : vector<32x64xf32> to vector<32x32xf32>
    %205 = vector.extract_strided_slice %203 {offsets = [0, 32], sizes = [32, 32], strides = [1, 1]} : vector<32x64xf32> to vector<32x32xf32>
    %206 = vector.extract_strided_slice %196 {offsets = [0, 0], sizes = [8, 8], strides = [1, 1]} : vector<16x32xf32> to vector<8x8xf32>
    %207 = vector.extract_strided_slice %196 {offsets = [0, 8], sizes = [8, 8], strides = [1, 1]} : vector<16x32xf32> to vector<8x8xf32>
    %208 = vector.extract_strided_slice %196 {offsets = [0, 16], sizes = [8, 8], strides = [1, 1]} : vector<16x32xf32> to vector<8x8xf32>
    %209 = vector.extract_strided_slice %196 {offsets = [0, 24], sizes = [8, 8], strides = [1, 1]} : vector<16x32xf32> to vector<8x8xf32>
    %210 = vector.extract_strided_slice %196 {offsets = [8, 0], sizes = [8, 8], strides = [1, 1]} : vector<16x32xf32> to vector<8x8xf32>
    %211 = vector.extract_strided_slice %196 {offsets = [8, 8], sizes = [8, 8], strides = [1, 1]} : vector<16x32xf32> to vector<8x8xf32>
    %212 = vector.extract_strided_slice %196 {offsets = [8, 16], sizes = [8, 8], strides = [1, 1]} : vector<16x32xf32> to vector<8x8xf32>
    %213 = vector.extract_strided_slice %196 {offsets = [8, 24], sizes = [8, 8], strides = [1, 1]} : vector<16x32xf32> to vector<8x8xf32>
    %214 = vector.shape_cast %206 : vector<8x8xf32> to vector<1x8x8xf32>
    %215 = vector.shape_cast %207 : vector<8x8xf32> to vector<1x8x8xf32>
    %216 = vector.shape_cast %208 : vector<8x8xf32> to vector<1x8x8xf32>
    %217 = vector.shape_cast %209 : vector<8x8xf32> to vector<1x8x8xf32>
    %218 = vector.shape_cast %210 : vector<8x8xf32> to vector<1x8x8xf32>
    %219 = vector.shape_cast %211 : vector<8x8xf32> to vector<1x8x8xf32>
    %220 = vector.shape_cast %212 : vector<8x8xf32> to vector<1x8x8xf32>
    %221 = vector.shape_cast %213 : vector<8x8xf32> to vector<1x8x8xf32>
    %222 = tpu.concatenate %214, %215, %216, %217, %218, %219, %220, %221 in 0 : vector<1x8x8xf32>, vector<1x8x8xf32>, vector<1x8x8xf32>, vector<1x8x8xf32>, vector<1x8x8xf32>, vector<1x8x8xf32>, vector<1x8x8xf32>, vector<1x8x8xf32> -> vector<8x8x8xf32>
    %223 = arith.truncf %222 : vector<8x8x8xf32> to vector<8x8x8xbf16>
    %224 = vector.extract_strided_slice %204 {offsets = [0, 0], sizes = [16, 8], strides = [1, 1]} : vector<32x32xf32> to vector<16x8xf32>
    %225 = vector.extract_strided_slice %204 {offsets = [0, 8], sizes = [16, 8], strides = [1, 1]} : vector<32x32xf32> to vector<16x8xf32>
    %226 = vector.extract_strided_slice %204 {offsets = [0, 16], sizes = [16, 8], strides = [1, 1]} : vector<32x32xf32> to vector<16x8xf32>
    %227 = vector.extract_strided_slice %204 {offsets = [0, 24], sizes = [16, 8], strides = [1, 1]} : vector<32x32xf32> to vector<16x8xf32>
    %228 = vector.extract_strided_slice %204 {offsets = [16, 0], sizes = [16, 8], strides = [1, 1]} : vector<32x32xf32> to vector<16x8xf32>
    %229 = vector.extract_strided_slice %204 {offsets = [16, 8], sizes = [16, 8], strides = [1, 1]} : vector<32x32xf32> to vector<16x8xf32>
    %230 = vector.extract_strided_slice %204 {offsets = [16, 16], sizes = [16, 8], strides = [1, 1]} : vector<32x32xf32> to vector<16x8xf32>
    %231 = vector.extract_strided_slice %204 {offsets = [16, 24], sizes = [16, 8], strides = [1, 1]} : vector<32x32xf32> to vector<16x8xf32>
    %232 = vector.shape_cast %224 : vector<16x8xf32> to vector<1x16x8xf32>
    %233 = vector.shape_cast %225 : vector<16x8xf32> to vector<1x16x8xf32>
    %234 = vector.shape_cast %226 : vector<16x8xf32> to vector<1x16x8xf32>
    %235 = vector.shape_cast %227 : vector<16x8xf32> to vector<1x16x8xf32>
    %236 = vector.shape_cast %228 : vector<16x8xf32> to vector<1x16x8xf32>
    %237 = vector.shape_cast %229 : vector<16x8xf32> to vector<1x16x8xf32>
    %238 = vector.shape_cast %230 : vector<16x8xf32> to vector<1x16x8xf32>
    %239 = vector.shape_cast %231 : vector<16x8xf32> to vector<1x16x8xf32>
    %240 = tpu.concatenate %232, %233, %234, %235, %236, %237, %238, %239 in 0 : vector<1x16x8xf32>, vector<1x16x8xf32>, vector<1x16x8xf32>, vector<1x16x8xf32>, vector<1x16x8xf32>, vector<1x16x8xf32>, vector<1x16x8xf32>, vector<1x16x8xf32> -> vector<8x16x8xf32>
    %241 = arith.truncf %240 : vector<8x16x8xf32> to vector<8x16x8xbf16>
    %242 = vector.extract_strided_slice %205 {offsets = [0, 0], sizes = [16, 8], strides = [1, 1]} : vector<32x32xf32> to vector<16x8xf32>
    %243 = vector.extract_strided_slice %205 {offsets = [0, 8], sizes = [16, 8], strides = [1, 1]} : vector<32x32xf32> to vector<16x8xf32>
    %244 = vector.extract_strided_slice %205 {offsets = [0, 16], sizes = [16, 8], strides = [1, 1]} : vector<32x32xf32> to vector<16x8xf32>
    %245 = vector.extract_strided_slice %205 {offsets = [0, 24], sizes = [16, 8], strides = [1, 1]} : vector<32x32xf32> to vector<16x8xf32>
    %246 = vector.extract_strided_slice %205 {offsets = [16, 0], sizes = [16, 8], strides = [1, 1]} : vector<32x32xf32> to vector<16x8xf32>
    %247 = vector.extract_strided_slice %205 {offsets = [16, 8], sizes = [16, 8], strides = [1, 1]} : vector<32x32xf32> to vector<16x8xf32>
    %248 = vector.extract_strided_slice %205 {offsets = [16, 16], sizes = [16, 8], strides = [1, 1]} : vector<32x32xf32> to vector<16x8xf32>
    %249 = vector.extract_strided_slice %205 {offsets = [16, 24], sizes = [16, 8], strides = [1, 1]} : vector<32x32xf32> to vector<16x8xf32>
    %250 = vector.shape_cast %242 : vector<16x8xf32> to vector<1x16x8xf32>
    %251 = vector.shape_cast %243 : vector<16x8xf32> to vector<1x16x8xf32>
    %252 = vector.shape_cast %244 : vector<16x8xf32> to vector<1x16x8xf32>
    %253 = vector.shape_cast %245 : vector<16x8xf32> to vector<1x16x8xf32>
    %254 = vector.shape_cast %246 : vector<16x8xf32> to vector<1x16x8xf32>
    %255 = vector.shape_cast %247 : vector<16x8xf32> to vector<1x16x8xf32>
    %256 = vector.shape_cast %248 : vector<16x8xf32> to vector<1x16x8xf32>
    %257 = vector.shape_cast %249 : vector<16x8xf32> to vector<1x16x8xf32>
    %258 = tpu.concatenate %250, %251, %252, %253, %254, %255, %256, %257 in 0 : vector<1x16x8xf32>, vector<1x16x8xf32>, vector<1x16x8xf32>, vector<1x16x8xf32>, vector<1x16x8xf32>, vector<1x16x8xf32>, vector<1x16x8xf32>, vector<1x16x8xf32> -> vector<8x16x8xf32>
    %259 = arith.truncf %258 : vector<8x16x8xf32> to vector<8x16x8xbf16>
    %260 = vector.extract_strided_slice %2 {offsets = [0, 0, 0], sizes = [1, 8, 16], strides = [1, 1, 1]} : vector<2x8x16xf32> to vector<1x8x16xf32>
    %261 = vector.shape_cast %260 : vector<1x8x16xf32> to vector<8x16xf32>
    %262 = vector.extract_strided_slice %2 {offsets = [0, 0, 0], sizes = [1, 8, 16], strides = [1, 1, 1]} : vector<2x8x16xf32> to vector<1x8x16xf32>
    %263 = vector.shape_cast %262 : vector<1x8x16xf32> to vector<8x16xf32>
    %264 = vector.extract_strided_slice %2 {offsets = [0, 0, 0], sizes = [1, 8, 16], strides = [1, 1, 1]} : vector<2x8x16xf32> to vector<1x8x16xf32>
    %265 = vector.shape_cast %264 : vector<1x8x16xf32> to vector<8x16xf32>
    %266 = vector.extract_strided_slice %2 {offsets = [0, 0, 0], sizes = [1, 8, 16], strides = [1, 1, 1]} : vector<2x8x16xf32> to vector<1x8x16xf32>
    %267 = vector.shape_cast %266 : vector<1x8x16xf32> to vector<8x16xf32>
    %268 = vector.extract_strided_slice %2 {offsets = [1, 0, 0], sizes = [1, 8, 16], strides = [1, 1, 1]} : vector<2x8x16xf32> to vector<1x8x16xf32>
    %269 = vector.shape_cast %268 : vector<1x8x16xf32> to vector<8x16xf32>
    %270 = vector.extract_strided_slice %2 {offsets = [1, 0, 0], sizes = [1, 8, 16], strides = [1, 1, 1]} : vector<2x8x16xf32> to vector<1x8x16xf32>
    %271 = vector.shape_cast %270 : vector<1x8x16xf32> to vector<8x16xf32>
    %272 = vector.extract_strided_slice %2 {offsets = [1, 0, 0], sizes = [1, 8, 16], strides = [1, 1, 1]} : vector<2x8x16xf32> to vector<1x8x16xf32>
    %273 = vector.shape_cast %272 : vector<1x8x16xf32> to vector<8x16xf32>
    %274 = vector.extract_strided_slice %2 {offsets = [1, 0, 0], sizes = [1, 8, 16], strides = [1, 1, 1]} : vector<2x8x16xf32> to vector<1x8x16xf32>
    %275 = vector.shape_cast %274 : vector<1x8x16xf32> to vector<8x16xf32>
    %276 = vector.shape_cast %261 : vector<8x16xf32> to vector<1x8x16xf32>
    %277 = vector.shape_cast %263 : vector<8x16xf32> to vector<1x8x16xf32>
    %278 = vector.shape_cast %265 : vector<8x16xf32> to vector<1x8x16xf32>
    %279 = vector.shape_cast %267 : vector<8x16xf32> to vector<1x8x16xf32>
    %280 = vector.shape_cast %269 : vector<8x16xf32> to vector<1x8x16xf32>
    %281 = vector.shape_cast %271 : vector<8x16xf32> to vector<1x8x16xf32>
    %282 = vector.shape_cast %273 : vector<8x16xf32> to vector<1x8x16xf32>
    %283 = vector.shape_cast %275 : vector<8x16xf32> to vector<1x8x16xf32>
    %284 = tpu.concatenate %276, %277, %278, %279, %280, %281, %282, %283 in 0 : vector<1x8x16xf32>, vector<1x8x16xf32>, vector<1x8x16xf32>, vector<1x8x16xf32>, vector<1x8x16xf32>, vector<1x8x16xf32>, vector<1x8x16xf32>, vector<1x8x16xf32> -> vector<8x8x16xf32>
    "tpu.trace_start"() <{level = 10 : i32, message = "nqd,nkd->nqk"}> : () -> ()
    %cst_62 = arith.constant dense<0.000000e+00> : vector<8x8x16xf32>
    %285 = tpu.matmul %223, %241, %cst_62 {dimension_numbers = #tpu.dot_dimension_numbers<[2], [2], [1], [1], [0, 0, 0, 1, 1, 1], [0], [0]>} : vector<8x8x8xbf16>, vector<8x16x8xbf16>, vector<8x8x16xf32> -> vector<8x8x16xf32>
    "tpu.trace_stop"() : () -> ()
    %286 = arith.addf %285, %284 : vector<8x8x16xf32>
    %cst_63 = arith.constant dense<0xFF800000> : vector<8x8xf32>
    %287 = vector.multi_reduction <maximumf>, %286, %cst_63 [2] : vector<8x8x16xf32> to vector<8x8xf32>
    %288 = vector.shape_cast %287 : vector<8x8xf32> to vector<8x8x1xf32>
    %289 = vector.broadcast %288 : vector<8x8x1xf32> to vector<8x8x16xf32>
    %290 = arith.subf %286, %289 : vector<8x8x16xf32>
    %291 = math.exp %290 : vector<8x8x16xf32>
    %cst_64 = arith.constant dense<0.000000e+00> : vector<8x8xf32>
    %292 = vector.multi_reduction <add>, %291, %cst_64 [2] : vector<8x8x16xf32> to vector<8x8xf32>
    %293 = vector.shape_cast %292 : vector<8x8xf32> to vector<8x8x1xf32>
    %294 = tpu.reciprocal %293 {approx = true} : vector<8x8x1xf32> -> vector<8x8x1xf32>
    %295 = vector.broadcast %294 : vector<8x8x1xf32> to vector<8x8x16xf32>
    %296 = arith.mulf %291, %295 : vector<8x8x16xf32>
    %297 = arith.truncf %296 : vector<8x8x16xf32> to vector<8x8x16xbf16>
    "tpu.trace_start"() <{level = 10 : i32, message = "nqk,nkd->nqd"}> : () -> ()
    %cst_65 = arith.constant dense<0.000000e+00> : vector<8x8x8xf32>
    %298 = tpu.matmul %297, %259, %cst_65 {dimension_numbers = #tpu.dot_dimension_numbers<[2], [1], [1], [2], [0, 0, 0, 1, 1, 2], [0], [0]>} : vector<8x8x16xbf16>, vector<8x16x8xbf16>, vector<8x8x8xf32> -> vector<8x8x8xf32>
    "tpu.trace_stop"() : () -> ()
    %299 = vector.extract_strided_slice %298 {offsets = [0, 0, 0], sizes = [1, 8, 8], strides = [1, 1, 1]} : vector<8x8x8xf32> to vector<1x8x8xf32>
    %300 = vector.shape_cast %299 : vector<1x8x8xf32> to vector<8x8xf32>
    %301 = vector.extract_strided_slice %298 {offsets = [1, 0, 0], sizes = [1, 8, 8], strides = [1, 1, 1]} : vector<8x8x8xf32> to vector<1x8x8xf32>
    %302 = vector.shape_cast %301 : vector<1x8x8xf32> to vector<8x8xf32>
    %303 = vector.extract_strided_slice %298 {offsets = [2, 0, 0], sizes = [1, 8, 8], strides = [1, 1, 1]} : vector<8x8x8xf32> to vector<1x8x8xf32>
    %304 = vector.shape_cast %303 : vector<1x8x8xf32> to vector<8x8xf32>
    %305 = vector.extract_strided_slice %298 {offsets = [3, 0, 0], sizes = [1, 8, 8], strides = [1, 1, 1]} : vector<8x8x8xf32> to vector<1x8x8xf32>
    %306 = vector.shape_cast %305 : vector<1x8x8xf32> to vector<8x8xf32>
    %307 = tpu.concatenate %300, %302, %304, %306 in 1 : vector<8x8xf32>, vector<8x8xf32>, vector<8x8xf32>, vector<8x8xf32> -> vector<8x32xf32>
    %308 = vector.extract_strided_slice %298 {offsets = [4, 0, 0], sizes = [1, 8, 8], strides = [1, 1, 1]} : vector<8x8x8xf32> to vector<1x8x8xf32>
    %309 = vector.shape_cast %308 : vector<1x8x8xf32> to vector<8x8xf32>
    %310 = vector.extract_strided_slice %298 {offsets = [5, 0, 0], sizes = [1, 8, 8], strides = [1, 1, 1]} : vector<8x8x8xf32> to vector<1x8x8xf32>
    %311 = vector.shape_cast %310 : vector<1x8x8xf32> to vector<8x8xf32>
    %312 = vector.extract_strided_slice %298 {offsets = [6, 0, 0], sizes = [1, 8, 8], strides = [1, 1, 1]} : vector<8x8x8xf32> to vector<1x8x8xf32>
    %313 = vector.shape_cast %312 : vector<1x8x8xf32> to vector<8x8xf32>
    %314 = vector.extract_strided_slice %298 {offsets = [7, 0, 0], sizes = [1, 8, 8], strides = [1, 1, 1]} : vector<8x8x8xf32> to vector<1x8x8xf32>
    %315 = vector.shape_cast %314 : vector<1x8x8xf32> to vector<8x8xf32>
    %316 = tpu.concatenate %309, %311, %313, %315 in 1 : vector<8x8xf32>, vector<8x8xf32>, vector<8x8xf32>, vector<8x8xf32> -> vector<8x32xf32>
    %317 = tpu.concatenate %307, %316 in 0 : vector<8x32xf32>, vector<8x32xf32> -> vector<16x32xf32>
    %318 = arith.truncf %317 : vector<16x32xf32> to vector<16x32xbf16>
    %c0_66 = arith.constant 0 : index
    %c0_67 = arith.constant 0 : index
    %c0_68 = arith.constant 0 : index
    %319 = vector.load %arg13[%c0_66, %c0_67, %c0_68] : memref<2x32x32xbf16, #tpu.memory_space<vmem>>, vector<1x32x32xbf16>
    %320 = vector.shape_cast %319 : vector<1x32x32xbf16> to vector<32x32xbf16>
    %cst_69 = arith.constant dense<0.000000e+00> : vector<16x32xf32>
    %321 = tpu.matmul %318, %320, %cst_69 {dimension_numbers = #tpu.dot_dimension_numbers<[1], [0], [0], [1], [0, 0, 1, 1], [], []>} : vector<16x32xbf16>, vector<32x32xbf16>, vector<16x32xf32> -> vector<16x32xf32>
    %c0_70 = arith.constant 0 : index
    %c0_71 = arith.constant 0 : index
    %c0_72 = arith.constant 0 : index
    %322 = vector.load %arg14[%c0_70, %c0_71, %c0_72] : memref<2x1x32xf32, #tpu.memory_space<vmem>>, vector<1x1x32xf32>
    %323 = vector.shape_cast %322 : vector<1x1x32xf32> to vector<1x32xf32>
    %324 = vector.broadcast %323 : vector<1x32xf32> to vector<16x32xf32>
    %325 = arith.addf %321, %324 : vector<16x32xf32>
    %326 = arith.addf %162, %325 : vector<16x32xf32>
    %c0_73 = arith.constant 0 : index
    %c0_74 = arith.constant 0 : index
    %c0_75 = arith.constant 0 : index
    %327 = vector.load %arg23[%c0_73, %c0_74, %c0_75] : memref<2x1x32xf32, #tpu.memory_space<vmem>>, vector<1x1x32xf32>
    %328 = vector.shape_cast %327 : vector<1x1x32xf32> to vector<1x32xf32>
    %c0_76 = arith.constant 0 : index
    %c0_77 = arith.constant 0 : index
    %c0_78 = arith.constant 0 : index
    %329 = vector.load %arg24[%c0_76, %c0_77, %c0_78] : memref<2x1x32xf32, #tpu.memory_space<vmem>>, vector<1x1x32xf32>
    %330 = vector.shape_cast %329 : vector<1x1x32xf32> to vector<1x32xf32>
    %cst_79 = arith.constant dense<0.000000e+00> : vector<16xf32>
    %331 = vector.multi_reduction <add>, %326, %cst_79 [1] : vector<16x32xf32> to vector<16xf32>
    %332 = vector.shape_cast %331 : vector<16xf32> to vector<16x1xf32>
    %cst_80 = arith.constant 3.200000e+01 : f32
    %333 = vector.broadcast %cst_80 : f32 to vector<16x1xf32>
    %334 = arith.divf %332, %333 : vector<16x1xf32>
    %335 = vector.broadcast %334 : vector<16x1xf32> to vector<16x32xf32>
    %336 = arith.subf %326, %335 : vector<16x32xf32>
    %337 = arith.mulf %336, %336 : vector<16x32xf32>
    %cst_81 = arith.constant dense<0.000000e+00> : vector<16xf32>
    %338 = vector.multi_reduction <add>, %337, %cst_81 [1] : vector<16x32xf32> to vector<16xf32>
    %339 = vector.shape_cast %338 : vector<16xf32> to vector<16x1xf32>
    %cst_82 = arith.constant 0.0322580636 : f32
    %340 = vector.broadcast %cst_82 : f32 to vector<16x1xf32>
    %341 = arith.mulf %339, %340 : vector<16x1xf32>
    %cst_83 = arith.constant 9.99999996E-13 : f32
    %342 = vector.broadcast %cst_83 : f32 to vector<16x1xf32>
    %343 = arith.addf %341, %342 : vector<16x1xf32>
    %344 = math.rsqrt %343 : vector<16x1xf32>
    %345 = vector.broadcast %334 : vector<16x1xf32> to vector<16x32xf32>
    %346 = arith.subf %326, %345 : vector<16x32xf32>
    %347 = vector.broadcast %344 : vector<16x1xf32> to vector<16x32xf32>
    %348 = arith.mulf %346, %347 : vector<16x32xf32>
    %349 = vector.broadcast %328 : vector<1x32xf32> to vector<16x32xf32>
    %350 = arith.mulf %349, %348 : vector<16x32xf32>
    %351 = vector.broadcast %330 : vector<1x32xf32> to vector<16x32xf32>
    %352 = arith.addf %350, %351 : vector<16x32xf32>
    %c0_84 = arith.constant 0 : index
    %c0_85 = arith.constant 0 : index
    %c0_86 = arith.constant 0 : index
    %353 = vector.load %arg15[%c0_84, %c0_85, %c0_86] : memref<2x32x2048xbf16, #tpu.memory_space<vmem>>, vector<1x32x2048xbf16>
    %354 = vector.shape_cast %353 : vector<1x32x2048xbf16> to vector<32x2048xbf16>
    %c0_87 = arith.constant 0 : index
    %c0_88 = arith.constant 0 : index
    %c0_89 = arith.constant 0 : index
    %355 = vector.load %arg16[%c0_87, %c0_88, %c0_89] : memref<2x1x2048xf32, #tpu.memory_space<vmem>>, vector<1x1x2048xf32>
    %356 = vector.shape_cast %355 : vector<1x1x2048xf32> to vector<1x2048xf32>
    %c0_90 = arith.constant 0 : index
    %c0_91 = arith.constant 0 : index
    %c0_92 = arith.constant 0 : index
    %357 = vector.load %arg17[%c0_90, %c0_91, %c0_92] : memref<2x2048x32xbf16, #tpu.memory_space<vmem>>, vector<1x2048x32xbf16>
    %358 = vector.shape_cast %357 : vector<1x2048x32xbf16> to vector<2048x32xbf16>
    %c0_93 = arith.constant 0 : index
    %c0_94 = arith.constant 0 : index
    %c0_95 = arith.constant 0 : index
    %359 = vector.load %arg18[%c0_93, %c0_94, %c0_95] : memref<2x1x32xf32, #tpu.memory_space<vmem>>, vector<1x1x32xf32>
    %360 = vector.shape_cast %359 : vector<1x1x32xf32> to vector<1x32xf32>
    %361 = arith.truncf %352 : vector<16x32xf32> to vector<16x32xbf16>
    %cst_96 = arith.constant dense<0.000000e+00> : vector<16x2048xf32>
    %362 = tpu.matmul %361, %354, %cst_96 {dimension_numbers = #tpu.dot_dimension_numbers<[1], [0], [0], [1], [0, 0, 1, 1], [], []>} : vector<16x32xbf16>, vector<32x2048xbf16>, vector<16x2048xf32> -> vector<16x2048xf32>
    %363 = vector.broadcast %356 : vector<1x2048xf32> to vector<16x2048xf32>
    %364 = arith.addf %362, %363 : vector<16x2048xf32>
    %cst_97 = arith.constant 0.000000e+00 : f32
    %365 = vector.broadcast %cst_97 : f32 to vector<16x2048xf32>
    %366 = arith.maximumf %364, %365 : vector<16x2048xf32>
    %367 = arith.truncf %366 : vector<16x2048xf32> to vector<16x2048xbf16>
    %cst_98 = arith.constant dense<0.000000e+00> : vector<16x32xf32>
    %368 = tpu.matmul %367, %358, %cst_98 {dimension_numbers = #tpu.dot_dimension_numbers<[1], [0], [0], [1], [0, 0, 1, 1], [], []>} : vector<16x2048xbf16>, vector<2048x32xbf16>, vector<16x32xf32> -> vector<16x32xf32>
    %369 = vector.broadcast %360 : vector<1x32xf32> to vector<16x32xf32>
    %370 = arith.addf %368, %369 : vector<16x32xf32>
    %371 = arith.addf %326, %370 : vector<16x32xf32>
    %c1 = arith.constant 1 : index
    %c0_99 = arith.constant 0 : index
    %c0_100 = arith.constant 0 : index
    %372 = vector.load %arg19[%c1, %c0_99, %c0_100] : memref<2x1x32xf32, #tpu.memory_space<vmem>>, vector<1x1x32xf32>
    %373 = vector.shape_cast %372 : vector<1x1x32xf32> to vector<1x32xf32>
    %c1_101 = arith.constant 1 : index
    %c0_102 = arith.constant 0 : index
    %c0_103 = arith.constant 0 : index
    %374 = vector.load %arg20[%c1_101, %c0_102, %c0_103] : memref<2x1x32xf32, #tpu.memory_space<vmem>>, vector<1x1x32xf32>
    %375 = vector.shape_cast %374 : vector<1x1x32xf32> to vector<1x32xf32>
    %cst_104 = arith.constant dense<0.000000e+00> : vector<16xf32>
    %376 = vector.multi_reduction <add>, %371, %cst_104 [1] : vector<16x32xf32> to vector<16xf32>
    %377 = vector.shape_cast %376 : vector<16xf32> to vector<16x1xf32>
    %cst_105 = arith.constant 3.200000e+01 : f32
    %378 = vector.broadcast %cst_105 : f32 to vector<16x1xf32>
    %379 = arith.divf %377, %378 : vector<16x1xf32>
    %380 = vector.broadcast %379 : vector<16x1xf32> to vector<16x32xf32>
    %381 = arith.subf %371, %380 : vector<16x32xf32>
    %382 = arith.mulf %381, %381 : vector<16x32xf32>
    %cst_106 = arith.constant dense<0.000000e+00> : vector<16xf32>
    %383 = vector.multi_reduction <add>, %382, %cst_106 [1] : vector<16x32xf32> to vector<16xf32>
    %384 = vector.shape_cast %383 : vector<16xf32> to vector<16x1xf32>
    %cst_107 = arith.constant 0.0322580636 : f32
    %385 = vector.broadcast %cst_107 : f32 to vector<16x1xf32>
    %386 = arith.mulf %384, %385 : vector<16x1xf32>
    %cst_108 = arith.constant 9.99999996E-13 : f32
    %387 = vector.broadcast %cst_108 : f32 to vector<16x1xf32>
    %388 = arith.addf %386, %387 : vector<16x1xf32>
    %389 = math.rsqrt %388 : vector<16x1xf32>
    %390 = vector.broadcast %379 : vector<16x1xf32> to vector<16x32xf32>
    %391 = arith.subf %371, %390 : vector<16x32xf32>
    %392 = vector.broadcast %389 : vector<16x1xf32> to vector<16x32xf32>
    %393 = arith.mulf %391, %392 : vector<16x32xf32>
    %394 = vector.broadcast %373 : vector<1x32xf32> to vector<16x32xf32>
    %395 = arith.mulf %394, %393 : vector<16x32xf32>
    %396 = vector.broadcast %375 : vector<1x32xf32> to vector<16x32xf32>
    %397 = arith.addf %395, %396 : vector<16x32xf32>
    %398 = arith.truncf %397 : vector<16x32xf32> to vector<16x32xbf16>
    %c1_109 = arith.constant 1 : index
    %c0_110 = arith.constant 0 : index
    %c0_111 = arith.constant 0 : index
    %399 = vector.load %arg5[%c1_109, %c0_110, %c0_111] : memref<2x32x96xbf16, #tpu.memory_space<vmem>>, vector<1x32x96xbf16>
    %400 = vector.shape_cast %399 : vector<1x32x96xbf16> to vector<32x96xbf16>
    %cst_112 = arith.constant dense<0.000000e+00> : vector<16x96xf32>
    %401 = tpu.matmul %398, %400, %cst_112 {dimension_numbers = #tpu.dot_dimension_numbers<[1], [0], [0], [1], [0, 0, 1, 1], [], []>} : vector<16x32xbf16>, vector<32x96xbf16>, vector<16x96xf32> -> vector<16x96xf32>
    %c1_113 = arith.constant 1 : index
    %c0_114 = arith.constant 0 : index
    %c0_115 = arith.constant 0 : index
    %402 = vector.load %arg6[%c1_113, %c0_114, %c0_115] : memref<2x1x96xf32, #tpu.memory_space<vmem>>, vector<1x1x96xf32>
    %403 = vector.shape_cast %402 : vector<1x1x96xf32> to vector<1x96xf32>
    %404 = vector.broadcast %403 : vector<1x96xf32> to vector<16x96xf32>
    %405 = arith.addf %401, %404 : vector<16x96xf32>
    %406 = vector.extract_strided_slice %405 {offsets = [0, 0], sizes = [16, 32], strides = [1, 1]} : vector<16x96xf32> to vector<16x32xf32>
    %407 = vector.extract_strided_slice %405 {offsets = [0, 32], sizes = [16, 32], strides = [1, 1]} : vector<16x96xf32> to vector<16x32xf32>
    %408 = vector.extract_strided_slice %405 {offsets = [0, 64], sizes = [16, 32], strides = [1, 1]} : vector<16x96xf32> to vector<16x32xf32>
    %409 = vector.extract_strided_slice %406 {offsets = [0, 0], sizes = [8, 8], strides = [1, 1]} : vector<16x32xf32> to vector<8x8xf32>
    %410 = vector.extract_strided_slice %406 {offsets = [0, 8], sizes = [8, 8], strides = [1, 1]} : vector<16x32xf32> to vector<8x8xf32>
    %411 = vector.extract_strided_slice %406 {offsets = [0, 16], sizes = [8, 8], strides = [1, 1]} : vector<16x32xf32> to vector<8x8xf32>
    %412 = vector.extract_strided_slice %406 {offsets = [0, 24], sizes = [8, 8], strides = [1, 1]} : vector<16x32xf32> to vector<8x8xf32>
    %413 = vector.extract_strided_slice %406 {offsets = [8, 0], sizes = [8, 8], strides = [1, 1]} : vector<16x32xf32> to vector<8x8xf32>
    %414 = vector.extract_strided_slice %406 {offsets = [8, 8], sizes = [8, 8], strides = [1, 1]} : vector<16x32xf32> to vector<8x8xf32>
    %415 = vector.extract_strided_slice %406 {offsets = [8, 16], sizes = [8, 8], strides = [1, 1]} : vector<16x32xf32> to vector<8x8xf32>
    %416 = vector.extract_strided_slice %406 {offsets = [8, 24], sizes = [8, 8], strides = [1, 1]} : vector<16x32xf32> to vector<8x8xf32>
    %417 = vector.shape_cast %409 : vector<8x8xf32> to vector<1x8x8xf32>
    %418 = vector.shape_cast %410 : vector<8x8xf32> to vector<1x8x8xf32>
    %419 = vector.shape_cast %411 : vector<8x8xf32> to vector<1x8x8xf32>
    %420 = vector.shape_cast %412 : vector<8x8xf32> to vector<1x8x8xf32>
    %421 = vector.shape_cast %413 : vector<8x8xf32> to vector<1x8x8xf32>
    %422 = vector.shape_cast %414 : vector<8x8xf32> to vector<1x8x8xf32>
    %423 = vector.shape_cast %415 : vector<8x8xf32> to vector<1x8x8xf32>
    %424 = vector.shape_cast %416 : vector<8x8xf32> to vector<1x8x8xf32>
    %425 = tpu.concatenate %417, %418, %419, %420, %421, %422, %423, %424 in 0 : vector<1x8x8xf32>, vector<1x8x8xf32>, vector<1x8x8xf32>, vector<1x8x8xf32>, vector<1x8x8xf32>, vector<1x8x8xf32>, vector<1x8x8xf32>, vector<1x8x8xf32> -> vector<8x8x8xf32>
    %426 = arith.truncf %425 : vector<8x8x8xf32> to vector<8x8x8xbf16>
    %427 = vector.extract_strided_slice %407 {offsets = [0, 0], sizes = [8, 8], strides = [1, 1]} : vector<16x32xf32> to vector<8x8xf32>
    %428 = vector.extract_strided_slice %407 {offsets = [0, 8], sizes = [8, 8], strides = [1, 1]} : vector<16x32xf32> to vector<8x8xf32>
    %429 = vector.extract_strided_slice %407 {offsets = [0, 16], sizes = [8, 8], strides = [1, 1]} : vector<16x32xf32> to vector<8x8xf32>
    %430 = vector.extract_strided_slice %407 {offsets = [0, 24], sizes = [8, 8], strides = [1, 1]} : vector<16x32xf32> to vector<8x8xf32>
    %431 = vector.extract_strided_slice %407 {offsets = [8, 0], sizes = [8, 8], strides = [1, 1]} : vector<16x32xf32> to vector<8x8xf32>
    %432 = vector.extract_strided_slice %407 {offsets = [8, 8], sizes = [8, 8], strides = [1, 1]} : vector<16x32xf32> to vector<8x8xf32>
    %433 = vector.extract_strided_slice %407 {offsets = [8, 16], sizes = [8, 8], strides = [1, 1]} : vector<16x32xf32> to vector<8x8xf32>
    %434 = vector.extract_strided_slice %407 {offsets = [8, 24], sizes = [8, 8], strides = [1, 1]} : vector<16x32xf32> to vector<8x8xf32>
    %435 = vector.shape_cast %427 : vector<8x8xf32> to vector<1x8x8xf32>
    %436 = vector.shape_cast %428 : vector<8x8xf32> to vector<1x8x8xf32>
    %437 = vector.shape_cast %429 : vector<8x8xf32> to vector<1x8x8xf32>
    %438 = vector.shape_cast %430 : vector<8x8xf32> to vector<1x8x8xf32>
    %439 = vector.shape_cast %431 : vector<8x8xf32> to vector<1x8x8xf32>
    %440 = vector.shape_cast %432 : vector<8x8xf32> to vector<1x8x8xf32>
    %441 = vector.shape_cast %433 : vector<8x8xf32> to vector<1x8x8xf32>
    %442 = vector.shape_cast %434 : vector<8x8xf32> to vector<1x8x8xf32>
    %443 = tpu.concatenate %435, %436, %437, %438, %439, %440, %441, %442 in 0 : vector<1x8x8xf32>, vector<1x8x8xf32>, vector<1x8x8xf32>, vector<1x8x8xf32>, vector<1x8x8xf32>, vector<1x8x8xf32>, vector<1x8x8xf32>, vector<1x8x8xf32> -> vector<8x8x8xf32>
    %444 = arith.truncf %443 : vector<8x8x8xf32> to vector<8x8x8xbf16>
    %445 = vector.extract_strided_slice %408 {offsets = [0, 0], sizes = [8, 8], strides = [1, 1]} : vector<16x32xf32> to vector<8x8xf32>
    %446 = vector.extract_strided_slice %408 {offsets = [0, 8], sizes = [8, 8], strides = [1, 1]} : vector<16x32xf32> to vector<8x8xf32>
    %447 = vector.extract_strided_slice %408 {offsets = [0, 16], sizes = [8, 8], strides = [1, 1]} : vector<16x32xf32> to vector<8x8xf32>
    %448 = vector.extract_strided_slice %408 {offsets = [0, 24], sizes = [8, 8], strides = [1, 1]} : vector<16x32xf32> to vector<8x8xf32>
    %449 = vector.extract_strided_slice %408 {offsets = [8, 0], sizes = [8, 8], strides = [1, 1]} : vector<16x32xf32> to vector<8x8xf32>
    %450 = vector.extract_strided_slice %408 {offsets = [8, 8], sizes = [8, 8], strides = [1, 1]} : vector<16x32xf32> to vector<8x8xf32>
    %451 = vector.extract_strided_slice %408 {offsets = [8, 16], sizes = [8, 8], strides = [1, 1]} : vector<16x32xf32> to vector<8x8xf32>
    %452 = vector.extract_strided_slice %408 {offsets = [8, 24], sizes = [8, 8], strides = [1, 1]} : vector<16x32xf32> to vector<8x8xf32>
    %453 = vector.shape_cast %445 : vector<8x8xf32> to vector<1x8x8xf32>
    %454 = vector.shape_cast %446 : vector<8x8xf32> to vector<1x8x8xf32>
    %455 = vector.shape_cast %447 : vector<8x8xf32> to vector<1x8x8xf32>
    %456 = vector.shape_cast %448 : vector<8x8xf32> to vector<1x8x8xf32>
    %457 = vector.shape_cast %449 : vector<8x8xf32> to vector<1x8x8xf32>
    %458 = vector.shape_cast %450 : vector<8x8xf32> to vector<1x8x8xf32>
    %459 = vector.shape_cast %451 : vector<8x8xf32> to vector<1x8x8xf32>
    %460 = vector.shape_cast %452 : vector<8x8xf32> to vector<1x8x8xf32>
    %461 = tpu.concatenate %453, %454, %455, %456, %457, %458, %459, %460 in 0 : vector<1x8x8xf32>, vector<1x8x8xf32>, vector<1x8x8xf32>, vector<1x8x8xf32>, vector<1x8x8xf32>, vector<1x8x8xf32>, vector<1x8x8xf32>, vector<1x8x8xf32> -> vector<8x8x8xf32>
    %462 = arith.truncf %461 : vector<8x8x8xf32> to vector<8x8x8xbf16>
    %463 = vector.extract_strided_slice %1 {offsets = [0, 0, 0], sizes = [1, 8, 8], strides = [1, 1, 1]} : vector<2x8x8xf32> to vector<1x8x8xf32>
    %464 = vector.shape_cast %463 : vector<1x8x8xf32> to vector<8x8xf32>
    %465 = vector.extract_strided_slice %1 {offsets = [0, 0, 0], sizes = [1, 8, 8], strides = [1, 1, 1]} : vector<2x8x8xf32> to vector<1x8x8xf32>
    %466 = vector.shape_cast %465 : vector<1x8x8xf32> to vector<8x8xf32>
    %467 = vector.extract_strided_slice %1 {offsets = [0, 0, 0], sizes = [1, 8, 8], strides = [1, 1, 1]} : vector<2x8x8xf32> to vector<1x8x8xf32>
    %468 = vector.shape_cast %467 : vector<1x8x8xf32> to vector<8x8xf32>
    %469 = vector.extract_strided_slice %1 {offsets = [0, 0, 0], sizes = [1, 8, 8], strides = [1, 1, 1]} : vector<2x8x8xf32> to vector<1x8x8xf32>
    %470 = vector.shape_cast %469 : vector<1x8x8xf32> to vector<8x8xf32>
    %471 = vector.extract_strided_slice %1 {offsets = [1, 0, 0], sizes = [1, 8, 8], strides = [1, 1, 1]} : vector<2x8x8xf32> to vector<1x8x8xf32>
    %472 = vector.shape_cast %471 : vector<1x8x8xf32> to vector<8x8xf32>
    %473 = vector.extract_strided_slice %1 {offsets = [1, 0, 0], sizes = [1, 8, 8], strides = [1, 1, 1]} : vector<2x8x8xf32> to vector<1x8x8xf32>
    %474 = vector.shape_cast %473 : vector<1x8x8xf32> to vector<8x8xf32>
    %475 = vector.extract_strided_slice %1 {offsets = [1, 0, 0], sizes = [1, 8, 8], strides = [1, 1, 1]} : vector<2x8x8xf32> to vector<1x8x8xf32>
    %476 = vector.shape_cast %475 : vector<1x8x8xf32> to vector<8x8xf32>
    %477 = vector.extract_strided_slice %1 {offsets = [1, 0, 0], sizes = [1, 8, 8], strides = [1, 1, 1]} : vector<2x8x8xf32> to vector<1x8x8xf32>
    %478 = vector.shape_cast %477 : vector<1x8x8xf32> to vector<8x8xf32>
    %479 = vector.shape_cast %464 : vector<8x8xf32> to vector<1x8x8xf32>
    %480 = vector.shape_cast %466 : vector<8x8xf32> to vector<1x8x8xf32>
    %481 = vector.shape_cast %468 : vector<8x8xf32> to vector<1x8x8xf32>
    %482 = vector.shape_cast %470 : vector<8x8xf32> to vector<1x8x8xf32>
    %483 = vector.shape_cast %472 : vector<8x8xf32> to vector<1x8x8xf32>
    %484 = vector.shape_cast %474 : vector<8x8xf32> to vector<1x8x8xf32>
    %485 = vector.shape_cast %476 : vector<8x8xf32> to vector<1x8x8xf32>
    %486 = vector.shape_cast %478 : vector<8x8xf32> to vector<1x8x8xf32>
    %487 = tpu.concatenate %479, %480, %481, %482, %483, %484, %485, %486 in 0 : vector<1x8x8xf32>, vector<1x8x8xf32>, vector<1x8x8xf32>, vector<1x8x8xf32>, vector<1x8x8xf32>, vector<1x8x8xf32>, vector<1x8x8xf32>, vector<1x8x8xf32> -> vector<8x8x8xf32>
    "tpu.trace_start"() <{level = 10 : i32, message = "nqd,nkd->nqk"}> : () -> ()
    %cst_116 = arith.constant dense<0.000000e+00> : vector<8x8x8xf32>
    %488 = tpu.matmul %426, %444, %cst_116 {dimension_numbers = #tpu.dot_dimension_numbers<[2], [2], [1], [1], [0, 0, 0, 1, 1, 1], [0], [0]>} : vector<8x8x8xbf16>, vector<8x8x8xbf16>, vector<8x8x8xf32> -> vector<8x8x8xf32>
    "tpu.trace_stop"() : () -> ()
    %489 = arith.addf %488, %487 : vector<8x8x8xf32>
    %cst_117 = arith.constant dense<0xFF800000> : vector<8x8xf32>
    %490 = vector.multi_reduction <maximumf>, %489, %cst_117 [2] : vector<8x8x8xf32> to vector<8x8xf32>
    %491 = vector.shape_cast %490 : vector<8x8xf32> to vector<8x8x1xf32>
    %492 = vector.broadcast %491 : vector<8x8x1xf32> to vector<8x8x8xf32>
    %493 = arith.subf %489, %492 : vector<8x8x8xf32>
    %494 = math.exp %493 : vector<8x8x8xf32>
    %cst_118 = arith.constant dense<0.000000e+00> : vector<8x8xf32>
    %495 = vector.multi_reduction <add>, %494, %cst_118 [2] : vector<8x8x8xf32> to vector<8x8xf32>
    %496 = vector.shape_cast %495 : vector<8x8xf32> to vector<8x8x1xf32>
    %497 = tpu.reciprocal %496 {approx = true} : vector<8x8x1xf32> -> vector<8x8x1xf32>
    %498 = vector.broadcast %497 : vector<8x8x1xf32> to vector<8x8x8xf32>
    %499 = arith.mulf %494, %498 : vector<8x8x8xf32>
    %500 = arith.truncf %499 : vector<8x8x8xf32> to vector<8x8x8xbf16>
    "tpu.trace_start"() <{level = 10 : i32, message = "nqk,nkd->nqd"}> : () -> ()
    %cst_119 = arith.constant dense<0.000000e+00> : vector<8x8x8xf32>
    %501 = tpu.matmul %500, %462, %cst_119 {dimension_numbers = #tpu.dot_dimension_numbers<[2], [1], [1], [2], [0, 0, 0, 1, 1, 2], [0], [0]>} : vector<8x8x8xbf16>, vector<8x8x8xbf16>, vector<8x8x8xf32> -> vector<8x8x8xf32>
    "tpu.trace_stop"() : () -> ()
    %502 = vector.extract_strided_slice %501 {offsets = [0, 0, 0], sizes = [1, 8, 8], strides = [1, 1, 1]} : vector<8x8x8xf32> to vector<1x8x8xf32>
    %503 = vector.shape_cast %502 : vector<1x8x8xf32> to vector<8x8xf32>
    %504 = vector.extract_strided_slice %501 {offsets = [1, 0, 0], sizes = [1, 8, 8], strides = [1, 1, 1]} : vector<8x8x8xf32> to vector<1x8x8xf32>
    %505 = vector.shape_cast %504 : vector<1x8x8xf32> to vector<8x8xf32>
    %506 = vector.extract_strided_slice %501 {offsets = [2, 0, 0], sizes = [1, 8, 8], strides = [1, 1, 1]} : vector<8x8x8xf32> to vector<1x8x8xf32>
    %507 = vector.shape_cast %506 : vector<1x8x8xf32> to vector<8x8xf32>
    %508 = vector.extract_strided_slice %501 {offsets = [3, 0, 0], sizes = [1, 8, 8], strides = [1, 1, 1]} : vector<8x8x8xf32> to vector<1x8x8xf32>
    %509 = vector.shape_cast %508 : vector<1x8x8xf32> to vector<8x8xf32>
    %510 = tpu.concatenate %503, %505, %507, %509 in 1 : vector<8x8xf32>, vector<8x8xf32>, vector<8x8xf32>, vector<8x8xf32> -> vector<8x32xf32>
    %511 = vector.extract_strided_slice %501 {offsets = [4, 0, 0], sizes = [1, 8, 8], strides = [1, 1, 1]} : vector<8x8x8xf32> to vector<1x8x8xf32>
    %512 = vector.shape_cast %511 : vector<1x8x8xf32> to vector<8x8xf32>
    %513 = vector.extract_strided_slice %501 {offsets = [5, 0, 0], sizes = [1, 8, 8], strides = [1, 1, 1]} : vector<8x8x8xf32> to vector<1x8x8xf32>
    %514 = vector.shape_cast %513 : vector<1x8x8xf32> to vector<8x8xf32>
    %515 = vector.extract_strided_slice %501 {offsets = [6, 0, 0], sizes = [1, 8, 8], strides = [1, 1, 1]} : vector<8x8x8xf32> to vector<1x8x8xf32>
    %516 = vector.shape_cast %515 : vector<1x8x8xf32> to vector<8x8xf32>
    %517 = vector.extract_strided_slice %501 {offsets = [7, 0, 0], sizes = [1, 8, 8], strides = [1, 1, 1]} : vector<8x8x8xf32> to vector<1x8x8xf32>
    %518 = vector.shape_cast %517 : vector<1x8x8xf32> to vector<8x8xf32>
    %519 = tpu.concatenate %512, %514, %516, %518 in 1 : vector<8x8xf32>, vector<8x8xf32>, vector<8x8xf32>, vector<8x8xf32> -> vector<8x32xf32>
    %520 = tpu.concatenate %510, %519 in 0 : vector<8x32xf32>, vector<8x32xf32> -> vector<16x32xf32>
    %521 = arith.truncf %520 : vector<16x32xf32> to vector<16x32xbf16>
    %c1_120 = arith.constant 1 : index
    %c0_121 = arith.constant 0 : index
    %c0_122 = arith.constant 0 : index
    %522 = vector.load %arg7[%c1_120, %c0_121, %c0_122] : memref<2x32x32xbf16, #tpu.memory_space<vmem>>, vector<1x32x32xbf16>
    %523 = vector.shape_cast %522 : vector<1x32x32xbf16> to vector<32x32xbf16>
    %cst_123 = arith.constant dense<0.000000e+00> : vector<16x32xf32>
    %524 = tpu.matmul %521, %523, %cst_123 {dimension_numbers = #tpu.dot_dimension_numbers<[1], [0], [0], [1], [0, 0, 1, 1], [], []>} : vector<16x32xbf16>, vector<32x32xbf16>, vector<16x32xf32> -> vector<16x32xf32>
    %c1_124 = arith.constant 1 : index
    %c0_125 = arith.constant 0 : index
    %c0_126 = arith.constant 0 : index
    %525 = vector.load %arg8[%c1_124, %c0_125, %c0_126] : memref<2x1x32xf32, #tpu.memory_space<vmem>>, vector<1x1x32xf32>
    %526 = vector.shape_cast %525 : vector<1x1x32xf32> to vector<1x32xf32>
    %527 = vector.broadcast %526 : vector<1x32xf32> to vector<16x32xf32>
    %528 = arith.addf %524, %527 : vector<16x32xf32>
    %529 = arith.addf %371, %528 : vector<16x32xf32>
    %c1_127 = arith.constant 1 : index
    %c0_128 = arith.constant 0 : index
    %c0_129 = arith.constant 0 : index
    %530 = vector.load %arg21[%c1_127, %c0_128, %c0_129] : memref<2x1x32xf32, #tpu.memory_space<vmem>>, vector<1x1x32xf32>
    %531 = vector.shape_cast %530 : vector<1x1x32xf32> to vector<1x32xf32>
    %c1_130 = arith.constant 1 : index
    %c0_131 = arith.constant 0 : index
    %c0_132 = arith.constant 0 : index
    %532 = vector.load %arg22[%c1_130, %c0_131, %c0_132] : memref<2x1x32xf32, #tpu.memory_space<vmem>>, vector<1x1x32xf32>
    %533 = vector.shape_cast %532 : vector<1x1x32xf32> to vector<1x32xf32>
    %cst_133 = arith.constant dense<0.000000e+00> : vector<16xf32>
    %534 = vector.multi_reduction <add>, %529, %cst_133 [1] : vector<16x32xf32> to vector<16xf32>
    %535 = vector.shape_cast %534 : vector<16xf32> to vector<16x1xf32>
    %cst_134 = arith.constant 3.200000e+01 : f32
    %536 = vector.broadcast %cst_134 : f32 to vector<16x1xf32>
    %537 = arith.divf %535, %536 : vector<16x1xf32>
    %538 = vector.broadcast %537 : vector<16x1xf32> to vector<16x32xf32>
    %539 = arith.subf %529, %538 : vector<16x32xf32>
    %540 = arith.mulf %539, %539 : vector<16x32xf32>
    %cst_135 = arith.constant dense<0.000000e+00> : vector<16xf32>
    %541 = vector.multi_reduction <add>, %540, %cst_135 [1] : vector<16x32xf32> to vector<16xf32>
    %542 = vector.shape_cast %541 : vector<16xf32> to vector<16x1xf32>
    %cst_136 = arith.constant 0.0322580636 : f32
    %543 = vector.broadcast %cst_136 : f32 to vector<16x1xf32>
    %544 = arith.mulf %542, %543 : vector<16x1xf32>
    %cst_137 = arith.constant 9.99999996E-13 : f32
    %545 = vector.broadcast %cst_137 : f32 to vector<16x1xf32>
    %546 = arith.addf %544, %545 : vector<16x1xf32>
    %547 = math.rsqrt %546 : vector<16x1xf32>
    %548 = vector.broadcast %537 : vector<16x1xf32> to vector<16x32xf32>
    %549 = arith.subf %529, %548 : vector<16x32xf32>
    %550 = vector.broadcast %547 : vector<16x1xf32> to vector<16x32xf32>
    %551 = arith.mulf %549, %550 : vector<16x32xf32>
    %552 = vector.broadcast %531 : vector<1x32xf32> to vector<16x32xf32>
    %553 = arith.mulf %552, %551 : vector<16x32xf32>
    %554 = vector.broadcast %533 : vector<1x32xf32> to vector<16x32xf32>
    %555 = arith.addf %553, %554 : vector<16x32xf32>
    %556 = arith.truncf %555 : vector<16x32xf32> to vector<16x32xbf16>
    %c1_138 = arith.constant 1 : index
    %c0_139 = arith.constant 0 : index
    %c0_140 = arith.constant 0 : index
    %557 = vector.load %arg9[%c1_138, %c0_139, %c0_140] : memref<2x32x32xbf16, #tpu.memory_space<vmem>>, vector<1x32x32xbf16>
    %558 = vector.shape_cast %557 : vector<1x32x32xbf16> to vector<32x32xbf16>
    %cst_141 = arith.constant dense<0.000000e+00> : vector<16x32xf32>
    %559 = tpu.matmul %556, %558, %cst_141 {dimension_numbers = #tpu.dot_dimension_numbers<[1], [0], [0], [1], [0, 0, 1, 1], [], []>} : vector<16x32xbf16>, vector<32x32xbf16>, vector<16x32xf32> -> vector<16x32xf32>
    %c1_142 = arith.constant 1 : index
    %c0_143 = arith.constant 0 : index
    %c0_144 = arith.constant 0 : index
    %560 = vector.load %arg10[%c1_142, %c0_143, %c0_144] : memref<2x1x32xf32, #tpu.memory_space<vmem>>, vector<1x1x32xf32>
    %561 = vector.shape_cast %560 : vector<1x1x32xf32> to vector<1x32xf32>
    %562 = vector.broadcast %561 : vector<1x32xf32> to vector<16x32xf32>
    %563 = arith.addf %559, %562 : vector<16x32xf32>
    %c1_145 = arith.constant 1 : index
    %c0_146 = arith.constant 0 : index
    %c0_147 = arith.constant 0 : index
    %564 = vector.load %arg11[%c1_145, %c0_146, %c0_147] : memref<2x32x64xbf16, #tpu.memory_space<vmem>>, vector<1x32x64xbf16>
    %565 = vector.shape_cast %564 : vector<1x32x64xbf16> to vector<32x64xbf16>
    %cst_148 = arith.constant dense<0.000000e+00> : vector<32x64xf32>
    %566 = tpu.matmul %4, %565, %cst_148 {dimension_numbers = #tpu.dot_dimension_numbers<[1], [0], [0], [1], [0, 0, 1, 1], [], []>} : vector<32x32xbf16>, vector<32x64xbf16>, vector<32x64xf32> -> vector<32x64xf32>
    %c1_149 = arith.constant 1 : index
    %c0_150 = arith.constant 0 : index
    %c0_151 = arith.constant 0 : index
    %567 = vector.load %arg12[%c1_149, %c0_150, %c0_151] : memref<2x1x64xf32, #tpu.memory_space<vmem>>, vector<1x1x64xf32>
    %568 = vector.shape_cast %567 : vector<1x1x64xf32> to vector<1x64xf32>
    %569 = vector.broadcast %568 : vector<1x64xf32> to vector<32x64xf32>
    %570 = arith.addf %566, %569 : vector<32x64xf32>
    %571 = vector.extract_strided_slice %570 {offsets = [0, 0], sizes = [32, 32], strides = [1, 1]} : vector<32x64xf32> to vector<32x32xf32>
    %572 = vector.extract_strided_slice %570 {offsets = [0, 32], sizes = [32, 32], strides = [1, 1]} : vector<32x64xf32> to vector<32x32xf32>
    %573 = vector.extract_strided_slice %563 {offsets = [0, 0], sizes = [8, 8], strides = [1, 1]} : vector<16x32xf32> to vector<8x8xf32>
    %574 = vector.extract_strided_slice %563 {offsets = [0, 8], sizes = [8, 8], strides = [1, 1]} : vector<16x32xf32> to vector<8x8xf32>
    %575 = vector.extract_strided_slice %563 {offsets = [0, 16], sizes = [8, 8], strides = [1, 1]} : vector<16x32xf32> to vector<8x8xf32>
    %576 = vector.extract_strided_slice %563 {offsets = [0, 24], sizes = [8, 8], strides = [1, 1]} : vector<16x32xf32> to vector<8x8xf32>
    %577 = vector.extract_strided_slice %563 {offsets = [8, 0], sizes = [8, 8], strides = [1, 1]} : vector<16x32xf32> to vector<8x8xf32>
    %578 = vector.extract_strided_slice %563 {offsets = [8, 8], sizes = [8, 8], strides = [1, 1]} : vector<16x32xf32> to vector<8x8xf32>
    %579 = vector.extract_strided_slice %563 {offsets = [8, 16], sizes = [8, 8], strides = [1, 1]} : vector<16x32xf32> to vector<8x8xf32>
    %580 = vector.extract_strided_slice %563 {offsets = [8, 24], sizes = [8, 8], strides = [1, 1]} : vector<16x32xf32> to vector<8x8xf32>
    %581 = vector.shape_cast %573 : vector<8x8xf32> to vector<1x8x8xf32>
    %582 = vector.shape_cast %574 : vector<8x8xf32> to vector<1x8x8xf32>
    %583 = vector.shape_cast %575 : vector<8x8xf32> to vector<1x8x8xf32>
    %584 = vector.shape_cast %576 : vector<8x8xf32> to vector<1x8x8xf32>
    %585 = vector.shape_cast %577 : vector<8x8xf32> to vector<1x8x8xf32>
    %586 = vector.shape_cast %578 : vector<8x8xf32> to vector<1x8x8xf32>
    %587 = vector.shape_cast %579 : vector<8x8xf32> to vector<1x8x8xf32>
    %588 = vector.shape_cast %580 : vector<8x8xf32> to vector<1x8x8xf32>
    %589 = tpu.concatenate %581, %582, %583, %584, %585, %586, %587, %588 in 0 : vector<1x8x8xf32>, vector<1x8x8xf32>, vector<1x8x8xf32>, vector<1x8x8xf32>, vector<1x8x8xf32>, vector<1x8x8xf32>, vector<1x8x8xf32>, vector<1x8x8xf32> -> vector<8x8x8xf32>
    %590 = arith.truncf %589 : vector<8x8x8xf32> to vector<8x8x8xbf16>
    %591 = vector.extract_strided_slice %571 {offsets = [0, 0], sizes = [16, 8], strides = [1, 1]} : vector<32x32xf32> to vector<16x8xf32>
    %592 = vector.extract_strided_slice %571 {offsets = [0, 8], sizes = [16, 8], strides = [1, 1]} : vector<32x32xf32> to vector<16x8xf32>
    %593 = vector.extract_strided_slice %571 {offsets = [0, 16], sizes = [16, 8], strides = [1, 1]} : vector<32x32xf32> to vector<16x8xf32>
    %594 = vector.extract_strided_slice %571 {offsets = [0, 24], sizes = [16, 8], strides = [1, 1]} : vector<32x32xf32> to vector<16x8xf32>
    %595 = vector.extract_strided_slice %571 {offsets = [16, 0], sizes = [16, 8], strides = [1, 1]} : vector<32x32xf32> to vector<16x8xf32>
    %596 = vector.extract_strided_slice %571 {offsets = [16, 8], sizes = [16, 8], strides = [1, 1]} : vector<32x32xf32> to vector<16x8xf32>
    %597 = vector.extract_strided_slice %571 {offsets = [16, 16], sizes = [16, 8], strides = [1, 1]} : vector<32x32xf32> to vector<16x8xf32>
    %598 = vector.extract_strided_slice %571 {offsets = [16, 24], sizes = [16, 8], strides = [1, 1]} : vector<32x32xf32> to vector<16x8xf32>
    %599 = vector.shape_cast %591 : vector<16x8xf32> to vector<1x16x8xf32>
    %600 = vector.shape_cast %592 : vector<16x8xf32> to vector<1x16x8xf32>
    %601 = vector.shape_cast %593 : vector<16x8xf32> to vector<1x16x8xf32>
    %602 = vector.shape_cast %594 : vector<16x8xf32> to vector<1x16x8xf32>
    %603 = vector.shape_cast %595 : vector<16x8xf32> to vector<1x16x8xf32>
    %604 = vector.shape_cast %596 : vector<16x8xf32> to vector<1x16x8xf32>
    %605 = vector.shape_cast %597 : vector<16x8xf32> to vector<1x16x8xf32>
    %606 = vector.shape_cast %598 : vector<16x8xf32> to vector<1x16x8xf32>
    %607 = tpu.concatenate %599, %600, %601, %602, %603, %604, %605, %606 in 0 : vector<1x16x8xf32>, vector<1x16x8xf32>, vector<1x16x8xf32>, vector<1x16x8xf32>, vector<1x16x8xf32>, vector<1x16x8xf32>, vector<1x16x8xf32>, vector<1x16x8xf32> -> vector<8x16x8xf32>
    %608 = arith.truncf %607 : vector<8x16x8xf32> to vector<8x16x8xbf16>
    %609 = vector.extract_strided_slice %572 {offsets = [0, 0], sizes = [16, 8], strides = [1, 1]} : vector<32x32xf32> to vector<16x8xf32>
    %610 = vector.extract_strided_slice %572 {offsets = [0, 8], sizes = [16, 8], strides = [1, 1]} : vector<32x32xf32> to vector<16x8xf32>
    %611 = vector.extract_strided_slice %572 {offsets = [0, 16], sizes = [16, 8], strides = [1, 1]} : vector<32x32xf32> to vector<16x8xf32>
    %612 = vector.extract_strided_slice %572 {offsets = [0, 24], sizes = [16, 8], strides = [1, 1]} : vector<32x32xf32> to vector<16x8xf32>
    %613 = vector.extract_strided_slice %572 {offsets = [16, 0], sizes = [16, 8], strides = [1, 1]} : vector<32x32xf32> to vector<16x8xf32>
    %614 = vector.extract_strided_slice %572 {offsets = [16, 8], sizes = [16, 8], strides = [1, 1]} : vector<32x32xf32> to vector<16x8xf32>
    %615 = vector.extract_strided_slice %572 {offsets = [16, 16], sizes = [16, 8], strides = [1, 1]} : vector<32x32xf32> to vector<16x8xf32>
    %616 = vector.extract_strided_slice %572 {offsets = [16, 24], sizes = [16, 8], strides = [1, 1]} : vector<32x32xf32> to vector<16x8xf32>
    %617 = vector.shape_cast %609 : vector<16x8xf32> to vector<1x16x8xf32>
    %618 = vector.shape_cast %610 : vector<16x8xf32> to vector<1x16x8xf32>
    %619 = vector.shape_cast %611 : vector<16x8xf32> to vector<1x16x8xf32>
    %620 = vector.shape_cast %612 : vector<16x8xf32> to vector<1x16x8xf32>
    %621 = vector.shape_cast %613 : vector<16x8xf32> to vector<1x16x8xf32>
    %622 = vector.shape_cast %614 : vector<16x8xf32> to vector<1x16x8xf32>
    %623 = vector.shape_cast %615 : vector<16x8xf32> to vector<1x16x8xf32>
    %624 = vector.shape_cast %616 : vector<16x8xf32> to vector<1x16x8xf32>
    %625 = tpu.concatenate %617, %618, %619, %620, %621, %622, %623, %624 in 0 : vector<1x16x8xf32>, vector<1x16x8xf32>, vector<1x16x8xf32>, vector<1x16x8xf32>, vector<1x16x8xf32>, vector<1x16x8xf32>, vector<1x16x8xf32>, vector<1x16x8xf32> -> vector<8x16x8xf32>
    %626 = arith.truncf %625 : vector<8x16x8xf32> to vector<8x16x8xbf16>
    %627 = vector.extract_strided_slice %2 {offsets = [0, 0, 0], sizes = [1, 8, 16], strides = [1, 1, 1]} : vector<2x8x16xf32> to vector<1x8x16xf32>
    %628 = vector.shape_cast %627 : vector<1x8x16xf32> to vector<8x16xf32>
    %629 = vector.extract_strided_slice %2 {offsets = [0, 0, 0], sizes = [1, 8, 16], strides = [1, 1, 1]} : vector<2x8x16xf32> to vector<1x8x16xf32>
    %630 = vector.shape_cast %629 : vector<1x8x16xf32> to vector<8x16xf32>
    %631 = vector.extract_strided_slice %2 {offsets = [0, 0, 0], sizes = [1, 8, 16], strides = [1, 1, 1]} : vector<2x8x16xf32> to vector<1x8x16xf32>
    %632 = vector.shape_cast %631 : vector<1x8x16xf32> to vector<8x16xf32>
    %633 = vector.extract_strided_slice %2 {offsets = [0, 0, 0], sizes = [1, 8, 16], strides = [1, 1, 1]} : vector<2x8x16xf32> to vector<1x8x16xf32>
    %634 = vector.shape_cast %633 : vector<1x8x16xf32> to vector<8x16xf32>
    %635 = vector.extract_strided_slice %2 {offsets = [1, 0, 0], sizes = [1, 8, 16], strides = [1, 1, 1]} : vector<2x8x16xf32> to vector<1x8x16xf32>
    %636 = vector.shape_cast %635 : vector<1x8x16xf32> to vector<8x16xf32>
    %637 = vector.extract_strided_slice %2 {offsets = [1, 0, 0], sizes = [1, 8, 16], strides = [1, 1, 1]} : vector<2x8x16xf32> to vector<1x8x16xf32>
    %638 = vector.shape_cast %637 : vector<1x8x16xf32> to vector<8x16xf32>
    %639 = vector.extract_strided_slice %2 {offsets = [1, 0, 0], sizes = [1, 8, 16], strides = [1, 1, 1]} : vector<2x8x16xf32> to vector<1x8x16xf32>
    %640 = vector.shape_cast %639 : vector<1x8x16xf32> to vector<8x16xf32>
    %641 = vector.extract_strided_slice %2 {offsets = [1, 0, 0], sizes = [1, 8, 16], strides = [1, 1, 1]} : vector<2x8x16xf32> to vector<1x8x16xf32>
    %642 = vector.shape_cast %641 : vector<1x8x16xf32> to vector<8x16xf32>
    %643 = vector.shape_cast %628 : vector<8x16xf32> to vector<1x8x16xf32>
    %644 = vector.shape_cast %630 : vector<8x16xf32> to vector<1x8x16xf32>
    %645 = vector.shape_cast %632 : vector<8x16xf32> to vector<1x8x16xf32>
    %646 = vector.shape_cast %634 : vector<8x16xf32> to vector<1x8x16xf32>
    %647 = vector.shape_cast %636 : vector<8x16xf32> to vector<1x8x16xf32>
    %648 = vector.shape_cast %638 : vector<8x16xf32> to vector<1x8x16xf32>
    %649 = vector.shape_cast %640 : vector<8x16xf32> to vector<1x8x16xf32>
    %650 = vector.shape_cast %642 : vector<8x16xf32> to vector<1x8x16xf32>
    %651 = tpu.concatenate %643, %644, %645, %646, %647, %648, %649, %650 in 0 : vector<1x8x16xf32>, vector<1x8x16xf32>, vector<1x8x16xf32>, vector<1x8x16xf32>, vector<1x8x16xf32>, vector<1x8x16xf32>, vector<1x8x16xf32>, vector<1x8x16xf32> -> vector<8x8x16xf32>
    "tpu.trace_start"() <{level = 10 : i32, message = "nqd,nkd->nqk"}> : () -> ()
    %cst_152 = arith.constant dense<0.000000e+00> : vector<8x8x16xf32>
    %652 = tpu.matmul %590, %608, %cst_152 {dimension_numbers = #tpu.dot_dimension_numbers<[2], [2], [1], [1], [0, 0, 0, 1, 1, 1], [0], [0]>} : vector<8x8x8xbf16>, vector<8x16x8xbf16>, vector<8x8x16xf32> -> vector<8x8x16xf32>
    "tpu.trace_stop"() : () -> ()
    %653 = arith.addf %652, %651 : vector<8x8x16xf32>
    %cst_153 = arith.constant dense<0xFF800000> : vector<8x8xf32>
    %654 = vector.multi_reduction <maximumf>, %653, %cst_153 [2] : vector<8x8x16xf32> to vector<8x8xf32>
    %655 = vector.shape_cast %654 : vector<8x8xf32> to vector<8x8x1xf32>
    %656 = vector.broadcast %655 : vector<8x8x1xf32> to vector<8x8x16xf32>
    %657 = arith.subf %653, %656 : vector<8x8x16xf32>
    %658 = math.exp %657 : vector<8x8x16xf32>
    %cst_154 = arith.constant dense<0.000000e+00> : vector<8x8xf32>
    %659 = vector.multi_reduction <add>, %658, %cst_154 [2] : vector<8x8x16xf32> to vector<8x8xf32>
    %660 = vector.shape_cast %659 : vector<8x8xf32> to vector<8x8x1xf32>
    %661 = tpu.reciprocal %660 {approx = true} : vector<8x8x1xf32> -> vector<8x8x1xf32>
    %662 = vector.broadcast %661 : vector<8x8x1xf32> to vector<8x8x16xf32>
    %663 = arith.mulf %658, %662 : vector<8x8x16xf32>
    %664 = arith.truncf %663 : vector<8x8x16xf32> to vector<8x8x16xbf16>
    "tpu.trace_start"() <{level = 10 : i32, message = "nqk,nkd->nqd"}> : () -> ()
    %cst_155 = arith.constant dense<0.000000e+00> : vector<8x8x8xf32>
    %665 = tpu.matmul %664, %626, %cst_155 {dimension_numbers = #tpu.dot_dimension_numbers<[2], [1], [1], [2], [0, 0, 0, 1, 1, 2], [0], [0]>} : vector<8x8x16xbf16>, vector<8x16x8xbf16>, vector<8x8x8xf32> -> vector<8x8x8xf32>
    "tpu.trace_stop"() : () -> ()
    %666 = vector.extract_strided_slice %665 {offsets = [0, 0, 0], sizes = [1, 8, 8], strides = [1, 1, 1]} : vector<8x8x8xf32> to vector<1x8x8xf32>
    %667 = vector.shape_cast %666 : vector<1x8x8xf32> to vector<8x8xf32>
    %668 = vector.extract_strided_slice %665 {offsets = [1, 0, 0], sizes = [1, 8, 8], strides = [1, 1, 1]} : vector<8x8x8xf32> to vector<1x8x8xf32>
    %669 = vector.shape_cast %668 : vector<1x8x8xf32> to vector<8x8xf32>
    %670 = vector.extract_strided_slice %665 {offsets = [2, 0, 0], sizes = [1, 8, 8], strides = [1, 1, 1]} : vector<8x8x8xf32> to vector<1x8x8xf32>
    %671 = vector.shape_cast %670 : vector<1x8x8xf32> to vector<8x8xf32>
    %672 = vector.extract_strided_slice %665 {offsets = [3, 0, 0], sizes = [1, 8, 8], strides = [1, 1, 1]} : vector<8x8x8xf32> to vector<1x8x8xf32>
    %673 = vector.shape_cast %672 : vector<1x8x8xf32> to vector<8x8xf32>
    %674 = tpu.concatenate %667, %669, %671, %673 in 1 : vector<8x8xf32>, vector<8x8xf32>, vector<8x8xf32>, vector<8x8xf32> -> vector<8x32xf32>
    %675 = vector.extract_strided_slice %665 {offsets = [4, 0, 0], sizes = [1, 8, 8], strides = [1, 1, 1]} : vector<8x8x8xf32> to vector<1x8x8xf32>
    %676 = vector.shape_cast %675 : vector<1x8x8xf32> to vector<8x8xf32>
    %677 = vector.extract_strided_slice %665 {offsets = [5, 0, 0], sizes = [1, 8, 8], strides = [1, 1, 1]} : vector<8x8x8xf32> to vector<1x8x8xf32>
    %678 = vector.shape_cast %677 : vector<1x8x8xf32> to vector<8x8xf32>
    %679 = vector.extract_strided_slice %665 {offsets = [6, 0, 0], sizes = [1, 8, 8], strides = [1, 1, 1]} : vector<8x8x8xf32> to vector<1x8x8xf32>
    %680 = vector.shape_cast %679 : vector<1x8x8xf32> to vector<8x8xf32>
    %681 = vector.extract_strided_slice %665 {offsets = [7, 0, 0], sizes = [1, 8, 8], strides = [1, 1, 1]} : vector<8x8x8xf32> to vector<1x8x8xf32>
    %682 = vector.shape_cast %681 : vector<1x8x8xf32> to vector<8x8xf32>
    %683 = tpu.concatenate %676, %678, %680, %682 in 1 : vector<8x8xf32>, vector<8x8xf32>, vector<8x8xf32>, vector<8x8xf32> -> vector<8x32xf32>
    %684 = tpu.concatenate %674, %683 in 0 : vector<8x32xf32>, vector<8x32xf32> -> vector<16x32xf32>
    %685 = arith.truncf %684 : vector<16x32xf32> to vector<16x32xbf16>
    %c1_156 = arith.constant 1 : index
    %c0_157 = arith.constant 0 : index
    %c0_158 = arith.constant 0 : index
    %686 = vector.load %arg13[%c1_156, %c0_157, %c0_158] : memref<2x32x32xbf16, #tpu.memory_space<vmem>>, vector<1x32x32xbf16>
    %687 = vector.shape_cast %686 : vector<1x32x32xbf16> to vector<32x32xbf16>
    %cst_159 = arith.constant dense<0.000000e+00> : vector<16x32xf32>
    %688 = tpu.matmul %685, %687, %cst_159 {dimension_numbers = #tpu.dot_dimension_numbers<[1], [0], [0], [1], [0, 0, 1, 1], [], []>} : vector<16x32xbf16>, vector<32x32xbf16>, vector<16x32xf32> -> vector<16x32xf32>
    %c1_160 = arith.constant 1 : index
    %c0_161 = arith.constant 0 : index
    %c0_162 = arith.constant 0 : index
    %689 = vector.load %arg14[%c1_160, %c0_161, %c0_162] : memref<2x1x32xf32, #tpu.memory_space<vmem>>, vector<1x1x32xf32>
    %690 = vector.shape_cast %689 : vector<1x1x32xf32> to vector<1x32xf32>
    %691 = vector.broadcast %690 : vector<1x32xf32> to vector<16x32xf32>
    %692 = arith.addf %688, %691 : vector<16x32xf32>
    %693 = arith.addf %529, %692 : vector<16x32xf32>
    %c1_163 = arith.constant 1 : index
    %c0_164 = arith.constant 0 : index
    %c0_165 = arith.constant 0 : index
    %694 = vector.load %arg23[%c1_163, %c0_164, %c0_165] : memref<2x1x32xf32, #tpu.memory_space<vmem>>, vector<1x1x32xf32>
    %695 = vector.shape_cast %694 : vector<1x1x32xf32> to vector<1x32xf32>
    %c1_166 = arith.constant 1 : index
    %c0_167 = arith.constant 0 : index
    %c0_168 = arith.constant 0 : index
    %696 = vector.load %arg24[%c1_166, %c0_167, %c0_168] : memref<2x1x32xf32, #tpu.memory_space<vmem>>, vector<1x1x32xf32>
    %697 = vector.shape_cast %696 : vector<1x1x32xf32> to vector<1x32xf32>
    %cst_169 = arith.constant dense<0.000000e+00> : vector<16xf32>
    %698 = vector.multi_reduction <add>, %693, %cst_169 [1] : vector<16x32xf32> to vector<16xf32>
    %699 = vector.shape_cast %698 : vector<16xf32> to vector<16x1xf32>
    %cst_170 = arith.constant 3.200000e+01 : f32
    %700 = vector.broadcast %cst_170 : f32 to vector<16x1xf32>
    %701 = arith.divf %699, %700 : vector<16x1xf32>
    %702 = vector.broadcast %701 : vector<16x1xf32> to vector<16x32xf32>
    %703 = arith.subf %693, %702 : vector<16x32xf32>
    %704 = arith.mulf %703, %703 : vector<16x32xf32>
    %cst_171 = arith.constant dense<0.000000e+00> : vector<16xf32>
    %705 = vector.multi_reduction <add>, %704, %cst_171 [1] : vector<16x32xf32> to vector<16xf32>
    %706 = vector.shape_cast %705 : vector<16xf32> to vector<16x1xf32>
    %cst_172 = arith.constant 0.0322580636 : f32
    %707 = vector.broadcast %cst_172 : f32 to vector<16x1xf32>
    %708 = arith.mulf %706, %707 : vector<16x1xf32>
    %cst_173 = arith.constant 9.99999996E-13 : f32
    %709 = vector.broadcast %cst_173 : f32 to vector<16x1xf32>
    %710 = arith.addf %708, %709 : vector<16x1xf32>
    %711 = math.rsqrt %710 : vector<16x1xf32>
    %712 = vector.broadcast %701 : vector<16x1xf32> to vector<16x32xf32>
    %713 = arith.subf %693, %712 : vector<16x32xf32>
    %714 = vector.broadcast %711 : vector<16x1xf32> to vector<16x32xf32>
    %715 = arith.mulf %713, %714 : vector<16x32xf32>
    %716 = vector.broadcast %695 : vector<1x32xf32> to vector<16x32xf32>
    %717 = arith.mulf %716, %715 : vector<16x32xf32>
    %718 = vector.broadcast %697 : vector<1x32xf32> to vector<16x32xf32>
    %719 = arith.addf %717, %718 : vector<16x32xf32>
    %c1_174 = arith.constant 1 : index
    %c0_175 = arith.constant 0 : index
    %c0_176 = arith.constant 0 : index
    %720 = vector.load %arg15[%c1_174, %c0_175, %c0_176] : memref<2x32x2048xbf16, #tpu.memory_space<vmem>>, vector<1x32x2048xbf16>
    %721 = vector.shape_cast %720 : vector<1x32x2048xbf16> to vector<32x2048xbf16>
    %c1_177 = arith.constant 1 : index
    %c0_178 = arith.constant 0 : index
    %c0_179 = arith.constant 0 : index
    %722 = vector.load %arg16[%c1_177, %c0_178, %c0_179] : memref<2x1x2048xf32, #tpu.memory_space<vmem>>, vector<1x1x2048xf32>
    %723 = vector.shape_cast %722 : vector<1x1x2048xf32> to vector<1x2048xf32>
    %c1_180 = arith.constant 1 : index
    %c0_181 = arith.constant 0 : index
    %c0_182 = arith.constant 0 : index
    %724 = vector.load %arg17[%c1_180, %c0_181, %c0_182] : memref<2x2048x32xbf16, #tpu.memory_space<vmem>>, vector<1x2048x32xbf16>
    %725 = vector.shape_cast %724 : vector<1x2048x32xbf16> to vector<2048x32xbf16>
    %c1_183 = arith.constant 1 : index
    %c0_184 = arith.constant 0 : index
    %c0_185 = arith.constant 0 : index
    %726 = vector.load %arg18[%c1_183, %c0_184, %c0_185] : memref<2x1x32xf32, #tpu.memory_space<vmem>>, vector<1x1x32xf32>
    %727 = vector.shape_cast %726 : vector<1x1x32xf32> to vector<1x32xf32>
    %728 = arith.truncf %719 : vector<16x32xf32> to vector<16x32xbf16>
    %cst_186 = arith.constant dense<0.000000e+00> : vector<16x2048xf32>
    %729 = tpu.matmul %728, %721, %cst_186 {dimension_numbers = #tpu.dot_dimension_numbers<[1], [0], [0], [1], [0, 0, 1, 1], [], []>} : vector<16x32xbf16>, vector<32x2048xbf16>, vector<16x2048xf32> -> vector<16x2048xf32>
    %730 = vector.broadcast %723 : vector<1x2048xf32> to vector<16x2048xf32>
    %731 = arith.addf %729, %730 : vector<16x2048xf32>
    %cst_187 = arith.constant 0.000000e+00 : f32
    %732 = vector.broadcast %cst_187 : f32 to vector<16x2048xf32>
    %733 = arith.maximumf %731, %732 : vector<16x2048xf32>
    %734 = arith.truncf %733 : vector<16x2048xf32> to vector<16x2048xbf16>
    %cst_188 = arith.constant dense<0.000000e+00> : vector<16x32xf32>
    %735 = tpu.matmul %734, %725, %cst_188 {dimension_numbers = #tpu.dot_dimension_numbers<[1], [0], [0], [1], [0, 0, 1, 1], [], []>} : vector<16x2048xbf16>, vector<2048x32xbf16>, vector<16x32xf32> -> vector<16x32xf32>
    %736 = vector.broadcast %727 : vector<1x32xf32> to vector<16x32xf32>
    %737 = arith.addf %735, %736 : vector<16x32xf32>
    %738 = arith.addf %693, %737 : vector<16x32xf32>
    %c0_189 = arith.constant 0 : index
    %c0_190 = arith.constant 0 : index
    %739 = vector.load %arg25[%c0_189, %c0_190] : memref<1x32xf32, #tpu.memory_space<vmem>>, vector<1x32xf32>
    %c0_191 = arith.constant 0 : index
    %c0_192 = arith.constant 0 : index
    %740 = vector.load %arg26[%c0_191, %c0_192] : memref<1x32xf32, #tpu.memory_space<vmem>>, vector<1x32xf32>
    %cst_193 = arith.constant dense<0.000000e+00> : vector<16xf32>
    %741 = vector.multi_reduction <add>, %738, %cst_193 [1] : vector<16x32xf32> to vector<16xf32>
    %742 = vector.shape_cast %741 : vector<16xf32> to vector<16x1xf32>
    %cst_194 = arith.constant 3.200000e+01 : f32
    %743 = vector.broadcast %cst_194 : f32 to vector<16x1xf32>
    %744 = arith.divf %742, %743 : vector<16x1xf32>
    %745 = vector.broadcast %744 : vector<16x1xf32> to vector<16x32xf32>
    %746 = arith.subf %738, %745 : vector<16x32xf32>
    %747 = arith.mulf %746, %746 : vector<16x32xf32>
    %cst_195 = arith.constant dense<0.000000e+00> : vector<16xf32>
    %748 = vector.multi_reduction <add>, %747, %cst_195 [1] : vector<16x32xf32> to vector<16xf32>
    %749 = vector.shape_cast %748 : vector<16xf32> to vector<16x1xf32>
    %cst_196 = arith.constant 0.0322580636 : f32
    %750 = vector.broadcast %cst_196 : f32 to vector<16x1xf32>
    %751 = arith.mulf %749, %750 : vector<16x1xf32>
    %cst_197 = arith.constant 9.99999996E-13 : f32
    %752 = vector.broadcast %cst_197 : f32 to vector<16x1xf32>
    %753 = arith.addf %751, %752 : vector<16x1xf32>
    %754 = math.rsqrt %753 : vector<16x1xf32>
    %755 = vector.broadcast %744 : vector<16x1xf32> to vector<16x32xf32>
    %756 = arith.subf %738, %755 : vector<16x32xf32>
    %757 = vector.broadcast %754 : vector<16x1xf32> to vector<16x32xf32>
    %758 = arith.mulf %756, %757 : vector<16x32xf32>
    %759 = vector.broadcast %739 : vector<1x32xf32> to vector<16x32xf32>
    %760 = arith.mulf %759, %758 : vector<16x32xf32>
    %761 = vector.broadcast %740 : vector<1x32xf32> to vector<16x32xf32>
    %762 = arith.addf %760, %761 : vector<16x32xf32>
    %c0_198 = arith.constant 0 : index
    %c0_199 = arith.constant 0 : index
    %763 = vector.load %arg27[%c0_198, %c0_199] : memref<16x32xf32, #tpu.memory_space<vmem>>, vector<16x32xf32>
    tpu.vector_store %arg27[%c0_198, %c0_199], %762 {strides = array<i32>} : memref<16x32xf32, #tpu.memory_space<vmem>>, vector<16x32xf32>,
    return
  }
  func.func @transform_0(%arg0: i32) -> (i32, i32) {
    %c0_i32 = arith.constant 0 : i32
    %c0_i32_0 = arith.constant 0 : i32
    %c0_i32_1 = arith.constant 0 : i32
    return %c0_i32, %c0_i32_0 : i32, i32
  }
  func.func @transform_1(%arg0: i32) -> (i32, i32) {
    %c0_i32 = arith.constant 0 : i32
    %c0_i32_0 = arith.constant 0 : i32
    %c0_i32_1 = arith.constant 0 : i32
    return %c0_i32, %c0_i32_0 : i32, i32
  }
  func.func @transform_2(%arg0: i32) -> (i32, i32, i32) {
    %c0_i32 = arith.constant 0 : i32
    %c0_i32_0 = arith.constant 0 : i32
    %c0_i32_1 = arith.constant 0 : i32
    %c0_i32_2 = arith.constant 0 : i32
    return %c0_i32, %c0_i32_0, %c0_i32_1 : i32, i32, i32
  }
  func.func @transform_3(%arg0: i32) -> (i32, i32, i32) {
    %c0_i32 = arith.constant 0 : i32
    %c0_i32_0 = arith.constant 0 : i32
    %c0_i32_1 = arith.constant 0 : i32
    %c0_i32_2 = arith.constant 0 : i32
    return %c0_i32, %c0_i32_0, %c0_i32_1 : i32, i32, i32
  }
  func.func @transform_4(%arg0: i32) -> (i32, i32, i32) {
    %c0_i32 = arith.constant 0 : i32
    %c0_i32_0 = arith.constant 0 : i32
    %c0_i32_1 = arith.constant 0 : i32
    %c0_i32_2 = arith.constant 0 : i32
    return %c0_i32, %c0_i32_0, %c0_i32_1 : i32, i32, i32
  }
  func.func @transform_5(%arg0: i32) -> (i32, i32, i32) {
    %c0_i32 = arith.constant 0 : i32
    %c0_i32_0 = arith.constant 0 : i32
    %c0_i32_1 = arith.constant 0 : i32
    %c0_i32_2 = arith.constant 0 : i32
    return %c0_i32, %c0_i32_0, %c0_i32_1 : i32, i32, i32
  }
  func.func @transform_6(%arg0: i32) -> (i32, i32, i32) {
    %c0_i32 = arith.constant 0 : i32
    %c0_i32_0 = arith.constant 0 : i32
    %c0_i32_1 = arith.constant 0 : i32
    %c0_i32_2 = arith.constant 0 : i32
    return %c0_i32, %c0_i32_0, %c0_i32_1 : i32, i32, i32
  }
  func.func @transform_7(%arg0: i32) -> (i32, i32, i32) {
    %c0_i32 = arith.constant 0 : i32
    %c0_i32_0 = arith.constant 0 : i32
    %c0_i32_1 = arith.constant 0 : i32
    %c0_i32_2 = arith.constant 0 : i32
    return %c0_i32, %c0_i32_0, %c0_i32_1 : i32, i32, i32
  }
  func.func @transform_8(%arg0: i32) -> (i32, i32, i32) {
    %c0_i32 = arith.constant 0 : i32
    %c0_i32_0 = arith.constant 0 : i32
    %c0_i32_1 = arith.constant 0 : i32
    %c0_i32_2 = arith.constant 0 : i32
    return %c0_i32, %c0_i32_0, %c0_i32_1 : i32, i32, i32
  }
  func.func @transform_9(%arg0: i32) -> (i32, i32, i32) {
    %c0_i32 = arith.constant 0 : i32
    %c0_i32_0 = arith.constant 0 : i32
    %c0_i32_1 = arith.constant 0 : i32
    %c0_i32_2 = arith.constant 0 : i32
    return %c0_i32, %c0_i32_0, %c0_i32_1 : i32, i32, i32
  }
  func.func @transform_10(%arg0: i32) -> (i32, i32, i32) {
    %c0_i32 = arith.constant 0 : i32
    %c0_i32_0 = arith.constant 0 : i32
    %c0_i32_1 = arith.constant 0 : i32
    %c0_i32_2 = arith.constant 0 : i32
    return %c0_i32, %c0_i32_0, %c0_i32_1 : i32, i32, i32
  }
  func.func @transform_11(%arg0: i32) -> (i32, i32, i32) {
    %c0_i32 = arith.constant 0 : i32
    %c0_i32_0 = arith.constant 0 : i32
    %c0_i32_1 = arith.constant 0 : i32
    %c0_i32_2 = arith.constant 0 : i32
    return %c0_i32, %c0_i32_0, %c0_i32_1 : i32, i32, i32
  }
  func.func @transform_12(%arg0: i32) -> (i32, i32, i32) {
    %c0_i32 = arith.constant 0 : i32
    %c0_i32_0 = arith.constant 0 : i32
    %c0_i32_1 = arith.constant 0 : i32
    %c0_i32_2 = arith.constant 0 : i32
    return %c0_i32, %c0_i32_0, %c0_i32_1 : i32, i32, i32
  }
  func.func @transform_13(%arg0: i32) -> (i32, i32, i32) {
    %c0_i32 = arith.constant 0 : i32
    %c0_i32_0 = arith.constant 0 : i32
    %c0_i32_1 = arith.constant 0 : i32
    %c0_i32_2 = arith.constant 0 : i32
    return %c0_i32, %c0_i32_0, %c0_i32_1 : i32, i32, i32
  }
  func.func @transform_14(%arg0: i32) -> (i32, i32, i32) {
    %c0_i32 = arith.constant 0 : i32
    %c0_i32_0 = arith.constant 0 : i32
    %c0_i32_1 = arith.constant 0 : i32
    %c0_i32_2 = arith.constant 0 : i32
    return %c0_i32, %c0_i32_0, %c0_i32_1 : i32, i32, i32
  }
  func.func @transform_15(%arg0: i32) -> (i32, i32, i32) {
    %c0_i32 = arith.constant 0 : i32
    %c0_i32_0 = arith.constant 0 : i32
    %c0_i32_1 = arith.constant 0 : i32
    %c0_i32_2 = arith.constant 0 : i32
    return %c0_i32, %c0_i32_0, %c0_i32_1 : i32, i32, i32
  }
  func.func @transform_16(%arg0: i32) -> (i32, i32, i32) {
    %c0_i32 = arith.constant 0 : i32
    %c0_i32_0 = arith.constant 0 : i32
    %c0_i32_1 = arith.constant 0 : i32
    %c0_i32_2 = arith.constant 0 : i32
    return %c0_i32, %c0_i32_0, %c0_i32_1 : i32, i32, i32
  }
  func.func @transform_17(%arg0: i32) -> (i32, i32, i32) {
    %c0_i32 = arith.constant 0 : i32
    %c0_i32_0 = arith.constant 0 : i32
    %c0_i32_1 = arith.constant 0 : i32
    %c0_i32_2 = arith.constant 0 : i32
    return %c0_i32, %c0_i32_0, %c0_i32_1 : i32, i32, i32
  }
  func.func @transform_18(%arg0: i32) -> (i32, i32, i32) {
    %c0_i32 = arith.constant 0 : i32
    %c0_i32_0 = arith.constant 0 : i32
    %c0_i32_1 = arith.constant 0 : i32
    %c0_i32_2 = arith.constant 0 : i32
    return %c0_i32, %c0_i32_0, %c0_i32_1 : i32, i32, i32
  }
  func.func @transform_19(%arg0: i32) -> (i32, i32, i32) {
    %c0_i32 = arith.constant 0 : i32
    %c0_i32_0 = arith.constant 0 : i32
    %c0_i32_1 = arith.constant 0 : i32
    %c0_i32_2 = arith.constant 0 : i32
    return %c0_i32, %c0_i32_0, %c0_i32_1 : i32, i32, i32
  }
  func.func @transform_20(%arg0: i32) -> (i32, i32, i32) {
    %c0_i32 = arith.constant 0 : i32
    %c0_i32_0 = arith.constant 0 : i32
    %c0_i32_1 = arith.constant 0 : i32
    %c0_i32_2 = arith.constant 0 : i32
    return %c0_i32, %c0_i32_0, %c0_i32_1 : i32, i32, i32
  }
  func.func @transform_21(%arg0: i32) -> (i32, i32, i32) {
    %c0_i32 = arith.constant 0 : i32
    %c0_i32_0 = arith.constant 0 : i32
    %c0_i32_1 = arith.constant 0 : i32
    %c0_i32_2 = arith.constant 0 : i32
    return %c0_i32, %c0_i32_0, %c0_i32_1 : i32, i32, i32
  }
  func.func @transform_22(%arg0: i32) -> (i32, i32, i32) {
    %c0_i32 = arith.constant 0 : i32
    %c0_i32_0 = arith.constant 0 : i32
    %c0_i32_1 = arith.constant 0 : i32
    %c0_i32_2 = arith.constant 0 : i32
    return %c0_i32, %c0_i32_0, %c0_i32_1 : i32, i32, i32
  }
  func.func @transform_23(%arg0: i32) -> (i32, i32, i32) {
    %c0_i32 = arith.constant 0 : i32
    %c0_i32_0 = arith.constant 0 : i32
    %c0_i32_1 = arith.constant 0 : i32
    %c0_i32_2 = arith.constant 0 : i32
    return %c0_i32, %c0_i32_0, %c0_i32_1 : i32, i32, i32
  }
  func.func @transform_24(%arg0: i32) -> (i32, i32) {
    %c0_i32 = arith.constant 0 : i32
    %c0_i32_0 = arith.constant 0 : i32
    %c0_i32_1 = arith.constant 0 : i32
    return %c0_i32, %c0_i32_0 : i32, i32
  }
  func.func @transform_25(%arg0: i32) -> (i32, i32) {
    %c0_i32 = arith.constant 0 : i32
    %c0_i32_0 = arith.constant 0 : i32
    %c0_i32_1 = arith.constant 0 : i32
    return %c0_i32, %c0_i32_0 : i32, i32
  }
  func.func @transform_26(%arg0: i32) -> (i32, i32) {
    %c0_i32 = arith.constant 0 : i32
    %c0_i32_0 = arith.constant 0 : i32
    %c0_i32_1 = arith.constant 0 : i32
    return %c0_i32, %c0_i32_0 : i32, i32
  }
}

</mosaic_0001>

<llo_original>
// kernel: tpu_custom_call.1
$region0: #{tpu_custom_call.1}
  #allocation0 [shape = 'u32[]', space=smem, size = 0x4, offset = 0x4, fixed_abs, tag = 'smem constant byte address 0x4 - core index']
  #allocation1 [shape = 'u32[144,128]{1,0:T(1,128)}', space=vmem, size = 0x12000, scoped, tag = 'internal scratch']
  %s0 = inlined_call_operand.vmem [shape: f32[16,32], index: 0, kind: input, shape index: {}]
  %s1 = inlined_call_operand.vmem [shape: f32[32,32], index: 1, kind: input, shape index: {}]
  %s2 = inlined_call_operand.vmem [shape: f32[2,8,8], index: 2, kind: input, shape index: {}]
  %s3 = inlined_call_operand.vmem [shape: f32[2,8,16], index: 3, kind: input, shape index: {}]
  %s4 = inlined_call_operand.vmem [shape: bf16[2,32,96], index: 4, kind: input, shape index: {}]
  %s5 = inlined_call_operand.vmem [shape: f32[2,1,96], index: 5, kind: input, shape index: {}]
  %s6 = inlined_call_operand.vmem [shape: bf16[2,32,32], index: 6, kind: input, shape index: {}]
  %s7 = inlined_call_operand.vmem [shape: f32[2,1,32], index: 7, kind: input, shape index: {}]
  %s8 = inlined_call_operand.vmem [shape: bf16[2,32,32], index: 8, kind: input, shape index: {}]
  %s9 = inlined_call_operand.vmem [shape: f32[2,1,32], index: 9, kind: input, shape index: {}]
  %s10 = inlined_call_operand.vmem [shape: bf16[2,32,64], index: 10, kind: input, shape index: {}]
  %s11 = inlined_call_operand.vmem [shape: f32[2,1,64], index: 11, kind: input, shape index: {}]
  %s12 = inlined_call_operand.vmem [shape: bf16[2,32,32], index: 12, kind: input, shape index: {}]
  %s13 = inlined_call_operand.vmem [shape: f32[2,1,32], index: 13, kind: input, shape index: {}]
  %s14 = inlined_call_operand.vmem [shape: bf16[2,32,2048], index: 14, kind: input, shape index: {}]
  %s15 = inlined_call_operand.vmem [shape: f32[2,1,2048], index: 15, kind: input, shape index: {}]
  %s16 = inlined_call_operand.vmem [shape: bf16[2,2048,32], index: 16, kind: input, shape index: {}]
  %s17 = inlined_call_operand.vmem [shape: f32[2,1,32], index: 17, kind: input, shape index: {}]
  %s18 = inlined_call_operand.vmem [shape: f32[2,1,32], index: 18, kind: input, shape index: {}]
  %s19 = inlined_call_operand.vmem [shape: f32[2,1,32], index: 19, kind: input, shape index: {}]
  %s20 = inlined_call_operand.vmem [shape: f32[2,1,32], index: 20, kind: input, shape index: {}]
  %s21 = inlined_call_operand.vmem [shape: f32[2,1,32], index: 21, kind: input, shape index: {}]
  %s22 = inlined_call_operand.vmem [shape: f32[2,1,32], index: 22, kind: input, shape index: {}]
  %s23 = inlined_call_operand.vmem [shape: f32[2,1,32], index: 23, kind: input, shape index: {}]
  %s24 = inlined_call_operand.vmem [shape: f32[1,32], index: 24, kind: input, shape index: {}]
  %s25 = inlined_call_operand.vmem [shape: f32[1,32], index: 25, kind: input, shape index: {}]
  %s26 = inlined_call_operand.hbm [shape: f32[16,32], index: 26, kind: output, shape index: {}]
  %s27 = sld [smem:[#allocation0]]
  $region114: #{tpu_custom_call.1} parent=0
    _
  %s29 = ssub.s32 1, %s27
  %s30 = scalar_select 0, %s29, %s27
  $region1: #{tpu_custom_call.1} parent=0
    #allocation2 [shape = 'u8[8192]{0}', space=vmem, size = 0x2000, scoped, tag = 'output window, operand 0, single buffered']
    #allocation3 [shape = 's32[1]{0}', space=sflag, size = 0x4, scoped, tag = 'scoped memory for tpu_custom_call.1']
    %31 = vsyncpa [#allocation3], 0
    // Predicated region
    $region2: #{tpu_custom_call.1} parent=1 // pred_check
      _
    $region3: #{tpu_custom_call.1} parent=1 // pred_check_branch
      %33 = sbr.rel (0) target = $region5
    $region4: #{tpu_custom_call.1} parent=1 // pred_region
      _
    $region5: #{tpu_custom_call.1} parent=1 // pred_fallthru
      _
    // Predicated region
    $region6: #{tpu_custom_call.1} parent=1 // pred_check
      _
    $region7: #{tpu_custom_call.1} parent=1 // pred_check_branch
      %35 = sbr.rel (0) target = $region9
    $region8: #{tpu_custom_call.1} parent=1 // pred_region
      _
    $region9: #{tpu_custom_call.1} parent=1 // pred_fallthru
      _
    // Predicated region
    $region10: #{tpu_custom_call.1} parent=1 // pred_check
      _
    $region11: #{tpu_custom_call.1} parent=1 // pred_check_branch
      %37 = sbr.rel (0) target = $region13
    $region12: #{tpu_custom_call.1} parent=1 // pred_region
      _
    $region13: #{tpu_custom_call.1} parent=1 // pred_fallthru
      _
    // Predicated region
    $region14: #{tpu_custom_call.1} parent=1 // pred_check
      _
    $region15: #{tpu_custom_call.1} parent=1 // pred_check_branch
      %39 = sbr.rel (0) target = $region17
    $region16: #{tpu_custom_call.1} parent=1 // pred_region
      _
    $region17: #{tpu_custom_call.1} parent=1 // pred_fallthru
      _
    // Predicated region
    $region18: #{tpu_custom_call.1} parent=1 // pred_check
      _
    $region19: #{tpu_custom_call.1} parent=1 // pred_check_branch
      %41 = sbr.rel (0) target = $region21
    $region20: #{tpu_custom_call.1} parent=1 // pred_region
      _
    $region21: #{tpu_custom_call.1} parent=1 // pred_fallthru
      _
    // Predicated region
    $region22: #{tpu_custom_call.1} parent=1 // pred_check
      _
    $region23: #{tpu_custom_call.1} parent=1 // pred_check_branch
      %43 = sbr.rel (0) target = $region25
    $region24: #{tpu_custom_call.1} parent=1 // pred_region
      _
    $region25: #{tpu_custom_call.1} parent=1 // pred_fallthru
      _
    // Predicated region
    $region26: #{tpu_custom_call.1} parent=1 // pred_check
      _
    $region27: #{tpu_custom_call.1} parent=1 // pred_check_branch
      %45 = sbr.rel (0) target = $region29
    $region28: #{tpu_custom_call.1} parent=1 // pred_region
      _
    $region29: #{tpu_custom_call.1} parent=1 // pred_fallthru
      _
    // Predicated region
    $region30: #{tpu_custom_call.1} parent=1 // pred_check
      _
    $region31: #{tpu_custom_call.1} parent=1 // pred_check_branch
      %47 = sbr.rel (0) target = $region33
    $region32: #{tpu_custom_call.1} parent=1 // pred_region
      _
    $region33: #{tpu_custom_call.1} parent=1 // pred_fallthru
      _
    // Predicated region
    $region34: #{tpu_custom_call.1} parent=1 // pred_check
      _
    $region35: #{tpu_custom_call.1} parent=1 // pred_check_branch
      %49 = sbr.rel (0) target = $region37
    $region36: #{tpu_custom_call.1} parent=1 // pred_region
      _
    $region37: #{tpu_custom_call.1} parent=1 // pred_fallthru
      _
    // Predicated region
    $region38: #{tpu_custom_call.1} parent=1 // pred_check
      _
    $region39: #{tpu_custom_call.1} parent=1 // pred_check_branch
      %51 = sbr.rel (0) target = $region41
    $region40: #{tpu_custom_call.1} parent=1 // pred_region
      _
    $region41: #{tpu_custom_call.1} parent=1 // pred_fallthru
      _
    // Predicated region
    $region42: #{tpu_custom_call.1} parent=1 // pred_check
      _
    $region43: #{tpu_custom_call.1} parent=1 // pred_check_branch
      %53 = sbr.rel (0) target = $region45
    $region44: #{tpu_custom_call.1} parent=1 // pred_region
      _
    $region45: #{tpu_custom_call.1} parent=1 // pred_fallthru
      _
    // Predicated region
    $region46: #{tpu_custom_call.1} parent=1 // pred_check
      _
    $region47: #{tpu_custom_call.1} parent=1 // pred_check_branch
      %55 = sbr.rel (0) target = $region49
    $region48: #{tpu_custom_call.1} parent=1 // pred_region
      _
    $region49: #{tpu_custom_call.1} parent=1 // pred_fallthru
      _
    // Predicated region
    $region50: #{tpu_custom_call.1} parent=1 // pred_check
      _
    $region51: #{tpu_custom_call.1} parent=1 // pred_check_branch
      %57 = sbr.rel (0) target = $region53
    $region52: #{tpu_custom_call.1} parent=1 // pred_region
      _
    $region53: #{tpu_custom_call.1} parent=1 // pred_fallthru
      _
    // Predicated region
    $region54: #{tpu_custom_call.1} parent=1 // pred_check
      _
    $region55: #{tpu_custom_call.1} parent=1 // pred_check_branch
      %59 = sbr.rel (0) target = $region57
    $region56: #{tpu_custom_call.1} parent=1 // pred_region
      _
    $region57: #{tpu_custom_call.1} parent=1 // pred_fallthru
      _
    // Predicated region
    $region58: #{tpu_custom_call.1} parent=1 // pred_check
      _
    $region59: #{tpu_custom_call.1} parent=1 // pred_check_branch
      %61 = sbr.rel (0) target = $region61
    $region60: #{tpu_custom_call.1} parent=1 // pred_region
      _
    $region61: #{tpu_custom_call.1} parent=1 // pred_fallthru
      _
    // Predicated region
    $region62: #{tpu_custom_call.1} parent=1 // pred_check
      _
    $region63: #{tpu_custom_call.1} parent=1 // pred_check_branch
      %63 = sbr.rel (0) target = $region65
    $region64: #{tpu_custom_call.1} parent=1 // pred_region
      _
    $region65: #{tpu_custom_call.1} parent=1 // pred_fallthru
      _
    // Predicated region
    $region66: #{tpu_custom_call.1} parent=1 // pred_check
      _
    $region67: #{tpu_custom_call.1} parent=1 // pred_check_branch
      %65 = sbr.rel (0) target = $region69
    $region68: #{tpu_custom_call.1} parent=1 // pred_region
      _
    $region69: #{tpu_custom_call.1} parent=1 // pred_fallthru
      _
    // Predicated region
    $region70: #{tpu_custom_call.1} parent=1 // pred_check
      _
    $region71: #{tpu_custom_call.1} parent=1 // pred_check_branch
      %67 = sbr.rel (0) target = $region73
    $region72: #{tpu_custom_call.1} parent=1 // pred_region
      _
    $region73: #{tpu_custom_call.1} parent=1 // pred_fallthru
      _
    // Predicated region
    $region74: #{tpu_custom_call.1} parent=1 // pred_check
      _
    $region75: #{tpu_custom_call.1} parent=1 // pred_check_branch
      %69 = sbr.rel (0) target = $region77
    $region76: #{tpu_custom_call.1} parent=1 // pred_region
      _
    $region77: #{tpu_custom_call.1} parent=1 // pred_fallthru
      _
    // Predicated region
    $region78: #{tpu_custom_call.1} parent=1 // pred_check
      _
    $region79: #{tpu_custom_call.1} parent=1 // pred_check_branch
      %71 = sbr.rel (0) target = $region81
    $region80: #{tpu_custom_call.1} parent=1 // pred_region
      _
    $region81: #{tpu_custom_call.1} parent=1 // pred_fallthru
      _
    // Predicated region
    $region82: #{tpu_custom_call.1} parent=1 // pred_check
      _
    $region83: #{tpu_custom_call.1} parent=1 // pred_check_branch
      %73 = sbr.rel (0) target = $region85
    $region84: #{tpu_custom_call.1} parent=1 // pred_region
      _
    $region85: #{tpu_custom_call.1} parent=1 // pred_fallthru
      _
    // Predicated region
    $region86: #{tpu_custom_call.1} parent=1 // pred_check
      _
    $region87: #{tpu_custom_call.1} parent=1 // pred_check_branch
      %75 = sbr.rel (0) target = $region89
    $region88: #{tpu_custom_call.1} parent=1 // pred_region
      _
    $region89: #{tpu_custom_call.1} parent=1 // pred_fallthru
      _
    // Predicated region
    $region90: #{tpu_custom_call.1} parent=1 // pred_check
      _
    $region91: #{tpu_custom_call.1} parent=1 // pred_check_branch
      %77 = sbr.rel (0) target = $region93
    $region92: #{tpu_custom_call.1} parent=1 // pred_region
      _
    $region93: #{tpu_custom_call.1} parent=1 // pred_fallthru
      _
    // Predicated region
    $region94: #{tpu_custom_call.1} parent=1 // pred_check
      _
    $region95: #{tpu_custom_call.1} parent=1 // pred_check_branch
      %79 = sbr.rel (0) target = $region97
    $region96: #{tpu_custom_call.1} parent=1 // pred_region
      _
    $region97: #{tpu_custom_call.1} parent=1 // pred_fallthru
      _
    // Predicated region
    $region98: #{tpu_custom_call.1} parent=1 // pred_check
      _
    $region99: #{tpu_custom_call.1} parent=1 // pred_check_branch
      %81 = sbr.rel (0) target = $region101
    $region100: #{tpu_custom_call.1} parent=1 // pred_region
      _
    $region101: #{tpu_custom_call.1} parent=1 // pred_fallthru
      _
    // Predicated region
    $region102: #{tpu_custom_call.1} parent=1 // pred_check
      _
    $region103: #{tpu_custom_call.1} parent=1 // pred_check_branch
      %83 = sbr.rel (0) target = $region105
    $region104: #{tpu_custom_call.1} parent=1 // pred_region
      _
    $region105: #{tpu_custom_call.1} parent=1 // pred_fallthru
      _
    %v85 = vld [vmem:[%s0] sm:$0xff]
    %v86 = vld [vmem:[%s0 + $0x8] sm:$0xff]
    %v87 = vld [vmem:[%s2] sm:$0xff]
    %v88 = vld [vmem:[%s2 + $0x8] sm:$0xff]
    %v89 = vld [vmem:[%s3] sm:$0xff]
    %v90 = vld [vmem:[%s3 + $0x8] sm:$0xff]
    %v91 = vld [vmem:[%s1] sm:$0xff]
    %v92 = vld [vmem:[%s1 + $0x8] sm:$0xff]
    %v93 = vld [vmem:[%s1 + $0x10] sm:$0xff]
    %v94 = vld [vmem:[%s1 + $0x18] sm:$0xff]
    %v95 = vpack.c.bf16 %v92, %v91
    %v96 = vpack.c.bf16 %v94, %v93
    %v97 = vld [vmem:[%s18] sm:$0x1]
    %v98 = vld [vmem:[%s19] sm:$0x1]
    %vm99 = vcmask 261120
    %v100 = vsel %vm99, %v85, 0.0
    %101 = vadd.xlane.f32.xlu0 %v100
    %v102 = vpop.xlane.xlu0 %101
    %v103 = vsel %vm99, %v86, 0.0
    %104 = vadd.xlane.f32.xlu0 %v103
    %v105 = vpop.xlane.xlu0 %104
    %v106 = vrcp.pop 32.0
    %v107 = vmul.f32 %v102, %v106
    %v108 = vmul.f32 %v105, %v106
    %v109 = vsub.f32 %v85, %v107
    %v110 = vsub.f32 %v86, %v108
    %v111 = vmul.f32 %v109, %v109
    %v112 = vmul.f32 %v110, %v110
    %v113 = vsel %vm99, %v111, 0.0
    %114 = vadd.xlane.f32.xlu0 %v113
    %v115 = vpop.xlane.xlu0 %114
    %v116 = vsel %vm99, %v112, 0.0
    %117 = vadd.xlane.f32.xlu0 %v116
    %v118 = vpop.xlane.xlu0 %117
    %v119 = vmul.f32 %v115, 0.032258064
    %v120 = vmul.f32 %v118, 0.032258064
    %v121 = vadd.f32 %v119, 1e-12
    %v122 = vadd.f32 %v120, 1e-12
    %v123 = vrsqrt.pop %v121
    %v124 = vrsqrt.pop %v122
    %v125 = vmul.f32 %v109, %v123
    %v126 = vmul.f32 %v110, %v124
    %v128 = vlaneseq
    %v129 = vshrl.u32 %v128, 7
    %v130 = vsub.s32 0, %v129
    %v131 = vrot.slane %v97, %v130
    %v133 = vmul.f32 %v131, %v125
    %v134 = vmul.f32 %v131, %v126
    %v136 = vlaneseq
    %v137 = vshrl.u32 %v136, 7
    %v138 = vsub.s32 0, %v137
    %v139 = vrot.slane %v98, %v138
    %v141 = vadd.f32 %v133, %v139
    %v142 = vadd.f32 %v134, %v139
    %v143 = vpack.c.bf16 %v142, %v141
    %v144 = vld [vmem:[%s4] sm:$0xf]
    %v145 = vld [vmem:[%s4 + $0x4] sm:$0xf]
    %v146 = vld [vmem:[%s4 + $0x8] sm:$0xf]
    %v147 = vld [vmem:[%s4 + $0xc] sm:$0xf]
    %v148 = vld [vmem:[%s5] sm:$0x1]
    %v150 = vlaneseq
    %v151 = vshrl.u32 %v150, 7
    %v152 = vsub.s32 0, %v151
    %v153 = vrot.slane %v148, %v152
    %v159 = vunpack.c.l.b16 %v144
    %v160 = vunpack.c.l.b16 %v145
    %v161 = vunpack.c.l.b16 %v146
    %v162 = vunpack.c.l.b16 %v147
    %v163 = vpack.c.b16 %v160, %v159
    %v164 = vpack.c.b16 %v162, %v161
    %v168 = vsel %vm99, %v143, 0
    %170 = vmatprep.subr.bf16.mxu0 0
    %171 = vmatpush1.bf16.msra.mxu0 %v163
    %172 = vmatprep.subr.bf16.mxu0 0
    %173 = vmatpush1.bf16.msra.mxu0 %v164
    %174 = vmatprep.subr.bf16.mxu0 0
    %175 = vmatpush1.bf16.msra.mxu0 0
    %176 = vmatprep.subr.bf16.mxu0 0
    %177 = vmatpush1.bf16.msra.mxu0 0
    %178 = vmatprep.subr.bf16.mxu0 0
    %179 = vmatpush1.bf16.msra.mxu0 0
    %180 = vmatprep.subr.bf16.mxu0 0
    %181 = vmatpush1.bf16.msra.mxu0 0
    %182 = vmatprep.subr.bf16.mxu0 0
    %183 = vmatpush1.bf16.msra.mxu0 0
    %184 = vmatprep.subr.bf16.mxu0 0
    %185 = vmatpush1.bf16.msra.mxu0 0
    %186 = vmatprep.subr.bf16.mxu0 0
    %187 = vmatpush1.bf16.msra.mxu0 0
    %188 = vmatprep.subr.bf16.mxu0 0
    %189 = vmatpush1.bf16.msra.mxu0 0
    %190 = vmatprep.subr.bf16.mxu0 0
    %191 = vmatpush1.bf16.msra.mxu0 0
    %192 = vmatprep.subr.bf16.mxu0 0
    %193 = vmatpush1.bf16.msra.mxu0 0
    %194 = vmatprep.subr.bf16.mxu0 0
    %195 = vmatpush1.bf16.msra.mxu0 0
    %196 = vmatprep.subr.bf16.mxu0 0
    %197 = vmatpush1.bf16.msra.mxu0 0
    %198 = vmatprep.subr.bf16.mxu0 0
    %199 = vmatpush1.bf16.msra.mxu0 0
    %200 = vmatprep.subr.bf16.mxu0 0
    %201 = vmatpush1.bf16.msra.mxu0 0
    %202 = vmatprep.mubr.bf16.mxu0 0
    %203 = vmatmul.mubr.bf16.gmra.mrb[0].mxu0 %v168
    %v204 = vpop.f32.mrb[0].mxu0
    %v205 = vadd.f32 %v153, %v204
    %v206 = vpop.f32.mrb[0].mxu0
    %v207 = vpop.f32.mrb[0].mxu0
    %v208 = vadd.f32 %v153, %v207
    %v209 = vpop.f32.mrb[0].mxu0
    %210 = vdwg.mxu0
    %212 = vrot.lane.b32.xlu0 %v205, 120
    %v213 = vpop.permute.xlu0 %212
    %215 = vrot.lane.b32.xlu0 %v205, 112
    %v216 = vpop.permute.xlu0 %215
    %218 = vrot.lane.b32.xlu0 %v205, 104
    %v219 = vpop.permute.xlu0 %218
    %222 = vrot.lane.b32.xlu0 %v208, 120
    %v223 = vpop.permute.xlu0 %222
    %225 = vrot.lane.b32.xlu0 %v208, 112
    %v226 = vpop.permute.xlu0 %225
    %228 = vrot.lane.b32.xlu0 %v208, 104
    %v229 = vpop.permute.xlu0 %228
    %v231 = vpack.c.bf16 %v205, %v205
    %v232 = vpack.c.bf16 %v213, %v213
    %v233 = vpack.c.bf16 %v216, %v216
    %v234 = vpack.c.bf16 %v219, %v219
    %v235 = vpack.c.bf16 %v208, %v208
    %v236 = vpack.c.bf16 %v223, %v223
    %v237 = vpack.c.bf16 %v226, %v226
    %v238 = vpack.c.bf16 %v229, %v229
    %240 = vrot.lane.b32.xlu0 %v231, 96
    %v241 = vpop.permute.xlu0 %240
    %vm242 = vcmask 64512
    %v244 = vsel %vm242, %v231, 0
    %v247 = vsel %vm242, %v241, 0
    %249 = vmatprep.subr.bf16.mxu0 0
    %250 = vmatpush1.bf16.xpose.msra.mxu0 %v247
    %251 = vmatprep.subr.bf16.mxu0 0
    %252 = vmatpush1.bf16.xpose.msra.mxu0 0
    %253 = vmatprep.subr.bf16.mxu0 0
    %254 = vmatpush1.bf16.xpose.msra.mxu0 0
    %255 = vmatprep.subr.bf16.mxu0 0
    %256 = vmatpush1.bf16.xpose.msra.mxu0 0
    %257 = vmatprep.subr.bf16.mxu0 0
    %258 = vmatpush1.bf16.xpose.msra.mxu0 0
    %259 = vmatprep.subr.bf16.mxu0 0
    %260 = vmatpush1.bf16.xpose.msra.mxu0 0
    %261 = vmatprep.subr.bf16.mxu0 0
    %262 = vmatpush1.bf16.xpose.msra.mxu0 0
    %263 = vmatprep.subr.bf16.mxu0 0
    %264 = vmatpush1.bf16.xpose.msra.mxu0 0
    %265 = vmatprep.subr.bf16.mxu0 0
    %266 = vmatpush1.bf16.xpose.msra.mxu0 0
    %267 = vmatprep.subr.bf16.mxu0 0
    %268 = vmatpush1.bf16.xpose.msra.mxu0 0
    %269 = vmatprep.subr.bf16.mxu0 0
    %270 = vmatpush1.bf16.xpose.msra.mxu0 0
    %271 = vmatprep.subr.bf16.mxu0 0
    %272 = vmatpush1.bf16.xpose.msra.mxu0 0
    %273 = vmatprep.subr.bf16.mxu0 0
    %274 = vmatpush1.bf16.xpose.msra.mxu0 0
    %275 = vmatprep.subr.bf16.mxu0 0
    %276 = vmatpush1.bf16.xpose.msra.mxu0 0
    %277 = vmatprep.subr.bf16.mxu0 0
    %278 = vmatpush1.bf16.xpose.msra.mxu0 0
    %279 = vmatprep.subr.bf16.mxu0 0
    %280 = vmatpush1.bf16.xpose.msra.mxu0 0
    %281 = vmatprep.mubr.bf16.mxu0 0
    %282 = vmatmul.mubr.bf16.gmra.mrb[0].mxu0 %v244
    %v283 = vpop.f32.mrb[0].mxu0
    %v284 = vadd.f32 %v87, %v283
    %v285 = vpop.f32.mrb[0].mxu0
    %v286 = vpop.f32.mrb[0].mxu0
    %v287 = vpop.f32.mrb[0].mxu0
    %288 = vdwg.mxu0
    %290 = vrot.lane.b32.xlu0 %v232, 96
    %v291 = vpop.permute.xlu0 %290
    %v293 = vsel %vm242, %v232, 0
    %v296 = vsel %vm242, %v291, 0
    %298 = vmatprep.subr.bf16.mxu0 0
    %299 = vmatpush1.bf16.xpose.msra.mxu0 %v296
    %300 = vmatprep.subr.bf16.mxu0 0
    %301 = vmatpush1.bf16.xpose.msra.mxu0 0
    %302 = vmatprep.subr.bf16.mxu0 0
    %303 = vmatpush1.bf16.xpose.msra.mxu0 0
    %304 = vmatprep.subr.bf16.mxu0 0
    %305 = vmatpush1.bf16.xpose.msra.mxu0 0
    %306 = vmatprep.subr.bf16.mxu0 0
    %307 = vmatpush1.bf16.xpose.msra.mxu0 0
    %308 = vmatprep.subr.bf16.mxu0 0
    %309 = vmatpush1.bf16.xpose.msra.mxu0 0
    %310 = vmatprep.subr.bf16.mxu0 0
    %311 = vmatpush1.bf16.xpose.msra.mxu0 0
    %312 = vmatprep.subr.bf16.mxu0 0
    %313 = vmatpush1.bf16.xpose.msra.mxu0 0
    %314 = vmatprep.subr.bf16.mxu0 0
    %315 = vmatpush1.bf16.xpose.msra.mxu0 0
    %316 = vmatprep.subr.bf16.mxu0 0
    %317 = vmatpush1.bf16.xpose.msra.mxu0 0
    %318 = vmatprep.subr.bf16.mxu0 0
    %319 = vmatpush1.bf16.xpose.msra.mxu0 0
    %320 = vmatprep.subr.bf16.mxu0 0
    %321 = vmatpush1.bf16.xpose.msra.mxu0 0
    %322 = vmatprep.subr.bf16.mxu0 0
    %323 = vmatpush1.bf16.xpose.msra.mxu0 0
    %324 = vmatprep.subr.bf16.mxu0 0
    %325 = vmatpush1.bf16.xpose.msra.mxu0 0
    %326 = vmatprep.subr.bf16.mxu0 0
    %327 = vmatpush1.bf16.xpose.msra.mxu0 0
    %328 = vmatprep.subr.bf16.mxu0 0
    %329 = vmatpush1.bf16.xpose.msra.mxu0 0
    %330 = vmatprep.mubr.bf16.mxu0 0
    %331 = vmatmul.mubr.bf16.gmra.mrb[0].mxu0 %v293
    %v332 = vpop.f32.mrb[0].mxu0
    %v333 = vadd.f32 %v87, %v332
    %v334 = vpop.f32.mrb[0].mxu0
    %v335 = vpop.f32.mrb[0].mxu0
    %v336 = vpop.f32.mrb[0].mxu0
    %337 = vdwg.mxu0
    %339 = vrot.lane.b32.xlu0 %v233, 96
    %v340 = vpop.permute.xlu0 %339
    %v342 = vsel %vm242, %v233, 0
    %v345 = vsel %vm242, %v340, 0
    %347 = vmatprep.subr.bf16.mxu0 0
    %348 = vmatpush1.bf16.xpose.msra.mxu0 %v345
    %349 = vmatprep.subr.bf16.mxu0 0
    %350 = vmatpush1.bf16.xpose.msra.mxu0 0
    %351 = vmatprep.subr.bf16.mxu0 0
    %352 = vmatpush1.bf16.xpose.msra.mxu0 0
    %353 = vmatprep.subr.bf16.mxu0 0
    %354 = vmatpush1.bf16.xpose.msra.mxu0 0
    %355 = vmatprep.subr.bf16.mxu0 0
    %356 = vmatpush1.bf16.xpose.msra.mxu0 0
    %357 = vmatprep.subr.bf16.mxu0 0
    %358 = vmatpush1.bf16.xpose.msra.mxu0 0
    %359 = vmatprep.subr.bf16.mxu0 0
    %360 = vmatpush1.bf16.xpose.msra.mxu0 0
    %361 = vmatprep.subr.bf16.mxu0 0
    %362 = vmatpush1.bf16.xpose.msra.mxu0 0
    %363 = vmatprep.subr.bf16.mxu0 0
    %364 = vmatpush1.bf16.xpose.msra.mxu0 0
    %365 = vmatprep.subr.bf16.mxu0 0
    %366 = vmatpush1.bf16.xpose.msra.mxu0 0
    %367 = vmatprep.subr.bf16.mxu0 0
    %368 = vmatpush1.bf16.xpose.msra.mxu0 0
    %369 = vmatprep.subr.bf16.mxu0 0
    %370 = vmatpush1.bf16.xpose.msra.mxu0 0
    %371 = vmatprep.subr.bf16.mxu0 0
    %372 = vmatpush1.bf16.xpose.msra.mxu0 0
    %373 = vmatprep.subr.bf16.mxu0 0
    %374 = vmatpush1.bf16.xpose.msra.mxu0 0
    %375 = vmatprep.subr.bf16.mxu0 0
    %376 = vmatpush1.bf16.xpose.msra.mxu0 0
    %377 = vmatprep.subr.bf16.mxu0 0
    %378 = vmatpush1.bf16.xpose.msra.mxu0 0
    %379 = vmatprep.mubr.bf16.mxu0 0
    %380 = vmatmul.mubr.bf16.gmra.mrb[0].mxu0 %v342
    %v381 = vpop.f32.mrb[0].mxu0
    %v382 = vadd.f32 %v87, %v381
    %v383 = vpop.f32.mrb[0].mxu0
    %v384 = vpop.f32.mrb[0].mxu0
    %v385 = vpop.f32.mrb[0].mxu0
    %386 = vdwg.mxu0
    %388 = vrot.lane.b32.xlu0 %v234, 96
    %v389 = vpop.permute.xlu0 %388
    %v391 = vsel %vm242, %v234, 0
    %v394 = vsel %vm242, %v389, 0
    %396 = vmatprep.subr.bf16.mxu0 0
    %397 = vmatpush1.bf16.xpose.msra.mxu0 %v394
    %398 = vmatprep.subr.bf16.mxu0 0
    %399 = vmatpush1.bf16.xpose.msra.mxu0 0
    %400 = vmatprep.subr.bf16.mxu0 0
    %401 = vmatpush1.bf16.xpose.msra.mxu0 0
    %402 = vmatprep.subr.bf16.mxu0 0
    %403 = vmatpush1.bf16.xpose.msra.mxu0 0
    %404 = vmatprep.subr.bf16.mxu0 0
    %405 = vmatpush1.bf16.xpose.msra.mxu0 0
    %406 = vmatprep.subr.bf16.mxu0 0
    %407 = vmatpush1.bf16.xpose.msra.mxu0 0
    %408 = vmatprep.subr.bf16.mxu0 0
    %409 = vmatpush1.bf16.xpose.msra.mxu0 0
    %410 = vmatprep.subr.bf16.mxu0 0
    %411 = vmatpush1.bf16.xpose.msra.mxu0 0
    %412 = vmatprep.subr.bf16.mxu0 0
    %413 = vmatpush1.bf16.xpose.msra.mxu0 0
    %414 = vmatprep.subr.bf16.mxu0 0
    %415 = vmatpush1.bf16.xpose.msra.mxu0 0
    %416 = vmatprep.subr.bf16.mxu0 0
    %417 = vmatpush1.bf16.xpose.msra.mxu0 0
    %418 = vmatprep.subr.bf16.mxu0 0
    %419 = vmatpush1.bf16.xpose.msra.mxu0 0
    %420 = vmatprep.subr.bf16.mxu0 0
    %421 = vmatpush1.bf16.xpose.msra.mxu0 0
    %422 = vmatprep.subr.bf16.mxu0 0
    %423 = vmatpush1.bf16.xpose.msra.mxu0 0
    %424 = vmatprep.subr.bf16.mxu0 0
    %425 = vmatpush1.bf16.xpose.msra.mxu0 0
    %426 = vmatprep.subr.bf16.mxu0 0
    %427 = vmatpush1.bf16.xpose.msra.mxu0 0
    %428 = vmatprep.mubr.bf16.mxu0 0
    %429 = vmatmul.mubr.bf16.gmra.mrb[0].mxu0 %v391
    %v430 = vpop.f32.mrb[0].mxu0
    %v431 = vadd.f32 %v87, %v430
    %v432 = vpop.f32.mrb[0].mxu0
    %v433 = vpop.f32.mrb[0].mxu0
    %v434 = vpop.f32.mrb[0].mxu0
    %435 = vdwg.mxu0
    %437 = vrot.lane.b32.xlu0 %v235, 96
    %v438 = vpop.permute.xlu0 %437
    %v440 = vsel %vm242, %v235, 0
    %v443 = vsel %vm242, %v438, 0
    %445 = vmatprep.subr.bf16.mxu0 0
    %446 = vmatpush1.bf16.xpose.msra.mxu0 %v443
    %447 = vmatprep.subr.bf16.mxu0 0
    %448 = vmatpush1.bf16.xpose.msra.mxu0 0
    %449 = vmatprep.subr.bf16.mxu0 0
    %450 = vmatpush1.bf16.xpose.msra.mxu0 0
    %451 = vmatprep.subr.bf16.mxu0 0
    %452 = vmatpush1.bf16.xpose.msra.mxu0 0
    %453 = vmatprep.subr.bf16.mxu0 0
    %454 = vmatpush1.bf16.xpose.msra.mxu0 0
    %455 = vmatprep.subr.bf16.mxu0 0
    %456 = vmatpush1.bf16.xpose.msra.mxu0 0
    %457 = vmatprep.subr.bf16.mxu0 0
    %458 = vmatpush1.bf16.xpose.msra.mxu0 0
    %459 = vmatprep.subr.bf16.mxu0 0
    %460 = vmatpush1.bf16.xpose.msra.mxu0 0
    %461 = vmatprep.subr.bf16.mxu0 0
    %462 = vmatpush1.bf16.xpose.msra.mxu0 0
    %463 = vmatprep.subr.bf16.mxu0 0
    %464 = vmatpush1.bf16.xpose.msra.mxu0 0
    %465 = vmatprep.subr.bf16.mxu0 0
    %466 = vmatpush1.bf16.xpose.msra.mxu0 0
    %467 = vmatprep.subr.bf16.mxu0 0
    %468 = vmatpush1.bf16.xpose.msra.mxu0 0
    %469 = vmatprep.subr.bf16.mxu0 0
    %470 = vmatpush1.bf16.xpose.msra.mxu0 0
    %471 = vmatprep.subr.bf16.mxu0 0
    %472 = vmatpush1.bf16.xpose.msra.mxu0 0
    %473 = vmatprep.subr.bf16.mxu0 0
    %474 = vmatpush1.bf16.xpose.msra.mxu0 0
    %475 = vmatprep.subr.bf16.mxu0 0
    %476 = vmatpush1.bf16.xpose.msra.mxu0 0
    %477 = vmatprep.mubr.bf16.mxu0 0
    %478 = vmatmul.mubr.bf16.gmra.mrb[0].mxu0 %v440
    %v479 = vpop.f32.mrb[0].mxu0
    %v480 = vadd.f32 %v88, %v479
    %v481 = vpop.f32.mrb[0].mxu0
    %v482 = vpop.f32.mrb[0].mxu0
    %v483 = vpop.f32.mrb[0].mxu0
    %484 = vdwg.mxu0
    %486 = vrot.lane.b32.xlu0 %v236, 96
    %v487 = vpop.permute.xlu0 %486
    %v489 = vsel %vm242, %v236, 0
    %v492 = vsel %vm242, %v487, 0
    %494 = vmatprep.subr.bf16.mxu0 0
    %495 = vmatpush1.bf16.xpose.msra.mxu0 %v492
    %496 = vmatprep.subr.bf16.mxu0 0
    %497 = vmatpush1.bf16.xpose.msra.mxu0 0
    %498 = vmatprep.subr.bf16.mxu0 0
    %499 = vmatpush1.bf16.xpose.msra.mxu0 0
    %500 = vmatprep.subr.bf16.mxu0 0
    %501 = vmatpush1.bf16.xpose.msra.mxu0 0
    %502 = vmatprep.subr.bf16.mxu0 0
    %503 = vmatpush1.bf16.xpose.msra.mxu0 0
    %504 = vmatprep.subr.bf16.mxu0 0
    %505 = vmatpush1.bf16.xpose.msra.mxu0 0
    %506 = vmatprep.subr.bf16.mxu0 0
    %507 = vmatpush1.bf16.xpose.msra.mxu0 0
    %508 = vmatprep.subr.bf16.mxu0 0
    %509 = vmatpush1.bf16.xpose.msra.mxu0 0
    %510 = vmatprep.subr.bf16.mxu0 0
    %511 = vmatpush1.bf16.xpose.msra.mxu0 0
    %512 = vmatprep.subr.bf16.mxu0 0
    %513 = vmatpush1.bf16.xpose.msra.mxu0 0
    %514 = vmatprep.subr.bf16.mxu0 0
    %515 = vmatpush1.bf16.xpose.msra.mxu0 0
    %516 = vmatprep.subr.bf16.mxu0 0
    %517 = vmatpush1.bf16.xpose.msra.mxu0 0
    %518 = vmatprep.subr.bf16.mxu0 0
    %519 = vmatpush1.bf16.xpose.msra.mxu0 0
    %520 = vmatprep.subr.bf16.mxu0 0
    %521 = vmatpush1.bf16.xpose.msra.mxu0 0
    %522 = vmatprep.subr.bf16.mxu0 0
    %523 = vmatpush1.bf16.xpose.msra.mxu0 0
    %524 = vmatprep.subr.bf16.mxu0 0
    %525 = vmatpush1.bf16.xpose.msra.mxu0 0
    %526 = vmatprep.mubr.bf16.mxu0 0
    %527 = vmatmul.mubr.bf16.gmra.mrb[0].mxu0 %v489
    %v528 = vpop.f32.mrb[0].mxu0
    %v529 = vadd.f32 %v88, %v528
    %v530 = vpop.f32.mrb[0].mxu0
    %v531 = vpop.f32.mrb[0].mxu0
    %v532 = vpop.f32.mrb[0].mxu0
    %533 = vdwg.mxu0
    %535 = vrot.lane.b32.xlu0 %v237, 96
    %v536 = vpop.permute.xlu0 %535
    %v538 = vsel %vm242, %v237, 0
    %v541 = vsel %vm242, %v536, 0
    %543 = vmatprep.subr.bf16.mxu0 0
    %544 = vmatpush1.bf16.xpose.msra.mxu0 %v541
    %545 = vmatprep.subr.bf16.mxu0 0
    %546 = vmatpush1.bf16.xpose.msra.mxu0 0
    %547 = vmatprep.subr.bf16.mxu0 0
    %548 = vmatpush1.bf16.xpose.msra.mxu0 0
    %549 = vmatprep.subr.bf16.mxu0 0
    %550 = vmatpush1.bf16.xpose.msra.mxu0 0
    %551 = vmatprep.subr.bf16.mxu0 0
    %552 = vmatpush1.bf16.xpose.msra.mxu0 0
    %553 = vmatprep.subr.bf16.mxu0 0
    %554 = vmatpush1.bf16.xpose.msra.mxu0 0
    %555 = vmatprep.subr.bf16.mxu0 0
    %556 = vmatpush1.bf16.xpose.msra.mxu0 0
    %557 = vmatprep.subr.bf16.mxu0 0
    %558 = vmatpush1.bf16.xpose.msra.mxu0 0
    %559 = vmatprep.subr.bf16.mxu0 0
    %560 = vmatpush1.bf16.xpose.msra.mxu0 0
    %561 = vmatprep.subr.bf16.mxu0 0
    %562 = vmatpush1.bf16.xpose.msra.mxu0 0
    %563 = vmatprep.subr.bf16.mxu0 0
    %564 = vmatpush1.bf16.xpose.msra.mxu0 0
    %565 = vmatprep.subr.bf16.mxu0 0
    %566 = vmatpush1.bf16.xpose.msra.mxu0 0
    %567 = vmatprep.subr.bf16.mxu0 0
    %568 = vmatpush1.bf16.xpose.msra.mxu0 0
    %569 = vmatprep.subr.bf16.mxu0 0
    %570 = vmatpush1.bf16.xpose.msra.mxu0 0
    %571 = vmatprep.subr.bf16.mxu0 0
    %572 = vmatpush1.bf16.xpose.msra.mxu0 0
    %573 = vmatprep.subr.bf16.mxu0 0
    %574 = vmatpush1.bf16.xpose.msra.mxu0 0
    %575 = vmatprep.mubr.bf16.mxu0 0
    %576 = vmatmul.mubr.bf16.gmra.mrb[0].mxu0 %v538
    %v577 = vpop.f32.mrb[0].mxu0
    %v578 = vadd.f32 %v88, %v577
    %v579 = vpop.f32.mrb[0].mxu0
    %v580 = vpop.f32.mrb[0].mxu0
    %v581 = vpop.f32.mrb[0].mxu0
    %582 = vdwg.mxu0
    %584 = vrot.lane.b32.xlu0 %v238, 96
    %v585 = vpop.permute.xlu0 %584
    %v587 = vsel %vm242, %v238, 0
    %v590 = vsel %vm242, %v585, 0
    %592 = vmatprep.subr.bf16.mxu0 0
    %593 = vmatpush1.bf16.xpose.msra.mxu0 %v590
    %594 = vmatprep.subr.bf16.mxu0 0
    %595 = vmatpush1.bf16.xpose.msra.mxu0 0
    %596 = vmatprep.subr.bf16.mxu0 0
    %597 = vmatpush1.bf16.xpose.msra.mxu0 0
    %598 = vmatprep.subr.bf16.mxu0 0
    %599 = vmatpush1.bf16.xpose.msra.mxu0 0
    %600 = vmatprep.subr.bf16.mxu0 0
    %601 = vmatpush1.bf16.xpose.msra.mxu0 0
    %602 = vmatprep.subr.bf16.mxu0 0
    %603 = vmatpush1.bf16.xpose.msra.mxu0 0
    %604 = vmatprep.subr.bf16.mxu0 0
    %605 = vmatpush1.bf16.xpose.msra.mxu0 0
    %606 = vmatprep.subr.bf16.mxu0 0
    %607 = vmatpush1.bf16.xpose.msra.mxu0 0
    %608 = vmatprep.subr.bf16.mxu0 0
    %609 = vmatpush1.bf16.xpose.msra.mxu0 0
    %610 = vmatprep.subr.bf16.mxu0 0
    %611 = vmatpush1.bf16.xpose.msra.mxu0 0
    %612 = vmatprep.subr.bf16.mxu0 0
    %613 = vmatpush1.bf16.xpose.msra.mxu0 0
    %614 = vmatprep.subr.bf16.mxu0 0
    %615 = vmatpush1.bf16.xpose.msra.mxu0 0
    %616 = vmatprep.subr.bf16.mxu0 0
    %617 = vmatpush1.bf16.xpose.msra.mxu0 0
    %618 = vmatprep.subr.bf16.mxu0 0
    %619 = vmatpush1.bf16.xpose.msra.mxu0 0
    %620 = vmatprep.subr.bf16.mxu0 0
    %621 = vmatpush1.bf16.xpose.msra.mxu0 0
    %622 = vmatprep.subr.bf16.mxu0 0
    %623 = vmatpush1.bf16.xpose.msra.mxu0 0
    %624 = vmatprep.mubr.bf16.mxu0 0
    %625 = vmatmul.mubr.bf16.gmra.mrb[0].mxu0 %v587
    %v626 = vpop.f32.mrb[0].mxu0
    %v627 = vadd.f32 %v88, %v626
    %v628 = vpop.f32.mrb[0].mxu0
    %v629 = vpop.f32.mrb[0].mxu0
    %v630 = vpop.f32.mrb[0].mxu0
    %631 = vdwg.mxu0
    %v632 = vsel %vm242, %v284, -inf
    %633 = vmax.xlane.f32.xlu0 %v632
    %v634 = vpop.xlane.xlu0 %633
    %v635 = vsel %vm242, %v333, -inf
    %636 = vmax.xlane.f32.xlu0 %v635
    %v637 = vpop.xlane.xlu0 %636
    %v638 = vsel %vm242, %v382, -inf
    %639 = vmax.xlane.f32.xlu0 %v638
    %v640 = vpop.xlane.xlu0 %639
    %v641 = vsel %vm242, %v431, -inf
    %642 = vmax.xlane.f32.xlu0 %v641
    %v643 = vpop.xlane.xlu0 %642
    %v644 = vsel %vm242, %v480, -inf
    %645 = vmax.xlane.f32.xlu0 %v644
    %v646 = vpop.xlane.xlu0 %645
    %v647 = vsel %vm242, %v529, -inf
    %648 = vmax.xlane.f32.xlu0 %v647
    %v649 = vpop.xlane.xlu0 %648
    %v650 = vsel %vm242, %v578, -inf
    %651 = vmax.xlane.f32.xlu0 %v650
    %v652 = vpop.xlane.xlu0 %651
    %v653 = vsel %vm242, %v627, -inf
    %654 = vmax.xlane.f32.xlu0 %v653
    %v655 = vpop.xlane.xlu0 %654
    %v656 = vsub.f32 %v284, %v634
    %v657 = vsub.f32 %v333, %v637
    %v658 = vsub.f32 %v382, %v640
    %v659 = vsub.f32 %v431, %v643
    %v660 = vsub.f32 %v480, %v646
    %v661 = vsub.f32 %v529, %v649
    %v662 = vsub.f32 %v578, %v652
    %v663 = vsub.f32 %v627, %v655
    %v664 = vmul.f32 %v656, 1.442695
    %v665 = vpow.pop %v664
    %v666 = vmul.f32 %v657, 1.442695
    %v667 = vpow.pop %v666
    %v668 = vmul.f32 %v658, 1.442695
    %v669 = vpow.pop %v668
    %v670 = vmul.f32 %v659, 1.442695
    %v671 = vpow.pop %v670
    %v672 = vmul.f32 %v660, 1.442695
    %v673 = vpow.pop %v672
    %v674 = vmul.f32 %v661, 1.442695
    %v675 = vpow.pop %v674
    %v676 = vmul.f32 %v662, 1.442695
    %v677 = vpow.pop %v676
    %v678 = vmul.f32 %v663, 1.442695
    %v679 = vpow.pop %v678
    %v680 = vsel %vm242, %v665, 0.0
    %681 = vadd.xlane.f32.xlu0 %v680
    %v682 = vpop.xlane.xlu0 %681
    %v683 = vsel %vm242, %v667, 0.0
    %684 = vadd.xlane.f32.xlu0 %v683
    %v685 = vpop.xlane.xlu0 %684
    %v686 = vsel %vm242, %v669, 0.0
    %687 = vadd.xlane.f32.xlu0 %v686
    %v688 = vpop.xlane.xlu0 %687
    %v689 = vsel %vm242, %v671, 0.0
    %690 = vadd.xlane.f32.xlu0 %v689
    %v691 = vpop.xlane.xlu0 %690
    %v692 = vsel %vm242, %v673, 0.0
    %693 = vadd.xlane.f32.xlu0 %v692
    %v694 = vpop.xlane.xlu0 %693
    %v695 = vsel %vm242, %v675, 0.0
    %696 = vadd.xlane.f32.xlu0 %v695
    %v697 = vpop.xlane.xlu0 %696
    %v698 = vsel %vm242, %v677, 0.0
    %699 = vadd.xlane.f32.xlu0 %v698
    %v700 = vpop.xlane.xlu0 %699
    %v701 = vsel %vm242, %v679, 0.0
    %702 = vadd.xlane.f32.xlu0 %v701
    %v703 = vpop.xlane.xlu0 %702
    %v704 = vrcp.pop %v682
    %v705 = vrcp.pop %v685
    %v706 = vrcp.pop %v688
    %v707 = vrcp.pop %v691
    %v708 = vrcp.pop %v694
    %v709 = vrcp.pop %v697
    %v710 = vrcp.pop %v700
    %v711 = vrcp.pop %v703
    %v712 = vmul.f32 %v665, %v704
    %v713 = vmul.f32 %v667, %v705
    %v714 = vmul.f32 %v669, %v706
    %v715 = vmul.f32 %v671, %v707
    %v716 = vmul.f32 %v673, %v708
    %v717 = vmul.f32 %v675, %v709
    %v718 = vmul.f32 %v677, %v710
    %v719 = vmul.f32 %v679, %v711
    %v720 = vpack.c.bf16 %v712, %v712
    %v721 = vpack.c.bf16 %v713, %v713
    %v722 = vpack.c.bf16 %v714, %v714
    %v723 = vpack.c.bf16 %v715, %v715
    %v724 = vpack.c.bf16 %v716, %v716
    %v725 = vpack.c.bf16 %v717, %v717
    %v726 = vpack.c.bf16 %v718, %v718
    %v727 = vpack.c.bf16 %v719, %v719
    %728 = vrot.lane.b32.xlu0 %v231, 64
    %v729 = vpop.permute.xlu0 %728
    %v731 = vsel %vm242, %v720, 0
    %vm733 = vcmask 1043456
    %v735 = vsel %vm733, %v729, 0
    %737 = vmatprep.subr.bf16.mxu0 0
    %738 = vmatpush1.bf16.msra.mxu0 %v735
    %739 = vmatprep.subr.bf16.mxu0 0
    %740 = vmatpush1.bf16.msra.mxu0 0
    %741 = vmatprep.subr.bf16.mxu0 0
    %742 = vmatpush1.bf16.msra.mxu0 0
    %743 = vmatprep.subr.bf16.mxu0 0
    %744 = vmatpush1.bf16.msra.mxu0 0
    %745 = vmatprep.subr.bf16.mxu0 0
    %746 = vmatpush1.bf16.msra.mxu0 0
    %747 = vmatprep.subr.bf16.mxu0 0
    %748 = vmatpush1.bf16.msra.mxu0 0
    %749 = vmatprep.subr.bf16.mxu0 0
    %750 = vmatpush1.bf16.msra.mxu0 0
    %751 = vmatprep.subr.bf16.mxu0 0
    %752 = vmatpush1.bf16.msra.mxu0 0
    %753 = vmatprep.subr.bf16.mxu0 0
    %754 = vmatpush1.bf16.msra.mxu0 0
    %755 = vmatprep.subr.bf16.mxu0 0
    %756 = vmatpush1.bf16.msra.mxu0 0
    %757 = vmatprep.subr.bf16.mxu0 0
    %758 = vmatpush1.bf16.msra.mxu0 0
    %759 = vmatprep.subr.bf16.mxu0 0
    %760 = vmatpush1.bf16.msra.mxu0 0
    %761 = vmatprep.subr.bf16.mxu0 0
    %762 = vmatpush1.bf16.msra.mxu0 0
    %763 = vmatprep.subr.bf16.mxu0 0
    %764 = vmatpush1.bf16.msra.mxu0 0
    %765 = vmatprep.subr.bf16.mxu0 0
    %766 = vmatpush1.bf16.msra.mxu0 0
    %767 = vmatprep.subr.bf16.mxu0 0
    %768 = vmatpush1.bf16.msra.mxu0 0
    %769 = vmatprep.mubr.bf16.mxu0 0
    %770 = vmatmul.mubr.bf16.gmra.mrb[0].mxu0 %v731
    %v771 = vpop.f32.mrb[0].mxu0
    %v772 = vadd.f32 0.0, %v771
    %v773 = vpop.f32.mrb[0].mxu0
    %v774 = vpop.f32.mrb[0].mxu0
    %v775 = vpop.f32.mrb[0].mxu0
    %776 = vdwg.mxu0
    %777 = vrot.lane.b32.xlu0 %v232, 64
    %v778 = vpop.permute.xlu0 %777
    %v780 = vsel %vm242, %v721, 0
    %v783 = vsel %vm733, %v778, 0
    %785 = vmatprep.subr.bf16.mxu0 0
    %786 = vmatpush1.bf16.msra.mxu0 %v783
    %787 = vmatprep.subr.bf16.mxu0 0
    %788 = vmatpush1.bf16.msra.mxu0 0
    %789 = vmatprep.subr.bf16.mxu0 0
    %790 = vmatpush1.bf16.msra.mxu0 0
    %791 = vmatprep.subr.bf16.mxu0 0
    %792 = vmatpush1.bf16.msra.mxu0 0
    %793 = vmatprep.subr.bf16.mxu0 0
    %794 = vmatpush1.bf16.msra.mxu0 0
    %795 = vmatprep.subr.bf16.mxu0 0
    %796 = vmatpush1.bf16.msra.mxu0 0
    %797 = vmatprep.subr.bf16.mxu0 0
    %798 = vmatpush1.bf16.msra.mxu0 0
    %799 = vmatprep.subr.bf16.mxu0 0
    %800 = vmatpush1.bf16.msra.mxu0 0
    %801 = vmatprep.subr.bf16.mxu0 0
    %802 = vmatpush1.bf16.msra.mxu0 0
    %803 = vmatprep.subr.bf16.mxu0 0
    %804 = vmatpush1.bf16.msra.mxu0 0
    %805 = vmatprep.subr.bf16.mxu0 0
    %806 = vmatpush1.bf16.msra.mxu0 0
    %807 = vmatprep.subr.bf16.mxu0 0
    %808 = vmatpush1.bf16.msra.mxu0 0
    %809 = vmatprep.subr.bf16.mxu0 0
    %810 = vmatpush1.bf16.msra.mxu0 0
    %811 = vmatprep.subr.bf16.mxu0 0
    %812 = vmatpush1.bf16.msra.mxu0 0
    %813 = vmatprep.subr.bf16.mxu0 0
    %814 = vmatpush1.bf16.msra.mxu0 0
    %815 = vmatprep.subr.bf16.mxu0 0
    %816 = vmatpush1.bf16.msra.mxu0 0
    %817 = vmatprep.mubr.bf16.mxu0 0
    %818 = vmatmul.mubr.bf16.gmra.mrb[0].mxu0 %v780
    %v819 = vpop.f32.mrb[0].mxu0
    %v820 = vadd.f32 0.0, %v819
    %v821 = vpop.f32.mrb[0].mxu0
    %v822 = vpop.f32.mrb[0].mxu0
    %v823 = vpop.f32.mrb[0].mxu0
    %824 = vdwg.mxu0
    %825 = vrot.lane.b32.xlu0 %v233, 64
    %v826 = vpop.permute.xlu0 %825
    %v828 = vsel %vm242, %v722, 0
    %v831 = vsel %vm733, %v826, 0
    %833 = vmatprep.subr.bf16.mxu0 0
    %834 = vmatpush1.bf16.msra.mxu0 %v831
    %835 = vmatprep.subr.bf16.mxu0 0
    %836 = vmatpush1.bf16.msra.mxu0 0
    %837 = vmatprep.subr.bf16.mxu0 0
    %838 = vmatpush1.bf16.msra.mxu0 0
    %839 = vmatprep.subr.bf16.mxu0 0
    %840 = vmatpush1.bf16.msra.mxu0 0
    %841 = vmatprep.subr.bf16.mxu0 0
    %842 = vmatpush1.bf16.msra.mxu0 0
    %843 = vmatprep.subr.bf16.mxu0 0
    %844 = vmatpush1.bf16.msra.mxu0 0
    %845 = vmatprep.subr.bf16.mxu0 0
    %846 = vmatpush1.bf16.msra.mxu0 0
    %847 = vmatprep.subr.bf16.mxu0 0
    %848 = vmatpush1.bf16.msra.mxu0 0
    %849 = vmatprep.subr.bf16.mxu0 0
    %850 = vmatpush1.bf16.msra.mxu0 0
    %851 = vmatprep.subr.bf16.mxu0 0
    %852 = vmatpush1.bf16.msra.mxu0 0
    %853 = vmatprep.subr.bf16.mxu0 0
    %854 = vmatpush1.bf16.msra.mxu0 0
    %855 = vmatprep.subr.bf16.mxu0 0
    %856 = vmatpush1.bf16.msra.mxu0 0
    %857 = vmatprep.subr.bf16.mxu0 0
    %858 = vmatpush1.bf16.msra.mxu0 0
    %859 = vmatprep.subr.bf16.mxu0 0
    %860 = vmatpush1.bf16.msra.mxu0 0
    %861 = vmatprep.subr.bf16.mxu0 0
    %862 = vmatpush1.bf16.msra.mxu0 0
    %863 = vmatprep.subr.bf16.mxu0 0
    %864 = vmatpush1.bf16.msra.mxu0 0
    %865 = vmatprep.mubr.bf16.mxu0 0
    %866 = vmatmul.mubr.bf16.gmra.mrb[0].mxu0 %v828
    %v867 = vpop.f32.mrb[0].mxu0
    %v868 = vadd.f32 0.0, %v867
    %v869 = vpop.f32.mrb[0].mxu0
    %v870 = vpop.f32.mrb[0].mxu0
    %v871 = vpop.f32.mrb[0].mxu0
    %872 = vdwg.mxu0
    %873 = vrot.lane.b32.xlu0 %v234, 64
    %v874 = vpop.permute.xlu0 %873
    %v876 = vsel %vm242, %v723, 0
    %v879 = vsel %vm733, %v874, 0
    %881 = vmatprep.subr.bf16.mxu0 0
    %882 = vmatpush1.bf16.msra.mxu0 %v879
    %883 = vmatprep.subr.bf16.mxu0 0
    %884 = vmatpush1.bf16.msra.mxu0 0
    %885 = vmatprep.subr.bf16.mxu0 0
    %886 = vmatpush1.bf16.msra.mxu0 0
    %887 = vmatprep.subr.bf16.mxu0 0
    %888 = vmatpush1.bf16.msra.mxu0 0
    %889 = vmatprep.subr.bf16.mxu0 0
    %890 = vmatpush1.bf16.msra.mxu0 0
    %891 = vmatprep.subr.bf16.mxu0 0
    %892 = vmatpush1.bf16.msra.mxu0 0
    %893 = vmatprep.subr.bf16.mxu0 0
    %894 = vmatpush1.bf16.msra.mxu0 0
    %895 = vmatprep.subr.bf16.mxu0 0
    %896 = vmatpush1.bf16.msra.mxu0 0
    %897 = vmatprep.subr.bf16.mxu0 0
    %898 = vmatpush1.bf16.msra.mxu0 0
    %899 = vmatprep.subr.bf16.mxu0 0
    %900 = vmatpush1.bf16.msra.mxu0 0
    %901 = vmatprep.subr.bf16.mxu0 0
    %902 = vmatpush1.bf16.msra.mxu0 0
    %903 = vmatprep.subr.bf16.mxu0 0
    %904 = vmatpush1.bf16.msra.mxu0 0
    %905 = vmatprep.subr.bf16.mxu0 0
    %906 = vmatpush1.bf16.msra.mxu0 0
    %907 = vmatprep.subr.bf16.mxu0 0
    %908 = vmatpush1.bf16.msra.mxu0 0
    %909 = vmatprep.subr.bf16.mxu0 0
    %910 = vmatpush1.bf16.msra.mxu0 0
    %911 = vmatprep.subr.bf16.mxu0 0
    %912 = vmatpush1.bf16.msra.mxu0 0
    %913 = vmatprep.mubr.bf16.mxu0 0
    %914 = vmatmul.mubr.bf16.gmra.mrb[0].mxu0 %v876
    %v915 = vpop.f32.mrb[0].mxu0
    %v916 = vadd.f32 0.0, %v915
    %v917 = vpop.f32.mrb[0].mxu0
    %v918 = vpop.f32.mrb[0].mxu0
    %v919 = vpop.f32.mrb[0].mxu0
    %920 = vdwg.mxu0
    %921 = vrot.lane.b32.xlu0 %v235, 64
    %v922 = vpop.permute.xlu0 %921
    %v924 = vsel %vm242, %v724, 0
    %v927 = vsel %vm733, %v922, 0
    %929 = vmatprep.subr.bf16.mxu0 0
    %930 = vmatpush1.bf16.msra.mxu0 %v927
    %931 = vmatprep.subr.bf16.mxu0 0
    %932 = vmatpush1.bf16.msra.mxu0 0
    %933 = vmatprep.subr.bf16.mxu0 0
    %934 = vmatpush1.bf16.msra.mxu0 0
    %935 = vmatprep.subr.bf16.mxu0 0
    %936 = vmatpush1.bf16.msra.mxu0 0
    %937 = vmatprep.subr.bf16.mxu0 0
    %938 = vmatpush1.bf16.msra.mxu0 0
    %939 = vmatprep.subr.bf16.mxu0 0
    %940 = vmatpush1.bf16.msra.mxu0 0
    %941 = vmatprep.subr.bf16.mxu0 0
    %942 = vmatpush1.bf16.msra.mxu0 0
    %943 = vmatprep.subr.bf16.mxu0 0
    %944 = vmatpush1.bf16.msra.mxu0 0
    %945 = vmatprep.subr.bf16.mxu0 0
    %946 = vmatpush1.bf16.msra.mxu0 0
    %947 = vmatprep.subr.bf16.mxu0 0
    %948 = vmatpush1.bf16.msra.mxu0 0
    %949 = vmatprep.subr.bf16.mxu0 0
    %950 = vmatpush1.bf16.msra.mxu0 0
    %951 = vmatprep.subr.bf16.mxu0 0
    %952 = vmatpush1.bf16.msra.mxu0 0
    %953 = vmatprep.subr.bf16.mxu0 0
    %954 = vmatpush1.bf16.msra.mxu0 0
    %955 = vmatprep.subr.bf16.mxu0 0
    %956 = vmatpush1.bf16.msra.mxu0 0
    %957 = vmatprep.subr.bf16.mxu0 0
    %958 = vmatpush1.bf16.msra.mxu0 0
    %959 = vmatprep.subr.bf16.mxu0 0
    %960 = vmatpush1.bf16.msra.mxu0 0
    %961 = vmatprep.mubr.bf16.mxu0 0
    %962 = vmatmul.mubr.bf16.gmra.mrb[0].mxu0 %v924
    %v963 = vpop.f32.mrb[0].mxu0
    %v964 = vadd.f32 0.0, %v963
    %v965 = vpop.f32.mrb[0].mxu0
    %v966 = vpop.f32.mrb[0].mxu0
    %v967 = vpop.f32.mrb[0].mxu0
    %968 = vdwg.mxu0
    %969 = vrot.lane.b32.xlu0 %v236, 64
    %v970 = vpop.permute.xlu0 %969
    %v972 = vsel %vm242, %v725, 0
    %v975 = vsel %vm733, %v970, 0
    %977 = vmatprep.subr.bf16.mxu0 0
    %978 = vmatpush1.bf16.msra.mxu0 %v975
    %979 = vmatprep.subr.bf16.mxu0 0
    %980 = vmatpush1.bf16.msra.mxu0 0
    %981 = vmatprep.subr.bf16.mxu0 0
    %982 = vmatpush1.bf16.msra.mxu0 0
    %983 = vmatprep.subr.bf16.mxu0 0
    %984 = vmatpush1.bf16.msra.mxu0 0
    %985 = vmatprep.subr.bf16.mxu0 0
    %986 = vmatpush1.bf16.msra.mxu0 0
    %987 = vmatprep.subr.bf16.mxu0 0
    %988 = vmatpush1.bf16.msra.mxu0 0
    %989 = vmatprep.subr.bf16.mxu0 0
    %990 = vmatpush1.bf16.msra.mxu0 0
    %991 = vmatprep.subr.bf16.mxu0 0
    %992 = vmatpush1.bf16.msra.mxu0 0
    %993 = vmatprep.subr.bf16.mxu0 0
    %994 = vmatpush1.bf16.msra.mxu0 0
    %995 = vmatprep.subr.bf16.mxu0 0
    %996 = vmatpush1.bf16.msra.mxu0 0
    %997 = vmatprep.subr.bf16.mxu0 0
    %998 = vmatpush1.bf16.msra.mxu0 0
    %999 = vmatprep.subr.bf16.mxu0 0
    %1000 = vmatpush1.bf16.msra.mxu0 0
    %1001 = vmatprep.subr.bf16.mxu0 0
    %1002 = vmatpush1.bf16.msra.mxu0 0
    %1003 = vmatprep.subr.bf16.mxu0 0
    %1004 = vmatpush1.bf16.msra.mxu0 0
    %1005 = vmatprep.subr.bf16.mxu0 0
    %1006 = vmatpush1.bf16.msra.mxu0 0
    %1007 = vmatprep.subr.bf16.mxu0 0
    %1008 = vmatpush1.bf16.msra.mxu0 0
    %1009 = vmatprep.mubr.bf16.mxu0 0
    %1010 = vmatmul.mubr.bf16.gmra.mrb[0].mxu0 %v972
    %v1011 = vpop.f32.mrb[0].mxu0
    %v1012 = vadd.f32 0.0, %v1011
    %v1013 = vpop.f32.mrb[0].mxu0
    %v1014 = vpop.f32.mrb[0].mxu0
    %v1015 = vpop.f32.mrb[0].mxu0
    %1016 = vdwg.mxu0
    %1017 = vrot.lane.b32.xlu0 %v237, 64
    %v1018 = vpop.permute.xlu0 %1017
    %v1020 = vsel %vm242, %v726, 0
    %v1023 = vsel %vm733, %v1018, 0
    %1025 = vmatprep.subr.bf16.mxu0 0
    %1026 = vmatpush1.bf16.msra.mxu0 %v1023
    %1027 = vmatprep.subr.bf16.mxu0 0
    %1028 = vmatpush1.bf16.msra.mxu0 0
    %1029 = vmatprep.subr.bf16.mxu0 0
    %1030 = vmatpush1.bf16.msra.mxu0 0
    %1031 = vmatprep.subr.bf16.mxu0 0
    %1032 = vmatpush1.bf16.msra.mxu0 0
    %1033 = vmatprep.subr.bf16.mxu0 0
    %1034 = vmatpush1.bf16.msra.mxu0 0
    %1035 = vmatprep.subr.bf16.mxu0 0
    %1036 = vmatpush1.bf16.msra.mxu0 0
    %1037 = vmatprep.subr.bf16.mxu0 0
    %1038 = vmatpush1.bf16.msra.mxu0 0
    %1039 = vmatprep.subr.bf16.mxu0 0
    %1040 = vmatpush1.bf16.msra.mxu0 0
    %1041 = vmatprep.subr.bf16.mxu0 0
    %1042 = vmatpush1.bf16.msra.mxu0 0
    %1043 = vmatprep.subr.bf16.mxu0 0
    %1044 = vmatpush1.bf16.msra.mxu0 0
    %1045 = vmatprep.subr.bf16.mxu0 0
    %1046 = vmatpush1.bf16.msra.mxu0 0
    %1047 = vmatprep.subr.bf16.mxu0 0
    %1048 = vmatpush1.bf16.msra.mxu0 0
    %1049 = vmatprep.subr.bf16.mxu0 0
    %1050 = vmatpush1.bf16.msra.mxu0 0
    %1051 = vmatprep.subr.bf16.mxu0 0
    %1052 = vmatpush1.bf16.msra.mxu0 0
    %1053 = vmatprep.subr.bf16.mxu0 0
    %1054 = vmatpush1.bf16.msra.mxu0 0
    %1055 = vmatprep.subr.bf16.mxu0 0
    %1056 = vmatpush1.bf16.msra.mxu0 0
    %1057 = vmatprep.mubr.bf16.mxu0 0
    %1058 = vmatmul.mubr.bf16.gmra.mrb[0].mxu0 %v1020
    %v1059 = vpop.f32.mrb[0].mxu0
    %v1060 = vadd.f32 0.0, %v1059
    %v1061 = vpop.f32.mrb[0].mxu0
    %v1062 = vpop.f32.mrb[0].mxu0
    %v1063 = vpop.f32.mrb[0].mxu0
    %1064 = vdwg.mxu0
    %1065 = vrot.lane.b32.xlu0 %v238, 64
    %v1066 = vpop.permute.xlu0 %1065
    %v1068 = vsel %vm242, %v727, 0
    %v1071 = vsel %vm733, %v1066, 0
    %1073 = vmatprep.subr.bf16.mxu0 0
    %1074 = vmatpush1.bf16.msra.mxu0 %v1071
    %1075 = vmatprep.subr.bf16.mxu0 0
    %1076 = vmatpush1.bf16.msra.mxu0 0
    %1077 = vmatprep.subr.bf16.mxu0 0
    %1078 = vmatpush1.bf16.msra.mxu0 0
    %1079 = vmatprep.subr.bf16.mxu0 0
    %1080 = vmatpush1.bf16.msra.mxu0 0
    %1081 = vmatprep.subr.bf16.mxu0 0
    %1082 = vmatpush1.bf16.msra.mxu0 0
    %1083 = vmatprep.subr.bf16.mxu0 0
    %1084 = vmatpush1.bf16.msra.mxu0 0
    %1085 = vmatprep.subr.bf16.mxu0 0
    %1086 = vmatpush1.bf16.msra.mxu0 0
    %1087 = vmatprep.subr.bf16.mxu0 0
    %1088 = vmatpush1.bf16.msra.mxu0 0
    %1089 = vmatprep.subr.bf16.mxu0 0
    %1090 = vmatpush1.bf16.msra.mxu0 0
    %1091 = vmatprep.subr.bf16.mxu0 0
    %1092 = vmatpush1.bf16.msra.mxu0 0
    %1093 = vmatprep.subr.bf16.mxu0 0
    %1094 = vmatpush1.bf16.msra.mxu0 0
    %1095 = vmatprep.subr.bf16.mxu0 0
    %1096 = vmatpush1.bf16.msra.mxu0 0
    %1097 = vmatprep.subr.bf16.mxu0 0
    %1098 = vmatpush1.bf16.msra.mxu0 0
    %1099 = vmatprep.subr.bf16.mxu0 0
    %1100 = vmatpush1.bf16.msra.mxu0 0
    %1101 = vmatprep.subr.bf16.mxu0 0
    %1102 = vmatpush1.bf16.msra.mxu0 0
    %1103 = vmatprep.subr.bf16.mxu0 0
    %1104 = vmatpush1.bf16.msra.mxu0 0
    %1105 = vmatprep.mubr.bf16.mxu0 0
    %1106 = vmatmul.mubr.bf16.gmra.mrb[0].mxu0 %v1068
    %v1107 = vpop.f32.mrb[0].mxu0
    %v1108 = vadd.f32 0.0, %v1107
    %v1109 = vpop.f32.mrb[0].mxu0
    %v1110 = vpop.f32.mrb[0].mxu0
    %v1111 = vpop.f32.mrb[0].mxu0
    %1112 = vdwg.mxu0
    %1114 = vrot.lane.b32.xlu0 %v820, 8
    %v1115 = vpop.permute.xlu0 %1114
    %1118 = vrot.lane.b32.xlu0 %v868, 16
    %v1119 = vpop.permute.xlu0 %1118
    %1122 = vrot.lane.b32.xlu0 %v916, 24
    %v1123 = vpop.permute.xlu0 %1122
    %v1125 = vsel %vm242, %v772, %v1115
    %vm1126 = vcmask 130048
    %v1127 = vsel %vm1126, %v1125, %v1119
    %vm1128 = vcmask 195584
    %v1129 = vsel %vm1128, %v1127, %v1123
    %1131 = vrot.lane.b32.xlu0 %v1012, 8
    %v1132 = vpop.permute.xlu0 %1131
    %1135 = vrot.lane.b32.xlu0 %v1060, 16
    %v1136 = vpop.permute.xlu0 %1135
    %1139 = vrot.lane.b32.xlu0 %v1108, 24
    %v1140 = vpop.permute.xlu0 %1139
    %v1142 = vsel %vm242, %v964, %v1132
    %v1143 = vsel %vm1126, %v1142, %v1136
    %v1144 = vsel %vm1128, %v1143, %v1140
    %v1145 = vpack.c.bf16 %v1144, %v1129
    %v1146 = vld [vmem:[%s6] sm:$0xf]
    %v1147 = vld [vmem:[%s6 + $0x4] sm:$0xf]
    %v1148 = vld [vmem:[%s6 + $0x8] sm:$0xf]
    %v1149 = vld [vmem:[%s6 + $0xc] sm:$0xf]
    %v1150 = vld [vmem:[%s7] sm:$0x1]
    %v1152 = vlaneseq
    %v1153 = vshrl.u32 %v1152, 7
    %v1154 = vsub.s32 0, %v1153
    %v1155 = vrot.slane %v1150, %v1154
    %v1161 = vunpack.c.l.b16 %v1146
    %v1162 = vunpack.c.l.b16 %v1147
    %v1163 = vunpack.c.l.b16 %v1148
    %v1164 = vunpack.c.l.b16 %v1149
    %v1165 = vpack.c.b16 %v1162, %v1161
    %v1166 = vpack.c.b16 %v1164, %v1163
    %v1170 = vsel %vm99, %v1145, 0
    %1172 = vmatprep.subr.bf16.mxu0 0
    %1173 = vmatpush1.bf16.msra.mxu0 %v1165
    %1174 = vmatprep.subr.bf16.mxu0 0
    %1175 = vmatpush1.bf16.msra.mxu0 %v1166
    %1176 = vmatprep.subr.bf16.mxu0 0
    %1177 = vmatpush1.bf16.msra.mxu0 0
    %1178 = vmatprep.subr.bf16.mxu0 0
    %1179 = vmatpush1.bf16.msra.mxu0 0
    %1180 = vmatprep.subr.bf16.mxu0 0
    %1181 = vmatpush1.bf16.msra.mxu0 0
    %1182 = vmatprep.subr.bf16.mxu0 0
    %1183 = vmatpush1.bf16.msra.mxu0 0
    %1184 = vmatprep.subr.bf16.mxu0 0
    %1185 = vmatpush1.bf16.msra.mxu0 0
    %1186 = vmatprep.subr.bf16.mxu0 0
    %1187 = vmatpush1.bf16.msra.mxu0 0
    %1188 = vmatprep.subr.bf16.mxu0 0
    %1189 = vmatpush1.bf16.msra.mxu0 0
    %1190 = vmatprep.subr.bf16.mxu0 0
    %1191 = vmatpush1.bf16.msra.mxu0 0
    %1192 = vmatprep.subr.bf16.mxu0 0
    %1193 = vmatpush1.bf16.msra.mxu0 0
    %1194 = vmatprep.subr.bf16.mxu0 0
    %1195 = vmatpush1.bf16.msra.mxu0 0
    %1196 = vmatprep.subr.bf16.mxu0 0
    %1197 = vmatpush1.bf16.msra.mxu0 0
    %1198 = vmatprep.subr.bf16.mxu0 0
    %1199 = vmatpush1.bf16.msra.mxu0 0
    %1200 = vmatprep.subr.bf16.mxu0 0
    %1201 = vmatpush1.bf16.msra.mxu0 0
    %1202 = vmatprep.subr.bf16.mxu0 0
    %1203 = vmatpush1.bf16.msra.mxu0 0
    %1204 = vmatprep.mubr.bf16.mxu0 0
    %1205 = vmatmul.mubr.bf16.gmra.mrb[0].mxu0 %v1170
    %v1206 = vpop.f32.mrb[0].mxu0
    %v1207 = vadd.f32 %v1155, %v1206
    %v1208 = vpop.f32.mrb[0].mxu0
    %v1209 = vpop.f32.mrb[0].mxu0
    %v1210 = vadd.f32 %v1155, %v1209
    %v1211 = vpop.f32.mrb[0].mxu0
    %1212 = vdwg.mxu0
    %v1213 = vadd.f32 %v85, %v1207
    %v1214 = vadd.f32 %v86, %v1210
    %v1215 = vld [vmem:[%s20] sm:$0x1]
    %v1216 = vld [vmem:[%s21] sm:$0x1]
    %v1217 = vsel %vm99, %v1213, 0.0
    %1218 = vadd.xlane.f32.xlu0 %v1217
    %v1219 = vpop.xlane.xlu0 %1218
    %v1220 = vsel %vm99, %v1214, 0.0
    %1221 = vadd.xlane.f32.xlu0 %v1220
    %v1222 = vpop.xlane.xlu0 %1221
    %v1223 = vmul.f32 %v1219, %v106
    %v1224 = vmul.f32 %v1222, %v106
    %v1225 = vsub.f32 %v1213, %v1223
    %v1226 = vsub.f32 %v1214, %v1224
    %v1227 = vmul.f32 %v1225, %v1225
    %v1228 = vmul.f32 %v1226, %v1226
    %v1229 = vsel %vm99, %v1227, 0.0
    %1230 = vadd.xlane.f32.xlu0 %v1229
    %v1231 = vpop.xlane.xlu0 %1230
    %v1232 = vsel %vm99, %v1228, 0.0
    %1233 = vadd.xlane.f32.xlu0 %v1232
    %v1234 = vpop.xlane.xlu0 %1233
    %v1235 = vmul.f32 %v1231, 0.032258064
    %v1236 = vmul.f32 %v1234, 0.032258064
    %v1237 = vadd.f32 %v1235, 1e-12
    %v1238 = vadd.f32 %v1236, 1e-12
    %v1239 = vrsqrt.pop %v1237
    %v1240 = vrsqrt.pop %v1238
    %v1241 = vmul.f32 %v1225, %v1239
    %v1242 = vmul.f32 %v1226, %v1240
    %v1244 = vlaneseq
    %v1245 = vshrl.u32 %v1244, 7
    %v1246 = vsub.s32 0, %v1245
    %v1247 = vrot.slane %v1215, %v1246
    %v1249 = vmul.f32 %v1247, %v1241
    %v1250 = vmul.f32 %v1247, %v1242
    %v1252 = vlaneseq
    %v1253 = vshrl.u32 %v1252, 7
    %v1254 = vsub.s32 0, %v1253
    %v1255 = vrot.slane %v1216, %v1254
    %v1257 = vadd.f32 %v1249, %v1255
    %v1258 = vadd.f32 %v1250, %v1255
    %v1259 = vpack.c.bf16 %v1258, %v1257
    %v1260 = vld [vmem:[%s8] sm:$0xf]
    %v1261 = vld [vmem:[%s8 + $0x4] sm:$0xf]
    %v1262 = vld [vmem:[%s8 + $0x8] sm:$0xf]
    %v1263 = vld [vmem:[%s8 + $0xc] sm:$0xf]
    %v1264 = vld [vmem:[%s9] sm:$0x1]
    %v1266 = vlaneseq
    %v1267 = vshrl.u32 %v1266, 7
    %v1268 = vsub.s32 0, %v1267
    %v1269 = vrot.slane %v1264, %v1268
    %v1275 = vunpack.c.l.b16 %v1260
    %v1276 = vunpack.c.l.b16 %v1261
    %v1277 = vunpack.c.l.b16 %v1262
    %v1278 = vunpack.c.l.b16 %v1263
    %v1279 = vpack.c.b16 %v1276, %v1275
    %v1280 = vpack.c.b16 %v1278, %v1277
    %v1284 = vsel %vm99, %v1259, 0
    %1286 = vmatprep.subr.bf16.mxu0 0
    %1287 = vmatpush1.bf16.msra.mxu0 %v1279
    %1288 = vmatprep.subr.bf16.mxu0 0
    %1289 = vmatpush1.bf16.msra.mxu0 %v1280
    %1290 = vmatprep.subr.bf16.mxu0 0
    %1291 = vmatpush1.bf16.msra.mxu0 0
    %1292 = vmatprep.subr.bf16.mxu0 0
    %1293 = vmatpush1.bf16.msra.mxu0 0
    %1294 = vmatprep.subr.bf16.mxu0 0
    %1295 = vmatpush1.bf16.msra.mxu0 0
    %1296 = vmatprep.subr.bf16.mxu0 0
    %1297 = vmatpush1.bf16.msra.mxu0 0
    %1298 = vmatprep.subr.bf16.mxu0 0
    %1299 = vmatpush1.bf16.msra.mxu0 0
    %1300 = vmatprep.subr.bf16.mxu0 0
    %1301 = vmatpush1.bf16.msra.mxu0 0
    %1302 = vmatprep.subr.bf16.mxu0 0
    %1303 = vmatpush1.bf16.msra.mxu0 0
    %1304 = vmatprep.subr.bf16.mxu0 0
    %1305 = vmatpush1.bf16.msra.mxu0 0
    %1306 = vmatprep.subr.bf16.mxu0 0
    %1307 = vmatpush1.bf16.msra.mxu0 0
    %1308 = vmatprep.subr.bf16.mxu0 0
    %1309 = vmatpush1.bf16.msra.mxu0 0
    %1310 = vmatprep.subr.bf16.mxu0 0
    %1311 = vmatpush1.bf16.msra.mxu0 0
    %1312 = vmatprep.subr.bf16.mxu0 0
    %1313 = vmatpush1.bf16.msra.mxu0 0
    %1314 = vmatprep.subr.bf16.mxu0 0
    %1315 = vmatpush1.bf16.msra.mxu0 0
    %1316 = vmatprep.subr.bf16.mxu0 0
    %1317 = vmatpush1.bf16.msra.mxu0 0
    %1318 = vmatprep.mubr.bf16.mxu0 0
    %1319 = vmatmul.mubr.bf16.gmra.mrb[0].mxu0 %v1284
    %v1320 = vpop.f32.mrb[0].mxu0
    %v1321 = vadd.f32 %v1269, %v1320
    %v1322 = vpop.f32.mrb[0].mxu0
    %v1323 = vpop.f32.mrb[0].mxu0
    %v1324 = vadd.f32 %v1269, %v1323
    %v1325 = vpop.f32.mrb[0].mxu0
    %1326 = vdwg.mxu0
    %v1327 = vld [vmem:[%s10] sm:$0xf]
    %v1328 = vld [vmem:[%s10 + $0x4] sm:$0xf]
    %v1329 = vld [vmem:[%s10 + $0x8] sm:$0xf]
    %v1330 = vld [vmem:[%s10 + $0xc] sm:$0xf]
    %v1331 = vld [vmem:[%s11] sm:$0x1]
    %v1333 = vlaneseq
    %v1334 = vshrl.u32 %v1333, 7
    %v1335 = vsub.s32 0, %v1334
    %v1336 = vrot.slane %v1331, %v1335
    %v1342 = vunpack.c.l.b16 %v1327
    %v1343 = vunpack.c.l.b16 %v1328
    %v1344 = vunpack.c.l.b16 %v1329
    %v1345 = vunpack.c.l.b16 %v1330
    %v1346 = vpack.c.b16 %v1343, %v1342
    %v1347 = vpack.c.b16 %v1345, %v1344
    %v1351 = vsel %vm99, %v95, 0
    %v1354 = vsel %vm99, %v96, 0
    %1356 = vmatprep.subr.bf16.mxu0 0
    %1357 = vmatpush1.bf16.msra.mxu0 %v1346
    %1358 = vmatprep.subr.bf16.mxu0 0
    %1359 = vmatpush1.bf16.msra.mxu0 %v1347
    %1360 = vmatprep.subr.bf16.mxu0 0
    %1361 = vmatpush1.bf16.msra.mxu0 0
    %1362 = vmatprep.subr.bf16.mxu0 0
    %1363 = vmatpush1.bf16.msra.mxu0 0
    %1364 = vmatprep.subr.bf16.mxu0 0
    %1365 = vmatpush1.bf16.msra.mxu0 0
    %1366 = vmatprep.subr.bf16.mxu0 0
    %1367 = vmatpush1.bf16.msra.mxu0 0
    %1368 = vmatprep.subr.bf16.mxu0 0
    %1369 = vmatpush1.bf16.msra.mxu0 0
    %1370 = vmatprep.subr.bf16.mxu0 0
    %1371 = vmatpush1.bf16.msra.mxu0 0
    %1372 = vmatprep.subr.bf16.mxu0 0
    %1373 = vmatpush1.bf16.msra.mxu0 0
    %1374 = vmatprep.subr.bf16.mxu0 0
    %1375 = vmatpush1.bf16.msra.mxu0 0
    %1376 = vmatprep.subr.bf16.mxu0 0
    %1377 = vmatpush1.bf16.msra.mxu0 0
    %1378 = vmatprep.subr.bf16.mxu0 0
    %1379 = vmatpush1.bf16.msra.mxu0 0
    %1380 = vmatprep.subr.bf16.mxu0 0
    %1381 = vmatpush1.bf16.msra.mxu0 0
    %1382 = vmatprep.subr.bf16.mxu0 0
    %1383 = vmatpush1.bf16.msra.mxu0 0
    %1384 = vmatprep.subr.bf16.mxu0 0
    %1385 = vmatpush1.bf16.msra.mxu0 0
    %1386 = vmatprep.subr.bf16.mxu0 0
    %1387 = vmatpush1.bf16.msra.mxu0 0
    %1388 = vmatprep.mubr.bf16.mxu0 0
    %1389 = vmatmul.mubr.bf16.gmra.mrb[0].mxu0 %v1351
    %v1390 = vpop.f32.mrb[0].mxu0
    %v1391 = vadd.f32 %v1336, %v1390
    %v1392 = vpop.f32.mrb[0].mxu0
    %v1393 = vpop.f32.mrb[0].mxu0
    %v1394 = vadd.f32 %v1336, %v1393
    %v1395 = vpop.f32.mrb[0].mxu0
    %1396 = vmatprep.mubr.bf16.mxu0 0
    %1397 = vmatmul.mubr.bf16.gmra.mrb[0].mxu0 %v1354
    %v1398 = vpop.f32.mrb[0].mxu0
    %v1399 = vadd.f32 %v1336, %v1398
    %v1400 = vpop.f32.mrb[0].mxu0
    %v1401 = vpop.f32.mrb[0].mxu0
    %v1402 = vadd.f32 %v1336, %v1401
    %v1403 = vpop.f32.mrb[0].mxu0
    %1404 = vdwg.mxu0
    %1406 = vrot.lane.b32.xlu0 %v1321, 120
    %v1407 = vpop.permute.xlu0 %1406
    %1409 = vrot.lane.b32.xlu0 %v1321, 112
    %v1410 = vpop.permute.xlu0 %1409
    %1412 = vrot.lane.b32.xlu0 %v1321, 104
    %v1413 = vpop.permute.xlu0 %1412
    %1416 = vrot.lane.b32.xlu0 %v1324, 120
    %v1417 = vpop.permute.xlu0 %1416
    %1419 = vrot.lane.b32.xlu0 %v1324, 112
    %v1420 = vpop.permute.xlu0 %1419
    %1422 = vrot.lane.b32.xlu0 %v1324, 104
    %v1423 = vpop.permute.xlu0 %1422
    %v1425 = vpack.c.bf16 %v1321, %v1321
    %v1426 = vpack.c.bf16 %v1407, %v1407
    %v1427 = vpack.c.bf16 %v1410, %v1410
    %v1428 = vpack.c.bf16 %v1413, %v1413
    %v1429 = vpack.c.bf16 %v1324, %v1324
    %v1430 = vpack.c.bf16 %v1417, %v1417
    %v1431 = vpack.c.bf16 %v1420, %v1420
    %v1432 = vpack.c.bf16 %v1423, %v1423
    %1435 = vrot.lane.b32.xlu0 %v1391, 120
    %v1436 = vpop.permute.xlu0 %1435
    %1437 = vrot.lane.b32.xlu0 %v1394, 120
    %v1438 = vpop.permute.xlu0 %1437
    %1441 = vrot.lane.b32.xlu0 %v1391, 112
    %v1442 = vpop.permute.xlu0 %1441
    %1443 = vrot.lane.b32.xlu0 %v1394, 112
    %v1444 = vpop.permute.xlu0 %1443
    %1447 = vrot.lane.b32.xlu0 %v1391, 104
    %v1448 = vpop.permute.xlu0 %1447
    %1449 = vrot.lane.b32.xlu0 %v1394, 104
    %v1450 = vpop.permute.xlu0 %1449
    %1455 = vrot.lane.b32.xlu0 %v1399, 120
    %v1456 = vpop.permute.xlu0 %1455
    %1457 = vrot.lane.b32.xlu0 %v1402, 120
    %v1458 = vpop.permute.xlu0 %1457
    %1461 = vrot.lane.b32.xlu0 %v1399, 112
    %v1462 = vpop.permute.xlu0 %1461
    %1463 = vrot.lane.b32.xlu0 %v1402, 112
    %v1464 = vpop.permute.xlu0 %1463
    %1467 = vrot.lane.b32.xlu0 %v1399, 104
    %v1468 = vpop.permute.xlu0 %1467
    %1469 = vrot.lane.b32.xlu0 %v1402, 104
    %v1470 = vpop.permute.xlu0 %1469
    %v1473 = vpack.c.bf16 %v1394, %v1391
    %v1474 = vpack.c.bf16 %v1438, %v1436
    %v1475 = vpack.c.bf16 %v1444, %v1442
    %v1476 = vpack.c.bf16 %v1450, %v1448
    %v1477 = vpack.c.bf16 %v1402, %v1399
    %v1478 = vpack.c.bf16 %v1458, %v1456
    %v1479 = vpack.c.bf16 %v1464, %v1462
    %v1480 = vpack.c.bf16 %v1470, %v1468
    %v1482 = vsel %vm242, %v1425, 0
    %v1485 = vsel %vm242, %v1473, 0
    %1487 = vmatprep.subr.bf16.mxu0 0
    %1488 = vmatpush1.bf16.xpose.msra.mxu0 %v1485
    %1489 = vmatprep.subr.bf16.mxu0 0
    %1490 = vmatpush1.bf16.xpose.msra.mxu0 0
    %1491 = vmatprep.subr.bf16.mxu0 0
    %1492 = vmatpush1.bf16.xpose.msra.mxu0 0
    %1493 = vmatprep.subr.bf16.mxu0 0
    %1494 = vmatpush1.bf16.xpose.msra.mxu0 0
    %1495 = vmatprep.subr.bf16.mxu0 0
    %1496 = vmatpush1.bf16.xpose.msra.mxu0 0
    %1497 = vmatprep.subr.bf16.mxu0 0
    %1498 = vmatpush1.bf16.xpose.msra.mxu0 0
    %1499 = vmatprep.subr.bf16.mxu0 0
    %1500 = vmatpush1.bf16.xpose.msra.mxu0 0
    %1501 = vmatprep.subr.bf16.mxu0 0
    %1502 = vmatpush1.bf16.xpose.msra.mxu0 0
    %1503 = vmatprep.subr.bf16.mxu0 0
    %1504 = vmatpush1.bf16.xpose.msra.mxu0 0
    %1505 = vmatprep.subr.bf16.mxu0 0
    %1506 = vmatpush1.bf16.xpose.msra.mxu0 0
    %1507 = vmatprep.subr.bf16.mxu0 0
    %1508 = vmatpush1.bf16.xpose.msra.mxu0 0
    %1509 = vmatprep.subr.bf16.mxu0 0
    %1510 = vmatpush1.bf16.xpose.msra.mxu0 0
    %1511 = vmatprep.subr.bf16.mxu0 0
    %1512 = vmatpush1.bf16.xpose.msra.mxu0 0
    %1513 = vmatprep.subr.bf16.mxu0 0
    %1514 = vmatpush1.bf16.xpose.msra.mxu0 0
    %1515 = vmatprep.subr.bf16.mxu0 0
    %1516 = vmatpush1.bf16.xpose.msra.mxu0 0
    %1517 = vmatprep.subr.bf16.mxu0 0
    %1518 = vmatpush1.bf16.xpose.msra.mxu0 0
    %1519 = vmatprep.mubr.bf16.mxu0 0
    %1520 = vmatmul.mubr.bf16.gmra.mrb[0].mxu0 %v1482
    %v1521 = vpop.f32.mrb[0].mxu0
    %v1522 = vadd.f32 %v89, %v1521
    %v1523 = vpop.f32.mrb[0].mxu0
    %v1524 = vpop.f32.mrb[0].mxu0
    %v1525 = vpop.f32.mrb[0].mxu0
    %1526 = vdwg.mxu0
    %v1528 = vsel %vm242, %v1426, 0
    %v1531 = vsel %vm242, %v1474, 0
    %1533 = vmatprep.subr.bf16.mxu0 0
    %1534 = vmatpush1.bf16.xpose.msra.mxu0 %v1531
    %1535 = vmatprep.subr.bf16.mxu0 0
    %1536 = vmatpush1.bf16.xpose.msra.mxu0 0
    %1537 = vmatprep.subr.bf16.mxu0 0
    %1538 = vmatpush1.bf16.xpose.msra.mxu0 0
    %1539 = vmatprep.subr.bf16.mxu0 0
    %1540 = vmatpush1.bf16.xpose.msra.mxu0 0
    %1541 = vmatprep.subr.bf16.mxu0 0
    %1542 = vmatpush1.bf16.xpose.msra.mxu0 0
    %1543 = vmatprep.subr.bf16.mxu0 0
    %1544 = vmatpush1.bf16.xpose.msra.mxu0 0
    %1545 = vmatprep.subr.bf16.mxu0 0
    %1546 = vmatpush1.bf16.xpose.msra.mxu0 0
    %1547 = vmatprep.subr.bf16.mxu0 0
    %1548 = vmatpush1.bf16.xpose.msra.mxu0 0
    %1549 = vmatprep.subr.bf16.mxu0 0
    %1550 = vmatpush1.bf16.xpose.msra.mxu0 0
    %1551 = vmatprep.subr.bf16.mxu0 0
    %1552 = vmatpush1.bf16.xpose.msra.mxu0 0
    %1553 = vmatprep.subr.bf16.mxu0 0
    %1554 = vmatpush1.bf16.xpose.msra.mxu0 0
    %1555 = vmatprep.subr.bf16.mxu0 0
    %1556 = vmatpush1.bf16.xpose.msra.mxu0 0
    %1557 = vmatprep.subr.bf16.mxu0 0
    %1558 = vmatpush1.bf16.xpose.msra.mxu0 0
    %1559 = vmatprep.subr.bf16.mxu0 0
    %1560 = vmatpush1.bf16.xpose.msra.mxu0 0
    %1561 = vmatprep.subr.bf16.mxu0 0
    %1562 = vmatpush1.bf16.xpose.msra.mxu0 0
    %1563 = vmatprep.subr.bf16.mxu0 0
    %1564 = vmatpush1.bf16.xpose.msra.mxu0 0
    %1565 = vmatprep.mubr.bf16.mxu0 0
    %1566 = vmatmul.mubr.bf16.gmra.mrb[0].mxu0 %v1528
    %v1567 = vpop.f32.mrb[0].mxu0
    %v1568 = vadd.f32 %v89, %v1567
    %v1569 = vpop.f32.mrb[0].mxu0
    %v1570 = vpop.f32.mrb[0].mxu0
    %v1571 = vpop.f32.mrb[0].mxu0
    %1572 = vdwg.mxu0
    %v1574 = vsel %vm242, %v1427, 0
    %v1577 = vsel %vm242, %v1475, 0
    %1579 = vmatprep.subr.bf16.mxu0 0
    %1580 = vmatpush1.bf16.xpose.msra.mxu0 %v1577
    %1581 = vmatprep.subr.bf16.mxu0 0
    %1582 = vmatpush1.bf16.xpose.msra.mxu0 0
    %1583 = vmatprep.subr.bf16.mxu0 0
    %1584 = vmatpush1.bf16.xpose.msra.mxu0 0
    %1585 = vmatprep.subr.bf16.mxu0 0
    %1586 = vmatpush1.bf16.xpose.msra.mxu0 0
    %1587 = vmatprep.subr.bf16.mxu0 0
    %1588 = vmatpush1.bf16.xpose.msra.mxu0 0
    %1589 = vmatprep.subr.bf16.mxu0 0
    %1590 = vmatpush1.bf16.xpose.msra.mxu0 0
    %1591 = vmatprep.subr.bf16.mxu0 0
    %1592 = vmatpush1.bf16.xpose.msra.mxu0 0
    %1593 = vmatprep.subr.bf16.mxu0 0
    %1594 = vmatpush1.bf16.xpose.msra.mxu0 0
    %1595 = vmatprep.subr.bf16.mxu0 0
    %1596 = vmatpush1.bf16.xpose.msra.mxu0 0
    %1597 = vmatprep.subr.bf16.mxu0 0
    %1598 = vmatpush1.bf16.xpose.msra.mxu0 0
    %1599 = vmatprep.subr.bf16.mxu0 0
    %1600 = vmatpush1.bf16.xpose.msra.mxu0 0
    %1601 = vmatprep.subr.bf16.mxu0 0
    %1602 = vmatpush1.bf16.xpose.msra.mxu0 0
    %1603 = vmatprep.subr.bf16.mxu0 0
    %1604 = vmatpush1.bf16.xpose.msra.mxu0 0
    %1605 = vmatprep.subr.bf16.mxu0 0
    %1606 = vmatpush1.bf16.xpose.msra.mxu0 0
    %1607 = vmatprep.subr.bf16.mxu0 0
    %1608 = vmatpush1.bf16.xpose.msra.mxu0 0
    %1609 = vmatprep.subr.bf16.mxu0 0
    %1610 = vmatpush1.bf16.xpose.msra.mxu0 0
    %1611 = vmatprep.mubr.bf16.mxu0 0
    %1612 = vmatmul.mubr.bf16.gmra.mrb[0].mxu0 %v1574
    %v1613 = vpop.f32.mrb[0].mxu0
    %v1614 = vadd.f32 %v89, %v1613
    %v1615 = vpop.f32.mrb[0].mxu0
    %v1616 = vpop.f32.mrb[0].mxu0
    %v1617 = vpop.f32.mrb[0].mxu0
    %1618 = vdwg.mxu0
    %v1620 = vsel %vm242, %v1428, 0
    %v1623 = vsel %vm242, %v1476, 0
    %1625 = vmatprep.subr.bf16.mxu0 0
    %1626 = vmatpush1.bf16.xpose.msra.mxu0 %v1623
    %1627 = vmatprep.subr.bf16.mxu0 0
    %1628 = vmatpush1.bf16.xpose.msra.mxu0 0
    %1629 = vmatprep.subr.bf16.mxu0 0
    %1630 = vmatpush1.bf16.xpose.msra.mxu0 0
    %1631 = vmatprep.subr.bf16.mxu0 0
    %1632 = vmatpush1.bf16.xpose.msra.mxu0 0
    %1633 = vmatprep.subr.bf16.mxu0 0
    %1634 = vmatpush1.bf16.xpose.msra.mxu0 0
    %1635 = vmatprep.subr.bf16.mxu0 0
    %1636 = vmatpush1.bf16.xpose.msra.mxu0 0
    %1637 = vmatprep.subr.bf16.mxu0 0
    %1638 = vmatpush1.bf16.xpose.msra.mxu0 0
    %1639 = vmatprep.subr.bf16.mxu0 0
    %1640 = vmatpush1.bf16.xpose.msra.mxu0 0
    %1641 = vmatprep.subr.bf16.mxu0 0
    %1642 = vmatpush1.bf16.xpose.msra.mxu0 0
    %1643 = vmatprep.subr.bf16.mxu0 0
    %1644 = vmatpush1.bf16.xpose.msra.mxu0 0
    %1645 = vmatprep.subr.bf16.mxu0 0
    %1646 = vmatpush1.bf16.xpose.msra.mxu0 0
    %1647 = vmatprep.subr.bf16.mxu0 0
    %1648 = vmatpush1.bf16.xpose.msra.mxu0 0
    %1649 = vmatprep.subr.bf16.mxu0 0
    %1650 = vmatpush1.bf16.xpose.msra.mxu0 0
    %1651 = vmatprep.subr.bf16.mxu0 0
    %1652 = vmatpush1.bf16.xpose.msra.mxu0 0
    %1653 = vmatprep.subr.bf16.mxu0 0
    %1654 = vmatpush1.bf16.xpose.msra.mxu0 0
    %1655 = vmatprep.subr.bf16.mxu0 0
    %1656 = vmatpush1.bf16.xpose.msra.mxu0 0
    %1657 = vmatprep.mubr.bf16.mxu0 0
    %1658 = vmatmul.mubr.bf16.gmra.mrb[0].mxu0 %v1620
    %v1659 = vpop.f32.mrb[0].mxu0
    %v1660 = vadd.f32 %v89, %v1659
    %v1661 = vpop.f32.mrb[0].mxu0
    %v1662 = vpop.f32.mrb[0].mxu0
    %v1663 = vpop.f32.mrb[0].mxu0
    %1664 = vdwg.mxu0
    %v1666 = vsel %vm242, %v1429, 0
    %v1669 = vsel %vm242, %v1477, 0
    %1671 = vmatprep.subr.bf16.mxu0 0
    %1672 = vmatpush1.bf16.xpose.msra.mxu0 %v1669
    %1673 = vmatprep.subr.bf16.mxu0 0
    %1674 = vmatpush1.bf16.xpose.msra.mxu0 0
    %1675 = vmatprep.subr.bf16.mxu0 0
    %1676 = vmatpush1.bf16.xpose.msra.mxu0 0
    %1677 = vmatprep.subr.bf16.mxu0 0
    %1678 = vmatpush1.bf16.xpose.msra.mxu0 0
    %1679 = vmatprep.subr.bf16.mxu0 0
    %1680 = vmatpush1.bf16.xpose.msra.mxu0 0
    %1681 = vmatprep.subr.bf16.mxu0 0
    %1682 = vmatpush1.bf16.xpose.msra.mxu0 0
    %1683 = vmatprep.subr.bf16.mxu0 0
    %1684 = vmatpush1.bf16.xpose.msra.mxu0 0
    %1685 = vmatprep.subr.bf16.mxu0 0
    %1686 = vmatpush1.bf16.xpose.msra.mxu0 0
    %1687 = vmatprep.subr.bf16.mxu0 0
    %1688 = vmatpush1.bf16.xpose.msra.mxu0 0
    %1689 = vmatprep.subr.bf16.mxu0 0
    %1690 = vmatpush1.bf16.xpose.msra.mxu0 0
    %1691 = vmatprep.subr.bf16.mxu0 0
    %1692 = vmatpush1.bf16.xpose.msra.mxu0 0
    %1693 = vmatprep.subr.bf16.mxu0 0
    %1694 = vmatpush1.bf16.xpose.msra.mxu0 0
    %1695 = vmatprep.subr.bf16.mxu0 0
    %1696 = vmatpush1.bf16.xpose.msra.mxu0 0
    %1697 = vmatprep.subr.bf16.mxu0 0
    %1698 = vmatpush1.bf16.xpose.msra.mxu0 0
    %1699 = vmatprep.subr.bf16.mxu0 0
    %1700 = vmatpush1.bf16.xpose.msra.mxu0 0
    %1701 = vmatprep.subr.bf16.mxu0 0
    %1702 = vmatpush1.bf16.xpose.msra.mxu0 0
    %1703 = vmatprep.mubr.bf16.mxu0 0
    %1704 = vmatmul.mubr.bf16.gmra.mrb[0].mxu0 %v1666
    %v1705 = vpop.f32.mrb[0].mxu0
    %v1706 = vadd.f32 %v90, %v1705
    %v1707 = vpop.f32.mrb[0].mxu0
    %v1708 = vpop.f32.mrb[0].mxu0
    %v1709 = vpop.f32.mrb[0].mxu0
    %1710 = vdwg.mxu0
    %v1712 = vsel %vm242, %v1430, 0
    %v1715 = vsel %vm242, %v1478, 0
    %1717 = vmatprep.subr.bf16.mxu0 0
    %1718 = vmatpush1.bf16.xpose.msra.mxu0 %v1715
    %1719 = vmatprep.subr.bf16.mxu0 0
    %1720 = vmatpush1.bf16.xpose.msra.mxu0 0
    %1721 = vmatprep.subr.bf16.mxu0 0
    %1722 = vmatpush1.bf16.xpose.msra.mxu0 0
    %1723 = vmatprep.subr.bf16.mxu0 0
    %1724 = vmatpush1.bf16.xpose.msra.mxu0 0
    %1725 = vmatprep.subr.bf16.mxu0 0
    %1726 = vmatpush1.bf16.xpose.msra.mxu0 0
    %1727 = vmatprep.subr.bf16.mxu0 0
    %1728 = vmatpush1.bf16.xpose.msra.mxu0 0
    %1729 = vmatprep.subr.bf16.mxu0 0
    %1730 = vmatpush1.bf16.xpose.msra.mxu0 0
    %1731 = vmatprep.subr.bf16.mxu0 0
    %1732 = vmatpush1.bf16.xpose.msra.mxu0 0
    %1733 = vmatprep.subr.bf16.mxu0 0
    %1734 = vmatpush1.bf16.xpose.msra.mxu0 0
    %1735 = vmatprep.subr.bf16.mxu0 0
    %1736 = vmatpush1.bf16.xpose.msra.mxu0 0
    %1737 = vmatprep.subr.bf16.mxu0 0
    %1738 = vmatpush1.bf16.xpose.msra.mxu0 0
    %1739 = vmatprep.subr.bf16.mxu0 0
    %1740 = vmatpush1.bf16.xpose.msra.mxu0 0
    %1741 = vmatprep.subr.bf16.mxu0 0
    %1742 = vmatpush1.bf16.xpose.msra.mxu0 0
    %1743 = vmatprep.subr.bf16.mxu0 0
    %1744 = vmatpush1.bf16.xpose.msra.mxu0 0
    %1745 = vmatprep.subr.bf16.mxu0 0
    %1746 = vmatpush1.bf16.xpose.msra.mxu0 0
    %1747 = vmatprep.subr.bf16.mxu0 0
    %1748 = vmatpush1.bf16.xpose.msra.mxu0 0
    %1749 = vmatprep.mubr.bf16.mxu0 0
    %1750 = vmatmul.mubr.bf16.gmra.mrb[0].mxu0 %v1712
    %v1751 = vpop.f32.mrb[0].mxu0
    %v1752 = vadd.f32 %v90, %v1751
    %v1753 = vpop.f32.mrb[0].mxu0
    %v1754 = vpop.f32.mrb[0].mxu0
    %v1755 = vpop.f32.mrb[0].mxu0
    %1756 = vdwg.mxu0
    %v1758 = vsel %vm242, %v1431, 0
    %v1761 = vsel %vm242, %v1479, 0
    %1763 = vmatprep.subr.bf16.mxu0 0
    %1764 = vmatpush1.bf16.xpose.msra.mxu0 %v1761
    %1765 = vmatprep.subr.bf16.mxu0 0
    %1766 = vmatpush1.bf16.xpose.msra.mxu0 0
    %1767 = vmatprep.subr.bf16.mxu0 0
    %1768 = vmatpush1.bf16.xpose.msra.mxu0 0
    %1769 = vmatprep.subr.bf16.mxu0 0
    %1770 = vmatpush1.bf16.xpose.msra.mxu0 0
    %1771 = vmatprep.subr.bf16.mxu0 0
    %1772 = vmatpush1.bf16.xpose.msra.mxu0 0
    %1773 = vmatprep.subr.bf16.mxu0 0
    %1774 = vmatpush1.bf16.xpose.msra.mxu0 0
    %1775 = vmatprep.subr.bf16.mxu0 0
    %1776 = vmatpush1.bf16.xpose.msra.mxu0 0
    %1777 = vmatprep.subr.bf16.mxu0 0
    %1778 = vmatpush1.bf16.xpose.msra.mxu0 0
    %1779 = vmatprep.subr.bf16.mxu0 0
    %1780 = vmatpush1.bf16.xpose.msra.mxu0 0
    %1781 = vmatprep.subr.bf16.mxu0 0
    %1782 = vmatpush1.bf16.xpose.msra.mxu0 0
    %1783 = vmatprep.subr.bf16.mxu0 0
    %1784 = vmatpush1.bf16.xpose.msra.mxu0 0
    %1785 = vmatprep.subr.bf16.mxu0 0
    %1786 = vmatpush1.bf16.xpose.msra.mxu0 0
    %1787 = vmatprep.subr.bf16.mxu0 0
    %1788 = vmatpush1.bf16.xpose.msra.mxu0 0
    %1789 = vmatprep.subr.bf16.mxu0 0
    %1790 = vmatpush1.bf16.xpose.msra.mxu0 0
    %1791 = vmatprep.subr.bf16.mxu0 0
    %1792 = vmatpush1.bf16.xpose.msra.mxu0 0
    %1793 = vmatprep.subr.bf16.mxu0 0
    %1794 = vmatpush1.bf16.xpose.msra.mxu0 0
    %1795 = vmatprep.mubr.bf16.mxu0 0
    %1796 = vmatmul.mubr.bf16.gmra.mrb[0].mxu0 %v1758
    %v1797 = vpop.f32.mrb[0].mxu0
    %v1798 = vadd.f32 %v90, %v1797
    %v1799 = vpop.f32.mrb[0].mxu0
    %v1800 = vpop.f32.mrb[0].mxu0
    %v1801 = vpop.f32.mrb[0].mxu0
    %1802 = vdwg.mxu0
    %v1804 = vsel %vm242, %v1432, 0
    %v1807 = vsel %vm242, %v1480, 0
    %1809 = vmatprep.subr.bf16.mxu0 0
    %1810 = vmatpush1.bf16.xpose.msra.mxu0 %v1807
    %1811 = vmatprep.subr.bf16.mxu0 0
    %1812 = vmatpush1.bf16.xpose.msra.mxu0 0
    %1813 = vmatprep.subr.bf16.mxu0 0
    %1814 = vmatpush1.bf16.xpose.msra.mxu0 0
    %1815 = vmatprep.subr.bf16.mxu0 0
    %1816 = vmatpush1.bf16.xpose.msra.mxu0 0
    %1817 = vmatprep.subr.bf16.mxu0 0
    %1818 = vmatpush1.bf16.xpose.msra.mxu0 0
    %1819 = vmatprep.subr.bf16.mxu0 0
    %1820 = vmatpush1.bf16.xpose.msra.mxu0 0
    %1821 = vmatprep.subr.bf16.mxu0 0
    %1822 = vmatpush1.bf16.xpose.msra.mxu0 0
    %1823 = vmatprep.subr.bf16.mxu0 0
    %1824 = vmatpush1.bf16.xpose.msra.mxu0 0
    %1825 = vmatprep.subr.bf16.mxu0 0
    %1826 = vmatpush1.bf16.xpose.msra.mxu0 0
    %1827 = vmatprep.subr.bf16.mxu0 0
    %1828 = vmatpush1.bf16.xpose.msra.mxu0 0
    %1829 = vmatprep.subr.bf16.mxu0 0
    %1830 = vmatpush1.bf16.xpose.msra.mxu0 0
    %1831 = vmatprep.subr.bf16.mxu0 0
    %1832 = vmatpush1.bf16.xpose.msra.mxu0 0
    %1833 = vmatprep.subr.bf16.mxu0 0
    %1834 = vmatpush1.bf16.xpose.msra.mxu0 0
    %1835 = vmatprep.subr.bf16.mxu0 0
    %1836 = vmatpush1.bf16.xpose.msra.mxu0 0
    %1837 = vmatprep.subr.bf16.mxu0 0
    %1838 = vmatpush1.bf16.xpose.msra.mxu0 0
    %1839 = vmatprep.subr.bf16.mxu0 0
    %1840 = vmatpush1.bf16.xpose.msra.mxu0 0
    %1841 = vmatprep.mubr.bf16.mxu0 0
    %1842 = vmatmul.mubr.bf16.gmra.mrb[0].mxu0 %v1804
    %v1843 = vpop.f32.mrb[0].mxu0
    %v1844 = vadd.f32 %v90, %v1843
    %v1845 = vpop.f32.mrb[0].mxu0
    %v1846 = vpop.f32.mrb[0].mxu0
    %v1847 = vpop.f32.mrb[0].mxu0
    %1848 = vdwg.mxu0
    %v1849 = vsel %vm1126, %v1522, -inf
    %1850 = vmax.xlane.f32.xlu0 %v1849
    %v1851 = vpop.xlane.xlu0 %1850
    %v1852 = vsel %vm1126, %v1568, -inf
    %1853 = vmax.xlane.f32.xlu0 %v1852
    %v1854 = vpop.xlane.xlu0 %1853
    %v1855 = vsel %vm1126, %v1614, -inf
    %1856 = vmax.xlane.f32.xlu0 %v1855
    %v1857 = vpop.xlane.xlu0 %1856
    %v1858 = vsel %vm1126, %v1660, -inf
    %1859 = vmax.xlane.f32.xlu0 %v1858
    %v1860 = vpop.xlane.xlu0 %1859
    %v1861 = vsel %vm1126, %v1706, -inf
    %1862 = vmax.xlane.f32.xlu0 %v1861
    %v1863 = vpop.xlane.xlu0 %1862
    %v1864 = vsel %vm1126, %v1752, -inf
    %1865 = vmax.xlane.f32.xlu0 %v1864
    %v1866 = vpop.xlane.xlu0 %1865
    %v1867 = vsel %vm1126, %v1798, -inf
    %1868 = vmax.xlane.f32.xlu0 %v1867
    %v1869 = vpop.xlane.xlu0 %1868
    %v1870 = vsel %vm1126, %v1844, -inf
    %1871 = vmax.xlane.f32.xlu0 %v1870
    %v1872 = vpop.xlane.xlu0 %1871
    %v1873 = vsub.f32 %v1522, %v1851
    %v1874 = vsub.f32 %v1568, %v1854
    %v1875 = vsub.f32 %v1614, %v1857
    %v1876 = vsub.f32 %v1660, %v1860
    %v1877 = vsub.f32 %v1706, %v1863
    %v1878 = vsub.f32 %v1752, %v1866
    %v1879 = vsub.f32 %v1798, %v1869
    %v1880 = vsub.f32 %v1844, %v1872
    %v1881 = vmul.f32 %v1873, 1.442695
    %v1882 = vpow.pop %v1881
    %v1883 = vmul.f32 %v1874, 1.442695
    %v1884 = vpow.pop %v1883
    %v1885 = vmul.f32 %v1875, 1.442695
    %v1886 = vpow.pop %v1885
    %v1887 = vmul.f32 %v1876, 1.442695
    %v1888 = vpow.pop %v1887
    %v1889 = vmul.f32 %v1877, 1.442695
    %v1890 = vpow.pop %v1889
    %v1891 = vmul.f32 %v1878, 1.442695
    %v1892 = vpow.pop %v1891
    %v1893 = vmul.f32 %v1879, 1.442695
    %v1894 = vpow.pop %v1893
    %v1895 = vmul.f32 %v1880, 1.442695
    %v1896 = vpow.pop %v1895
    %v1897 = vsel %vm1126, %v1882, 0.0
    %1898 = vadd.xlane.f32.xlu0 %v1897
    %v1899 = vpop.xlane.xlu0 %1898
    %v1900 = vsel %vm1126, %v1884, 0.0
    %1901 = vadd.xlane.f32.xlu0 %v1900
    %v1902 = vpop.xlane.xlu0 %1901
    %v1903 = vsel %vm1126, %v1886, 0.0
    %1904 = vadd.xlane.f32.xlu0 %v1903
    %v1905 = vpop.xlane.xlu0 %1904
    %v1906 = vsel %vm1126, %v1888, 0.0
    %1907 = vadd.xlane.f32.xlu0 %v1906
    %v1908 = vpop.xlane.xlu0 %1907
    %v1909 = vsel %vm1126, %v1890, 0.0
    %1910 = vadd.xlane.f32.xlu0 %v1909
    %v1911 = vpop.xlane.xlu0 %1910
    %v1912 = vsel %vm1126, %v1892, 0.0
    %1913 = vadd.xlane.f32.xlu0 %v1912
    %v1914 = vpop.xlane.xlu0 %1913
    %v1915 = vsel %vm1126, %v1894, 0.0
    %1916 = vadd.xlane.f32.xlu0 %v1915
    %v1917 = vpop.xlane.xlu0 %1916
    %v1918 = vsel %vm1126, %v1896, 0.0
    %1919 = vadd.xlane.f32.xlu0 %v1918
    %v1920 = vpop.xlane.xlu0 %1919
    %v1921 = vrcp.pop %v1899
    %v1922 = vrcp.pop %v1902
    %v1923 = vrcp.pop %v1905
    %v1924 = vrcp.pop %v1908
    %v1925 = vrcp.pop %v1911
    %v1926 = vrcp.pop %v1914
    %v1927 = vrcp.pop %v1917
    %v1928 = vrcp.pop %v1920
    %v1929 = vmul.f32 %v1882, %v1921
    %v1930 = vmul.f32 %v1884, %v1922
    %v1931 = vmul.f32 %v1886, %v1923
    %v1932 = vmul.f32 %v1888, %v1924
    %v1933 = vmul.f32 %v1890, %v1925
    %v1934 = vmul.f32 %v1892, %v1926
    %v1935 = vmul.f32 %v1894, %v1927
    %v1936 = vmul.f32 %v1896, %v1928
    %v1937 = vpack.c.bf16 %v1929, %v1929
    %v1938 = vpack.c.bf16 %v1930, %v1930
    %v1939 = vpack.c.bf16 %v1931, %v1931
    %v1940 = vpack.c.bf16 %v1932, %v1932
    %v1941 = vpack.c.bf16 %v1933, %v1933
    %v1942 = vpack.c.bf16 %v1934, %v1934
    %v1943 = vpack.c.bf16 %v1935, %v1935
    %v1944 = vpack.c.bf16 %v1936, %v1936
    %1946 = vrot.lane.b32.xlu0 %v1473, 96
    %v1947 = vpop.permute.xlu0 %1946
    %v1950 = vsel %vm1126, %v1937, 0
    %1952 = vmatprep.subr.bf16.mxu0 0
    %1953 = vmatpush1.bf16.msra.mxu0 %v1947
    %1954 = vmatprep.subr.bf16.mxu0 0
    %1955 = vmatpush1.bf16.msra.mxu0 0
    %1956 = vmatprep.subr.bf16.mxu0 0
    %1957 = vmatpush1.bf16.msra.mxu0 0
    %1958 = vmatprep.subr.bf16.mxu0 0
    %1959 = vmatpush1.bf16.msra.mxu0 0
    %1960 = vmatprep.subr.bf16.mxu0 0
    %1961 = vmatpush1.bf16.msra.mxu0 0
    %1962 = vmatprep.subr.bf16.mxu0 0
    %1963 = vmatpush1.bf16.msra.mxu0 0
    %1964 = vmatprep.subr.bf16.mxu0 0
    %1965 = vmatpush1.bf16.msra.mxu0 0
    %1966 = vmatprep.subr.bf16.mxu0 0
    %1967 = vmatpush1.bf16.msra.mxu0 0
    %1968 = vmatprep.subr.bf16.mxu0 0
    %1969 = vmatpush1.bf16.msra.mxu0 0
    %1970 = vmatprep.subr.bf16.mxu0 0
    %1971 = vmatpush1.bf16.msra.mxu0 0
    %1972 = vmatprep.subr.bf16.mxu0 0
    %1973 = vmatpush1.bf16.msra.mxu0 0
    %1974 = vmatprep.subr.bf16.mxu0 0
    %1975 = vmatpush1.bf16.msra.mxu0 0
    %1976 = vmatprep.subr.bf16.mxu0 0
    %1977 = vmatpush1.bf16.msra.mxu0 0
    %1978 = vmatprep.subr.bf16.mxu0 0
    %1979 = vmatpush1.bf16.msra.mxu0 0
    %1980 = vmatprep.subr.bf16.mxu0 0
    %1981 = vmatpush1.bf16.msra.mxu0 0
    %1982 = vmatprep.subr.bf16.mxu0 0
    %1983 = vmatpush1.bf16.msra.mxu0 0
    %1984 = vmatprep.mubr.bf16.mxu0 0
    %1985 = vmatmul.mubr.bf16.gmra.mrb[0].mxu0 %v1950
    %v1986 = vpop.f32.mrb[0].mxu0
    %v1987 = vadd.f32 0.0, %v1986
    %v1988 = vpop.f32.mrb[0].mxu0
    %v1989 = vpop.f32.mrb[0].mxu0
    %v1990 = vpop.f32.mrb[0].mxu0
    %1991 = vdwg.mxu0
    %1993 = vrot.lane.b32.xlu0 %v1474, 96
    %v1994 = vpop.permute.xlu0 %1993
    %v1997 = vsel %vm1126, %v1938, 0
    %1999 = vmatprep.subr.bf16.mxu0 0
    %2000 = vmatpush1.bf16.msra.mxu0 %v1994
    %2001 = vmatprep.subr.bf16.mxu0 0
    %2002 = vmatpush1.bf16.msra.mxu0 0
    %2003 = vmatprep.subr.bf16.mxu0 0
    %2004 = vmatpush1.bf16.msra.mxu0 0
    %2005 = vmatprep.subr.bf16.mxu0 0
    %2006 = vmatpush1.bf16.msra.mxu0 0
    %2007 = vmatprep.subr.bf16.mxu0 0
    %2008 = vmatpush1.bf16.msra.mxu0 0
    %2009 = vmatprep.subr.bf16.mxu0 0
    %2010 = vmatpush1.bf16.msra.mxu0 0
    %2011 = vmatprep.subr.bf16.mxu0 0
    %2012 = vmatpush1.bf16.msra.mxu0 0
    %2013 = vmatprep.subr.bf16.mxu0 0
    %2014 = vmatpush1.bf16.msra.mxu0 0
    %2015 = vmatprep.subr.bf16.mxu0 0
    %2016 = vmatpush1.bf16.msra.mxu0 0
    %2017 = vmatprep.subr.bf16.mxu0 0
    %2018 = vmatpush1.bf16.msra.mxu0 0
    %2019 = vmatprep.subr.bf16.mxu0 0
    %2020 = vmatpush1.bf16.msra.mxu0 0
    %2021 = vmatprep.subr.bf16.mxu0 0
    %2022 = vmatpush1.bf16.msra.mxu0 0
    %2023 = vmatprep.subr.bf16.mxu0 0
    %2024 = vmatpush1.bf16.msra.mxu0 0
    %2025 = vmatprep.subr.bf16.mxu0 0
    %2026 = vmatpush1.bf16.msra.mxu0 0
    %2027 = vmatprep.subr.bf16.mxu0 0
    %2028 = vmatpush1.bf16.msra.mxu0 0
    %2029 = vmatprep.subr.bf16.mxu0 0
    %2030 = vmatpush1.bf16.msra.mxu0 0
    %2031 = vmatprep.mubr.bf16.mxu0 0
    %2032 = vmatmul.mubr.bf16.gmra.mrb[0].mxu0 %v1997
    %v2033 = vpop.f32.mrb[0].mxu0
    %v2034 = vadd.f32 0.0, %v2033
    %v2035 = vpop.f32.mrb[0].mxu0
    %v2036 = vpop.f32.mrb[0].mxu0
    %v2037 = vpop.f32.mrb[0].mxu0
    %2038 = vdwg.mxu0
    %2040 = vrot.lane.b32.xlu0 %v1475, 96
    %v2041 = vpop.permute.xlu0 %2040
    %v2044 = vsel %vm1126, %v1939, 0
    %2046 = vmatprep.subr.bf16.mxu0 0
    %2047 = vmatpush1.bf16.msra.mxu0 %v2041
    %2048 = vmatprep.subr.bf16.mxu0 0
    %2049 = vmatpush1.bf16.msra.mxu0 0
    %2050 = vmatprep.subr.bf16.mxu0 0
    %2051 = vmatpush1.bf16.msra.mxu0 0
    %2052 = vmatprep.subr.bf16.mxu0 0
    %2053 = vmatpush1.bf16.msra.mxu0 0
    %2054 = vmatprep.subr.bf16.mxu0 0
    %2055 = vmatpush1.bf16.msra.mxu0 0
    %2056 = vmatprep.subr.bf16.mxu0 0
    %2057 = vmatpush1.bf16.msra.mxu0 0
    %2058 = vmatprep.subr.bf16.mxu0 0
    %2059 = vmatpush1.bf16.msra.mxu0 0
    %2060 = vmatprep.subr.bf16.mxu0 0
    %2061 = vmatpush1.bf16.msra.mxu0 0
    %2062 = vmatprep.subr.bf16.mxu0 0
    %2063 = vmatpush1.bf16.msra.mxu0 0
    %2064 = vmatprep.subr.bf16.mxu0 0
    %2065 = vmatpush1.bf16.msra.mxu0 0
    %2066 = vmatprep.subr.bf16.mxu0 0
    %2067 = vmatpush1.bf16.msra.mxu0 0
    %2068 = vmatprep.subr.bf16.mxu0 0
    %2069 = vmatpush1.bf16.msra.mxu0 0
    %2070 = vmatprep.subr.bf16.mxu0 0
    %2071 = vmatpush1.bf16.msra.mxu0 0
    %2072 = vmatprep.subr.bf16.mxu0 0
    %2073 = vmatpush1.bf16.msra.mxu0 0
    %2074 = vmatprep.subr.bf16.mxu0 0
    %2075 = vmatpush1.bf16.msra.mxu0 0
    %2076 = vmatprep.subr.bf16.mxu0 0
    %2077 = vmatpush1.bf16.msra.mxu0 0
    %2078 = vmatprep.mubr.bf16.mxu0 0
    %2079 = vmatmul.mubr.bf16.gmra.mrb[0].mxu0 %v2044
    %v2080 = vpop.f32.mrb[0].mxu0
    %v2081 = vadd.f32 0.0, %v2080
    %v2082 = vpop.f32.mrb[0].mxu0
    %v2083 = vpop.f32.mrb[0].mxu0
    %v2084 = vpop.f32.mrb[0].mxu0
    %2085 = vdwg.mxu0
    %2087 = vrot.lane.b32.xlu0 %v1476, 96
    %v2088 = vpop.permute.xlu0 %2087
    %v2091 = vsel %vm1126, %v1940, 0
    %2093 = vmatprep.subr.bf16.mxu0 0
    %2094 = vmatpush1.bf16.msra.mxu0 %v2088
    %2095 = vmatprep.subr.bf16.mxu0 0
    %2096 = vmatpush1.bf16.msra.mxu0 0
    %2097 = vmatprep.subr.bf16.mxu0 0
    %2098 = vmatpush1.bf16.msra.mxu0 0
    %2099 = vmatprep.subr.bf16.mxu0 0
    %2100 = vmatpush1.bf16.msra.mxu0 0
    %2101 = vmatprep.subr.bf16.mxu0 0
    %2102 = vmatpush1.bf16.msra.mxu0 0
    %2103 = vmatprep.subr.bf16.mxu0 0
    %2104 = vmatpush1.bf16.msra.mxu0 0
    %2105 = vmatprep.subr.bf16.mxu0 0
    %2106 = vmatpush1.bf16.msra.mxu0 0
    %2107 = vmatprep.subr.bf16.mxu0 0
    %2108 = vmatpush1.bf16.msra.mxu0 0
    %2109 = vmatprep.subr.bf16.mxu0 0
    %2110 = vmatpush1.bf16.msra.mxu0 0
    %2111 = vmatprep.subr.bf16.mxu0 0
    %2112 = vmatpush1.bf16.msra.mxu0 0
    %2113 = vmatprep.subr.bf16.mxu0 0
    %2114 = vmatpush1.bf16.msra.mxu0 0
    %2115 = vmatprep.subr.bf16.mxu0 0
    %2116 = vmatpush1.bf16.msra.mxu0 0
    %2117 = vmatprep.subr.bf16.mxu0 0
    %2118 = vmatpush1.bf16.msra.mxu0 0
    %2119 = vmatprep.subr.bf16.mxu0 0
    %2120 = vmatpush1.bf16.msra.mxu0 0
    %2121 = vmatprep.subr.bf16.mxu0 0
    %2122 = vmatpush1.bf16.msra.mxu0 0
    %2123 = vmatprep.subr.bf16.mxu0 0
    %2124 = vmatpush1.bf16.msra.mxu0 0
    %2125 = vmatprep.mubr.bf16.mxu0 0
    %2126 = vmatmul.mubr.bf16.gmra.mrb[0].mxu0 %v2091
    %v2127 = vpop.f32.mrb[0].mxu0
    %v2128 = vadd.f32 0.0, %v2127
    %v2129 = vpop.f32.mrb[0].mxu0
    %v2130 = vpop.f32.mrb[0].mxu0
    %v2131 = vpop.f32.mrb[0].mxu0
    %2132 = vdwg.mxu0
    %2134 = vrot.lane.b32.xlu0 %v1477, 96
    %v2135 = vpop.permute.xlu0 %2134
    %v2138 = vsel %vm1126, %v1941, 0
    %2140 = vmatprep.subr.bf16.mxu0 0
    %2141 = vmatpush1.bf16.msra.mxu0 %v2135
    %2142 = vmatprep.subr.bf16.mxu0 0
    %2143 = vmatpush1.bf16.msra.mxu0 0
    %2144 = vmatprep.subr.bf16.mxu0 0
    %2145 = vmatpush1.bf16.msra.mxu0 0
    %2146 = vmatprep.subr.bf16.mxu0 0
    %2147 = vmatpush1.bf16.msra.mxu0 0
    %2148 = vmatprep.subr.bf16.mxu0 0
    %2149 = vmatpush1.bf16.msra.mxu0 0
    %2150 = vmatprep.subr.bf16.mxu0 0
    %2151 = vmatpush1.bf16.msra.mxu0 0
    %2152 = vmatprep.subr.bf16.mxu0 0
    %2153 = vmatpush1.bf16.msra.mxu0 0
    %2154 = vmatprep.subr.bf16.mxu0 0
    %2155 = vmatpush1.bf16.msra.mxu0 0
    %2156 = vmatprep.subr.bf16.mxu0 0
    %2157 = vmatpush1.bf16.msra.mxu0 0
    %2158 = vmatprep.subr.bf16.mxu0 0
    %2159 = vmatpush1.bf16.msra.mxu0 0
    %2160 = vmatprep.subr.bf16.mxu0 0
    %2161 = vmatpush1.bf16.msra.mxu0 0
    %2162 = vmatprep.subr.bf16.mxu0 0
    %2163 = vmatpush1.bf16.msra.mxu0 0
    %2164 = vmatprep.subr.bf16.mxu0 0
    %2165 = vmatpush1.bf16.msra.mxu0 0
    %2166 = vmatprep.subr.bf16.mxu0 0
    %2167 = vmatpush1.bf16.msra.mxu0 0
    %2168 = vmatprep.subr.bf16.mxu0 0
    %2169 = vmatpush1.bf16.msra.mxu0 0
    %2170 = vmatprep.subr.bf16.mxu0 0
    %2171 = vmatpush1.bf16.msra.mxu0 0
    %2172 = vmatprep.mubr.bf16.mxu0 0
    %2173 = vmatmul.mubr.bf16.gmra.mrb[0].mxu0 %v2138
    %v2174 = vpop.f32.mrb[0].mxu0
    %v2175 = vadd.f32 0.0, %v2174
    %v2176 = vpop.f32.mrb[0].mxu0
    %v2177 = vpop.f32.mrb[0].mxu0
    %v2178 = vpop.f32.mrb[0].mxu0
    %2179 = vdwg.mxu0
    %2181 = vrot.lane.b32.xlu0 %v1478, 96
    %v2182 = vpop.permute.xlu0 %2181
    %v2185 = vsel %vm1126, %v1942, 0
    %2187 = vmatprep.subr.bf16.mxu0 0
    %2188 = vmatpush1.bf16.msra.mxu0 %v2182
    %2189 = vmatprep.subr.bf16.mxu0 0
    %2190 = vmatpush1.bf16.msra.mxu0 0
    %2191 = vmatprep.subr.bf16.mxu0 0
    %2192 = vmatpush1.bf16.msra.mxu0 0
    %2193 = vmatprep.subr.bf16.mxu0 0
    %2194 = vmatpush1.bf16.msra.mxu0 0
    %2195 = vmatprep.subr.bf16.mxu0 0
    %2196 = vmatpush1.bf16.msra.mxu0 0
    %2197 = vmatprep.subr.bf16.mxu0 0
    %2198 = vmatpush1.bf16.msra.mxu0 0
    %2199 = vmatprep.subr.bf16.mxu0 0
    %2200 = vmatpush1.bf16.msra.mxu0 0
    %2201 = vmatprep.subr.bf16.mxu0 0
    %2202 = vmatpush1.bf16.msra.mxu0 0
    %2203 = vmatprep.subr.bf16.mxu0 0
    %2204 = vmatpush1.bf16.msra.mxu0 0
    %2205 = vmatprep.subr.bf16.mxu0 0
    %2206 = vmatpush1.bf16.msra.mxu0 0
    %2207 = vmatprep.subr.bf16.mxu0 0
    %2208 = vmatpush1.bf16.msra.mxu0 0
    %2209 = vmatprep.subr.bf16.mxu0 0
    %2210 = vmatpush1.bf16.msra.mxu0 0
    %2211 = vmatprep.subr.bf16.mxu0 0
    %2212 = vmatpush1.bf16.msra.mxu0 0
    %2213 = vmatprep.subr.bf16.mxu0 0
    %2214 = vmatpush1.bf16.msra.mxu0 0
    %2215 = vmatprep.subr.bf16.mxu0 0
    %2216 = vmatpush1.bf16.msra.mxu0 0
    %2217 = vmatprep.subr.bf16.mxu0 0
    %2218 = vmatpush1.bf16.msra.mxu0 0
    %2219 = vmatprep.mubr.bf16.mxu0 0
    %2220 = vmatmul.mubr.bf16.gmra.mrb[0].mxu0 %v2185
    %v2221 = vpop.f32.mrb[0].mxu0
    %v2222 = vadd.f32 0.0, %v2221
    %v2223 = vpop.f32.mrb[0].mxu0
    %v2224 = vpop.f32.mrb[0].mxu0
    %v2225 = vpop.f32.mrb[0].mxu0
    %2226 = vdwg.mxu0
    %2228 = vrot.lane.b32.xlu0 %v1479, 96
    %v2229 = vpop.permute.xlu0 %2228
    %v2232 = vsel %vm1126, %v1943, 0
    %2234 = vmatprep.subr.bf16.mxu0 0
    %2235 = vmatpush1.bf16.msra.mxu0 %v2229
    %2236 = vmatprep.subr.bf16.mxu0 0
    %2237 = vmatpush1.bf16.msra.mxu0 0
    %2238 = vmatprep.subr.bf16.mxu0 0
    %2239 = vmatpush1.bf16.msra.mxu0 0
    %2240 = vmatprep.subr.bf16.mxu0 0
    %2241 = vmatpush1.bf16.msra.mxu0 0
    %2242 = vmatprep.subr.bf16.mxu0 0
    %2243 = vmatpush1.bf16.msra.mxu0 0
    %2244 = vmatprep.subr.bf16.mxu0 0
    %2245 = vmatpush1.bf16.msra.mxu0 0
    %2246 = vmatprep.subr.bf16.mxu0 0
    %2247 = vmatpush1.bf16.msra.mxu0 0
    %2248 = vmatprep.subr.bf16.mxu0 0
    %2249 = vmatpush1.bf16.msra.mxu0 0
    %2250 = vmatprep.subr.bf16.mxu0 0
    %2251 = vmatpush1.bf16.msra.mxu0 0
    %2252 = vmatprep.subr.bf16.mxu0 0
    %2253 = vmatpush1.bf16.msra.mxu0 0
    %2254 = vmatprep.subr.bf16.mxu0 0
    %2255 = vmatpush1.bf16.msra.mxu0 0
    %2256 = vmatprep.subr.bf16.mxu0 0
    %2257 = vmatpush1.bf16.msra.mxu0 0
    %2258 = vmatprep.subr.bf16.mxu0 0
    %2259 = vmatpush1.bf16.msra.mxu0 0
    %2260 = vmatprep.subr.bf16.mxu0 0
    %2261 = vmatpush1.bf16.msra.mxu0 0
    %2262 = vmatprep.subr.bf16.mxu0 0
    %2263 = vmatpush1.bf16.msra.mxu0 0
    %2264 = vmatprep.subr.bf16.mxu0 0
    %2265 = vmatpush1.bf16.msra.mxu0 0
    %2266 = vmatprep.mubr.bf16.mxu0 0
    %2267 = vmatmul.mubr.bf16.gmra.mrb[0].mxu0 %v2232
    %v2268 = vpop.f32.mrb[0].mxu0
    %v2269 = vadd.f32 0.0, %v2268
    %v2270 = vpop.f32.mrb[0].mxu0
    %v2271 = vpop.f32.mrb[0].mxu0
    %v2272 = vpop.f32.mrb[0].mxu0
    %2273 = vdwg.mxu0
    %2275 = vrot.lane.b32.xlu0 %v1480, 96
    %v2276 = vpop.permute.xlu0 %2275
    %v2279 = vsel %vm1126, %v1944, 0
    %2281 = vmatprep.subr.bf16.mxu0 0
    %2282 = vmatpush1.bf16.msra.mxu0 %v2276
    %2283 = vmatprep.subr.bf16.mxu0 0
    %2284 = vmatpush1.bf16.msra.mxu0 0
    %2285 = vmatprep.subr.bf16.mxu0 0
    %2286 = vmatpush1.bf16.msra.mxu0 0
    %2287 = vmatprep.subr.bf16.mxu0 0
    %2288 = vmatpush1.bf16.msra.mxu0 0
    %2289 = vmatprep.subr.bf16.mxu0 0
    %2290 = vmatpush1.bf16.msra.mxu0 0
    %2291 = vmatprep.subr.bf16.mxu0 0
    %2292 = vmatpush1.bf16.msra.mxu0 0
    %2293 = vmatprep.subr.bf16.mxu0 0
    %2294 = vmatpush1.bf16.msra.mxu0 0
    %2295 = vmatprep.subr.bf16.mxu0 0
    %2296 = vmatpush1.bf16.msra.mxu0 0
    %2297 = vmatprep.subr.bf16.mxu0 0
    %2298 = vmatpush1.bf16.msra.mxu0 0
    %2299 = vmatprep.subr.bf16.mxu0 0
    %2300 = vmatpush1.bf16.msra.mxu0 0
    %2301 = vmatprep.subr.bf16.mxu0 0
    %2302 = vmatpush1.bf16.msra.mxu0 0
    %2303 = vmatprep.subr.bf16.mxu0 0
    %2304 = vmatpush1.bf16.msra.mxu0 0
    %2305 = vmatprep.subr.bf16.mxu0 0
    %2306 = vmatpush1.bf16.msra.mxu0 0
    %2307 = vmatprep.subr.bf16.mxu0 0
    %2308 = vmatpush1.bf16.msra.mxu0 0
    %2309 = vmatprep.subr.bf16.mxu0 0
    %2310 = vmatpush1.bf16.msra.mxu0 0
    %2311 = vmatprep.subr.bf16.mxu0 0
    %2312 = vmatpush1.bf16.msra.mxu0 0
    %2313 = vmatprep.mubr.bf16.mxu0 0
    %2314 = vmatmul.mubr.bf16.gmra.mrb[0].mxu0 %v2279
    %v2315 = vpop.f32.mrb[0].mxu0
    %v2316 = vadd.f32 0.0, %v2315
    %v2317 = vpop.f32.mrb[0].mxu0
    %v2318 = vpop.f32.mrb[0].mxu0
    %v2319 = vpop.f32.mrb[0].mxu0
    %2320 = vdwg.mxu0
    %2322 = vrot.lane.b32.xlu0 %v2034, 8
    %v2323 = vpop.permute.xlu0 %2322
    %2326 = vrot.lane.b32.xlu0 %v2081, 16
    %v2327 = vpop.permute.xlu0 %2326
    %2330 = vrot.lane.b32.xlu0 %v2128, 24
    %v2331 = vpop.permute.xlu0 %2330
    %v2333 = vsel %vm242, %v1987, %v2323
    %v2334 = vsel %vm1126, %v2333, %v2327
    %v2335 = vsel %vm1128, %v2334, %v2331
    %2337 = vrot.lane.b32.xlu0 %v2222, 8
    %v2338 = vpop.permute.xlu0 %2337
    %2341 = vrot.lane.b32.xlu0 %v2269, 16
    %v2342 = vpop.permute.xlu0 %2341
    %2345 = vrot.lane.b32.xlu0 %v2316, 24
    %v2346 = vpop.permute.xlu0 %2345
    %v2348 = vsel %vm242, %v2175, %v2338
    %v2349 = vsel %vm1126, %v2348, %v2342
    %v2350 = vsel %vm1128, %v2349, %v2346
    %v2351 = vpack.c.bf16 %v2350, %v2335
    %v2352 = vld [vmem:[%s12] sm:$0xf]
    %v2353 = vld [vmem:[%s12 + $0x4] sm:$0xf]
    %v2354 = vld [vmem:[%s12 + $0x8] sm:$0xf]
    %v2355 = vld [vmem:[%s12 + $0xc] sm:$0xf]
    %v2356 = vld [vmem:[%s13] sm:$0x1]
    %v2358 = vlaneseq
    %v2359 = vshrl.u32 %v2358, 7
    %v2360 = vsub.s32 0, %v2359
    %v2361 = vrot.slane %v2356, %v2360
    %v2367 = vunpack.c.l.b16 %v2352
    %v2368 = vunpack.c.l.b16 %v2353
    %v2369 = vunpack.c.l.b16 %v2354
    %v2370 = vunpack.c.l.b16 %v2355
    %v2371 = vpack.c.b16 %v2368, %v2367
    %v2372 = vpack.c.b16 %v2370, %v2369
    %v2376 = vsel %vm99, %v2351, 0
    %2378 = vmatprep.subr.bf16.mxu0 0
    %2379 = vmatpush1.bf16.msra.mxu0 %v2371
    %2380 = vmatprep.subr.bf16.mxu0 0
    %2381 = vmatpush1.bf16.msra.mxu0 %v2372
    %2382 = vmatprep.subr.bf16.mxu0 0
    %2383 = vmatpush1.bf16.msra.mxu0 0
    %2384 = vmatprep.subr.bf16.mxu0 0
    %2385 = vmatpush1.bf16.msra.mxu0 0
    %2386 = vmatprep.subr.bf16.mxu0 0
    %2387 = vmatpush1.bf16.msra.mxu0 0
    %2388 = vmatprep.subr.bf16.mxu0 0
    %2389 = vmatpush1.bf16.msra.mxu0 0
    %2390 = vmatprep.subr.bf16.mxu0 0
    %2391 = vmatpush1.bf16.msra.mxu0 0
    %2392 = vmatprep.subr.bf16.mxu0 0
    %2393 = vmatpush1.bf16.msra.mxu0 0
    %2394 = vmatprep.subr.bf16.mxu0 0
    %2395 = vmatpush1.bf16.msra.mxu0 0
    %2396 = vmatprep.subr.bf16.mxu0 0
    %2397 = vmatpush1.bf16.msra.mxu0 0
    %2398 = vmatprep.subr.bf16.mxu0 0
    %2399 = vmatpush1.bf16.msra.mxu0 0
    %2400 = vmatprep.subr.bf16.mxu0 0
    %2401 = vmatpush1.bf16.msra.mxu0 0
    %2402 = vmatprep.subr.bf16.mxu0 0
    %2403 = vmatpush1.bf16.msra.mxu0 0
    %2404 = vmatprep.subr.bf16.mxu0 0
    %2405 = vmatpush1.bf16.msra.mxu0 0
    %2406 = vmatprep.subr.bf16.mxu0 0
    %2407 = vmatpush1.bf16.msra.mxu0 0
    %2408 = vmatprep.subr.bf16.mxu0 0
    %2409 = vmatpush1.bf16.msra.mxu0 0
    %2410 = vmatprep.mubr.bf16.mxu0 0
    %2411 = vmatmul.mubr.bf16.gmra.mrb[0].mxu0 %v2376
    %v2412 = vpop.f32.mrb[0].mxu0
    %v2413 = vadd.f32 %v2361, %v2412
    %v2414 = vpop.f32.mrb[0].mxu0
    %v2415 = vpop.f32.mrb[0].mxu0
    %v2416 = vadd.f32 %v2361, %v2415
    %v2417 = vpop.f32.mrb[0].mxu0
    %2418 = vdwg.mxu0
    %v2419 = vadd.f32 %v1213, %v2413
    %v2420 = vadd.f32 %v1214, %v2416
    %v2421 = vld [vmem:[%s22] sm:$0x1]
    %v2422 = vld [vmem:[%s23] sm:$0x1]
    %v2423 = vsel %vm99, %v2419, 0.0
    %2424 = vadd.xlane.f32.xlu0 %v2423
    %v2425 = vpop.xlane.xlu0 %2424
    %v2426 = vsel %vm99, %v2420, 0.0
    %2427 = vadd.xlane.f32.xlu0 %v2426
    %v2428 = vpop.xlane.xlu0 %2427
    %v2429 = vmul.f32 %v2425, %v106
    %v2430 = vmul.f32 %v2428, %v106
    %v2431 = vsub.f32 %v2419, %v2429
    %v2432 = vsub.f32 %v2420, %v2430
    %v2433 = vmul.f32 %v2431, %v2431
    %v2434 = vmul.f32 %v2432, %v2432
    %v2435 = vsel %vm99, %v2433, 0.0
    %2436 = vadd.xlane.f32.xlu0 %v2435
    %v2437 = vpop.xlane.xlu0 %2436
    %v2438 = vsel %vm99, %v2434, 0.0
    %2439 = vadd.xlane.f32.xlu0 %v2438
    %v2440 = vpop.xlane.xlu0 %2439
    %v2441 = vmul.f32 %v2437, 0.032258064
    %v2442 = vmul.f32 %v2440, 0.032258064
    %v2443 = vadd.f32 %v2441, 1e-12
    %v2444 = vadd.f32 %v2442, 1e-12
    %v2445 = vrsqrt.pop %v2443
    %v2446 = vrsqrt.pop %v2444
    %v2447 = vmul.f32 %v2431, %v2445
    %v2448 = vmul.f32 %v2432, %v2446
    %v2450 = vlaneseq
    %v2451 = vshrl.u32 %v2450, 7
    %v2452 = vsub.s32 0, %v2451
    %v2453 = vrot.slane %v2421, %v2452
    %v2455 = vmul.f32 %v2453, %v2447
    %v2456 = vmul.f32 %v2453, %v2448
    %v2458 = vlaneseq
    %v2459 = vshrl.u32 %v2458, 7
    %v2460 = vsub.s32 0, %v2459
    %v2461 = vrot.slane %v2422, %v2460
    %v2463 = vadd.f32 %v2455, %v2461
    %v2464 = vadd.f32 %v2456, %v2461
    %v2465 = vld [vmem:[%s14] sm:$0xff]
    %v2466 = vld [vmem:[%s14 + $0x8] sm:$0xff]
    %v2467 = vld [vmem:[%s14 + $0x10] sm:$0xff]
    %v2468 = vld [vmem:[%s14 + $0x18] sm:$0xff]
    %v2469 = vld [vmem:[%s14 + $0x20] sm:$0xff]
    %v2470 = vld [vmem:[%s14 + $0x28] sm:$0xff]
    %v2471 = vld [vmem:[%s14 + $0x30] sm:$0xff]
    %v2472 = vld [vmem:[%s14 + $0x38] sm:$0xff]
    %v2473 = vld [vmem:[%s14 + $0x40] sm:$0xff]
    %v2474 = vld [vmem:[%s14 + $0x48] sm:$0xff]
    %v2475 = vld [vmem:[%s14 + $0x50] sm:$0xff]
    %v2476 = vld [vmem:[%s14 + $0x58] sm:$0xff]
    %v2477 = vld [vmem:[%s14 + $0x60] sm:$0xff]
    %v2478 = vld [vmem:[%s14 + $0x68] sm:$0xff]
    %v2479 = vld [vmem:[%s14 + $0x70] sm:$0xff]
    %v2480 = vld [vmem:[%s14 + $0x78] sm:$0xff]
    %v2481 = vld [vmem:[%s14 + $0x80] sm:$0xff]
    %v2482 = vld [vmem:[%s14 + $0x88] sm:$0xff]
    %v2483 = vld [vmem:[%s14 + $0x90] sm:$0xff]
    %v2484 = vld [vmem:[%s14 + $0x98] sm:$0xff]
    %v2485 = vld [vmem:[%s14 + $0xa0] sm:$0xff]
    %v2486 = vld [vmem:[%s14 + $0xa8] sm:$0xff]
    %v2487 = vld [vmem:[%s14 + $0xb0] sm:$0xff]
    %v2488 = vld [vmem:[%s14 + $0xb8] sm:$0xff]
    %v2489 = vld [vmem:[%s14 + $0xc0] sm:$0xff]
    %v2490 = vld [vmem:[%s14 + $0xc8] sm:$0xff]
    %v2491 = vld [vmem:[%s14 + $0xd0] sm:$0xff]
    %v2492 = vld [vmem:[%s14 + $0xd8] sm:$0xff]
    %v2493 = vld [vmem:[%s14 + $0xe0] sm:$0xff]
    %v2494 = vld [vmem:[%s14 + $0xe8] sm:$0xff]
    %v2495 = vld [vmem:[%s14 + $0xf0] sm:$0xff]
    %v2496 = vld [vmem:[%s14 + $0xf8] sm:$0xff]
    %v2497 = vld [vmem:[%s15] sm:$0xff]
    %v2498 = vld [vmem:[%s15 + $0x8] sm:$0xff]
    %v2499 = vld [vmem:[%s16] sm:$0xf]
    %v2500 = vld [vmem:[%s16 + $0x4] sm:$0xf]
    %v2501 = vld [vmem:[%s16 + $0x8] sm:$0xf]
    %v2502 = vld [vmem:[%s16 + $0xc] sm:$0xf]
    %v2503 = vld [vmem:[%s16 + $0x10] sm:$0xf]
    %v2504 = vld [vmem:[%s16 + $0x14] sm:$0xf]
    %v2505 = vld [vmem:[%s16 + $0x18] sm:$0xf]
    %v2506 = vld [vmem:[%s16 + $0x1c] sm:$0xf]
    %v2507 = vld [vmem:[%s16 + $0x20] sm:$0xf]
    %v2508 = vld [vmem:[%s16 + $0x24] sm:$0xf]
    %v2509 = vld [vmem:[%s16 + $0x28] sm:$0xf]
    %v2510 = vld [vmem:[%s16 + $0x2c] sm:$0xf]
    %v2511 = vld [vmem:[%s16 + $0x30] sm:$0xf]
    %v2512 = vld [vmem:[%s16 + $0x34] sm:$0xf]
    %v2513 = vld [vmem:[%s16 + $0x38] sm:$0xf]
    %v2514 = vld [vmem:[%s16 + $0x3c] sm:$0xf]
    %v2515 = vld [vmem:[%s16 + $0x40] sm:$0xf]
    %v2516 = vld [vmem:[%s16 + $0x44] sm:$0xf]
    %v2517 = vld [vmem:[%s16 + $0x48] sm:$0xf]
    %v2518 = vld [vmem:[%s16 + $0x4c] sm:$0xf]
    %v2519 = vld [vmem:[%s16 + $0x50] sm:$0xf]
    %v2520 = vld [vmem:[%s16 + $0x54] sm:$0xf]
    %v2521 = vld [vmem:[%s16 + $0x58] sm:$0xf]
    %v2522 = vld [vmem:[%s16 + $0x5c] sm:$0xf]
    %v2523 = vld [vmem:[%s16 + $0x60] sm:$0xf]
    %v2524 = vld [vmem:[%s16 + $0x64] sm:$0xf]
    %v2525 = vld [vmem:[%s16 + $0x68] sm:$0xf]
    %v2526 = vld [vmem:[%s16 + $0x6c] sm:$0xf]
    %v2527 = vld [vmem:[%s16 + $0x70] sm:$0xf]
    %v2528 = vld [vmem:[%s16 + $0x74] sm:$0xf]
    %v2529 = vld [vmem:[%s16 + $0x78] sm:$0xf]
    %v2530 = vld [vmem:[%s16 + $0x7c] sm:$0xf]
    %v2531 = vld [vmem:[%s16 + $0x80] sm:$0xf]
    %v2532 = vld [vmem:[%s16 + $0x84] sm:$0xf]
    %v2533 = vld [vmem:[%s16 + $0x88] sm:$0xf]
    %v2534 = vld [vmem:[%s16 + $0x8c] sm:$0xf]
    %v2535 = vld [vmem:[%s16 + $0x90] sm:$0xf]
    %v2536 = vld [vmem:[%s16 + $0x94] sm:$0xf]
    %v2537 = vld [vmem:[%s16 + $0x98] sm:$0xf]
    %v2538 = vld [vmem:[%s16 + $0x9c] sm:$0xf]
    %v2539 = vld [vmem:[%s16 + $0xa0] sm:$0xf]
    %v2540 = vld [vmem:[%s16 + $0xa4] sm:$0xf]
    %v2541 = vld [vmem:[%s16 + $0xa8] sm:$0xf]
    %v2542 = vld [vmem:[%s16 + $0xac] sm:$0xf]
    %v2543 = vld [vmem:[%s16 + $0xb0] sm:$0xf]
    %v2544 = vld [vmem:[%s16 + $0xb4] sm:$0xf]
    %v2545 = vld [vmem:[%s16 + $0xb8] sm:$0xf]
    %v2546 = vld [vmem:[%s16 + $0xbc] sm:$0xf]
    %v2547 = vld [vmem:[%s16 + $0xc0] sm:$0xf]
    %v2548 = vld [vmem:[%s16 + $0xc4] sm:$0xf]
    %v2549 = vld [vmem:[%s16 + $0xc8] sm:$0xf]
    %v2550 = vld [vmem:[%s16 + $0xcc] sm:$0xf]
    %v2551 = vld [vmem:[%s16 + $0xd0] sm:$0xf]
    %v2552 = vld [vmem:[%s16 + $0xd4] sm:$0xf]
    %v2553 = vld [vmem:[%s16 + $0xd8] sm:$0xf]
    %v2554 = vld [vmem:[%s16 + $0xdc] sm:$0xf]
    %v2555 = vld [vmem:[%s16 + $0xe0] sm:$0xf]
    %v2556 = vld [vmem:[%s16 + $0xe4] sm:$0xf]
    %v2557 = vld [vmem:[%s16 + $0xe8] sm:$0xf]
    %v2558 = vld [vmem:[%s16 + $0xec] sm:$0xf]
    %v2559 = vld [vmem:[%s16 + $0xf0] sm:$0xf]
    %v2560 = vld [vmem:[%s16 + $0xf4] sm:$0xf]
    %v2561 = vld [vmem:[%s16 + $0xf8] sm:$0xf]
    %v2562 = vld [vmem:[%s16 + $0xfc] sm:$0xf]
    %v2563 = vld [vmem:[%s16 + $0x100] sm:$0xf]
    %v2564 = vld [vmem:[%s16 + $0x104] sm:$0xf]
    %v2565 = vld [vmem:[%s16 + $0x108] sm:$0xf]
    %v2566 = vld [vmem:[%s16 + $0x10c] sm:$0xf]
    %v2567 = vld [vmem:[%s16 + $0x110] sm:$0xf]
    %v2568 = vld [vmem:[%s16 + $0x114] sm:$0xf]
    %v2569 = vld [vmem:[%s16 + $0x118] sm:$0xf]
    %v2570 = vld [vmem:[%s16 + $0x11c] sm:$0xf]
    %v2571 = vld [vmem:[%s16 + $0x120] sm:$0xf]
    %v2572 = vld [vmem:[%s16 + $0x124] sm:$0xf]
    %v2573 = vld [vmem:[%s16 + $0x128] sm:$0xf]
    %v2574 = vld [vmem:[%s16 + $0x12c] sm:$0xf]
    %v2575 = vld [vmem:[%s16 + $0x130] sm:$0xf]
    %v2576 = vld [vmem:[%s16 + $0x134] sm:$0xf]
    %v2577 = vld [vmem:[%s16 + $0x138] sm:$0xf]
    %v2578 = vld [vmem:[%s16 + $0x13c] sm:$0xf]
    %v2579 = vld [vmem:[%s16 + $0x140] sm:$0xf]
    %v2580 = vld [vmem:[%s16 + $0x144] sm:$0xf]
    %v2581 = vld [vmem:[%s16 + $0x148] sm:$0xf]
    %v2582 = vld [vmem:[%s16 + $0x14c] sm:$0xf]
    %v2583 = vld [vmem:[%s16 + $0x150] sm:$0xf]
    %v2584 = vld [vmem:[%s16 + $0x154] sm:$0xf]
    %v2585 = vld [vmem:[%s16 + $0x158] sm:$0xf]
    %v2586 = vld [vmem:[%s16 + $0x15c] sm:$0xf]
    %v2587 = vld [vmem:[%s16 + $0x160] sm:$0xf]
    %v2588 = vld [vmem:[%s16 + $0x164] sm:$0xf]
    %v2589 = vld [vmem:[%s16 + $0x168] sm:$0xf]
    %v2590 = vld [vmem:[%s16 + $0x16c] sm:$0xf]
    %v2591 = vld [vmem:[%s16 + $0x170] sm:$0xf]
    %v2592 = vld [vmem:[%s16 + $0x174] sm:$0xf]
    %v2593 = vld [vmem:[%s16 + $0x178] sm:$0xf]
    %v2594 = vld [vmem:[%s16 + $0x17c] sm:$0xf]
    %v2595 = vld [vmem:[%s16 + $0x180] sm:$0xf]
    %v2596 = vld [vmem:[%s16 + $0x184] sm:$0xf]
    %v2597 = vld [vmem:[%s16 + $0x188] sm:$0xf]
    %v2598 = vld [vmem:[%s16 + $0x18c] sm:$0xf]
    %v2599 = vld [vmem:[%s16 + $0x190] sm:$0xf]
    %v2600 = vld [vmem:[%s16 + $0x194] sm:$0xf]
    %v2601 = vld [vmem:[%s16 + $0x198] sm:$0xf]
    %v2602 = vld [vmem:[%s16 + $0x19c] sm:$0xf]
    %v2603 = vld [vmem:[%s16 + $0x1a0] sm:$0xf]
    %v2604 = vld [vmem:[%s16 + $0x1a4] sm:$0xf]
    %v2605 = vld [vmem:[%s16 + $0x1a8] sm:$0xf]
    %v2606 = vld [vmem:[%s16 + $0x1ac] sm:$0xf]
    %v2607 = vld [vmem:[%s16 + $0x1b0] sm:$0xf]
    %v2608 = vld [vmem:[%s16 + $0x1b4] sm:$0xf]
    %v2609 = vld [vmem:[%s16 + $0x1b8] sm:$0xf]
    %v2610 = vld [vmem:[%s16 + $0x1bc] sm:$0xf]
    %v2611 = vld [vmem:[%s16 + $0x1c0] sm:$0xf]
    %v2612 = vld [vmem:[%s16 + $0x1c4] sm:$0xf]
    %v2613 = vld [vmem:[%s16 + $0x1c8] sm:$0xf]
    %v2614 = vld [vmem:[%s16 + $0x1cc] sm:$0xf]
    %v2615 = vld [vmem:[%s16 + $0x1d0] sm:$0xf]
    %v2616 = vld [vmem:[%s16 + $0x1d4] sm:$0xf]
    %v2617 = vld [vmem:[%s16 + $0x1d8] sm:$0xf]
    %v2618 = vld [vmem:[%s16 + $0x1dc] sm:$0xf]
    %v2619 = vld [vmem:[%s16 + $0x1e0] sm:$0xf]
    %v2620 = vld [vmem:[%s16 + $0x1e4] sm:$0xf]
    %v2621 = vld [vmem:[%s16 + $0x1e8] sm:$0xf]
    %v2622 = vld [vmem:[%s16 + $0x1ec] sm:$0xf]
    %v2623 = vld [vmem:[%s16 + $0x1f0] sm:$0xf]
    %v2624 = vld [vmem:[%s16 + $0x1f4] sm:$0xf]
    %v2625 = vld [vmem:[%s16 + $0x1f8] sm:$0xf]
    %v2626 = vld [vmem:[%s16 + $0x1fc] sm:$0xf]
    %v2627 = vld [vmem:[%s16 + $0x200] sm:$0xf]
    %v2628 = vld [vmem:[%s16 + $0x204] sm:$0xf]
    %v2629 = vld [vmem:[%s16 + $0x208] sm:$0xf]
    %v2630 = vld [vmem:[%s16 + $0x20c] sm:$0xf]
    %v2631 = vld [vmem:[%s16 + $0x210] sm:$0xf]
    %v2632 = vld [vmem:[%s16 + $0x214] sm:$0xf]
    %v2633 = vld [vmem:[%s16 + $0x218] sm:$0xf]
    %v2634 = vld [vmem:[%s16 + $0x21c] sm:$0xf]
    %v2635 = vld [vmem:[%s16 + $0x220] sm:$0xf]
    %v2636 = vld [vmem:[%s16 + $0x224] sm:$0xf]
    %v2637 = vld [vmem:[%s16 + $0x228] sm:$0xf]
    %v2638 = vld [vmem:[%s16 + $0x22c] sm:$0xf]
    %v2639 = vld [vmem:[%s16 + $0x230] sm:$0xf]
    %v2640 = vld [vmem:[%s16 + $0x234] sm:$0xf]
    %v2641 = vld [vmem:[%s16 + $0x238] sm:$0xf]
    %v2642 = vld [vmem:[%s16 + $0x23c] sm:$0xf]
    %v2643 = vld [vmem:[%s16 + $0x240] sm:$0xf]
    %v2644 = vld [vmem:[%s16 + $0x244] sm:$0xf]
    %v2645 = vld [vmem:[%s16 + $0x248] sm:$0xf]
    %v2646 = vld [vmem:[%s16 + $0x24c] sm:$0xf]
    %v2647 = vld [vmem:[%s16 + $0x250] sm:$0xf]
    %v2648 = vld [vmem:[%s16 + $0x254] sm:$0xf]
    %v2649 = vld [vmem:[%s16 + $0x258] sm:$0xf]
    %v2650 = vld [vmem:[%s16 + $0x25c] sm:$0xf]
    %v2651 = vld [vmem:[%s16 + $0x260] sm:$0xf]
    %v2652 = vld [vmem:[%s16 + $0x264] sm:$0xf]
    %v2653 = vld [vmem:[%s16 + $0x268] sm:$0xf]
    %v2654 = vld [vmem:[%s16 + $0x26c] sm:$0xf]
    %v2655 = vld [vmem:[%s16 + $0x270] sm:$0xf]
    %v2656 = vld [vmem:[%s16 + $0x274] sm:$0xf]
    %v2657 = vld [vmem:[%s16 + $0x278] sm:$0xf]
    %v2658 = vld [vmem:[%s16 + $0x27c] sm:$0xf]
    %v2659 = vld [vmem:[%s16 + $0x280] sm:$0xf]
    %v2660 = vld [vmem:[%s16 + $0x284] sm:$0xf]
    %v2661 = vld [vmem:[%s16 + $0x288] sm:$0xf]
    %v2662 = vld [vmem:[%s16 + $0x28c] sm:$0xf]
    %v2663 = vld [vmem:[%s16 + $0x290] sm:$0xf]
    %v2664 = vld [vmem:[%s16 + $0x294] sm:$0xf]
    %v2665 = vld [vmem:[%s16 + $0x298] sm:$0xf]
    %v2666 = vld [vmem:[%s16 + $0x29c] sm:$0xf]
    %v2667 = vld [vmem:[%s16 + $0x2a0] sm:$0xf]
    %v2668 = vld [vmem:[%s16 + $0x2a4] sm:$0xf]
    %v2669 = vld [vmem:[%s16 + $0x2a8] sm:$0xf]
    %v2670 = vld [vmem:[%s16 + $0x2ac] sm:$0xf]
    %v2671 = vld [vmem:[%s16 + $0x2b0] sm:$0xf]
    %v2672 = vld [vmem:[%s16 + $0x2b4] sm:$0xf]
    %v2673 = vld [vmem:[%s16 + $0x2b8] sm:$0xf]
    %v2674 = vld [vmem:[%s16 + $0x2bc] sm:$0xf]
    %v2675 = vld [vmem:[%s16 + $0x2c0] sm:$0xf]
    %v2676 = vld [vmem:[%s16 + $0x2c4] sm:$0xf]
    %v2677 = vld [vmem:[%s16 + $0x2c8] sm:$0xf]
    %v2678 = vld [vmem:[%s16 + $0x2cc] sm:$0xf]
    %v2679 = vld [vmem:[%s16 + $0x2d0] sm:$0xf]
    %v2680 = vld [vmem:[%s16 + $0x2d4] sm:$0xf]
    %v2681 = vld [vmem:[%s16 + $0x2d8] sm:$0xf]
    %v2682 = vld [vmem:[%s16 + $0x2dc] sm:$0xf]
    %v2683 = vld [vmem:[%s16 + $0x2e0] sm:$0xf]
    %v2684 = vld [vmem:[%s16 + $0x2e4] sm:$0xf]
    %v2685 = vld [vmem:[%s16 + $0x2e8] sm:$0xf]
    %v2686 = vld [vmem:[%s16 + $0x2ec] sm:$0xf]
    %v2687 = vld [vmem:[%s16 + $0x2f0] sm:$0xf]
    %v2688 = vld [vmem:[%s16 + $0x2f4] sm:$0xf]
    %v2689 = vld [vmem:[%s16 + $0x2f8] sm:$0xf]
    %v2690 = vld [vmem:[%s16 + $0x2fc] sm:$0xf]
    %v2691 = vld [vmem:[%s16 + $0x300] sm:$0xf]
    %v2692 = vld [vmem:[%s16 + $0x304] sm:$0xf]
    %v2693 = vld [vmem:[%s16 + $0x308] sm:$0xf]
    %v2694 = vld [vmem:[%s16 + $0x30c] sm:$0xf]
    %v2695 = vld [vmem:[%s16 + $0x310] sm:$0xf]
    %v2696 = vld [vmem:[%s16 + $0x314] sm:$0xf]
    %v2697 = vld [vmem:[%s16 + $0x318] sm:$0xf]
    %v2698 = vld [vmem:[%s16 + $0x31c] sm:$0xf]
    %v2699 = vld [vmem:[%s16 + $0x320] sm:$0xf]
    %v2700 = vld [vmem:[%s16 + $0x324] sm:$0xf]
    %v2701 = vld [vmem:[%s16 + $0x328] sm:$0xf]
    %v2702 = vld [vmem:[%s16 + $0x32c] sm:$0xf]
    %v2703 = vld [vmem:[%s16 + $0x330] sm:$0xf]
    %v2704 = vld [vmem:[%s16 + $0x334] sm:$0xf]
    %v2705 = vld [vmem:[%s16 + $0x338] sm:$0xf]
    %v2706 = vld [vmem:[%s16 + $0x33c] sm:$0xf]
    %v2707 = vld [vmem:[%s16 + $0x340] sm:$0xf]
    %v2708 = vld [vmem:[%s16 + $0x344] sm:$0xf]
    %v2709 = vld [vmem:[%s16 + $0x348] sm:$0xf]
    %v2710 = vld [vmem:[%s16 + $0x34c] sm:$0xf]
    %v2711 = vld [vmem:[%s16 + $0x350] sm:$0xf]
    %v2712 = vld [vmem:[%s16 + $0x354] sm:$0xf]
    %v2713 = vld [vmem:[%s16 + $0x358] sm:$0xf]
    %v2714 = vld [vmem:[%s16 + $0x35c] sm:$0xf]
    %v2715 = vld [vmem:[%s16 + $0x360] sm:$0xf]
    %v2716 = vld [vmem:[%s16 + $0x364] sm:$0xf]
    %v2717 = vld [vmem:[%s16 + $0x368] sm:$0xf]
    %v2718 = vld [vmem:[%s16 + $0x36c] sm:$0xf]
    %v2719 = vld [vmem:[%s16 + $0x370] sm:$0xf]
    %v2720 = vld [vmem:[%s16 + $0x374] sm:$0xf]
    %v2721 = vld [vmem:[%s16 + $0x378] sm:$0xf]
    %v2722 = vld [vmem:[%s16 + $0x37c] sm:$0xf]
    %v2723 = vld [vmem:[%s16 + $0x380] sm:$0xf]
    %v2724 = vld [vmem:[%s16 + $0x384] sm:$0xf]
    %v2725 = vld [vmem:[%s16 + $0x388] sm:$0xf]
    %v2726 = vld [vmem:[%s16 + $0x38c] sm:$0xf]
    %v2727 = vld [vmem:[%s16 + $0x390] sm:$0xf]
    %v2728 = vld [vmem:[%s16 + $0x394] sm:$0xf]
    %v2729 = vld [vmem:[%s16 + $0x398] sm:$0xf]
    %v2730 = vld [vmem:[%s16 + $0x39c] sm:$0xf]
    %v2731 = vld [vmem:[%s16 + $0x3a0] sm:$0xf]
    %v2732 = vld [vmem:[%s16 + $0x3a4] sm:$0xf]
    %v2733 = vld [vmem:[%s16 + $0x3a8] sm:$0xf]
    %v2734 = vld [vmem:[%s16 + $0x3ac] sm:$0xf]
    %v2735 = vld [vmem:[%s16 + $0x3b0] sm:$0xf]
    %v2736 = vld [vmem:[%s16 + $0x3b4] sm:$0xf]
    %v2737 = vld [vmem:[%s16 + $0x3b8] sm:$0xf]
    %v2738 = vld [vmem:[%s16 + $0x3bc] sm:$0xf]
    %v2739 = vld [vmem:[%s16 + $0x3c0] sm:$0xf]
    %v2740 = vld [vmem:[%s16 + $0x3c4] sm:$0xf]
    %v2741 = vld [vmem:[%s16 + $0x3c8] sm:$0xf]
    %v2742 = vld [vmem:[%s16 + $0x3cc] sm:$0xf]
    %v2743 = vld [vmem:[%s16 + $0x3d0] sm:$0xf]
    %v2744 = vld [vmem:[%s16 + $0x3d4] sm:$0xf]
    %v2745 = vld [vmem:[%s16 + $0x3d8] sm:$0xf]
    %v2746 = vld [vmem:[%s16 + $0x3dc] sm:$0xf]
    %v2747 = vld [vmem:[%s16 + $0x3e0] sm:$0xf]
    %v2748 = vld [vmem:[%s16 + $0x3e4] sm:$0xf]
    %v2749 = vld [vmem:[%s16 + $0x3e8] sm:$0xf]
    %v2750 = vld [vmem:[%s16 + $0x3ec] sm:$0xf]
    %v2751 = vld [vmem:[%s16 + $0x3f0] sm:$0xf]
    %v2752 = vld [vmem:[%s16 + $0x3f4] sm:$0xf]
    %v2753 = vld [vmem:[%s16 + $0x3f8] sm:$0xf]
    %v2754 = vld [vmem:[%s16 + $0x3fc] sm:$0xf]
    %v2755 = vld [vmem:[%s17] sm:$0x1]
    %v2756 = vpack.c.bf16 %v2464, %v2463
    %v2759 = vlaneseq
    %v2760 = vshrl.u32 %v2759, 7
    %v2761 = vsub.s32 0, %v2760
    %v2762 = vrot.slane %v2497, %v2761
    %v2763 = vlaneseq
    %v2764 = vshrl.u32 %v2763, 7
    %v2765 = vsub.s32 1, %v2764
    %v2766 = vrot.slane %v2497, %v2765
    %v2767 = vlaneseq
    %v2768 = vshrl.u32 %v2767, 7
    %v2769 = vsub.s32 2, %v2768
    %v2770 = vrot.slane %v2497, %v2769
    %v2771 = vlaneseq
    %v2772 = vshrl.u32 %v2771, 7
    %v2773 = vsub.s32 3, %v2772
    %v2774 = vrot.slane %v2497, %v2773
    %v2775 = vlaneseq
    %v2776 = vshrl.u32 %v2775, 7
    %v2777 = vsub.s32 4, %v2776
    %v2778 = vrot.slane %v2497, %v2777
    %v2779 = vlaneseq
    %v2780 = vshrl.u32 %v2779, 7
    %v2781 = vsub.s32 5, %v2780
    %v2782 = vrot.slane %v2497, %v2781
    %v2783 = vlaneseq
    %v2784 = vshrl.u32 %v2783, 7
    %v2785 = vsub.s32 6, %v2784
    %v2786 = vrot.slane %v2497, %v2785
    %v2787 = vlaneseq
    %v2788 = vshrl.u32 %v2787, 7
    %v2789 = vsub.s32 7, %v2788
    %v2790 = vrot.slane %v2497, %v2789
    %v2791 = vlaneseq
    %v2792 = vshrl.u32 %v2791, 7
    %v2793 = vsub.s32 0, %v2792
    %v2794 = vrot.slane %v2498, %v2793
    %v2795 = vlaneseq
    %v2796 = vshrl.u32 %v2795, 7
    %v2797 = vsub.s32 1, %v2796
    %v2798 = vrot.slane %v2498, %v2797
    %v2799 = vlaneseq
    %v2800 = vshrl.u32 %v2799, 7
    %v2801 = vsub.s32 2, %v2800
    %v2802 = vrot.slane %v2498, %v2801
    %v2803 = vlaneseq
    %v2804 = vshrl.u32 %v2803, 7
    %v2805 = vsub.s32 3, %v2804
    %v2806 = vrot.slane %v2498, %v2805
    %v2807 = vlaneseq
    %v2808 = vshrl.u32 %v2807, 7
    %v2809 = vsub.s32 4, %v2808
    %v2810 = vrot.slane %v2498, %v2809
    %v2811 = vlaneseq
    %v2812 = vshrl.u32 %v2811, 7
    %v2813 = vsub.s32 5, %v2812
    %v2814 = vrot.slane %v2498, %v2813
    %v2815 = vlaneseq
    %v2816 = vshrl.u32 %v2815, 7
    %v2817 = vsub.s32 6, %v2816
    %v2818 = vrot.slane %v2498, %v2817
    %v2819 = vlaneseq
    %v2820 = vshrl.u32 %v2819, 7
    %v2821 = vsub.s32 7, %v2820
    %v2822 = vrot.slane %v2498, %v2821
    %v2871 = vunpack.c.l.b16 %v2465
    %v2872 = vunpack.c.h.b16 %v2465
    %v2873 = vunpack.c.l.b16 %v2466
    %v2874 = vunpack.c.h.b16 %v2466
    %v2875 = vunpack.c.l.b16 %v2467
    %v2876 = vunpack.c.h.b16 %v2467
    %v2877 = vunpack.c.l.b16 %v2468
    %v2878 = vunpack.c.h.b16 %v2468
    %v2879 = vunpack.c.l.b16 %v2469
    %v2880 = vunpack.c.h.b16 %v2469
    %v2881 = vunpack.c.l.b16 %v2470
    %v2882 = vunpack.c.h.b16 %v2470
    %v2883 = vunpack.c.l.b16 %v2471
    %v2884 = vunpack.c.h.b16 %v2471
    %v2885 = vunpack.c.l.b16 %v2472
    %v2886 = vunpack.c.h.b16 %v2472
    %v2887 = vunpack.c.l.b16 %v2473
    %v2888 = vunpack.c.h.b16 %v2473
    %v2889 = vunpack.c.l.b16 %v2474
    %v2890 = vunpack.c.h.b16 %v2474
    %v2891 = vunpack.c.l.b16 %v2475
    %v2892 = vunpack.c.h.b16 %v2475
    %v2893 = vunpack.c.l.b16 %v2476
    %v2894 = vunpack.c.h.b16 %v2476
    %v2895 = vunpack.c.l.b16 %v2477
    %v2896 = vunpack.c.h.b16 %v2477
    %v2897 = vunpack.c.l.b16 %v2478
    %v2898 = vunpack.c.h.b16 %v2478
    %v2899 = vunpack.c.l.b16 %v2479
    %v2900 = vunpack.c.h.b16 %v2479
    %v2901 = vunpack.c.l.b16 %v2480
    %v2902 = vunpack.c.h.b16 %v2480
    %v2903 = vunpack.c.l.b16 %v2481
    %v2904 = vunpack.c.h.b16 %v2481
    %v2905 = vunpack.c.l.b16 %v2482
    %v2906 = vunpack.c.h.b16 %v2482
    %v2907 = vunpack.c.l.b16 %v2483
    %v2908 = vunpack.c.h.b16 %v2483
    %v2909 = vunpack.c.l.b16 %v2484
    %v2910 = vunpack.c.h.b16 %v2484
    %v2911 = vunpack.c.l.b16 %v2485
    %v2912 = vunpack.c.h.b16 %v2485
    %v2913 = vunpack.c.l.b16 %v2486
    %v2914 = vunpack.c.h.b16 %v2486
    %v2915 = vunpack.c.l.b16 %v2487
    %v2916 = vunpack.c.h.b16 %v2487
    %v2917 = vunpack.c.l.b16 %v2488
    %v2918 = vunpack.c.h.b16 %v2488
    %v2919 = vunpack.c.l.b16 %v2489
    %v2920 = vunpack.c.h.b16 %v2489
    %v2921 = vunpack.c.l.b16 %v2490
    %v2922 = vunpack.c.h.b16 %v2490
    %v2923 = vunpack.c.l.b16 %v2491
    %v2924 = vunpack.c.h.b16 %v2491
    %v2925 = vunpack.c.l.b16 %v2492
    %v2926 = vunpack.c.h.b16 %v2492
    %v2927 = vunpack.c.l.b16 %v2493
    %v2928 = vunpack.c.h.b16 %v2493
    %v2929 = vunpack.c.l.b16 %v2494
    %v2930 = vunpack.c.h.b16 %v2494
    %v2931 = vunpack.c.l.b16 %v2495
    %v2932 = vunpack.c.h.b16 %v2495
    %v2933 = vunpack.c.l.b16 %v2496
    %v2934 = vunpack.c.h.b16 %v2496
    %v2935 = vpack.c.b16 %v2887, %v2871
    %v2936 = vpack.c.b16 %v2888, %v2872
    %v2937 = vpack.c.b16 %v2889, %v2873
    %v2938 = vpack.c.b16 %v2890, %v2874
    %v2939 = vpack.c.b16 %v2891, %v2875
    %v2940 = vpack.c.b16 %v2892, %v2876
    %v2941 = vpack.c.b16 %v2893, %v2877
    %v2942 = vpack.c.b16 %v2894, %v2878
    %v2943 = vpack.c.b16 %v2895, %v2879
    %v2944 = vpack.c.b16 %v2896, %v2880
    %v2945 = vpack.c.b16 %v2897, %v2881
    %v2946 = vpack.c.b16 %v2898, %v2882
    %v2947 = vpack.c.b16 %v2899, %v2883
    %v2948 = vpack.c.b16 %v2900, %v2884
    %v2949 = vpack.c.b16 %v2901, %v2885
    %v2950 = vpack.c.b16 %v2902, %v2886
    %v2951 = vpack.c.b16 %v2919, %v2903
    %v2952 = vpack.c.b16 %v2920, %v2904
    %v2953 = vpack.c.b16 %v2921, %v2905
    %v2954 = vpack.c.b16 %v2922, %v2906
    %v2955 = vpack.c.b16 %v2923, %v2907
    %v2956 = vpack.c.b16 %v2924, %v2908
    %v2957 = vpack.c.b16 %v2925, %v2909
    %v2958 = vpack.c.b16 %v2926, %v2910
    %v2959 = vpack.c.b16 %v2927, %v2911
    %v2960 = vpack.c.b16 %v2928, %v2912
    %v2961 = vpack.c.b16 %v2929, %v2913
    %v2962 = vpack.c.b16 %v2930, %v2914
    %v2963 = vpack.c.b16 %v2931, %v2915
    %v2964 = vpack.c.b16 %v2932, %v2916
    %v2965 = vpack.c.b16 %v2933, %v2917
    %v2966 = vpack.c.b16 %v2934, %v2918
    %v3000 = vsel %vm99, %v2756, 0
    %3002 = vmatprep.subr.bf16.mxu0 %v2936
    %3003 = vmatpush1.bf16.msra.mxu0 %v2935
    %3004 = vmatprep.subr.bf16.mxu0 %v2952
    %3005 = vmatpush1.bf16.msra.mxu0 %v2951
    %3006 = vmatprep.subr.bf16.mxu0 0
    %3007 = vmatpush1.bf16.msra.mxu0 0
    %3008 = vmatprep.subr.bf16.mxu0 0
    %3009 = vmatpush1.bf16.msra.mxu0 0
    %3010 = vmatprep.subr.bf16.mxu0 0
    %3011 = vmatpush1.bf16.msra.mxu0 0
    %3012 = vmatprep.subr.bf16.mxu0 0
    %3013 = vmatpush1.bf16.msra.mxu0 0
    %3014 = vmatprep.subr.bf16.mxu0 0
    %3015 = vmatpush1.bf16.msra.mxu0 0
    %3016 = vmatprep.subr.bf16.mxu0 0
    %3017 = vmatpush1.bf16.msra.mxu0 0
    %3018 = vmatprep.subr.bf16.mxu0 0
    %3019 = vmatpush1.bf16.msra.mxu0 0
    %3020 = vmatprep.subr.bf16.mxu0 0
    %3021 = vmatpush1.bf16.msra.mxu0 0
    %3022 = vmatprep.subr.bf16.mxu0 0
    %3023 = vmatpush1.bf16.msra.mxu0 0
    %3024 = vmatprep.subr.bf16.mxu0 0
    %3025 = vmatpush1.bf16.msra.mxu0 0
    %3026 = vmatprep.subr.bf16.mxu0 0
    %3027 = vmatpush1.bf16.msra.mxu0 0
    %3028 = vmatprep.subr.bf16.mxu0 0
    %3029 = vmatpush1.bf16.msra.mxu0 0
    %3030 = vmatprep.subr.bf16.mxu0 0
    %3031 = vmatpush1.bf16.msra.mxu0 0
    %3032 = vmatprep.subr.bf16.mxu0 0
    %3033 = vmatpush1.bf16.msra.mxu0 0
    %3034 = vmatprep.mubr.bf16.mxu0 0
    %3035 = vmatmul.mubr.bf16.gmra.mrb[0].mxu0 %v3000
    %v3036 = vpop.f32.mrb[0].mxu0
    %v3037 = vadd.f32 %v2762, %v3036
    %v3038 = vpop.f32.mrb[0].mxu0
    %v3039 = vadd.f32 %v2766, %v3038
    %v3040 = vpop.f32.mrb[0].mxu0
    %v3041 = vadd.f32 %v2762, %v3040
    %v3042 = vpop.f32.mrb[0].mxu0
    %v3043 = vadd.f32 %v2766, %v3042
    %3044 = vdwg.mxu0
    %3045 = vmatprep.subr.bf16.mxu0 %v2938
    %3046 = vmatpush1.bf16.msra.mxu0 %v2937
    %3047 = vmatprep.subr.bf16.mxu0 %v2954
    %3048 = vmatpush1.bf16.msra.mxu0 %v2953
    %3049 = vmatprep.subr.bf16.mxu0 0
    %3050 = vmatpush1.bf16.msra.mxu0 0
    %3051 = vmatprep.subr.bf16.mxu0 0
    %3052 = vmatpush1.bf16.msra.mxu0 0
    %3053 = vmatprep.subr.bf16.mxu0 0
    %3054 = vmatpush1.bf16.msra.mxu0 0
    %3055 = vmatprep.subr.bf16.mxu0 0
    %3056 = vmatpush1.bf16.msra.mxu0 0
    %3057 = vmatprep.subr.bf16.mxu0 0
    %3058 = vmatpush1.bf16.msra.mxu0 0
    %3059 = vmatprep.subr.bf16.mxu0 0
    %3060 = vmatpush1.bf16.msra.mxu0 0
    %3061 = vmatprep.subr.bf16.mxu0 0
    %3062 = vmatpush1.bf16.msra.mxu0 0
    %3063 = vmatprep.subr.bf16.mxu0 0
    %3064 = vmatpush1.bf16.msra.mxu0 0
    %3065 = vmatprep.subr.bf16.mxu0 0
    %3066 = vmatpush1.bf16.msra.mxu0 0
    %3067 = vmatprep.subr.bf16.mxu0 0
    %3068 = vmatpush1.bf16.msra.mxu0 0
    %3069 = vmatprep.subr.bf16.mxu0 0
    %3070 = vmatpush1.bf16.msra.mxu0 0
    %3071 = vmatprep.subr.bf16.mxu0 0
    %3072 = vmatpush1.bf16.msra.mxu0 0
    %3073 = vmatprep.subr.bf16.mxu0 0
    %3074 = vmatpush1.bf16.msra.mxu0 0
    %3075 = vmatprep.subr.bf16.mxu0 0
    %3076 = vmatpush1.bf16.msra.mxu0 0
    %3077 = vmatprep.mubr.bf16.mxu0 0
    %3078 = vmatmul.mubr.bf16.gmra.mrb[0].mxu0 %v3000
    %v3079 = vpop.f32.mrb[0].mxu0
    %v3080 = vadd.f32 %v2770, %v3079
    %v3081 = vpop.f32.mrb[0].mxu0
    %v3082 = vadd.f32 %v2774, %v3081
    %v3083 = vpop.f32.mrb[0].mxu0
    %v3084 = vadd.f32 %v2770, %v3083
    %v3085 = vpop.f32.mrb[0].mxu0
    %v3086 = vadd.f32 %v2774, %v3085
    %3087 = vdwg.mxu0
    %3088 = vmatprep.subr.bf16.mxu0 %v2940
    %3089 = vmatpush1.bf16.msra.mxu0 %v2939
    %3090 = vmatprep.subr.bf16.mxu0 %v2956
    %3091 = vmatpush1.bf16.msra.mxu0 %v2955
    %3092 = vmatprep.subr.bf16.mxu0 0
    %3093 = vmatpush1.bf16.msra.mxu0 0
    %3094 = vmatprep.subr.bf16.mxu0 0
    %3095 = vmatpush1.bf16.msra.mxu0 0
    %3096 = vmatprep.subr.bf16.mxu0 0
    %3097 = vmatpush1.bf16.msra.mxu0 0
    %3098 = vmatprep.subr.bf16.mxu0 0
    %3099 = vmatpush1.bf16.msra.mxu0 0
    %3100 = vmatprep.subr.bf16.mxu0 0
    %3101 = vmatpush1.bf16.msra.mxu0 0
    %3102 = vmatprep.subr.bf16.mxu0 0
    %3103 = vmatpush1.bf16.msra.mxu0 0
    %3104 = vmatprep.subr.bf16.mxu0 0
    %3105 = vmatpush1.bf16.msra.mxu0 0
    %3106 = vmatprep.subr.bf16.mxu0 0
    %3107 = vmatpush1.bf16.msra.mxu0 0
    %3108 = vmatprep.subr.bf16.mxu0 0
    %3109 = vmatpush1.bf16.msra.mxu0 0
    %3110 = vmatprep.subr.bf16.mxu0 0
    %3111 = vmatpush1.bf16.msra.mxu0 0
    %3112 = vmatprep.subr.bf16.mxu0 0
    %3113 = vmatpush1.bf16.msra.mxu0 0
    %3114 = vmatprep.subr.bf16.mxu0 0
    %3115 = vmatpush1.bf16.msra.mxu0 0
    %3116 = vmatprep.subr.bf16.mxu0 0
    %3117 = vmatpush1.bf16.msra.mxu0 0
    %3118 = vmatprep.subr.bf16.mxu0 0
    %3119 = vmatpush1.bf16.msra.mxu0 0
    %3120 = vmatprep.mubr.bf16.mxu0 0
    %3121 = vmatmul.mubr.bf16.gmra.mrb[0].mxu0 %v3000
    %v3122 = vpop.f32.mrb[0].mxu0
    %v3123 = vadd.f32 %v2778, %v3122
    %v3124 = vpop.f32.mrb[0].mxu0
    %v3125 = vadd.f32 %v2782, %v3124
    %v3126 = vpop.f32.mrb[0].mxu0
    %v3127 = vadd.f32 %v2778, %v3126
    %v3128 = vpop.f32.mrb[0].mxu0
    %v3129 = vadd.f32 %v2782, %v3128
    %3130 = vdwg.mxu0
    %3131 = vmatprep.subr.bf16.mxu0 %v2942
    %3132 = vmatpush1.bf16.msra.mxu0 %v2941
    %3133 = vmatprep.subr.bf16.mxu0 %v2958
    %3134 = vmatpush1.bf16.msra.mxu0 %v2957
    %3135 = vmatprep.subr.bf16.mxu0 0
    %3136 = vmatpush1.bf16.msra.mxu0 0
    %3137 = vmatprep.subr.bf16.mxu0 0
    %3138 = vmatpush1.bf16.msra.mxu0 0
    %3139 = vmatprep.subr.bf16.mxu0 0
    %3140 = vmatpush1.bf16.msra.mxu0 0
    %3141 = vmatprep.subr.bf16.mxu0 0
    %3142 = vmatpush1.bf16.msra.mxu0 0
    %3143 = vmatprep.subr.bf16.mxu0 0
    %3144 = vmatpush1.bf16.msra.mxu0 0
    %3145 = vmatprep.subr.bf16.mxu0 0
    %3146 = vmatpush1.bf16.msra.mxu0 0
    %3147 = vmatprep.subr.bf16.mxu0 0
    %3148 = vmatpush1.bf16.msra.mxu0 0
    %3149 = vmatprep.subr.bf16.mxu0 0
    %3150 = vmatpush1.bf16.msra.mxu0 0
    %3151 = vmatprep.subr.bf16.mxu0 0
    %3152 = vmatpush1.bf16.msra.mxu0 0
    %3153 = vmatprep.subr.bf16.mxu0 0
    %3154 = vmatpush1.bf16.msra.mxu0 0
    %3155 = vmatprep.subr.bf16.mxu0 0
    %3156 = vmatpush1.bf16.msra.mxu0 0
    %3157 = vmatprep.subr.bf16.mxu0 0
    %3158 = vmatpush1.bf16.msra.mxu0 0
    %3159 = vmatprep.subr.bf16.mxu0 0
    %3160 = vmatpush1.bf16.msra.mxu0 0
    %3161 = vmatprep.subr.bf16.mxu0 0
    %3162 = vmatpush1.bf16.msra.mxu0 0
    %3163 = vmatprep.mubr.bf16.mxu0 0
    %3164 = vmatmul.mubr.bf16.gmra.mrb[0].mxu0 %v3000
    %v3165 = vpop.f32.mrb[0].mxu0
    %v3166 = vadd.f32 %v2786, %v3165
    %v3167 = vpop.f32.mrb[0].mxu0
    %v3168 = vadd.f32 %v2790, %v3167
    %v3169 = vpop.f32.mrb[0].mxu0
    %v3170 = vadd.f32 %v2786, %v3169
    %v3171 = vpop.f32.mrb[0].mxu0
    %v3172 = vadd.f32 %v2790, %v3171
    %3173 = vdwg.mxu0
    %3174 = vmatprep.subr.bf16.mxu0 %v2944
    %3175 = vmatpush1.bf16.msra.mxu0 %v2943
    %3176 = vmatprep.subr.bf16.mxu0 %v2960
    %3177 = vmatpush1.bf16.msra.mxu0 %v2959
    %3178 = vmatprep.subr.bf16.mxu0 0
    %3179 = vmatpush1.bf16.msra.mxu0 0
    %3180 = vmatprep.subr.bf16.mxu0 0
    %3181 = vmatpush1.bf16.msra.mxu0 0
    %3182 = vmatprep.subr.bf16.mxu0 0
    %3183 = vmatpush1.bf16.msra.mxu0 0
    %3184 = vmatprep.subr.bf16.mxu0 0
    %3185 = vmatpush1.bf16.msra.mxu0 0
    %3186 = vmatprep.subr.bf16.mxu0 0
    %3187 = vmatpush1.bf16.msra.mxu0 0
    %3188 = vmatprep.subr.bf16.mxu0 0
    %3189 = vmatpush1.bf16.msra.mxu0 0
    %3190 = vmatprep.subr.bf16.mxu0 0
    %3191 = vmatpush1.bf16.msra.mxu0 0
    %3192 = vmatprep.subr.bf16.mxu0 0
    %3193 = vmatpush1.bf16.msra.mxu0 0
    %3194 = vmatprep.subr.bf16.mxu0 0
    %3195 = vmatpush1.bf16.msra.mxu0 0
    %3196 = vmatprep.subr.bf16.mxu0 0
    %3197 = vmatpush1.bf16.msra.mxu0 0
    %3198 = vmatprep.subr.bf16.mxu0 0
    %3199 = vmatpush1.bf16.msra.mxu0 0
    %3200 = vmatprep.subr.bf16.mxu0 0
    %3201 = vmatpush1.bf16.msra.mxu0 0
    %3202 = vmatprep.subr.bf16.mxu0 0
    %3203 = vmatpush1.bf16.msra.mxu0 0
    %3204 = vmatprep.subr.bf16.mxu0 0
    %3205 = vmatpush1.bf16.msra.mxu0 0
    %3206 = vmatprep.mubr.bf16.mxu0 0
    %3207 = vmatmul.mubr.bf16.gmra.mrb[0].mxu0 %v3000
    %v3208 = vpop.f32.mrb[0].mxu0
    %v3209 = vadd.f32 %v2794, %v3208
    %v3210 = vpop.f32.mrb[0].mxu0
    %v3211 = vadd.f32 %v2798, %v3210
    %v3212 = vpop.f32.mrb[0].mxu0
    %v3213 = vadd.f32 %v2794, %v3212
    %v3214 = vpop.f32.mrb[0].mxu0
    %v3215 = vadd.f32 %v2798, %v3214
    %3216 = vdwg.mxu0
    %3217 = vmatprep.subr.bf16.mxu0 %v2946
    %3218 = vmatpush1.bf16.msra.mxu0 %v2945
    %3219 = vmatprep.subr.bf16.mxu0 %v2962
    %3220 = vmatpush1.bf16.msra.mxu0 %v2961
    %3221 = vmatprep.subr.bf16.mxu0 0
    %3222 = vmatpush1.bf16.msra.mxu0 0
    %3223 = vmatprep.subr.bf16.mxu0 0
    %3224 = vmatpush1.bf16.msra.mxu0 0
    %3225 = vmatprep.subr.bf16.mxu0 0
    %3226 = vmatpush1.bf16.msra.mxu0 0
    %3227 = vmatprep.subr.bf16.mxu0 0
    %3228 = vmatpush1.bf16.msra.mxu0 0
    %3229 = vmatprep.subr.bf16.mxu0 0
    %3230 = vmatpush1.bf16.msra.mxu0 0
    %3231 = vmatprep.subr.bf16.mxu0 0
    %3232 = vmatpush1.bf16.msra.mxu0 0
    %3233 = vmatprep.subr.bf16.mxu0 0
    %3234 = vmatpush1.bf16.msra.mxu0 0
    %3235 = vmatprep.subr.bf16.mxu0 0
    %3236 = vmatpush1.bf16.msra.mxu0 0
    %3237 = vmatprep.subr.bf16.mxu0 0
    %3238 = vmatpush1.bf16.msra.mxu0 0
    %3239 = vmatprep.subr.bf16.mxu0 0
    %3240 = vmatpush1.bf16.msra.mxu0 0
    %3241 = vmatprep.subr.bf16.mxu0 0
    %3242 = vmatpush1.bf16.msra.mxu0 0
    %3243 = vmatprep.subr.bf16.mxu0 0
    %3244 = vmatpush1.bf16.msra.mxu0 0
    %3245 = vmatprep.subr.bf16.mxu0 0
    %3246 = vmatpush1.bf16.msra.mxu0 0
    %3247 = vmatprep.subr.bf16.mxu0 0
    %3248 = vmatpush1.bf16.msra.mxu0 0
    %3249 = vmatprep.mubr.bf16.mxu0 0
    %3250 = vmatmul.mubr.bf16.gmra.mrb[0].mxu0 %v3000
    %v3251 = vpop.f32.mrb[0].mxu0
    %v3252 = vadd.f32 %v2802, %v3251
    %v3253 = vpop.f32.mrb[0].mxu0
    %v3254 = vadd.f32 %v2806, %v3253
    %v3255 = vpop.f32.mrb[0].mxu0
    %v3256 = vadd.f32 %v2802, %v3255
    %v3257 = vpop.f32.mrb[0].mxu0
    %v3258 = vadd.f32 %v2806, %v3257
    %3259 = vdwg.mxu0
    %3260 = vmatprep.subr.bf16.mxu0 %v2948
    %3261 = vmatpush1.bf16.msra.mxu0 %v2947
    %3262 = vmatprep.subr.bf16.mxu0 %v2964
    %3263 = vmatpush1.bf16.msra.mxu0 %v2963
    %3264 = vmatprep.subr.bf16.mxu0 0
    %3265 = vmatpush1.bf16.msra.mxu0 0
    %3266 = vmatprep.subr.bf16.mxu0 0
    %3267 = vmatpush1.bf16.msra.mxu0 0
    %3268 = vmatprep.subr.bf16.mxu0 0
    %3269 = vmatpush1.bf16.msra.mxu0 0
    %3270 = vmatprep.subr.bf16.mxu0 0
    %3271 = vmatpush1.bf16.msra.mxu0 0
    %3272 = vmatprep.subr.bf16.mxu0 0
    %3273 = vmatpush1.bf16.msra.mxu0 0
    %3274 = vmatprep.subr.bf16.mxu0 0
    %3275 = vmatpush1.bf16.msra.mxu0 0
    %3276 = vmatprep.subr.bf16.mxu0 0
    %3277 = vmatpush1.bf16.msra.mxu0 0
    %3278 = vmatprep.subr.bf16.mxu0 0
    %3279 = vmatpush1.bf16.msra.mxu0 0
    %3280 = vmatprep.subr.bf16.mxu0 0
    %3281 = vmatpush1.bf16.msra.mxu0 0
    %3282 = vmatprep.subr.bf16.mxu0 0
    %3283 = vmatpush1.bf16.msra.mxu0 0
    %3284 = vmatprep.subr.bf16.mxu0 0
    %3285 = vmatpush1.bf16.msra.mxu0 0
    %3286 = vmatprep.subr.bf16.mxu0 0
    %3287 = vmatpush1.bf16.msra.mxu0 0
    %3288 = vmatprep.subr.bf16.mxu0 0
    %3289 = vmatpush1.bf16.msra.mxu0 0
    %3290 = vmatprep.subr.bf16.mxu0 0
    %3291 = vmatpush1.bf16.msra.mxu0 0
    %3292 = vmatprep.mubr.bf16.mxu0 0
    %3293 = vmatmul.mubr.bf16.gmra.mrb[0].mxu0 %v3000
    %v3294 = vpop.f32.mrb[0].mxu0
    %v3295 = vadd.f32 %v2810, %v3294
    %v3296 = vpop.f32.mrb[0].mxu0
    %v3297 = vadd.f32 %v2814, %v3296
    %v3298 = vpop.f32.mrb[0].mxu0
    %v3299 = vadd.f32 %v2810, %v3298
    %v3300 = vpop.f32.mrb[0].mxu0
    %v3301 = vadd.f32 %v2814, %v3300
    %3302 = vdwg.mxu0
    %3303 = vmatprep.subr.bf16.mxu0 %v2950
    %3304 = vmatpush1.bf16.msra.mxu0 %v2949
    %3305 = vmatprep.subr.bf16.mxu0 %v2966
    %3306 = vmatpush1.bf16.msra.mxu0 %v2965
    %3307 = vmatprep.subr.bf16.mxu0 0
    %3308 = vmatpush1.bf16.msra.mxu0 0
    %3309 = vmatprep.subr.bf16.mxu0 0
    %3310 = vmatpush1.bf16.msra.mxu0 0
    %3311 = vmatprep.subr.bf16.mxu0 0
    %3312 = vmatpush1.bf16.msra.mxu0 0
    %3313 = vmatprep.subr.bf16.mxu0 0
    %3314 = vmatpush1.bf16.msra.mxu0 0
    %3315 = vmatprep.subr.bf16.mxu0 0
    %3316 = vmatpush1.bf16.msra.mxu0 0
    %3317 = vmatprep.subr.bf16.mxu0 0
    %3318 = vmatpush1.bf16.msra.mxu0 0
    %3319 = vmatprep.subr.bf16.mxu0 0
    %3320 = vmatpush1.bf16.msra.mxu0 0
    %3321 = vmatprep.subr.bf16.mxu0 0
    %3322 = vmatpush1.bf16.msra.mxu0 0
    %3323 = vmatprep.subr.bf16.mxu0 0
    %3324 = vmatpush1.bf16.msra.mxu0 0
    %3325 = vmatprep.subr.bf16.mxu0 0
    %3326 = vmatpush1.bf16.msra.mxu0 0
    %3327 = vmatprep.subr.bf16.mxu0 0
    %3328 = vmatpush1.bf16.msra.mxu0 0
    %3329 = vmatprep.subr.bf16.mxu0 0
    %3330 = vmatpush1.bf16.msra.mxu0 0
    %3331 = vmatprep.subr.bf16.mxu0 0
    %3332 = vmatpush1.bf16.msra.mxu0 0
    %3333 = vmatprep.subr.bf16.mxu0 0
    %3334 = vmatpush1.bf16.msra.mxu0 0
    %3335 = vmatprep.mubr.bf16.mxu0 0
    %3336 = vmatmul.mubr.bf16.gmra.mrb[0].mxu0 %v3000
    %v3337 = vpop.f32.mrb[0].mxu0
    %v3338 = vadd.f32 %v2818, %v3337
    %v3339 = vpop.f32.mrb[0].mxu0
    %v3340 = vadd.f32 %v2822, %v3339
    %v3341 = vpop.f32.mrb[0].mxu0
    %v3342 = vadd.f32 %v2818, %v3341
    %v3343 = vpop.f32.mrb[0].mxu0
    %v3344 = vadd.f32 %v2822, %v3343
    %3345 = vdwg.mxu0
    %v3346 = vmax.f32 %v3037, 0.0
    %v3347 = vmax.f32 %v3039, 0.0
    %v3348 = vmax.f32 %v3080, 0.0
    %v3349 = vmax.f32 %v3082, 0.0
    %v3350 = vmax.f32 %v3123, 0.0
    %v3351 = vmax.f32 %v3125, 0.0
    %v3352 = vmax.f32 %v3166, 0.0
    %v3353 = vmax.f32 %v3168, 0.0
    %v3354 = vmax.f32 %v3209, 0.0
    %v3355 = vmax.f32 %v3211, 0.0
    %v3356 = vmax.f32 %v3252, 0.0
    %v3357 = vmax.f32 %v3254, 0.0
    %v3358 = vmax.f32 %v3295, 0.0
    %v3359 = vmax.f32 %v3297, 0.0
    %v3360 = vmax.f32 %v3338, 0.0
    %v3361 = vmax.f32 %v3340, 0.0
    %v3362 = vmax.f32 %v3041, 0.0
    %v3363 = vmax.f32 %v3043, 0.0
    %v3364 = vmax.f32 %v3084, 0.0
    %v3365 = vmax.f32 %v3086, 0.0
    %v3366 = vmax.f32 %v3127, 0.0
    %v3367 = vmax.f32 %v3129, 0.0
    %v3368 = vmax.f32 %v3170, 0.0
    %v3369 = vmax.f32 %v3172, 0.0
    %v3370 = vmax.f32 %v3213, 0.0
    %v3371 = vmax.f32 %v3215, 0.0
    %v3372 = vmax.f32 %v3256, 0.0
    %v3373 = vmax.f32 %v3258, 0.0
    %v3374 = vmax.f32 %v3299, 0.0
    %v3375 = vmax.f32 %v3301, 0.0
    %v3376 = vmax.f32 %v3342, 0.0
    %v3377 = vmax.f32 %v3344, 0.0
    %v3378 = vpack.c.bf16 %v3362, %v3346
    %v3379 = vpack.c.bf16 %v3363, %v3347
    %v3380 = vpack.c.bf16 %v3364, %v3348
    %v3381 = vpack.c.bf16 %v3365, %v3349
    %v3382 = vpack.c.bf16 %v3366, %v3350
    %v3383 = vpack.c.bf16 %v3367, %v3351
    %v3384 = vpack.c.bf16 %v3368, %v3352
    %v3385 = vpack.c.bf16 %v3369, %v3353
    %v3386 = vpack.c.bf16 %v3370, %v3354
    %v3387 = vpack.c.bf16 %v3371, %v3355
    %v3388 = vpack.c.bf16 %v3372, %v3356
    %v3389 = vpack.c.bf16 %v3373, %v3357
    %v3390 = vpack.c.bf16 %v3374, %v3358
    %v3391 = vpack.c.bf16 %v3375, %v3359
    %v3392 = vpack.c.bf16 %v3376, %v3360
    %v3393 = vpack.c.bf16 %v3377, %v3361
    %v3395 = vlaneseq
    %v3396 = vshrl.u32 %v3395, 7
    %v3397 = vsub.s32 0, %v3396
    %v3398 = vrot.slane %v2755, %v3397
    %v3656 = vunpack.c.l.b16 %v2499
    %v3657 = vunpack.c.l.b16 %v2500
    %v3658 = vunpack.c.l.b16 %v2501
    %v3659 = vunpack.c.l.b16 %v2502
    %v3660 = vunpack.c.l.b16 %v2503
    %v3661 = vunpack.c.l.b16 %v2504
    %v3662 = vunpack.c.l.b16 %v2505
    %v3663 = vunpack.c.l.b16 %v2506
    %v3664 = vunpack.c.l.b16 %v2507
    %v3665 = vunpack.c.l.b16 %v2508
    %v3666 = vunpack.c.l.b16 %v2509
    %v3667 = vunpack.c.l.b16 %v2510
    %v3668 = vunpack.c.l.b16 %v2511
    %v3669 = vunpack.c.l.b16 %v2512
    %v3670 = vunpack.c.l.b16 %v2513
    %v3671 = vunpack.c.l.b16 %v2514
    %v3672 = vunpack.c.l.b16 %v2515
    %v3673 = vunpack.c.l.b16 %v2516
    %v3674 = vunpack.c.l.b16 %v2517
    %v3675 = vunpack.c.l.b16 %v2518
    %v3676 = vunpack.c.l.b16 %v2519
    %v3677 = vunpack.c.l.b16 %v2520
    %v3678 = vunpack.c.l.b16 %v2521
    %v3679 = vunpack.c.l.b16 %v2522
    %v3680 = vunpack.c.l.b16 %v2523
    %v3681 = vunpack.c.l.b16 %v2524
    %v3682 = vunpack.c.l.b16 %v2525
    %v3683 = vunpack.c.l.b16 %v2526
    %v3684 = vunpack.c.l.b16 %v2527
    %v3685 = vunpack.c.l.b16 %v2528
    %v3686 = vunpack.c.l.b16 %v2529
    %v3687 = vunpack.c.l.b16 %v2530
    %v3688 = vunpack.c.l.b16 %v2531
    %v3689 = vunpack.c.l.b16 %v2532
    %v3690 = vunpack.c.l.b16 %v2533
    %v3691 = vunpack.c.l.b16 %v2534
    %v3692 = vunpack.c.l.b16 %v2535
    %v3693 = vunpack.c.l.b16 %v2536
    %v3694 = vunpack.c.l.b16 %v2537
    %v3695 = vunpack.c.l.b16 %v2538
    %v3696 = vunpack.c.l.b16 %v2539
    %v3697 = vunpack.c.l.b16 %v2540
    %v3698 = vunpack.c.l.b16 %v2541
    %v3699 = vunpack.c.l.b16 %v2542
    %v3700 = vunpack.c.l.b16 %v2543
    %v3701 = vunpack.c.l.b16 %v2544
    %v3702 = vunpack.c.l.b16 %v2545
    %v3703 = vunpack.c.l.b16 %v2546
    %v3704 = vunpack.c.l.b16 %v2547
    %v3705 = vunpack.c.l.b16 %v2548
    %v3706 = vunpack.c.l.b16 %v2549
    %v3707 = vunpack.c.l.b16 %v2550
    %v3708 = vunpack.c.l.b16 %v2551
    %v3709 = vunpack.c.l.b16 %v2552
    %v3710 = vunpack.c.l.b16 %v2553
    %v3711 = vunpack.c.l.b16 %v2554
    %v3712 = vunpack.c.l.b16 %v2555
    %v3713 = vunpack.c.l.b16 %v2556
    %v3714 = vunpack.c.l.b16 %v2557
    %v3715 = vunpack.c.l.b16 %v2558
    %v3716 = vunpack.c.l.b16 %v2559
    %v3717 = vunpack.c.l.b16 %v2560
    %v3718 = vunpack.c.l.b16 %v2561
    %v3719 = vunpack.c.l.b16 %v2562
    %v3720 = vunpack.c.l.b16 %v2563
    %v3721 = vunpack.c.l.b16 %v2564
    %v3722 = vunpack.c.l.b16 %v2565
    %v3723 = vunpack.c.l.b16 %v2566
    %v3724 = vunpack.c.l.b16 %v2567
    %v3725 = vunpack.c.l.b16 %v2568
    %v3726 = vunpack.c.l.b16 %v2569
    %v3727 = vunpack.c.l.b16 %v2570
    %v3728 = vunpack.c.l.b16 %v2571
    %v3729 = vunpack.c.l.b16 %v2572
    %v3730 = vunpack.c.l.b16 %v2573
    %v3731 = vunpack.c.l.b16 %v2574
    %v3732 = vunpack.c.l.b16 %v2575
    %v3733 = vunpack.c.l.b16 %v2576
    %v3734 = vunpack.c.l.b16 %v2577
    %v3735 = vunpack.c.l.b16 %v2578
    %v3736 = vunpack.c.l.b16 %v2579
    %v3737 = vunpack.c.l.b16 %v2580
    %v3738 = vunpack.c.l.b16 %v2581
    %v3739 = vunpack.c.l.b16 %v2582
    %v3740 = vunpack.c.l.b16 %v2583
    %v3741 = vunpack.c.l.b16 %v2584
    %v3742 = vunpack.c.l.b16 %v2585
    %v3743 = vunpack.c.l.b16 %v2586
    %v3744 = vunpack.c.l.b16 %v2587
    %v3745 = vunpack.c.l.b16 %v2588
    %v3746 = vunpack.c.l.b16 %v2589
    %v3747 = vunpack.c.l.b16 %v2590
    %v3748 = vunpack.c.l.b16 %v2591
    %v3749 = vunpack.c.l.b16 %v2592
    %v3750 = vunpack.c.l.b16 %v2593
    %v3751 = vunpack.c.l.b16 %v2594
    %v3752 = vunpack.c.l.b16 %v2595
    %v3753 = vunpack.c.l.b16 %v2596
    %v3754 = vunpack.c.l.b16 %v2597
    %v3755 = vunpack.c.l.b16 %v2598
    %v3756 = vunpack.c.l.b16 %v2599
    %v3757 = vunpack.c.l.b16 %v2600
    %v3758 = vunpack.c.l.b16 %v2601
    %v3759 = vunpack.c.l.b16 %v2602
    %v3760 = vunpack.c.l.b16 %v2603
    %v3761 = vunpack.c.l.b16 %v2604
    %v3762 = vunpack.c.l.b16 %v2605
    %v3763 = vunpack.c.l.b16 %v2606
    %v3764 = vunpack.c.l.b16 %v2607
    %v3765 = vunpack.c.l.b16 %v2608
    %v3766 = vunpack.c.l.b16 %v2609
    %v3767 = vunpack.c.l.b16 %v2610
    %v3768 = vunpack.c.l.b16 %v2611
    %v3769 = vunpack.c.l.b16 %v2612
    %v3770 = vunpack.c.l.b16 %v2613
    %v3771 = vunpack.c.l.b16 %v2614
    %v3772 = vunpack.c.l.b16 %v2615
    %v3773 = vunpack.c.l.b16 %v2616
    %v3774 = vunpack.c.l.b16 %v2617
    %v3775 = vunpack.c.l.b16 %v2618
    %v3776 = vunpack.c.l.b16 %v2619
    %v3777 = vunpack.c.l.b16 %v2620
    %v3778 = vunpack.c.l.b16 %v2621
    %v3779 = vunpack.c.l.b16 %v2622
    %v3780 = vunpack.c.l.b16 %v2623
    %v3781 = vunpack.c.l.b16 %v2624
    %v3782 = vunpack.c.l.b16 %v2625
    %v3783 = vunpack.c.l.b16 %v2626
    %v3784 = vunpack.c.l.b16 %v2627
    %v3785 = vunpack.c.l.b16 %v2628
    %v3786 = vunpack.c.l.b16 %v2629
    %v3787 = vunpack.c.l.b16 %v2630
    %v3788 = vunpack.c.l.b16 %v2631
    %v3789 = vunpack.c.l.b16 %v2632
    %v3790 = vunpack.c.l.b16 %v2633
    %v3791 = vunpack.c.l.b16 %v2634
    %v3792 = vunpack.c.l.b16 %v2635
    %v3793 = vunpack.c.l.b16 %v2636
    %v3794 = vunpack.c.l.b16 %v2637
    %v3795 = vunpack.c.l.b16 %v2638
    %v3796 = vunpack.c.l.b16 %v2639
    %v3797 = vunpack.c.l.b16 %v2640
    %v3798 = vunpack.c.l.b16 %v2641
    %v3799 = vunpack.c.l.b16 %v2642
    %v3800 = vunpack.c.l.b16 %v2643
    %v3801 = vunpack.c.l.b16 %v2644
    %v3802 = vunpack.c.l.b16 %v2645
    %v3803 = vunpack.c.l.b16 %v2646
    %v3804 = vunpack.c.l.b16 %v2647
    %v3805 = vunpack.c.l.b16 %v2648
    %v3806 = vunpack.c.l.b16 %v2649
    %v3807 = vunpack.c.l.b16 %v2650
    %v3808 = vunpack.c.l.b16 %v2651
    %v3809 = vunpack.c.l.b16 %v2652
    %v3810 = vunpack.c.l.b16 %v2653
    %v3811 = vunpack.c.l.b16 %v2654
    %v3812 = vunpack.c.l.b16 %v2655
    %v3813 = vunpack.c.l.b16 %v2656
    %v3814 = vunpack.c.l.b16 %v2657
    %v3815 = vunpack.c.l.b16 %v2658
    %v3816 = vunpack.c.l.b16 %v2659
    %v3817 = vunpack.c.l.b16 %v2660
    %v3818 = vunpack.c.l.b16 %v2661
    %v3819 = vunpack.c.l.b16 %v2662
    %v3820 = vunpack.c.l.b16 %v2663
    %v3821 = vunpack.c.l.b16 %v2664
    %v3822 = vunpack.c.l.b16 %v2665
    %v3823 = vunpack.c.l.b16 %v2666
    %v3824 = vunpack.c.l.b16 %v2667
    %v3825 = vunpack.c.l.b16 %v2668
    %v3826 = vunpack.c.l.b16 %v2669
    %v3827 = vunpack.c.l.b16 %v2670
    %v3828 = vunpack.c.l.b16 %v2671
    %v3829 = vunpack.c.l.b16 %v2672
    %v3830 = vunpack.c.l.b16 %v2673
    %v3831 = vunpack.c.l.b16 %v2674
    %v3832 = vunpack.c.l.b16 %v2675
    %v3833 = vunpack.c.l.b16 %v2676
    %v3834 = vunpack.c.l.b16 %v2677
    %v3835 = vunpack.c.l.b16 %v2678
    %v3836 = vunpack.c.l.b16 %v2679
    %v3837 = vunpack.c.l.b16 %v2680
    %v3838 = vunpack.c.l.b16 %v2681
    %v3839 = vunpack.c.l.b16 %v2682
    %v3840 = vunpack.c.l.b16 %v2683
    %v3841 = vunpack.c.l.b16 %v2684
    %v3842 = vunpack.c.l.b16 %v2685
    %v3843 = vunpack.c.l.b16 %v2686
    %v3844 = vunpack.c.l.b16 %v2687
    %v3845 = vunpack.c.l.b16 %v2688
    %v3846 = vunpack.c.l.b16 %v2689
    %v3847 = vunpack.c.l.b16 %v2690
    %v3848 = vunpack.c.l.b16 %v2691
    %v3849 = vunpack.c.l.b16 %v2692
    %v3850 = vunpack.c.l.b16 %v2693
    %v3851 = vunpack.c.l.b16 %v2694
    %v3852 = vunpack.c.l.b16 %v2695
    %v3853 = vunpack.c.l.b16 %v2696
    %v3854 = vunpack.c.l.b16 %v2697
    %v3855 = vunpack.c.l.b16 %v2698
    %v3856 = vunpack.c.l.b16 %v2699
    %v3857 = vunpack.c.l.b16 %v2700
    %v3858 = vunpack.c.l.b16 %v2701
    %v3859 = vunpack.c.l.b16 %v2702
    %v3860 = vunpack.c.l.b16 %v2703
    %v3861 = vunpack.c.l.b16 %v2704
    %v3862 = vunpack.c.l.b16 %v2705
    %v3863 = vunpack.c.l.b16 %v2706
    %v3864 = vunpack.c.l.b16 %v2707
    %v3865 = vunpack.c.l.b16 %v2708
    %v3866 = vunpack.c.l.b16 %v2709
    %v3867 = vunpack.c.l.b16 %v2710
    %v3868 = vunpack.c.l.b16 %v2711
    %v3869 = vunpack.c.l.b16 %v2712
    %v3870 = vunpack.c.l.b16 %v2713
    %v3871 = vunpack.c.l.b16 %v2714
    %v3872 = vunpack.c.l.b16 %v2715
    %v3873 = vunpack.c.l.b16 %v2716
    %v3874 = vunpack.c.l.b16 %v2717
    %v3875 = vunpack.c.l.b16 %v2718
    %v3876 = vunpack.c.l.b16 %v2719
    %v3877 = vunpack.c.l.b16 %v2720
    %v3878 = vunpack.c.l.b16 %v2721
    %v3879 = vunpack.c.l.b16 %v2722
    %v3880 = vunpack.c.l.b16 %v2723
    %v3881 = vunpack.c.l.b16 %v2724
    %v3882 = vunpack.c.l.b16 %v2725
    %v3883 = vunpack.c.l.b16 %v2726
    %v3884 = vunpack.c.l.b16 %v2727
    %v3885 = vunpack.c.l.b16 %v2728
    %v3886 = vunpack.c.l.b16 %v2729
    %v3887 = vunpack.c.l.b16 %v2730
    %v3888 = vunpack.c.l.b16 %v2731
    %v3889 = vunpack.c.l.b16 %v2732
    %v3890 = vunpack.c.l.b16 %v2733
    %v3891 = vunpack.c.l.b16 %v2734
    %v3892 = vunpack.c.l.b16 %v2735
    %v3893 = vunpack.c.l.b16 %v2736
    %v3894 = vunpack.c.l.b16 %v2737
    %v3895 = vunpack.c.l.b16 %v2738
    %v3896 = vunpack.c.l.b16 %v2739
    %v3897 = vunpack.c.l.b16 %v2740
    %v3898 = vunpack.c.l.b16 %v2741
    %v3899 = vunpack.c.l.b16 %v2742
    %v3900 = vunpack.c.l.b16 %v2743
    %v3901 = vunpack.c.l.b16 %v2744
    %v3902 = vunpack.c.l.b16 %v2745
    %v3903 = vunpack.c.l.b16 %v2746
    %v3904 = vunpack.c.l.b16 %v2747
    %v3905 = vunpack.c.l.b16 %v2748
    %v3906 = vunpack.c.l.b16 %v2749
    %v3907 = vunpack.c.l.b16 %v2750
    %v3908 = vunpack.c.l.b16 %v2751
    %v3909 = vunpack.c.l.b16 %v2752
    %v3910 = vunpack.c.l.b16 %v2753
    %v3911 = vunpack.c.l.b16 %v2754
    %v3912 = vpack.c.b16 %v3657, %v3656
    %v3913 = vpack.c.b16 %v3659, %v3658
    %v3914 = vpack.c.b16 %v3661, %v3660
    %v3915 = vpack.c.b16 %v3663, %v3662
    %v3916 = vpack.c.b16 %v3665, %v3664
    %v3917 = vpack.c.b16 %v3667, %v3666
    %v3918 = vpack.c.b16 %v3669, %v3668
    %v3919 = vpack.c.b16 %v3671, %v3670
    %v3920 = vpack.c.b16 %v3673, %v3672
    %v3921 = vpack.c.b16 %v3675, %v3674
    %v3922 = vpack.c.b16 %v3677, %v3676
    %v3923 = vpack.c.b16 %v3679, %v3678
    %v3924 = vpack.c.b16 %v3681, %v3680
    %v3925 = vpack.c.b16 %v3683, %v3682
    %v3926 = vpack.c.b16 %v3685, %v3684
    %v3927 = vpack.c.b16 %v3687, %v3686
    %v3928 = vpack.c.b16 %v3689, %v3688
    %v3929 = vpack.c.b16 %v3691, %v3690
    %v3930 = vpack.c.b16 %v3693, %v3692
    %v3931 = vpack.c.b16 %v3695, %v3694
    %v3932 = vpack.c.b16 %v3697, %v3696
    %v3933 = vpack.c.b16 %v3699, %v3698
    %v3934 = vpack.c.b16 %v3701, %v3700
    %v3935 = vpack.c.b16 %v3703, %v3702
    %v3936 = vpack.c.b16 %v3705, %v3704
    %v3937 = vpack.c.b16 %v3707, %v3706
    %v3938 = vpack.c.b16 %v3709, %v3708
    %v3939 = vpack.c.b16 %v3711, %v3710
    %v3940 = vpack.c.b16 %v3713, %v3712
    %v3941 = vpack.c.b16 %v3715, %v3714
    %v3942 = vpack.c.b16 %v3717, %v3716
    %v3943 = vpack.c.b16 %v3719, %v3718
    %v3944 = vpack.c.b16 %v3721, %v3720
    %v3945 = vpack.c.b16 %v3723, %v3722
    %v3946 = vpack.c.b16 %v3725, %v3724
    %v3947 = vpack.c.b16 %v3727, %v3726
    %v3948 = vpack.c.b16 %v3729, %v3728
    %v3949 = vpack.c.b16 %v3731, %v3730
    %v3950 = vpack.c.b16 %v3733, %v3732
    %v3951 = vpack.c.b16 %v3735, %v3734
    %v3952 = vpack.c.b16 %v3737, %v3736
    %v3953 = vpack.c.b16 %v3739, %v3738
    %v3954 = vpack.c.b16 %v3741, %v3740
    %v3955 = vpack.c.b16 %v3743, %v3742
    %v3956 = vpack.c.b16 %v3745, %v3744
    %v3957 = vpack.c.b16 %v3747, %v3746
    %v3958 = vpack.c.b16 %v3749, %v3748
    %v3959 = vpack.c.b16 %v3751, %v3750
    %v3960 = vpack.c.b16 %v3753, %v3752
    %v3961 = vpack.c.b16 %v3755, %v3754
    %v3962 = vpack.c.b16 %v3757, %v3756
    %v3963 = vpack.c.b16 %v3759, %v3758
    %v3964 = vpack.c.b16 %v3761, %v3760
    %v3965 = vpack.c.b16 %v3763, %v3762
    %v3966 = vpack.c.b16 %v3765, %v3764
    %v3967 = vpack.c.b16 %v3767, %v3766
    %v3968 = vpack.c.b16 %v3769, %v3768
    %v3969 = vpack.c.b16 %v3771, %v3770
    %v3970 = vpack.c.b16 %v3773, %v3772
    %v3971 = vpack.c.b16 %v3775, %v3774
    %v3972 = vpack.c.b16 %v3777, %v3776
    %v3973 = vpack.c.b16 %v3779, %v3778
    %v3974 = vpack.c.b16 %v3781, %v3780
    %v3975 = vpack.c.b16 %v3783, %v3782
    %v3976 = vpack.c.b16 %v3785, %v3784
    %v3977 = vpack.c.b16 %v3787, %v3786
    %v3978 = vpack.c.b16 %v3789, %v3788
    %v3979 = vpack.c.b16 %v3791, %v3790
    %v3980 = vpack.c.b16 %v3793, %v3792
    %v3981 = vpack.c.b16 %v3795, %v3794
    %v3982 = vpack.c.b16 %v3797, %v3796
    %v3983 = vpack.c.b16 %v3799, %v3798
    %v3984 = vpack.c.b16 %v3801, %v3800
    %v3985 = vpack.c.b16 %v3803, %v3802
    %v3986 = vpack.c.b16 %v3805, %v3804
    %v3987 = vpack.c.b16 %v3807, %v3806
    %v3988 = vpack.c.b16 %v3809, %v3808
    %v3989 = vpack.c.b16 %v3811, %v3810
    %v3990 = vpack.c.b16 %v3813, %v3812
    %v3991 = vpack.c.b16 %v3815, %v3814
    %v3992 = vpack.c.b16 %v3817, %v3816
    %v3993 = vpack.c.b16 %v3819, %v3818
    %v3994 = vpack.c.b16 %v3821, %v3820
    %v3995 = vpack.c.b16 %v3823, %v3822
    %v3996 = vpack.c.b16 %v3825, %v3824
    %v3997 = vpack.c.b16 %v3827, %v3826
    %v3998 = vpack.c.b16 %v3829, %v3828
    %v3999 = vpack.c.b16 %v3831, %v3830
    %v4000 = vpack.c.b16 %v3833, %v3832
    %v4001 = vpack.c.b16 %v3835, %v3834
    %v4002 = vpack.c.b16 %v3837, %v3836
    %v4003 = vpack.c.b16 %v3839, %v3838
    %v4004 = vpack.c.b16 %v3841, %v3840
    %v4005 = vpack.c.b16 %v3843, %v3842
    %v4006 = vpack.c.b16 %v3845, %v3844
    %v4007 = vpack.c.b16 %v3847, %v3846
    %v4008 = vpack.c.b16 %v3849, %v3848
    %v4009 = vpack.c.b16 %v3851, %v3850
    %v4010 = vpack.c.b16 %v3853, %v3852
    %v4011 = vpack.c.b16 %v3855, %v3854
    %v4012 = vpack.c.b16 %v3857, %v3856
    %v4013 = vpack.c.b16 %v3859, %v3858
    %v4014 = vpack.c.b16 %v3861, %v3860
    %v4015 = vpack.c.b16 %v3863, %v3862
    %v4016 = vpack.c.b16 %v3865, %v3864
    %v4017 = vpack.c.b16 %v3867, %v3866
    %v4018 = vpack.c.b16 %v3869, %v3868
    %v4019 = vpack.c.b16 %v3871, %v3870
    %v4020 = vpack.c.b16 %v3873, %v3872
    %v4021 = vpack.c.b16 %v3875, %v3874
    %v4022 = vpack.c.b16 %v3877, %v3876
    %v4023 = vpack.c.b16 %v3879, %v3878
    %v4024 = vpack.c.b16 %v3881, %v3880
    %v4025 = vpack.c.b16 %v3883, %v3882
    %v4026 = vpack.c.b16 %v3885, %v3884
    %v4027 = vpack.c.b16 %v3887, %v3886
    %v4028 = vpack.c.b16 %v3889, %v3888
    %v4029 = vpack.c.b16 %v3891, %v3890
    %v4030 = vpack.c.b16 %v3893, %v3892
    %v4031 = vpack.c.b16 %v3895, %v3894
    %v4032 = vpack.c.b16 %v3897, %v3896
    %v4033 = vpack.c.b16 %v3899, %v3898
    %v4034 = vpack.c.b16 %v3901, %v3900
    %v4035 = vpack.c.b16 %v3903, %v3902
    %v4036 = vpack.c.b16 %v3905, %v3904
    %v4037 = vpack.c.b16 %v3907, %v3906
    %v4038 = vpack.c.b16 %v3909, %v3908
    %v4039 = vpack.c.b16 %v3911, %v3910
    %4168 = vmatprep.subr.bf16.mxu0 0
    %4169 = vmatpush1.bf16.msra.mxu0 %v3912
    %4170 = vmatprep.subr.bf16.mxu0 0
    %4171 = vmatpush1.bf16.msra.mxu0 %v3913
    %4172 = vmatprep.subr.bf16.mxu0 0
    %4173 = vmatpush1.bf16.msra.mxu0 %v3914
    %4174 = vmatprep.subr.bf16.mxu0 0
    %4175 = vmatpush1.bf16.msra.mxu0 %v3915
    %4176 = vmatprep.subr.bf16.mxu0 0
    %4177 = vmatpush1.bf16.msra.mxu0 %v3916
    %4178 = vmatprep.subr.bf16.mxu0 0
    %4179 = vmatpush1.bf16.msra.mxu0 %v3917
    %4180 = vmatprep.subr.bf16.mxu0 0
    %4181 = vmatpush1.bf16.msra.mxu0 %v3918
    %4182 = vmatprep.subr.bf16.mxu0 0
    %4183 = vmatpush1.bf16.msra.mxu0 %v3919
    %4184 = vmatprep.subr.bf16.mxu0 0
    %4185 = vmatpush1.bf16.msra.mxu0 %v3920
    %4186 = vmatprep.subr.bf16.mxu0 0
    %4187 = vmatpush1.bf16.msra.mxu0 %v3921
    %4188 = vmatprep.subr.bf16.mxu0 0
    %4189 = vmatpush1.bf16.msra.mxu0 %v3922
    %4190 = vmatprep.subr.bf16.mxu0 0
    %4191 = vmatpush1.bf16.msra.mxu0 %v3923
    %4192 = vmatprep.subr.bf16.mxu0 0
    %4193 = vmatpush1.bf16.msra.mxu0 %v3924
    %4194 = vmatprep.subr.bf16.mxu0 0
    %4195 = vmatpush1.bf16.msra.mxu0 %v3925
    %4196 = vmatprep.subr.bf16.mxu0 0
    %4197 = vmatpush1.bf16.msra.mxu0 %v3926
    %4198 = vmatprep.subr.bf16.mxu0 0
    %4199 = vmatpush1.bf16.msra.mxu0 %v3927
    %4200 = vmatprep.mubr.bf16.mxu0 %v3379
    %4201 = vmatmul.mubr.bf16.gmra.mrb[0].mxu0 %v3378
    %v4202 = vpop.f32.mrb[0].mxu0
    %v4203 = vadd.f32 %v3398, %v4202
    %v4204 = vpop.f32.mrb[0].mxu0
    %v4205 = vpop.f32.mrb[0].mxu0
    %v4206 = vadd.f32 %v3398, %v4205
    %v4207 = vpop.f32.mrb[0].mxu0
    %4208 = vdwg.mxu0
    %4209 = vmatprep.subr.bf16.mxu0 0
    %4210 = vmatpush1.bf16.msra.mxu0 %v3928
    %4211 = vmatprep.subr.bf16.mxu0 0
    %4212 = vmatpush1.bf16.msra.mxu0 %v3929
    %4213 = vmatprep.subr.bf16.mxu0 0
    %4214 = vmatpush1.bf16.msra.mxu0 %v3930
    %4215 = vmatprep.subr.bf16.mxu0 0
    %4216 = vmatpush1.bf16.msra.mxu0 %v3931
    %4217 = vmatprep.subr.bf16.mxu0 0
    %4218 = vmatpush1.bf16.msra.mxu0 %v3932
    %4219 = vmatprep.subr.bf16.mxu0 0
    %4220 = vmatpush1.bf16.msra.mxu0 %v3933
    %4221 = vmatprep.subr.bf16.mxu0 0
    %4222 = vmatpush1.bf16.msra.mxu0 %v3934
    %4223 = vmatprep.subr.bf16.mxu0 0
    %4224 = vmatpush1.bf16.msra.mxu0 %v3935
    %4225 = vmatprep.subr.bf16.mxu0 0
    %4226 = vmatpush1.bf16.msra.mxu0 %v3936
    %4227 = vmatprep.subr.bf16.mxu0 0
    %4228 = vmatpush1.bf16.msra.mxu0 %v3937
    %4229 = vmatprep.subr.bf16.mxu0 0
    %4230 = vmatpush1.bf16.msra.mxu0 %v3938
    %4231 = vmatprep.subr.bf16.mxu0 0
    %4232 = vmatpush1.bf16.msra.mxu0 %v3939
    %4233 = vmatprep.subr.bf16.mxu0 0
    %4234 = vmatpush1.bf16.msra.mxu0 %v3940
    %4235 = vmatprep.subr.bf16.mxu0 0
    %4236 = vmatpush1.bf16.msra.mxu0 %v3941
    %4237 = vmatprep.subr.bf16.mxu0 0
    %4238 = vmatpush1.bf16.msra.mxu0 %v3942
    %4239 = vmatprep.subr.bf16.mxu0 0
    %4240 = vmatpush1.bf16.msra.mxu0 %v3943
    %4241 = vmatprep.mubr.bf16.mxu0 %v3381
    %4242 = vmatmul.mubr.bf16.gmra.mrb[0].mxu0 %v3380
    %v4243 = vpop.f32.mrb[0].mxu0
    %v4244 = vadd.f32 %v4203, %v4243
    %v4245 = vpop.f32.mrb[0].mxu0
    %v4246 = vpop.f32.mrb[0].mxu0
    %v4247 = vadd.f32 %v4206, %v4246
    %v4248 = vpop.f32.mrb[0].mxu0
    %4249 = vdwg.mxu0
    %4250 = vmatprep.subr.bf16.mxu0 0
    %4251 = vmatpush1.bf16.msra.mxu0 %v3944
    %4252 = vmatprep.subr.bf16.mxu0 0
    %4253 = vmatpush1.bf16.msra.mxu0 %v3945
    %4254 = vmatprep.subr.bf16.mxu0 0
    %4255 = vmatpush1.bf16.msra.mxu0 %v3946
    %4256 = vmatprep.subr.bf16.mxu0 0
    %4257 = vmatpush1.bf16.msra.mxu0 %v3947
    %4258 = vmatprep.subr.bf16.mxu0 0
    %4259 = vmatpush1.bf16.msra.mxu0 %v3948
    %4260 = vmatprep.subr.bf16.mxu0 0
    %4261 = vmatpush1.bf16.msra.mxu0 %v3949
    %4262 = vmatprep.subr.bf16.mxu0 0
    %4263 = vmatpush1.bf16.msra.mxu0 %v3950
    %4264 = vmatprep.subr.bf16.mxu0 0
    %4265 = vmatpush1.bf16.msra.mxu0 %v3951
    %4266 = vmatprep.subr.bf16.mxu0 0
    %4267 = vmatpush1.bf16.msra.mxu0 %v3952
    %4268 = vmatprep.subr.bf16.mxu0 0
    %4269 = vmatpush1.bf16.msra.mxu0 %v3953
    %4270 = vmatprep.subr.bf16.mxu0 0
    %4271 = vmatpush1.bf16.msra.mxu0 %v3954
    %4272 = vmatprep.subr.bf16.mxu0 0
    %4273 = vmatpush1.bf16.msra.mxu0 %v3955
    %4274 = vmatprep.subr.bf16.mxu0 0
    %4275 = vmatpush1.bf16.msra.mxu0 %v3956
    %4276 = vmatprep.subr.bf16.mxu0 0
    %4277 = vmatpush1.bf16.msra.mxu0 %v3957
    %4278 = vmatprep.subr.bf16.mxu0 0
    %4279 = vmatpush1.bf16.msra.mxu0 %v3958
    %4280 = vmatprep.subr.bf16.mxu0 0
    %4281 = vmatpush1.bf16.msra.mxu0 %v3959
    %4282 = vmatprep.mubr.bf16.mxu0 %v3383
    %4283 = vmatmul.mubr.bf16.gmra.mrb[0].mxu0 %v3382
    %v4284 = vpop.f32.mrb[0].mxu0
    %v4285 = vadd.f32 %v4244, %v4284
    %v4286 = vpop.f32.mrb[0].mxu0
    %v4287 = vpop.f32.mrb[0].mxu0
    %v4288 = vadd.f32 %v4247, %v4287
    %v4289 = vpop.f32.mrb[0].mxu0
    %4290 = vdwg.mxu0
    %4291 = vmatprep.subr.bf16.mxu0 0
    %4292 = vmatpush1.bf16.msra.mxu0 %v3960
    %4293 = vmatprep.subr.bf16.mxu0 0
    %4294 = vmatpush1.bf16.msra.mxu0 %v3961
    %4295 = vmatprep.subr.bf16.mxu0 0
    %4296 = vmatpush1.bf16.msra.mxu0 %v3962
    %4297 = vmatprep.subr.bf16.mxu0 0
    %4298 = vmatpush1.bf16.msra.mxu0 %v3963
    %4299 = vmatprep.subr.bf16.mxu0 0
    %4300 = vmatpush1.bf16.msra.mxu0 %v3964
    %4301 = vmatprep.subr.bf16.mxu0 0
    %4302 = vmatpush1.bf16.msra.mxu0 %v3965
    %4303 = vmatprep.subr.bf16.mxu0 0
    %4304 = vmatpush1.bf16.msra.mxu0 %v3966
    %4305 = vmatprep.subr.bf16.mxu0 0
    %4306 = vmatpush1.bf16.msra.mxu0 %v3967
    %4307 = vmatprep.subr.bf16.mxu0 0
    %4308 = vmatpush1.bf16.msra.mxu0 %v3968
    %4309 = vmatprep.subr.bf16.mxu0 0
    %4310 = vmatpush1.bf16.msra.mxu0 %v3969
    %4311 = vmatprep.subr.bf16.mxu0 0
    %4312 = vmatpush1.bf16.msra.mxu0 %v3970
    %4313 = vmatprep.subr.bf16.mxu0 0
    %4314 = vmatpush1.bf16.msra.mxu0 %v3971
    %4315 = vmatprep.subr.bf16.mxu0 0
    %4316 = vmatpush1.bf16.msra.mxu0 %v3972
    %4317 = vmatprep.subr.bf16.mxu0 0
    %4318 = vmatpush1.bf16.msra.mxu0 %v3973
    %4319 = vmatprep.subr.bf16.mxu0 0
    %4320 = vmatpush1.bf16.msra.mxu0 %v3974
    %4321 = vmatprep.subr.bf16.mxu0 0
    %4322 = vmatpush1.bf16.msra.mxu0 %v3975
    %4323 = vmatprep.mubr.bf16.mxu0 %v3385
    %4324 = vmatmul.mubr.bf16.gmra.mrb[0].mxu0 %v3384
    %v4325 = vpop.f32.mrb[0].mxu0
    %v4326 = vadd.f32 %v4285, %v4325
    %v4327 = vpop.f32.mrb[0].mxu0
    %v4328 = vpop.f32.mrb[0].mxu0
    %v4329 = vadd.f32 %v4288, %v4328
    %v4330 = vpop.f32.mrb[0].mxu0
    %4331 = vdwg.mxu0
    %4332 = vmatprep.subr.bf16.mxu0 0
    %4333 = vmatpush1.bf16.msra.mxu0 %v3976
    %4334 = vmatprep.subr.bf16.mxu0 0
    %4335 = vmatpush1.bf16.msra.mxu0 %v3977
    %4336 = vmatprep.subr.bf16.mxu0 0
    %4337 = vmatpush1.bf16.msra.mxu0 %v3978
    %4338 = vmatprep.subr.bf16.mxu0 0
    %4339 = vmatpush1.bf16.msra.mxu0 %v3979
    %4340 = vmatprep.subr.bf16.mxu0 0
    %4341 = vmatpush1.bf16.msra.mxu0 %v3980
    %4342 = vmatprep.subr.bf16.mxu0 0
    %4343 = vmatpush1.bf16.msra.mxu0 %v3981
    %4344 = vmatprep.subr.bf16.mxu0 0
    %4345 = vmatpush1.bf16.msra.mxu0 %v3982
    %4346 = vmatprep.subr.bf16.mxu0 0
    %4347 = vmatpush1.bf16.msra.mxu0 %v3983
    %4348 = vmatprep.subr.bf16.mxu0 0
    %4349 = vmatpush1.bf16.msra.mxu0 %v3984
    %4350 = vmatprep.subr.bf16.mxu0 0
    %4351 = vmatpush1.bf16.msra.mxu0 %v3985
    %4352 = vmatprep.subr.bf16.mxu0 0
    %4353 = vmatpush1.bf16.msra.mxu0 %v3986
    %4354 = vmatprep.subr.bf16.mxu0 0
    %4355 = vmatpush1.bf16.msra.mxu0 %v3987
    %4356 = vmatprep.subr.bf16.mxu0 0
    %4357 = vmatpush1.bf16.msra.mxu0 %v3988
    %4358 = vmatprep.subr.bf16.mxu0 0
    %4359 = vmatpush1.bf16.msra.mxu0 %v3989
    %4360 = vmatprep.subr.bf16.mxu0 0
    %4361 = vmatpush1.bf16.msra.mxu0 %v3990
    %4362 = vmatprep.subr.bf16.mxu0 0
    %4363 = vmatpush1.bf16.msra.mxu0 %v3991
    %4364 = vmatprep.mubr.bf16.mxu0 %v3387
    %4365 = vmatmul.mubr.bf16.gmra.mrb[0].mxu0 %v3386
    %v4366 = vpop.f32.mrb[0].mxu0
    %v4367 = vadd.f32 %v4326, %v4366
    %v4368 = vpop.f32.mrb[0].mxu0
    %v4369 = vpop.f32.mrb[0].mxu0
    %v4370 = vadd.f32 %v4329, %v4369
    %v4371 = vpop.f32.mrb[0].mxu0
    %4372 = vdwg.mxu0
    %4373 = vmatprep.subr.bf16.mxu0 0
    %4374 = vmatpush1.bf16.msra.mxu0 %v3992
    %4375 = vmatprep.subr.bf16.mxu0 0
    %4376 = vmatpush1.bf16.msra.mxu0 %v3993
    %4377 = vmatprep.subr.bf16.mxu0 0
    %4378 = vmatpush1.bf16.msra.mxu0 %v3994
    %4379 = vmatprep.subr.bf16.mxu0 0
    %4380 = vmatpush1.bf16.msra.mxu0 %v3995
    %4381 = vmatprep.subr.bf16.mxu0 0
    %4382 = vmatpush1.bf16.msra.mxu0 %v3996
    %4383 = vmatprep.subr.bf16.mxu0 0
    %4384 = vmatpush1.bf16.msra.mxu0 %v3997
    %4385 = vmatprep.subr.bf16.mxu0 0
    %4386 = vmatpush1.bf16.msra.mxu0 %v3998
    %4387 = vmatprep.subr.bf16.mxu0 0
    %4388 = vmatpush1.bf16.msra.mxu0 %v3999
    %4389 = vmatprep.subr.bf16.mxu0 0
    %4390 = vmatpush1.bf16.msra.mxu0 %v4000
    %4391 = vmatprep.subr.bf16.mxu0 0
    %4392 = vmatpush1.bf16.msra.mxu0 %v4001
    %4393 = vmatprep.subr.bf16.mxu0 0
    %4394 = vmatpush1.bf16.msra.mxu0 %v4002
    %4395 = vmatprep.subr.bf16.mxu0 0
    %4396 = vmatpush1.bf16.msra.mxu0 %v4003
    %4397 = vmatprep.subr.bf16.mxu0 0
    %4398 = vmatpush1.bf16.msra.mxu0 %v4004
    %4399 = vmatprep.subr.bf16.mxu0 0
    %4400 = vmatpush1.bf16.msra.mxu0 %v4005
    %4401 = vmatprep.subr.bf16.mxu0 0
    %4402 = vmatpush1.bf16.msra.mxu0 %v4006
    %4403 = vmatprep.subr.bf16.mxu0 0
    %4404 = vmatpush1.bf16.msra.mxu0 %v4007
    %4405 = vmatprep.mubr.bf16.mxu0 %v3389
    %4406 = vmatmul.mubr.bf16.gmra.mrb[0].mxu0 %v3388
    %v4407 = vpop.f32.mrb[0].mxu0
    %v4408 = vadd.f32 %v4367, %v4407
    %v4409 = vpop.f32.mrb[0].mxu0
    %v4410 = vpop.f32.mrb[0].mxu0
    %v4411 = vadd.f32 %v4370, %v4410
    %v4412 = vpop.f32.mrb[0].mxu0
    %4413 = vdwg.mxu0
    %4414 = vmatprep.subr.bf16.mxu0 0
    %4415 = vmatpush1.bf16.msra.mxu0 %v4008
    %4416 = vmatprep.subr.bf16.mxu0 0
    %4417 = vmatpush1.bf16.msra.mxu0 %v4009
    %4418 = vmatprep.subr.bf16.mxu0 0
    %4419 = vmatpush1.bf16.msra.mxu0 %v4010
    %4420 = vmatprep.subr.bf16.mxu0 0
    %4421 = vmatpush1.bf16.msra.mxu0 %v4011
    %4422 = vmatprep.subr.bf16.mxu0 0
    %4423 = vmatpush1.bf16.msra.mxu0 %v4012
    %4424 = vmatprep.subr.bf16.mxu0 0
    %4425 = vmatpush1.bf16.msra.mxu0 %v4013
    %4426 = vmatprep.subr.bf16.mxu0 0
    %4427 = vmatpush1.bf16.msra.mxu0 %v4014
    %4428 = vmatprep.subr.bf16.mxu0 0
    %4429 = vmatpush1.bf16.msra.mxu0 %v4015
    %4430 = vmatprep.subr.bf16.mxu0 0
    %4431 = vmatpush1.bf16.msra.mxu0 %v4016
    %4432 = vmatprep.subr.bf16.mxu0 0
    %4433 = vmatpush1.bf16.msra.mxu0 %v4017
    %4434 = vmatprep.subr.bf16.mxu0 0
    %4435 = vmatpush1.bf16.msra.mxu0 %v4018
    %4436 = vmatprep.subr.bf16.mxu0 0
    %4437 = vmatpush1.bf16.msra.mxu0 %v4019
    %4438 = vmatprep.subr.bf16.mxu0 0
    %4439 = vmatpush1.bf16.msra.mxu0 %v4020
    %4440 = vmatprep.subr.bf16.mxu0 0
    %4441 = vmatpush1.bf16.msra.mxu0 %v4021
    %4442 = vmatprep.subr.bf16.mxu0 0
    %4443 = vmatpush1.bf16.msra.mxu0 %v4022
    %4444 = vmatprep.subr.bf16.mxu0 0
    %4445 = vmatpush1.bf16.msra.mxu0 %v4023
    %4446 = vmatprep.mubr.bf16.mxu0 %v3391
    %4447 = vmatmul.mubr.bf16.gmra.mrb[0].mxu0 %v3390
    %v4448 = vpop.f32.mrb[0].mxu0
    %v4449 = vadd.f32 %v4408, %v4448
    %v4450 = vpop.f32.mrb[0].mxu0
    %v4451 = vpop.f32.mrb[0].mxu0
    %v4452 = vadd.f32 %v4411, %v4451
    %v4453 = vpop.f32.mrb[0].mxu0
    %4454 = vdwg.mxu0
    %4455 = vmatprep.subr.bf16.mxu0 0
    %4456 = vmatpush1.bf16.msra.mxu0 %v4024
    %4457 = vmatprep.subr.bf16.mxu0 0
    %4458 = vmatpush1.bf16.msra.mxu0 %v4025
    %4459 = vmatprep.subr.bf16.mxu0 0
    %4460 = vmatpush1.bf16.msra.mxu0 %v4026
    %4461 = vmatprep.subr.bf16.mxu0 0
    %4462 = vmatpush1.bf16.msra.mxu0 %v4027
    %4463 = vmatprep.subr.bf16.mxu0 0
    %4464 = vmatpush1.bf16.msra.mxu0 %v4028
    %4465 = vmatprep.subr.bf16.mxu0 0
    %4466 = vmatpush1.bf16.msra.mxu0 %v4029
    %4467 = vmatprep.subr.bf16.mxu0 0
    %4468 = vmatpush1.bf16.msra.mxu0 %v4030
    %4469 = vmatprep.subr.bf16.mxu0 0
    %4470 = vmatpush1.bf16.msra.mxu0 %v4031
    %4471 = vmatprep.subr.bf16.mxu0 0
    %4472 = vmatpush1.bf16.msra.mxu0 %v4032
    %4473 = vmatprep.subr.bf16.mxu0 0
    %4474 = vmatpush1.bf16.msra.mxu0 %v4033
    %4475 = vmatprep.subr.bf16.mxu0 0
    %4476 = vmatpush1.bf16.msra.mxu0 %v4034
    %4477 = vmatprep.subr.bf16.mxu0 0
    %4478 = vmatpush1.bf16.msra.mxu0 %v4035
    %4479 = vmatprep.subr.bf16.mxu0 0
    %4480 = vmatpush1.bf16.msra.mxu0 %v4036
    %4481 = vmatprep.subr.bf16.mxu0 0
    %4482 = vmatpush1.bf16.msra.mxu0 %v4037
    %4483 = vmatprep.subr.bf16.mxu0 0
    %4484 = vmatpush1.bf16.msra.mxu0 %v4038
    %4485 = vmatprep.subr.bf16.mxu0 0
    %4486 = vmatpush1.bf16.msra.mxu0 %v4039
    %4487 = vmatprep.mubr.bf16.mxu0 %v3393
    %4488 = vmatmul.mubr.bf16.gmra.mrb[0].mxu0 %v3392
    %v4489 = vpop.f32.mrb[0].mxu0
    %v4490 = vadd.f32 %v4449, %v4489
    %v4491 = vpop.f32.mrb[0].mxu0
    %v4492 = vpop.f32.mrb[0].mxu0
    %v4493 = vadd.f32 %v4452, %v4492
    %v4494 = vpop.f32.mrb[0].mxu0
    %4495 = vdwg.mxu0
    %v4496 = vadd.f32 %v2419, %v4490
    %v4497 = vadd.f32 %v2420, %v4493
    %s4498 = scalar_lea.vmem %s18, 1
    %v4499 = vld [vmem:[%s4498] sm:$0x1]
    %s4500 = scalar_lea.vmem %s19, 1
    %v4501 = vld [vmem:[%s4500] sm:$0x1]
    %v4502 = vsel %vm99, %v4496, 0.0
    %4503 = vadd.xlane.f32.xlu0 %v4502
    %v4504 = vpop.xlane.xlu0 %4503
    %v4505 = vsel %vm99, %v4497, 0.0
    %4506 = vadd.xlane.f32.xlu0 %v4505
    %v4507 = vpop.xlane.xlu0 %4506
    %v4508 = vmul.f32 %v4504, %v106
    %v4509 = vmul.f32 %v4507, %v106
    %v4510 = vsub.f32 %v4496, %v4508
    %v4511 = vsub.f32 %v4497, %v4509
    %v4512 = vmul.f32 %v4510, %v4510
    %v4513 = vmul.f32 %v4511, %v4511
    %v4514 = vsel %vm99, %v4512, 0.0
    %4515 = vadd.xlane.f32.xlu0 %v4514
    %v4516 = vpop.xlane.xlu0 %4515
    %v4517 = vsel %vm99, %v4513, 0.0
    %4518 = vadd.xlane.f32.xlu0 %v4517
    %v4519 = vpop.xlane.xlu0 %4518
    %v4520 = vmul.f32 %v4516, 0.032258064
    %v4521 = vmul.f32 %v4519, 0.032258064
    %v4522 = vadd.f32 %v4520, 1e-12
    %v4523 = vadd.f32 %v4521, 1e-12
    %v4524 = vrsqrt.pop %v4522
    %v4525 = vrsqrt.pop %v4523
    %v4526 = vmul.f32 %v4510, %v4524
    %v4527 = vmul.f32 %v4511, %v4525
    %v4529 = vlaneseq
    %v4530 = vshrl.u32 %v4529, 7
    %v4531 = vsub.s32 0, %v4530
    %v4532 = vrot.slane %v4499, %v4531
    %v4534 = vmul.f32 %v4532, %v4526
    %v4535 = vmul.f32 %v4532, %v4527
    %v4537 = vlaneseq
    %v4538 = vshrl.u32 %v4537, 7
    %v4539 = vsub.s32 0, %v4538
    %v4540 = vrot.slane %v4501, %v4539
    %v4542 = vadd.f32 %v4534, %v4540
    %v4543 = vadd.f32 %v4535, %v4540
    %v4544 = vpack.c.bf16 %v4543, %v4542
    %s4545 = scalar_lea.vmem %s4, 16
    %v4546 = vld [vmem:[%s4545] sm:$0xf]
    %v4547 = vld [vmem:[%s4545 + $0x4] sm:$0xf]
    %v4548 = vld [vmem:[%s4545 + $0x8] sm:$0xf]
    %v4549 = vld [vmem:[%s4545 + $0xc] sm:$0xf]
    %s4550 = scalar_lea.vmem %s5, 1
    %v4551 = vld [vmem:[%s4550] sm:$0x1]
    %v4553 = vlaneseq
    %v4554 = vshrl.u32 %v4553, 7
    %v4555 = vsub.s32 0, %v4554
    %v4556 = vrot.slane %v4551, %v4555
    %v4562 = vunpack.c.l.b16 %v4546
    %v4563 = vunpack.c.l.b16 %v4547
    %v4564 = vunpack.c.l.b16 %v4548
    %v4565 = vunpack.c.l.b16 %v4549
    %v4566 = vpack.c.b16 %v4563, %v4562
    %v4567 = vpack.c.b16 %v4565, %v4564
    %v4571 = vsel %vm99, %v4544, 0
    %4573 = vmatprep.subr.bf16.mxu0 0
    %4574 = vmatpush1.bf16.msra.mxu0 %v4566
    %4575 = vmatprep.subr.bf16.mxu0 0
    %4576 = vmatpush1.bf16.msra.mxu0 %v4567
    %4577 = vmatprep.subr.bf16.mxu0 0
    %4578 = vmatpush1.bf16.msra.mxu0 0
    %4579 = vmatprep.subr.bf16.mxu0 0
    %4580 = vmatpush1.bf16.msra.mxu0 0
    %4581 = vmatprep.subr.bf16.mxu0 0
    %4582 = vmatpush1.bf16.msra.mxu0 0
    %4583 = vmatprep.subr.bf16.mxu0 0
    %4584 = vmatpush1.bf16.msra.mxu0 0
    %4585 = vmatprep.subr.bf16.mxu0 0
    %4586 = vmatpush1.bf16.msra.mxu0 0
    %4587 = vmatprep.subr.bf16.mxu0 0
    %4588 = vmatpush1.bf16.msra.mxu0 0
    %4589 = vmatprep.subr.bf16.mxu0 0
    %4590 = vmatpush1.bf16.msra.mxu0 0
    %4591 = vmatprep.subr.bf16.mxu0 0
    %4592 = vmatpush1.bf16.msra.mxu0 0
    %4593 = vmatprep.subr.bf16.mxu0 0
    %4594 = vmatpush1.bf16.msra.mxu0 0
    %4595 = vmatprep.subr.bf16.mxu0 0
    %4596 = vmatpush1.bf16.msra.mxu0 0
    %4597 = vmatprep.subr.bf16.mxu0 0
    %4598 = vmatpush1.bf16.msra.mxu0 0
    %4599 = vmatprep.subr.bf16.mxu0 0
    %4600 = vmatpush1.bf16.msra.mxu0 0
    %4601 = vmatprep.subr.bf16.mxu0 0
    %4602 = vmatpush1.bf16.msra.mxu0 0
    %4603 = vmatprep.subr.bf16.mxu0 0
    %4604 = vmatpush1.bf16.msra.mxu0 0
    %4605 = vmatprep.mubr.bf16.mxu0 0
    %4606 = vmatmul.mubr.bf16.gmra.mrb[0].mxu0 %v4571
    %v4607 = vpop.f32.mrb[0].mxu0
    %v4608 = vadd.f32 %v4556, %v4607
    %v4609 = vpop.f32.mrb[0].mxu0
    %v4610 = vpop.f32.mrb[0].mxu0
    %v4611 = vadd.f32 %v4556, %v4610
    %v4612 = vpop.f32.mrb[0].mxu0
    %4613 = vdwg.mxu0
    %4615 = vrot.lane.b32.xlu0 %v4608, 120
    %v4616 = vpop.permute.xlu0 %4615
    %4618 = vrot.lane.b32.xlu0 %v4608, 112
    %v4619 = vpop.permute.xlu0 %4618
    %4621 = vrot.lane.b32.xlu0 %v4608, 104
    %v4622 = vpop.permute.xlu0 %4621
    %4625 = vrot.lane.b32.xlu0 %v4611, 120
    %v4626 = vpop.permute.xlu0 %4625
    %4628 = vrot.lane.b32.xlu0 %v4611, 112
    %v4629 = vpop.permute.xlu0 %4628
    %4631 = vrot.lane.b32.xlu0 %v4611, 104
    %v4632 = vpop.permute.xlu0 %4631
    %v4634 = vpack.c.bf16 %v4608, %v4608
    %v4635 = vpack.c.bf16 %v4616, %v4616
    %v4636 = vpack.c.bf16 %v4619, %v4619
    %v4637 = vpack.c.bf16 %v4622, %v4622
    %v4638 = vpack.c.bf16 %v4611, %v4611
    %v4639 = vpack.c.bf16 %v4626, %v4626
    %v4640 = vpack.c.bf16 %v4629, %v4629
    %v4641 = vpack.c.bf16 %v4632, %v4632
    %4643 = vrot.lane.b32.xlu0 %v4634, 96
    %v4644 = vpop.permute.xlu0 %4643
    %v4646 = vsel %vm242, %v4634, 0
    %v4649 = vsel %vm242, %v4644, 0
    %4651 = vmatprep.subr.bf16.mxu0 0
    %4652 = vmatpush1.bf16.xpose.msra.mxu0 %v4649
    %4653 = vmatprep.subr.bf16.mxu0 0
    %4654 = vmatpush1.bf16.xpose.msra.mxu0 0
    %4655 = vmatprep.subr.bf16.mxu0 0
    %4656 = vmatpush1.bf16.xpose.msra.mxu0 0
    %4657 = vmatprep.subr.bf16.mxu0 0
    %4658 = vmatpush1.bf16.xpose.msra.mxu0 0
    %4659 = vmatprep.subr.bf16.mxu0 0
    %4660 = vmatpush1.bf16.xpose.msra.mxu0 0
    %4661 = vmatprep.subr.bf16.mxu0 0
    %4662 = vmatpush1.bf16.xpose.msra.mxu0 0
    %4663 = vmatprep.subr.bf16.mxu0 0
    %4664 = vmatpush1.bf16.xpose.msra.mxu0 0
    %4665 = vmatprep.subr.bf16.mxu0 0
    %4666 = vmatpush1.bf16.xpose.msra.mxu0 0
    %4667 = vmatprep.subr.bf16.mxu0 0
    %4668 = vmatpush1.bf16.xpose.msra.mxu0 0
    %4669 = vmatprep.subr.bf16.mxu0 0
    %4670 = vmatpush1.bf16.xpose.msra.mxu0 0
    %4671 = vmatprep.subr.bf16.mxu0 0
    %4672 = vmatpush1.bf16.xpose.msra.mxu0 0
    %4673 = vmatprep.subr.bf16.mxu0 0
    %4674 = vmatpush1.bf16.xpose.msra.mxu0 0
    %4675 = vmatprep.subr.bf16.mxu0 0
    %4676 = vmatpush1.bf16.xpose.msra.mxu0 0
    %4677 = vmatprep.subr.bf16.mxu0 0
    %4678 = vmatpush1.bf16.xpose.msra.mxu0 0
    %4679 = vmatprep.subr.bf16.mxu0 0
    %4680 = vmatpush1.bf16.xpose.msra.mxu0 0
    %4681 = vmatprep.subr.bf16.mxu0 0
    %4682 = vmatpush1.bf16.xpose.msra.mxu0 0
    %4683 = vmatprep.mubr.bf16.mxu0 0
    %4684 = vmatmul.mubr.bf16.gmra.mrb[0].mxu0 %v4646
    %v4685 = vpop.f32.mrb[0].mxu0
    %v4686 = vadd.f32 %v87, %v4685
    %v4687 = vpop.f32.mrb[0].mxu0
    %v4688 = vpop.f32.mrb[0].mxu0
    %v4689 = vpop.f32.mrb[0].mxu0
    %4690 = vdwg.mxu0
    %4692 = vrot.lane.b32.xlu0 %v4635, 96
    %v4693 = vpop.permute.xlu0 %4692
    %v4695 = vsel %vm242, %v4635, 0
    %v4698 = vsel %vm242, %v4693, 0
    %4700 = vmatprep.subr.bf16.mxu0 0
    %4701 = vmatpush1.bf16.xpose.msra.mxu0 %v4698
    %4702 = vmatprep.subr.bf16.mxu0 0
    %4703 = vmatpush1.bf16.xpose.msra.mxu0 0
    %4704 = vmatprep.subr.bf16.mxu0 0
    %4705 = vmatpush1.bf16.xpose.msra.mxu0 0
    %4706 = vmatprep.subr.bf16.mxu0 0
    %4707 = vmatpush1.bf16.xpose.msra.mxu0 0
    %4708 = vmatprep.subr.bf16.mxu0 0
    %4709 = vmatpush1.bf16.xpose.msra.mxu0 0
    %4710 = vmatprep.subr.bf16.mxu0 0
    %4711 = vmatpush1.bf16.xpose.msra.mxu0 0
    %4712 = vmatprep.subr.bf16.mxu0 0
    %4713 = vmatpush1.bf16.xpose.msra.mxu0 0
    %4714 = vmatprep.subr.bf16.mxu0 0
    %4715 = vmatpush1.bf16.xpose.msra.mxu0 0
    %4716 = vmatprep.subr.bf16.mxu0 0
    %4717 = vmatpush1.bf16.xpose.msra.mxu0 0
    %4718 = vmatprep.subr.bf16.mxu0 0
    %4719 = vmatpush1.bf16.xpose.msra.mxu0 0
    %4720 = vmatprep.subr.bf16.mxu0 0
    %4721 = vmatpush1.bf16.xpose.msra.mxu0 0
    %4722 = vmatprep.subr.bf16.mxu0 0
    %4723 = vmatpush1.bf16.xpose.msra.mxu0 0
    %4724 = vmatprep.subr.bf16.mxu0 0
    %4725 = vmatpush1.bf16.xpose.msra.mxu0 0
    %4726 = vmatprep.subr.bf16.mxu0 0
    %4727 = vmatpush1.bf16.xpose.msra.mxu0 0
    %4728 = vmatprep.subr.bf16.mxu0 0
    %4729 = vmatpush1.bf16.xpose.msra.mxu0 0
    %4730 = vmatprep.subr.bf16.mxu0 0
    %4731 = vmatpush1.bf16.xpose.msra.mxu0 0
    %4732 = vmatprep.mubr.bf16.mxu0 0
    %4733 = vmatmul.mubr.bf16.gmra.mrb[0].mxu0 %v4695
    %v4734 = vpop.f32.mrb[0].mxu0
    %v4735 = vadd.f32 %v87, %v4734
    %v4736 = vpop.f32.mrb[0].mxu0
    %v4737 = vpop.f32.mrb[0].mxu0
    %v4738 = vpop.f32.mrb[0].mxu0
    %4739 = vdwg.mxu0
    %4741 = vrot.lane.b32.xlu0 %v4636, 96
    %v4742 = vpop.permute.xlu0 %4741
    %v4744 = vsel %vm242, %v4636, 0
    %v4747 = vsel %vm242, %v4742, 0
    %4749 = vmatprep.subr.bf16.mxu0 0
    %4750 = vmatpush1.bf16.xpose.msra.mxu0 %v4747
    %4751 = vmatprep.subr.bf16.mxu0 0
    %4752 = vmatpush1.bf16.xpose.msra.mxu0 0
    %4753 = vmatprep.subr.bf16.mxu0 0
    %4754 = vmatpush1.bf16.xpose.msra.mxu0 0
    %4755 = vmatprep.subr.bf16.mxu0 0
    %4756 = vmatpush1.bf16.xpose.msra.mxu0 0
    %4757 = vmatprep.subr.bf16.mxu0 0
    %4758 = vmatpush1.bf16.xpose.msra.mxu0 0
    %4759 = vmatprep.subr.bf16.mxu0 0
    %4760 = vmatpush1.bf16.xpose.msra.mxu0 0
    %4761 = vmatprep.subr.bf16.mxu0 0
    %4762 = vmatpush1.bf16.xpose.msra.mxu0 0
    %4763 = vmatprep.subr.bf16.mxu0 0
    %4764 = vmatpush1.bf16.xpose.msra.mxu0 0
    %4765 = vmatprep.subr.bf16.mxu0 0
    %4766 = vmatpush1.bf16.xpose.msra.mxu0 0
    %4767 = vmatprep.subr.bf16.mxu0 0
    %4768 = vmatpush1.bf16.xpose.msra.mxu0 0
    %4769 = vmatprep.subr.bf16.mxu0 0
    %4770 = vmatpush1.bf16.xpose.msra.mxu0 0
    %4771 = vmatprep.subr.bf16.mxu0 0
    %4772 = vmatpush1.bf16.xpose.msra.mxu0 0
    %4773 = vmatprep.subr.bf16.mxu0 0
    %4774 = vmatpush1.bf16.xpose.msra.mxu0 0
    %4775 = vmatprep.subr.bf16.mxu0 0
    %4776 = vmatpush1.bf16.xpose.msra.mxu0 0
    %4777 = vmatprep.subr.bf16.mxu0 0
    %4778 = vmatpush1.bf16.xpose.msra.mxu0 0
    %4779 = vmatprep.subr.bf16.mxu0 0
    %4780 = vmatpush1.bf16.xpose.msra.mxu0 0
    %4781 = vmatprep.mubr.bf16.mxu0 0
    %4782 = vmatmul.mubr.bf16.gmra.mrb[0].mxu0 %v4744
    %v4783 = vpop.f32.mrb[0].mxu0
    %v4784 = vadd.f32 %v87, %v4783
    %v4785 = vpop.f32.mrb[0].mxu0
    %v4786 = vpop.f32.mrb[0].mxu0
    %v4787 = vpop.f32.mrb[0].mxu0
    %4788 = vdwg.mxu0
    %4790 = vrot.lane.b32.xlu0 %v4637, 96
    %v4791 = vpop.permute.xlu0 %4790
    %v4793 = vsel %vm242, %v4637, 0
    %v4796 = vsel %vm242, %v4791, 0
    %4798 = vmatprep.subr.bf16.mxu0 0
    %4799 = vmatpush1.bf16.xpose.msra.mxu0 %v4796
    %4800 = vmatprep.subr.bf16.mxu0 0
    %4801 = vmatpush1.bf16.xpose.msra.mxu0 0
    %4802 = vmatprep.subr.bf16.mxu0 0
    %4803 = vmatpush1.bf16.xpose.msra.mxu0 0
    %4804 = vmatprep.subr.bf16.mxu0 0
    %4805 = vmatpush1.bf16.xpose.msra.mxu0 0
    %4806 = vmatprep.subr.bf16.mxu0 0
    %4807 = vmatpush1.bf16.xpose.msra.mxu0 0
    %4808 = vmatprep.subr.bf16.mxu0 0
    %4809 = vmatpush1.bf16.xpose.msra.mxu0 0
    %4810 = vmatprep.subr.bf16.mxu0 0
    %4811 = vmatpush1.bf16.xpose.msra.mxu0 0
    %4812 = vmatprep.subr.bf16.mxu0 0
    %4813 = vmatpush1.bf16.xpose.msra.mxu0 0
    %4814 = vmatprep.subr.bf16.mxu0 0
    %4815 = vmatpush1.bf16.xpose.msra.mxu0 0
    %4816 = vmatprep.subr.bf16.mxu0 0
    %4817 = vmatpush1.bf16.xpose.msra.mxu0 0
    %4818 = vmatprep.subr.bf16.mxu0 0
    %4819 = vmatpush1.bf16.xpose.msra.mxu0 0
    %4820 = vmatprep.subr.bf16.mxu0 0
    %4821 = vmatpush1.bf16.xpose.msra.mxu0 0
    %4822 = vmatprep.subr.bf16.mxu0 0
    %4823 = vmatpush1.bf16.xpose.msra.mxu0 0
    %4824 = vmatprep.subr.bf16.mxu0 0
    %4825 = vmatpush1.bf16.xpose.msra.mxu0 0
    %4826 = vmatprep.subr.bf16.mxu0 0
    %4827 = vmatpush1.bf16.xpose.msra.mxu0 0
    %4828 = vmatprep.subr.bf16.mxu0 0
    %4829 = vmatpush1.bf16.xpose.msra.mxu0 0
    %4830 = vmatprep.mubr.bf16.mxu0 0
    %4831 = vmatmul.mubr.bf16.gmra.mrb[0].mxu0 %v4793
    %v4832 = vpop.f32.mrb[0].mxu0
    %v4833 = vadd.f32 %v87, %v4832
    %v4834 = vpop.f32.mrb[0].mxu0
    %v4835 = vpop.f32.mrb[0].mxu0
    %v4836 = vpop.f32.mrb[0].mxu0
    %4837 = vdwg.mxu0
    %4839 = vrot.lane.b32.xlu0 %v4638, 96
    %v4840 = vpop.permute.xlu0 %4839
    %v4842 = vsel %vm242, %v4638, 0
    %v4845 = vsel %vm242, %v4840, 0
    %4847 = vmatprep.subr.bf16.mxu0 0
    %4848 = vmatpush1.bf16.xpose.msra.mxu0 %v4845
    %4849 = vmatprep.subr.bf16.mxu0 0
    %4850 = vmatpush1.bf16.xpose.msra.mxu0 0
    %4851 = vmatprep.subr.bf16.mxu0 0
    %4852 = vmatpush1.bf16.xpose.msra.mxu0 0
    %4853 = vmatprep.subr.bf16.mxu0 0
    %4854 = vmatpush1.bf16.xpose.msra.mxu0 0
    %4855 = vmatprep.subr.bf16.mxu0 0
    %4856 = vmatpush1.bf16.xpose.msra.mxu0 0
    %4857 = vmatprep.subr.bf16.mxu0 0
    %4858 = vmatpush1.bf16.xpose.msra.mxu0 0
    %4859 = vmatprep.subr.bf16.mxu0 0
    %4860 = vmatpush1.bf16.xpose.msra.mxu0 0
    %4861 = vmatprep.subr.bf16.mxu0 0
    %4862 = vmatpush1.bf16.xpose.msra.mxu0 0
    %4863 = vmatprep.subr.bf16.mxu0 0
    %4864 = vmatpush1.bf16.xpose.msra.mxu0 0
    %4865 = vmatprep.subr.bf16.mxu0 0
    %4866 = vmatpush1.bf16.xpose.msra.mxu0 0
    %4867 = vmatprep.subr.bf16.mxu0 0
    %4868 = vmatpush1.bf16.xpose.msra.mxu0 0
    %4869 = vmatprep.subr.bf16.mxu0 0
    %4870 = vmatpush1.bf16.xpose.msra.mxu0 0
    %4871 = vmatprep.subr.bf16.mxu0 0
    %4872 = vmatpush1.bf16.xpose.msra.mxu0 0
    %4873 = vmatprep.subr.bf16.mxu0 0
    %4874 = vmatpush1.bf16.xpose.msra.mxu0 0
    %4875 = vmatprep.subr.bf16.mxu0 0
    %4876 = vmatpush1.bf16.xpose.msra.mxu0 0
    %4877 = vmatprep.subr.bf16.mxu0 0
    %4878 = vmatpush1.bf16.xpose.msra.mxu0 0
    %4879 = vmatprep.mubr.bf16.mxu0 0
    %4880 = vmatmul.mubr.bf16.gmra.mrb[0].mxu0 %v4842
    %v4881 = vpop.f32.mrb[0].mxu0
    %v4882 = vadd.f32 %v88, %v4881
    %v4883 = vpop.f32.mrb[0].mxu0
    %v4884 = vpop.f32.mrb[0].mxu0
    %v4885 = vpop.f32.mrb[0].mxu0
    %4886 = vdwg.mxu0
    %4888 = vrot.lane.b32.xlu0 %v4639, 96
    %v4889 = vpop.permute.xlu0 %4888
    %v4891 = vsel %vm242, %v4639, 0
    %v4894 = vsel %vm242, %v4889, 0
    %4896 = vmatprep.subr.bf16.mxu0 0
    %4897 = vmatpush1.bf16.xpose.msra.mxu0 %v4894
    %4898 = vmatprep.subr.bf16.mxu0 0
    %4899 = vmatpush1.bf16.xpose.msra.mxu0 0
    %4900 = vmatprep.subr.bf16.mxu0 0
    %4901 = vmatpush1.bf16.xpose.msra.mxu0 0
    %4902 = vmatprep.subr.bf16.mxu0 0
    %4903 = vmatpush1.bf16.xpose.msra.mxu0 0
    %4904 = vmatprep.subr.bf16.mxu0 0
    %4905 = vmatpush1.bf16.xpose.msra.mxu0 0
    %4906 = vmatprep.subr.bf16.mxu0 0
    %4907 = vmatpush1.bf16.xpose.msra.mxu0 0
    %4908 = vmatprep.subr.bf16.mxu0 0
    %4909 = vmatpush1.bf16.xpose.msra.mxu0 0
    %4910 = vmatprep.subr.bf16.mxu0 0
    %4911 = vmatpush1.bf16.xpose.msra.mxu0 0
    %4912 = vmatprep.subr.bf16.mxu0 0
    %4913 = vmatpush1.bf16.xpose.msra.mxu0 0
    %4914 = vmatprep.subr.bf16.mxu0 0
    %4915 = vmatpush1.bf16.xpose.msra.mxu0 0
    %4916 = vmatprep.subr.bf16.mxu0 0
    %4917 = vmatpush1.bf16.xpose.msra.mxu0 0
    %4918 = vmatprep.subr.bf16.mxu0 0
    %4919 = vmatpush1.bf16.xpose.msra.mxu0 0
    %4920 = vmatprep.subr.bf16.mxu0 0
    %4921 = vmatpush1.bf16.xpose.msra.mxu0 0
    %4922 = vmatprep.subr.bf16.mxu0 0
    %4923 = vmatpush1.bf16.xpose.msra.mxu0 0
    %4924 = vmatprep.subr.bf16.mxu0 0
    %4925 = vmatpush1.bf16.xpose.msra.mxu0 0
    %4926 = vmatprep.subr.bf16.mxu0 0
    %4927 = vmatpush1.bf16.xpose.msra.mxu0 0
    %4928 = vmatprep.mubr.bf16.mxu0 0
    %4929 = vmatmul.mubr.bf16.gmra.mrb[0].mxu0 %v4891
    %v4930 = vpop.f32.mrb[0].mxu0
    %v4931 = vadd.f32 %v88, %v4930
    %v4932 = vpop.f32.mrb[0].mxu0
    %v4933 = vpop.f32.mrb[0].mxu0
    %v4934 = vpop.f32.mrb[0].mxu0
    %4935 = vdwg.mxu0
    %4937 = vrot.lane.b32.xlu0 %v4640, 96
    %v4938 = vpop.permute.xlu0 %4937
    %v4940 = vsel %vm242, %v4640, 0
    %v4943 = vsel %vm242, %v4938, 0
    %4945 = vmatprep.subr.bf16.mxu0 0
    %4946 = vmatpush1.bf16.xpose.msra.mxu0 %v4943
    %4947 = vmatprep.subr.bf16.mxu0 0
    %4948 = vmatpush1.bf16.xpose.msra.mxu0 0
    %4949 = vmatprep.subr.bf16.mxu0 0
    %4950 = vmatpush1.bf16.xpose.msra.mxu0 0
    %4951 = vmatprep.subr.bf16.mxu0 0
    %4952 = vmatpush1.bf16.xpose.msra.mxu0 0
    %4953 = vmatprep.subr.bf16.mxu0 0
    %4954 = vmatpush1.bf16.xpose.msra.mxu0 0
    %4955 = vmatprep.subr.bf16.mxu0 0
    %4956 = vmatpush1.bf16.xpose.msra.mxu0 0
    %4957 = vmatprep.subr.bf16.mxu0 0
    %4958 = vmatpush1.bf16.xpose.msra.mxu0 0
    %4959 = vmatprep.subr.bf16.mxu0 0
    %4960 = vmatpush1.bf16.xpose.msra.mxu0 0
    %4961 = vmatprep.subr.bf16.mxu0 0
    %4962 = vmatpush1.bf16.xpose.msra.mxu0 0
    %4963 = vmatprep.subr.bf16.mxu0 0
    %4964 = vmatpush1.bf16.xpose.msra.mxu0 0
    %4965 = vmatprep.subr.bf16.mxu0 0
    %4966 = vmatpush1.bf16.xpose.msra.mxu0 0
    %4967 = vmatprep.subr.bf16.mxu0 0
    %4968 = vmatpush1.bf16.xpose.msra.mxu0 0
    %4969 = vmatprep.subr.bf16.mxu0 0
    %4970 = vmatpush1.bf16.xpose.msra.mxu0 0
    %4971 = vmatprep.subr.bf16.mxu0 0
    %4972 = vmatpush1.bf16.xpose.msra.mxu0 0
    %4973 = vmatprep.subr.bf16.mxu0 0
    %4974 = vmatpush1.bf16.xpose.msra.mxu0 0
    %4975 = vmatprep.subr.bf16.mxu0 0
    %4976 = vmatpush1.bf16.xpose.msra.mxu0 0
    %4977 = vmatprep.mubr.bf16.mxu0 0
    %4978 = vmatmul.mubr.bf16.gmra.mrb[0].mxu0 %v4940
    %v4979 = vpop.f32.mrb[0].mxu0
    %v4980 = vadd.f32 %v88, %v4979
    %v4981 = vpop.f32.mrb[0].mxu0
    %v4982 = vpop.f32.mrb[0].mxu0
    %v4983 = vpop.f32.mrb[0].mxu0
    %4984 = vdwg.mxu0
    %4986 = vrot.lane.b32.xlu0 %v4641, 96
    %v4987 = vpop.permute.xlu0 %4986
    %v4989 = vsel %vm242, %v4641, 0
    %v4992 = vsel %vm242, %v4987, 0
    %4994 = vmatprep.subr.bf16.mxu0 0
    %4995 = vmatpush1.bf16.xpose.msra.mxu0 %v4992
    %4996 = vmatprep.subr.bf16.mxu0 0
    %4997 = vmatpush1.bf16.xpose.msra.mxu0 0
    %4998 = vmatprep.subr.bf16.mxu0 0
    %4999 = vmatpush1.bf16.xpose.msra.mxu0 0
    %5000 = vmatprep.subr.bf16.mxu0 0
    %5001 = vmatpush1.bf16.xpose.msra.mxu0 0
    %5002 = vmatprep.subr.bf16.mxu0 0
    %5003 = vmatpush1.bf16.xpose.msra.mxu0 0
    %5004 = vmatprep.subr.bf16.mxu0 0
    %5005 = vmatpush1.bf16.xpose.msra.mxu0 0
    %5006 = vmatprep.subr.bf16.mxu0 0
    %5007 = vmatpush1.bf16.xpose.msra.mxu0 0
    %5008 = vmatprep.subr.bf16.mxu0 0
    %5009 = vmatpush1.bf16.xpose.msra.mxu0 0
    %5010 = vmatprep.subr.bf16.mxu0 0
    %5011 = vmatpush1.bf16.xpose.msra.mxu0 0
    %5012 = vmatprep.subr.bf16.mxu0 0
    %5013 = vmatpush1.bf16.xpose.msra.mxu0 0
    %5014 = vmatprep.subr.bf16.mxu0 0
    %5015 = vmatpush1.bf16.xpose.msra.mxu0 0
    %5016 = vmatprep.subr.bf16.mxu0 0
    %5017 = vmatpush1.bf16.xpose.msra.mxu0 0
    %5018 = vmatprep.subr.bf16.mxu0 0
    %5019 = vmatpush1.bf16.xpose.msra.mxu0 0
    %5020 = vmatprep.subr.bf16.mxu0 0
    %5021 = vmatpush1.bf16.xpose.msra.mxu0 0
    %5022 = vmatprep.subr.bf16.mxu0 0
    %5023 = vmatpush1.bf16.xpose.msra.mxu0 0
    %5024 = vmatprep.subr.bf16.mxu0 0
    %5025 = vmatpush1.bf16.xpose.msra.mxu0 0
    %5026 = vmatprep.mubr.bf16.mxu0 0
    %5027 = vmatmul.mubr.bf16.gmra.mrb[0].mxu0 %v4989
    %v5028 = vpop.f32.mrb[0].mxu0
    %v5029 = vadd.f32 %v88, %v5028
    %v5030 = vpop.f32.mrb[0].mxu0
    %v5031 = vpop.f32.mrb[0].mxu0
    %v5032 = vpop.f32.mrb[0].mxu0
    %5033 = vdwg.mxu0
    %v5034 = vsel %vm242, %v4686, -inf
    %5035 = vmax.xlane.f32.xlu0 %v5034
    %v5036 = vpop.xlane.xlu0 %5035
    %v5037 = vsel %vm242, %v4735, -inf
    %5038 = vmax.xlane.f32.xlu0 %v5037
    %v5039 = vpop.xlane.xlu0 %5038
    %v5040 = vsel %vm242, %v4784, -inf
    %5041 = vmax.xlane.f32.xlu0 %v5040
    %v5042 = vpop.xlane.xlu0 %5041
    %v5043 = vsel %vm242, %v4833, -inf
    %5044 = vmax.xlane.f32.xlu0 %v5043
    %v5045 = vpop.xlane.xlu0 %5044
    %v5046 = vsel %vm242, %v4882, -inf
    %5047 = vmax.xlane.f32.xlu0 %v5046
    %v5048 = vpop.xlane.xlu0 %5047
    %v5049 = vsel %vm242, %v4931, -inf
    %5050 = vmax.xlane.f32.xlu0 %v5049
    %v5051 = vpop.xlane.xlu0 %5050
    %v5052 = vsel %vm242, %v4980, -inf
    %5053 = vmax.xlane.f32.xlu0 %v5052
    %v5054 = vpop.xlane.xlu0 %5053
    %v5055 = vsel %vm242, %v5029, -inf
    %5056 = vmax.xlane.f32.xlu0 %v5055
    %v5057 = vpop.xlane.xlu0 %5056
    %v5058 = vsub.f32 %v4686, %v5036
    %v5059 = vsub.f32 %v4735, %v5039
    %v5060 = vsub.f32 %v4784, %v5042
    %v5061 = vsub.f32 %v4833, %v5045
    %v5062 = vsub.f32 %v4882, %v5048
    %v5063 = vsub.f32 %v4931, %v5051
    %v5064 = vsub.f32 %v4980, %v5054
    %v5065 = vsub.f32 %v5029, %v5057
    %v5066 = vmul.f32 %v5058, 1.442695
    %v5067 = vpow.pop %v5066
    %v5068 = vmul.f32 %v5059, 1.442695
    %v5069 = vpow.pop %v5068
    %v5070 = vmul.f32 %v5060, 1.442695
    %v5071 = vpow.pop %v5070
    %v5072 = vmul.f32 %v5061, 1.442695
    %v5073 = vpow.pop %v5072
    %v5074 = vmul.f32 %v5062, 1.442695
    %v5075 = vpow.pop %v5074
    %v5076 = vmul.f32 %v5063, 1.442695
    %v5077 = vpow.pop %v5076
    %v5078 = vmul.f32 %v5064, 1.442695
    %v5079 = vpow.pop %v5078
    %v5080 = vmul.f32 %v5065, 1.442695
    %v5081 = vpow.pop %v5080
    %v5082 = vsel %vm242, %v5067, 0.0
    %5083 = vadd.xlane.f32.xlu0 %v5082
    %v5084 = vpop.xlane.xlu0 %5083
    %v5085 = vsel %vm242, %v5069, 0.0
    %5086 = vadd.xlane.f32.xlu0 %v5085
    %v5087 = vpop.xlane.xlu0 %5086
    %v5088 = vsel %vm242, %v5071, 0.0
    %5089 = vadd.xlane.f32.xlu0 %v5088
    %v5090 = vpop.xlane.xlu0 %5089
    %v5091 = vsel %vm242, %v5073, 0.0
    %5092 = vadd.xlane.f32.xlu0 %v5091
    %v5093 = vpop.xlane.xlu0 %5092
    %v5094 = vsel %vm242, %v5075, 0.0
    %5095 = vadd.xlane.f32.xlu0 %v5094
    %v5096 = vpop.xlane.xlu0 %5095
    %v5097 = vsel %vm242, %v5077, 0.0
    %5098 = vadd.xlane.f32.xlu0 %v5097
    %v5099 = vpop.xlane.xlu0 %5098
    %v5100 = vsel %vm242, %v5079, 0.0
    %5101 = vadd.xlane.f32.xlu0 %v5100
    %v5102 = vpop.xlane.xlu0 %5101
    %v5103 = vsel %vm242, %v5081, 0.0
    %5104 = vadd.xlane.f32.xlu0 %v5103
    %v5105 = vpop.xlane.xlu0 %5104
    %v5106 = vrcp.pop %v5084
    %v5107 = vrcp.pop %v5087
    %v5108 = vrcp.pop %v5090
    %v5109 = vrcp.pop %v5093
    %v5110 = vrcp.pop %v5096
    %v5111 = vrcp.pop %v5099
    %v5112 = vrcp.pop %v5102
    %v5113 = vrcp.pop %v5105
    %v5114 = vmul.f32 %v5067, %v5106
    %v5115 = vmul.f32 %v5069, %v5107
    %v5116 = vmul.f32 %v5071, %v5108
    %v5117 = vmul.f32 %v5073, %v5109
    %v5118 = vmul.f32 %v5075, %v5110
    %v5119 = vmul.f32 %v5077, %v5111
    %v5120 = vmul.f32 %v5079, %v5112
    %v5121 = vmul.f32 %v5081, %v5113
    %v5122 = vpack.c.bf16 %v5114, %v5114
    %v5123 = vpack.c.bf16 %v5115, %v5115
    %v5124 = vpack.c.bf16 %v5116, %v5116
    %v5125 = vpack.c.bf16 %v5117, %v5117
    %v5126 = vpack.c.bf16 %v5118, %v5118
    %v5127 = vpack.c.bf16 %v5119, %v5119
    %v5128 = vpack.c.bf16 %v5120, %v5120
    %v5129 = vpack.c.bf16 %v5121, %v5121
    %5130 = vrot.lane.b32.xlu0 %v4634, 64
    %v5131 = vpop.permute.xlu0 %5130
    %v5133 = vsel %vm242, %v5122, 0
    %v5136 = vsel %vm733, %v5131, 0
    %5138 = vmatprep.subr.bf16.mxu0 0
    %5139 = vmatpush1.bf16.msra.mxu0 %v5136
    %5140 = vmatprep.subr.bf16.mxu0 0
    %5141 = vmatpush1.bf16.msra.mxu0 0
    %5142 = vmatprep.subr.bf16.mxu0 0
    %5143 = vmatpush1.bf16.msra.mxu0 0
    %5144 = vmatprep.subr.bf16.mxu0 0
    %5145 = vmatpush1.bf16.msra.mxu0 0
    %5146 = vmatprep.subr.bf16.mxu0 0
    %5147 = vmatpush1.bf16.msra.mxu0 0
    %5148 = vmatprep.subr.bf16.mxu0 0
    %5149 = vmatpush1.bf16.msra.mxu0 0
    %5150 = vmatprep.subr.bf16.mxu0 0
    %5151 = vmatpush1.bf16.msra.mxu0 0
    %5152 = vmatprep.subr.bf16.mxu0 0
    %5153 = vmatpush1.bf16.msra.mxu0 0
    %5154 = vmatprep.subr.bf16.mxu0 0
    %5155 = vmatpush1.bf16.msra.mxu0 0
    %5156 = vmatprep.subr.bf16.mxu0 0
    %5157 = vmatpush1.bf16.msra.mxu0 0
    %5158 = vmatprep.subr.bf16.mxu0 0
    %5159 = vmatpush1.bf16.msra.mxu0 0
    %5160 = vmatprep.subr.bf16.mxu0 0
    %5161 = vmatpush1.bf16.msra.mxu0 0
    %5162 = vmatprep.subr.bf16.mxu0 0
    %5163 = vmatpush1.bf16.msra.mxu0 0
    %5164 = vmatprep.subr.bf16.mxu0 0
    %5165 = vmatpush1.bf16.msra.mxu0 0
    %5166 = vmatprep.subr.bf16.mxu0 0
    %5167 = vmatpush1.bf16.msra.mxu0 0
    %5168 = vmatprep.subr.bf16.mxu0 0
    %5169 = vmatpush1.bf16.msra.mxu0 0
    %5170 = vmatprep.mubr.bf16.mxu0 0
    %5171 = vmatmul.mubr.bf16.gmra.mrb[0].mxu0 %v5133
    %v5172 = vpop.f32.mrb[0].mxu0
    %v5173 = vadd.f32 0.0, %v5172
    %v5174 = vpop.f32.mrb[0].mxu0
    %v5175 = vpop.f32.mrb[0].mxu0
    %v5176 = vpop.f32.mrb[0].mxu0
    %5177 = vdwg.mxu0
    %5178 = vrot.lane.b32.xlu0 %v4635, 64
    %v5179 = vpop.permute.xlu0 %5178
    %v5181 = vsel %vm242, %v5123, 0
    %v5184 = vsel %vm733, %v5179, 0
    %5186 = vmatprep.subr.bf16.mxu0 0
    %5187 = vmatpush1.bf16.msra.mxu0 %v5184
    %5188 = vmatprep.subr.bf16.mxu0 0
    %5189 = vmatpush1.bf16.msra.mxu0 0
    %5190 = vmatprep.subr.bf16.mxu0 0
    %5191 = vmatpush1.bf16.msra.mxu0 0
    %5192 = vmatprep.subr.bf16.mxu0 0
    %5193 = vmatpush1.bf16.msra.mxu0 0
    %5194 = vmatprep.subr.bf16.mxu0 0
    %5195 = vmatpush1.bf16.msra.mxu0 0
    %5196 = vmatprep.subr.bf16.mxu0 0
    %5197 = vmatpush1.bf16.msra.mxu0 0
    %5198 = vmatprep.subr.bf16.mxu0 0
    %5199 = vmatpush1.bf16.msra.mxu0 0
    %5200 = vmatprep.subr.bf16.mxu0 0
    %5201 = vmatpush1.bf16.msra.mxu0 0
    %5202 = vmatprep.subr.bf16.mxu0 0
    %5203 = vmatpush1.bf16.msra.mxu0 0
    %5204 = vmatprep.subr.bf16.mxu0 0
    %5205 = vmatpush1.bf16.msra.mxu0 0
    %5206 = vmatprep.subr.bf16.mxu0 0
    %5207 = vmatpush1.bf16.msra.mxu0 0
    %5208 = vmatprep.subr.bf16.mxu0 0
    %5209 = vmatpush1.bf16.msra.mxu0 0
    %5210 = vmatprep.subr.bf16.mxu0 0
    %5211 = vmatpush1.bf16.msra.mxu0 0
    %5212 = vmatprep.subr.bf16.mxu0 0
    %5213 = vmatpush1.bf16.msra.mxu0 0
    %5214 = vmatprep.subr.bf16.mxu0 0
    %5215 = vmatpush1.bf16.msra.mxu0 0
    %5216 = vmatprep.subr.bf16.mxu0 0
    %5217 = vmatpush1.bf16.msra.mxu0 0
    %5218 = vmatprep.mubr.bf16.mxu0 0
    %5219 = vmatmul.mubr.bf16.gmra.mrb[0].mxu0 %v5181
    %v5220 = vpop.f32.mrb[0].mxu0
    %v5221 = vadd.f32 0.0, %v5220
    %v5222 = vpop.f32.mrb[0].mxu0
    %v5223 = vpop.f32.mrb[0].mxu0
    %v5224 = vpop.f32.mrb[0].mxu0
    %5225 = vdwg.mxu0
    %5226 = vrot.lane.b32.xlu0 %v4636, 64
    %v5227 = vpop.permute.xlu0 %5226
    %v5229 = vsel %vm242, %v5124, 0
    %v5232 = vsel %vm733, %v5227, 0
    %5234 = vmatprep.subr.bf16.mxu0 0
    %5235 = vmatpush1.bf16.msra.mxu0 %v5232
    %5236 = vmatprep.subr.bf16.mxu0 0
    %5237 = vmatpush1.bf16.msra.mxu0 0
    %5238 = vmatprep.subr.bf16.mxu0 0
    %5239 = vmatpush1.bf16.msra.mxu0 0
    %5240 = vmatprep.subr.bf16.mxu0 0
    %5241 = vmatpush1.bf16.msra.mxu0 0
    %5242 = vmatprep.subr.bf16.mxu0 0
    %5243 = vmatpush1.bf16.msra.mxu0 0
    %5244 = vmatprep.subr.bf16.mxu0 0
    %5245 = vmatpush1.bf16.msra.mxu0 0
    %5246 = vmatprep.subr.bf16.mxu0 0
    %5247 = vmatpush1.bf16.msra.mxu0 0
    %5248 = vmatprep.subr.bf16.mxu0 0
    %5249 = vmatpush1.bf16.msra.mxu0 0
    %5250 = vmatprep.subr.bf16.mxu0 0
    %5251 = vmatpush1.bf16.msra.mxu0 0
    %5252 = vmatprep.subr.bf16.mxu0 0
    %5253 = vmatpush1.bf16.msra.mxu0 0
    %5254 = vmatprep.subr.bf16.mxu0 0
    %5255 = vmatpush1.bf16.msra.mxu0 0
    %5256 = vmatprep.subr.bf16.mxu0 0
    %5257 = vmatpush1.bf16.msra.mxu0 0
    %5258 = vmatprep.subr.bf16.mxu0 0
    %5259 = vmatpush1.bf16.msra.mxu0 0
    %5260 = vmatprep.subr.bf16.mxu0 0
    %5261 = vmatpush1.bf16.msra.mxu0 0
    %5262 = vmatprep.subr.bf16.mxu0 0
    %5263 = vmatpush1.bf16.msra.mxu0 0
    %5264 = vmatprep.subr.bf16.mxu0 0
    %5265 = vmatpush1.bf16.msra.mxu0 0
    %5266 = vmatprep.mubr.bf16.mxu0 0
    %5267 = vmatmul.mubr.bf16.gmra.mrb[0].mxu0 %v5229
    %v5268 = vpop.f32.mrb[0].mxu0
    %v5269 = vadd.f32 0.0, %v5268
    %v5270 = vpop.f32.mrb[0].mxu0
    %v5271 = vpop.f32.mrb[0].mxu0
    %v5272 = vpop.f32.mrb[0].mxu0
    %5273 = vdwg.mxu0
    %5274 = vrot.lane.b32.xlu0 %v4637, 64
    %v5275 = vpop.permute.xlu0 %5274
    %v5277 = vsel %vm242, %v5125, 0
    %v5280 = vsel %vm733, %v5275, 0
    %5282 = vmatprep.subr.bf16.mxu0 0
    %5283 = vmatpush1.bf16.msra.mxu0 %v5280
    %5284 = vmatprep.subr.bf16.mxu0 0
    %5285 = vmatpush1.bf16.msra.mxu0 0
    %5286 = vmatprep.subr.bf16.mxu0 0
    %5287 = vmatpush1.bf16.msra.mxu0 0
    %5288 = vmatprep.subr.bf16.mxu0 0
    %5289 = vmatpush1.bf16.msra.mxu0 0
    %5290 = vmatprep.subr.bf16.mxu0 0
    %5291 = vmatpush1.bf16.msra.mxu0 0
    %5292 = vmatprep.subr.bf16.mxu0 0
    %5293 = vmatpush1.bf16.msra.mxu0 0
    %5294 = vmatprep.subr.bf16.mxu0 0
    %5295 = vmatpush1.bf16.msra.mxu0 0
    %5296 = vmatprep.subr.bf16.mxu0 0
    %5297 = vmatpush1.bf16.msra.mxu0 0
    %5298 = vmatprep.subr.bf16.mxu0 0
    %5299 = vmatpush1.bf16.msra.mxu0 0
    %5300 = vmatprep.subr.bf16.mxu0 0
    %5301 = vmatpush1.bf16.msra.mxu0 0
    %5302 = vmatprep.subr.bf16.mxu0 0
    %5303 = vmatpush1.bf16.msra.mxu0 0
    %5304 = vmatprep.subr.bf16.mxu0 0
    %5305 = vmatpush1.bf16.msra.mxu0 0
    %5306 = vmatprep.subr.bf16.mxu0 0
    %5307 = vmatpush1.bf16.msra.mxu0 0
    %5308 = vmatprep.subr.bf16.mxu0 0
    %5309 = vmatpush1.bf16.msra.mxu0 0
    %5310 = vmatprep.subr.bf16.mxu0 0
    %5311 = vmatpush1.bf16.msra.mxu0 0
    %5312 = vmatprep.subr.bf16.mxu0 0
    %5313 = vmatpush1.bf16.msra.mxu0 0
    %5314 = vmatprep.mubr.bf16.mxu0 0
    %5315 = vmatmul.mubr.bf16.gmra.mrb[0].mxu0 %v5277
    %v5316 = vpop.f32.mrb[0].mxu0
    %v5317 = vadd.f32 0.0, %v5316
    %v5318 = vpop.f32.mrb[0].mxu0
    %v5319 = vpop.f32.mrb[0].mxu0
    %v5320 = vpop.f32.mrb[0].mxu0
    %5321 = vdwg.mxu0
    %5322 = vrot.lane.b32.xlu0 %v4638, 64
    %v5323 = vpop.permute.xlu0 %5322
    %v5325 = vsel %vm242, %v5126, 0
    %v5328 = vsel %vm733, %v5323, 0
    %5330 = vmatprep.subr.bf16.mxu0 0
    %5331 = vmatpush1.bf16.msra.mxu0 %v5328
    %5332 = vmatprep.subr.bf16.mxu0 0
    %5333 = vmatpush1.bf16.msra.mxu0 0
    %5334 = vmatprep.subr.bf16.mxu0 0
    %5335 = vmatpush1.bf16.msra.mxu0 0
    %5336 = vmatprep.subr.bf16.mxu0 0
    %5337 = vmatpush1.bf16.msra.mxu0 0
    %5338 = vmatprep.subr.bf16.mxu0 0
    %5339 = vmatpush1.bf16.msra.mxu0 0
    %5340 = vmatprep.subr.bf16.mxu0 0
    %5341 = vmatpush1.bf16.msra.mxu0 0
    %5342 = vmatprep.subr.bf16.mxu0 0
    %5343 = vmatpush1.bf16.msra.mxu0 0
    %5344 = vmatprep.subr.bf16.mxu0 0
    %5345 = vmatpush1.bf16.msra.mxu0 0
    %5346 = vmatprep.subr.bf16.mxu0 0
    %5347 = vmatpush1.bf16.msra.mxu0 0
    %5348 = vmatprep.subr.bf16.mxu0 0
    %5349 = vmatpush1.bf16.msra.mxu0 0
    %5350 = vmatprep.subr.bf16.mxu0 0
    %5351 = vmatpush1.bf16.msra.mxu0 0
    %5352 = vmatprep.subr.bf16.mxu0 0
    %5353 = vmatpush1.bf16.msra.mxu0 0
    %5354 = vmatprep.subr.bf16.mxu0 0
    %5355 = vmatpush1.bf16.msra.mxu0 0
    %5356 = vmatprep.subr.bf16.mxu0 0
    %5357 = vmatpush1.bf16.msra.mxu0 0
    %5358 = vmatprep.subr.bf16.mxu0 0
    %5359 = vmatpush1.bf16.msra.mxu0 0
    %5360 = vmatprep.subr.bf16.mxu0 0
    %5361 = vmatpush1.bf16.msra.mxu0 0
    %5362 = vmatprep.mubr.bf16.mxu0 0
    %5363 = vmatmul.mubr.bf16.gmra.mrb[0].mxu0 %v5325
    %v5364 = vpop.f32.mrb[0].mxu0
    %v5365 = vadd.f32 0.0, %v5364
    %v5366 = vpop.f32.mrb[0].mxu0
    %v5367 = vpop.f32.mrb[0].mxu0
    %v5368 = vpop.f32.mrb[0].mxu0
    %5369 = vdwg.mxu0
    %5370 = vrot.lane.b32.xlu0 %v4639, 64
    %v5371 = vpop.permute.xlu0 %5370
    %v5373 = vsel %vm242, %v5127, 0
    %v5376 = vsel %vm733, %v5371, 0
    %5378 = vmatprep.subr.bf16.mxu0 0
    %5379 = vmatpush1.bf16.msra.mxu0 %v5376
    %5380 = vmatprep.subr.bf16.mxu0 0
    %5381 = vmatpush1.bf16.msra.mxu0 0
    %5382 = vmatprep.subr.bf16.mxu0 0
    %5383 = vmatpush1.bf16.msra.mxu0 0
    %5384 = vmatprep.subr.bf16.mxu0 0
    %5385 = vmatpush1.bf16.msra.mxu0 0
    %5386 = vmatprep.subr.bf16.mxu0 0
    %5387 = vmatpush1.bf16.msra.mxu0 0
    %5388 = vmatprep.subr.bf16.mxu0 0
    %5389 = vmatpush1.bf16.msra.mxu0 0
    %5390 = vmatprep.subr.bf16.mxu0 0
    %5391 = vmatpush1.bf16.msra.mxu0 0
    %5392 = vmatprep.subr.bf16.mxu0 0
    %5393 = vmatpush1.bf16.msra.mxu0 0
    %5394 = vmatprep.subr.bf16.mxu0 0
    %5395 = vmatpush1.bf16.msra.mxu0 0
    %5396 = vmatprep.subr.bf16.mxu0 0
    %5397 = vmatpush1.bf16.msra.mxu0 0
    %5398 = vmatprep.subr.bf16.mxu0 0
    %5399 = vmatpush1.bf16.msra.mxu0 0
    %5400 = vmatprep.subr.bf16.mxu0 0
    %5401 = vmatpush1.bf16.msra.mxu0 0
    %5402 = vmatprep.subr.bf16.mxu0 0
    %5403 = vmatpush1.bf16.msra.mxu0 0
    %5404 = vmatprep.subr.bf16.mxu0 0
    %5405 = vmatpush1.bf16.msra.mxu0 0
    %5406 = vmatprep.subr.bf16.mxu0 0
    %5407 = vmatpush1.bf16.msra.mxu0 0
    %5408 = vmatprep.subr.bf16.mxu0 0
    %5409 = vmatpush1.bf16.msra.mxu0 0
    %5410 = vmatprep.mubr.bf16.mxu0 0
    %5411 = vmatmul.mubr.bf16.gmra.mrb[0].mxu0 %v5373
    %v5412 = vpop.f32.mrb[0].mxu0
    %v5413 = vadd.f32 0.0, %v5412
    %v5414 = vpop.f32.mrb[0].mxu0
    %v5415 = vpop.f32.mrb[0].mxu0
    %v5416 = vpop.f32.mrb[0].mxu0
    %5417 = vdwg.mxu0
    %5418 = vrot.lane.b32.xlu0 %v4640, 64
    %v5419 = vpop.permute.xlu0 %5418
    %v5421 = vsel %vm242, %v5128, 0
    %v5424 = vsel %vm733, %v5419, 0
    %5426 = vmatprep.subr.bf16.mxu0 0
    %5427 = vmatpush1.bf16.msra.mxu0 %v5424
    %5428 = vmatprep.subr.bf16.mxu0 0
    %5429 = vmatpush1.bf16.msra.mxu0 0
    %5430 = vmatprep.subr.bf16.mxu0 0
    %5431 = vmatpush1.bf16.msra.mxu0 0
    %5432 = vmatprep.subr.bf16.mxu0 0
    %5433 = vmatpush1.bf16.msra.mxu0 0
    %5434 = vmatprep.subr.bf16.mxu0 0
    %5435 = vmatpush1.bf16.msra.mxu0 0
    %5436 = vmatprep.subr.bf16.mxu0 0
    %5437 = vmatpush1.bf16.msra.mxu0 0
    %5438 = vmatprep.subr.bf16.mxu0 0
    %5439 = vmatpush1.bf16.msra.mxu0 0
    %5440 = vmatprep.subr.bf16.mxu0 0
    %5441 = vmatpush1.bf16.msra.mxu0 0
    %5442 = vmatprep.subr.bf16.mxu0 0
    %5443 = vmatpush1.bf16.msra.mxu0 0
    %5444 = vmatprep.subr.bf16.mxu0 0
    %5445 = vmatpush1.bf16.msra.mxu0 0
    %5446 = vmatprep.subr.bf16.mxu0 0
    %5447 = vmatpush1.bf16.msra.mxu0 0
    %5448 = vmatprep.subr.bf16.mxu0 0
    %5449 = vmatpush1.bf16.msra.mxu0 0
    %5450 = vmatprep.subr.bf16.mxu0 0
    %5451 = vmatpush1.bf16.msra.mxu0 0
    %5452 = vmatprep.subr.bf16.mxu0 0
    %5453 = vmatpush1.bf16.msra.mxu0 0
    %5454 = vmatprep.subr.bf16.mxu0 0
    %5455 = vmatpush1.bf16.msra.mxu0 0
    %5456 = vmatprep.subr.bf16.mxu0 0
    %5457 = vmatpush1.bf16.msra.mxu0 0
    %5458 = vmatprep.mubr.bf16.mxu0 0
    %5459 = vmatmul.mubr.bf16.gmra.mrb[0].mxu0 %v5421
    %v5460 = vpop.f32.mrb[0].mxu0
    %v5461 = vadd.f32 0.0, %v5460
    %v5462 = vpop.f32.mrb[0].mxu0
    %v5463 = vpop.f32.mrb[0].mxu0
    %v5464 = vpop.f32.mrb[0].mxu0
    %5465 = vdwg.mxu0
    %5466 = vrot.lane.b32.xlu0 %v4641, 64
    %v5467 = vpop.permute.xlu0 %5466
    %v5469 = vsel %vm242, %v5129, 0
    %v5472 = vsel %vm733, %v5467, 0
    %5474 = vmatprep.subr.bf16.mxu0 0
    %5475 = vmatpush1.bf16.msra.mxu0 %v5472
    %5476 = vmatprep.subr.bf16.mxu0 0
    %5477 = vmatpush1.bf16.msra.mxu0 0
    %5478 = vmatprep.subr.bf16.mxu0 0
    %5479 = vmatpush1.bf16.msra.mxu0 0
    %5480 = vmatprep.subr.bf16.mxu0 0
    %5481 = vmatpush1.bf16.msra.mxu0 0
    %5482 = vmatprep.subr.bf16.mxu0 0
    %5483 = vmatpush1.bf16.msra.mxu0 0
    %5484 = vmatprep.subr.bf16.mxu0 0
    %5485 = vmatpush1.bf16.msra.mxu0 0
    %5486 = vmatprep.subr.bf16.mxu0 0
    %5487 = vmatpush1.bf16.msra.mxu0 0
    %5488 = vmatprep.subr.bf16.mxu0 0
    %5489 = vmatpush1.bf16.msra.mxu0 0
    %5490 = vmatprep.subr.bf16.mxu0 0
    %5491 = vmatpush1.bf16.msra.mxu0 0
    %5492 = vmatprep.subr.bf16.mxu0 0
    %5493 = vmatpush1.bf16.msra.mxu0 0
    %5494 = vmatprep.subr.bf16.mxu0 0
    %5495 = vmatpush1.bf16.msra.mxu0 0
    %5496 = vmatprep.subr.bf16.mxu0 0
    %5497 = vmatpush1.bf16.msra.mxu0 0
    %5498 = vmatprep.subr.bf16.mxu0 0
    %5499 = vmatpush1.bf16.msra.mxu0 0
    %5500 = vmatprep.subr.bf16.mxu0 0
    %5501 = vmatpush1.bf16.msra.mxu0 0
    %5502 = vmatprep.subr.bf16.mxu0 0
    %5503 = vmatpush1.bf16.msra.mxu0 0
    %5504 = vmatprep.subr.bf16.mxu0 0
    %5505 = vmatpush1.bf16.msra.mxu0 0
    %5506 = vmatprep.mubr.bf16.mxu0 0
    %5507 = vmatmul.mubr.bf16.gmra.mrb[0].mxu0 %v5469
    %v5508 = vpop.f32.mrb[0].mxu0
    %v5509 = vadd.f32 0.0, %v5508
    %v5510 = vpop.f32.mrb[0].mxu0
    %v5511 = vpop.f32.mrb[0].mxu0
    %v5512 = vpop.f32.mrb[0].mxu0
    %5513 = vdwg.mxu0
    %5515 = vrot.lane.b32.xlu0 %v5221, 8
    %v5516 = vpop.permute.xlu0 %5515
    %5519 = vrot.lane.b32.xlu0 %v5269, 16
    %v5520 = vpop.permute.xlu0 %5519
    %5523 = vrot.lane.b32.xlu0 %v5317, 24
    %v5524 = vpop.permute.xlu0 %5523
    %v5526 = vsel %vm242, %v5173, %v5516
    %v5527 = vsel %vm1126, %v5526, %v5520
    %v5528 = vsel %vm1128, %v5527, %v5524
    %5530 = vrot.lane.b32.xlu0 %v5413, 8
    %v5531 = vpop.permute.xlu0 %5530
    %5534 = vrot.lane.b32.xlu0 %v5461, 16
    %v5535 = vpop.permute.xlu0 %5534
    %5538 = vrot.lane.b32.xlu0 %v5509, 24
    %v5539 = vpop.permute.xlu0 %5538
    %v5541 = vsel %vm242, %v5365, %v5531
    %v5542 = vsel %vm1126, %v5541, %v5535
    %v5543 = vsel %vm1128, %v5542, %v5539
    %v5544 = vpack.c.bf16 %v5543, %v5528
    %s5545 = scalar_lea.vmem %s6, 16
    %v5546 = vld [vmem:[%s5545] sm:$0xf]
    %v5547 = vld [vmem:[%s5545 + $0x4] sm:$0xf]
    %v5548 = vld [vmem:[%s5545 + $0x8] sm:$0xf]
    %v5549 = vld [vmem:[%s5545 + $0xc] sm:$0xf]
    %s5550 = scalar_lea.vmem %s7, 1
    %v5551 = vld [vmem:[%s5550] sm:$0x1]
    %v5553 = vlaneseq
    %v5554 = vshrl.u32 %v5553, 7
    %v5555 = vsub.s32 0, %v5554
    %v5556 = vrot.slane %v5551, %v5555
    %v5562 = vunpack.c.l.b16 %v5546
    %v5563 = vunpack.c.l.b16 %v5547
    %v5564 = vunpack.c.l.b16 %v5548
    %v5565 = vunpack.c.l.b16 %v5549
    %v5566 = vpack.c.b16 %v5563, %v5562
    %v5567 = vpack.c.b16 %v5565, %v5564
    %v5571 = vsel %vm99, %v5544, 0
    %5573 = vmatprep.subr.bf16.mxu0 0
    %5574 = vmatpush1.bf16.msra.mxu0 %v5566
    %5575 = vmatprep.subr.bf16.mxu0 0
    %5576 = vmatpush1.bf16.msra.mxu0 %v5567
    %5577 = vmatprep.subr.bf16.mxu0 0
    %5578 = vmatpush1.bf16.msra.mxu0 0
    %5579 = vmatprep.subr.bf16.mxu0 0
    %5580 = vmatpush1.bf16.msra.mxu0 0
    %5581 = vmatprep.subr.bf16.mxu0 0
    %5582 = vmatpush1.bf16.msra.mxu0 0
    %5583 = vmatprep.subr.bf16.mxu0 0
    %5584 = vmatpush1.bf16.msra.mxu0 0
    %5585 = vmatprep.subr.bf16.mxu0 0
    %5586 = vmatpush1.bf16.msra.mxu0 0
    %5587 = vmatprep.subr.bf16.mxu0 0
    %5588 = vmatpush1.bf16.msra.mxu0 0
    %5589 = vmatprep.subr.bf16.mxu0 0
    %5590 = vmatpush1.bf16.msra.mxu0 0
    %5591 = vmatprep.subr.bf16.mxu0 0
    %5592 = vmatpush1.bf16.msra.mxu0 0
    %5593 = vmatprep.subr.bf16.mxu0 0
    %5594 = vmatpush1.bf16.msra.mxu0 0
    %5595 = vmatprep.subr.bf16.mxu0 0
    %5596 = vmatpush1.bf16.msra.mxu0 0
    %5597 = vmatprep.subr.bf16.mxu0 0
    %5598 = vmatpush1.bf16.msra.mxu0 0
    %5599 = vmatprep.subr.bf16.mxu0 0
    %5600 = vmatpush1.bf16.msra.mxu0 0
    %5601 = vmatprep.subr.bf16.mxu0 0
    %5602 = vmatpush1.bf16.msra.mxu0 0
    %5603 = vmatprep.subr.bf16.mxu0 0
    %5604 = vmatpush1.bf16.msra.mxu0 0
    %5605 = vmatprep.mubr.bf16.mxu0 0
    %5606 = vmatmul.mubr.bf16.gmra.mrb[0].mxu0 %v5571
    %v5607 = vpop.f32.mrb[0].mxu0
    %v5608 = vadd.f32 %v5556, %v5607
    %v5609 = vpop.f32.mrb[0].mxu0
    %v5610 = vpop.f32.mrb[0].mxu0
    %v5611 = vadd.f32 %v5556, %v5610
    %v5612 = vpop.f32.mrb[0].mxu0
    %5613 = vdwg.mxu0
    %v5614 = vadd.f32 %v4496, %v5608
    %v5615 = vadd.f32 %v4497, %v5611
    %s5616 = scalar_lea.vmem %s20, 1
    %v5617 = vld [vmem:[%s5616] sm:$0x1]
    %s5618 = scalar_lea.vmem %s21, 1
    %v5619 = vld [vmem:[%s5618] sm:$0x1]
    %v5620 = vsel %vm99, %v5614, 0.0
    %5621 = vadd.xlane.f32.xlu0 %v5620
    %v5622 = vpop.xlane.xlu0 %5621
    %v5623 = vsel %vm99, %v5615, 0.0
    %5624 = vadd.xlane.f32.xlu0 %v5623
    %v5625 = vpop.xlane.xlu0 %5624
    %v5626 = vmul.f32 %v5622, %v106
    %v5627 = vmul.f32 %v5625, %v106
    %v5628 = vsub.f32 %v5614, %v5626
    %v5629 = vsub.f32 %v5615, %v5627
    %v5630 = vmul.f32 %v5628, %v5628
    %v5631 = vmul.f32 %v5629, %v5629
    %v5632 = vsel %vm99, %v5630, 0.0
    %5633 = vadd.xlane.f32.xlu0 %v5632
    %v5634 = vpop.xlane.xlu0 %5633
    %v5635 = vsel %vm99, %v5631, 0.0
    %5636 = vadd.xlane.f32.xlu0 %v5635
    %v5637 = vpop.xlane.xlu0 %5636
    %v5638 = vmul.f32 %v5634, 0.032258064
    %v5639 = vmul.f32 %v5637, 0.032258064
    %v5640 = vadd.f32 %v5638, 1e-12
    %v5641 = vadd.f32 %v5639, 1e-12
    %v5642 = vrsqrt.pop %v5640
    %v5643 = vrsqrt.pop %v5641
    %v5644 = vmul.f32 %v5628, %v5642
    %v5645 = vmul.f32 %v5629, %v5643
    %v5647 = vlaneseq
    %v5648 = vshrl.u32 %v5647, 7
    %v5649 = vsub.s32 0, %v5648
    %v5650 = vrot.slane %v5617, %v5649
    %v5652 = vmul.f32 %v5650, %v5644
    %v5653 = vmul.f32 %v5650, %v5645
    %v5655 = vlaneseq
    %v5656 = vshrl.u32 %v5655, 7
    %v5657 = vsub.s32 0, %v5656
    %v5658 = vrot.slane %v5619, %v5657
    %v5660 = vadd.f32 %v5652, %v5658
    %v5661 = vadd.f32 %v5653, %v5658
    %v5662 = vpack.c.bf16 %v5661, %v5660
    %s5663 = scalar_lea.vmem %s8, 16
    %v5664 = vld [vmem:[%s5663] sm:$0xf]
    %v5665 = vld [vmem:[%s5663 + $0x4] sm:$0xf]
    %v5666 = vld [vmem:[%s5663 + $0x8] sm:$0xf]
    %v5667 = vld [vmem:[%s5663 + $0xc] sm:$0xf]
    %s5668 = scalar_lea.vmem %s9, 1
    %v5669 = vld [vmem:[%s5668] sm:$0x1]
    %v5671 = vlaneseq
    %v5672 = vshrl.u32 %v5671, 7
    %v5673 = vsub.s32 0, %v5672
    %v5674 = vrot.slane %v5669, %v5673
    %v5680 = vunpack.c.l.b16 %v5664
    %v5681 = vunpack.c.l.b16 %v5665
    %v5682 = vunpack.c.l.b16 %v5666
    %v5683 = vunpack.c.l.b16 %v5667
    %v5684 = vpack.c.b16 %v5681, %v5680
    %v5685 = vpack.c.b16 %v5683, %v5682
    %v5689 = vsel %vm99, %v5662, 0
    %5691 = vmatprep.subr.bf16.mxu0 0
    %5692 = vmatpush1.bf16.msra.mxu0 %v5684
    %5693 = vmatprep.subr.bf16.mxu0 0
    %5694 = vmatpush1.bf16.msra.mxu0 %v5685
    %5695 = vmatprep.subr.bf16.mxu0 0
    %5696 = vmatpush1.bf16.msra.mxu0 0
    %5697 = vmatprep.subr.bf16.mxu0 0
    %5698 = vmatpush1.bf16.msra.mxu0 0
    %5699 = vmatprep.subr.bf16.mxu0 0
    %5700 = vmatpush1.bf16.msra.mxu0 0
    %5701 = vmatprep.subr.bf16.mxu0 0
    %5702 = vmatpush1.bf16.msra.mxu0 0
    %5703 = vmatprep.subr.bf16.mxu0 0
    %5704 = vmatpush1.bf16.msra.mxu0 0
    %5705 = vmatprep.subr.bf16.mxu0 0
    %5706 = vmatpush1.bf16.msra.mxu0 0
    %5707 = vmatprep.subr.bf16.mxu0 0
    %5708 = vmatpush1.bf16.msra.mxu0 0
    %5709 = vmatprep.subr.bf16.mxu0 0
    %5710 = vmatpush1.bf16.msra.mxu0 0
    %5711 = vmatprep.subr.bf16.mxu0 0
    %5712 = vmatpush1.bf16.msra.mxu0 0
    %5713 = vmatprep.subr.bf16.mxu0 0
    %5714 = vmatpush1.bf16.msra.mxu0 0
    %5715 = vmatprep.subr.bf16.mxu0 0
    %5716 = vmatpush1.bf16.msra.mxu0 0
    %5717 = vmatprep.subr.bf16.mxu0 0
    %5718 = vmatpush1.bf16.msra.mxu0 0
    %5719 = vmatprep.subr.bf16.mxu0 0
    %5720 = vmatpush1.bf16.msra.mxu0 0
    %5721 = vmatprep.subr.bf16.mxu0 0
    %5722 = vmatpush1.bf16.msra.mxu0 0
    %5723 = vmatprep.mubr.bf16.mxu0 0
    %5724 = vmatmul.mubr.bf16.gmra.mrb[0].mxu0 %v5689
    %v5725 = vpop.f32.mrb[0].mxu0
    %v5726 = vadd.f32 %v5674, %v5725
    %v5727 = vpop.f32.mrb[0].mxu0
    %v5728 = vpop.f32.mrb[0].mxu0
    %v5729 = vadd.f32 %v5674, %v5728
    %v5730 = vpop.f32.mrb[0].mxu0
    %5731 = vdwg.mxu0
    %s5732 = scalar_lea.vmem %s10, 16
    %v5733 = vld [vmem:[%s5732] sm:$0xf]
    %v5734 = vld [vmem:[%s5732 + $0x4] sm:$0xf]
    %v5735 = vld [vmem:[%s5732 + $0x8] sm:$0xf]
    %v5736 = vld [vmem:[%s5732 + $0xc] sm:$0xf]
    %s5737 = scalar_lea.vmem %s11, 1
    %v5738 = vld [vmem:[%s5737] sm:$0x1]
    %v5740 = vlaneseq
    %v5741 = vshrl.u32 %v5740, 7
    %v5742 = vsub.s32 0, %v5741
    %v5743 = vrot.slane %v5738, %v5742
    %v5749 = vunpack.c.l.b16 %v5733
    %v5750 = vunpack.c.l.b16 %v5734
    %v5751 = vunpack.c.l.b16 %v5735
    %v5752 = vunpack.c.l.b16 %v5736
    %v5753 = vpack.c.b16 %v5750, %v5749
    %v5754 = vpack.c.b16 %v5752, %v5751
    %5757 = vmatprep.subr.bf16.mxu0 0
    %5758 = vmatpush1.bf16.msra.mxu0 %v5753
    %5759 = vmatprep.subr.bf16.mxu0 0
    %5760 = vmatpush1.bf16.msra.mxu0 %v5754
    %5761 = vmatprep.subr.bf16.mxu0 0
    %5762 = vmatpush1.bf16.msra.mxu0 0
    %5763 = vmatprep.subr.bf16.mxu0 0
    %5764 = vmatpush1.bf16.msra.mxu0 0
    %5765 = vmatprep.subr.bf16.mxu0 0
    %5766 = vmatpush1.bf16.msra.mxu0 0
    %5767 = vmatprep.subr.bf16.mxu0 0
    %5768 = vmatpush1.bf16.msra.mxu0 0
    %5769 = vmatprep.subr.bf16.mxu0 0
    %5770 = vmatpush1.bf16.msra.mxu0 0
    %5771 = vmatprep.subr.bf16.mxu0 0
    %5772 = vmatpush1.bf16.msra.mxu0 0
    %5773 = vmatprep.subr.bf16.mxu0 0
    %5774 = vmatpush1.bf16.msra.mxu0 0
    %5775 = vmatprep.subr.bf16.mxu0 0
    %5776 = vmatpush1.bf16.msra.mxu0 0
    %5777 = vmatprep.subr.bf16.mxu0 0
    %5778 = vmatpush1.bf16.msra.mxu0 0
    %5779 = vmatprep.subr.bf16.mxu0 0
    %5780 = vmatpush1.bf16.msra.mxu0 0
    %5781 = vmatprep.subr.bf16.mxu0 0
    %5782 = vmatpush1.bf16.msra.mxu0 0
    %5783 = vmatprep.subr.bf16.mxu0 0
    %5784 = vmatpush1.bf16.msra.mxu0 0
    %5785 = vmatprep.subr.bf16.mxu0 0
    %5786 = vmatpush1.bf16.msra.mxu0 0
    %5787 = vmatprep.subr.bf16.mxu0 0
    %5788 = vmatpush1.bf16.msra.mxu0 0
    %5789 = vmatprep.mubr.bf16.mxu0 0
    %5790 = vmatmul.mubr.bf16.gmra.mrb[0].mxu0 %v1351
    %v5791 = vpop.f32.mrb[0].mxu0
    %v5792 = vadd.f32 %v5743, %v5791
    %v5793 = vpop.f32.mrb[0].mxu0
    %v5794 = vpop.f32.mrb[0].mxu0
    %v5795 = vadd.f32 %v5743, %v5794
    %v5796 = vpop.f32.mrb[0].mxu0
    %5797 = vmatprep.mubr.bf16.mxu0 0
    %5798 = vmatmul.mubr.bf16.gmra.mrb[0].mxu0 %v1354
    %v5799 = vpop.f32.mrb[0].mxu0
    %v5800 = vadd.f32 %v5743, %v5799
    %v5801 = vpop.f32.mrb[0].mxu0
    %v5802 = vpop.f32.mrb[0].mxu0
    %v5803 = vadd.f32 %v5743, %v5802
    %v5804 = vpop.f32.mrb[0].mxu0
    %5805 = vdwg.mxu0
    %5807 = vrot.lane.b32.xlu0 %v5726, 120
    %v5808 = vpop.permute.xlu0 %5807
    %5810 = vrot.lane.b32.xlu0 %v5726, 112
    %v5811 = vpop.permute.xlu0 %5810
    %5813 = vrot.lane.b32.xlu0 %v5726, 104
    %v5814 = vpop.permute.xlu0 %5813
    %5817 = vrot.lane.b32.xlu0 %v5729, 120
    %v5818 = vpop.permute.xlu0 %5817
    %5820 = vrot.lane.b32.xlu0 %v5729, 112
    %v5821 = vpop.permute.xlu0 %5820
    %5823 = vrot.lane.b32.xlu0 %v5729, 104
    %v5824 = vpop.permute.xlu0 %5823
    %v5826 = vpack.c.bf16 %v5726, %v5726
    %v5827 = vpack.c.bf16 %v5808, %v5808
    %v5828 = vpack.c.bf16 %v5811, %v5811
    %v5829 = vpack.c.bf16 %v5814, %v5814
    %v5830 = vpack.c.bf16 %v5729, %v5729
    %v5831 = vpack.c.bf16 %v5818, %v5818
    %v5832 = vpack.c.bf16 %v5821, %v5821
    %v5833 = vpack.c.bf16 %v5824, %v5824
    %5836 = vrot.lane.b32.xlu0 %v5792, 120
    %v5837 = vpop.permute.xlu0 %5836
    %5838 = vrot.lane.b32.xlu0 %v5795, 120
    %v5839 = vpop.permute.xlu0 %5838
    %5842 = vrot.lane.b32.xlu0 %v5792, 112
    %v5843 = vpop.permute.xlu0 %5842
    %5844 = vrot.lane.b32.xlu0 %v5795, 112
    %v5845 = vpop.permute.xlu0 %5844
    %5848 = vrot.lane.b32.xlu0 %v5792, 104
    %v5849 = vpop.permute.xlu0 %5848
    %5850 = vrot.lane.b32.xlu0 %v5795, 104
    %v5851 = vpop.permute.xlu0 %5850
    %5856 = vrot.lane.b32.xlu0 %v5800, 120
    %v5857 = vpop.permute.xlu0 %5856
    %5858 = vrot.lane.b32.xlu0 %v5803, 120
    %v5859 = vpop.permute.xlu0 %5858
    %5862 = vrot.lane.b32.xlu0 %v5800, 112
    %v5863 = vpop.permute.xlu0 %5862
    %5864 = vrot.lane.b32.xlu0 %v5803, 112
    %v5865 = vpop.permute.xlu0 %5864
    %5868 = vrot.lane.b32.xlu0 %v5800, 104
    %v5869 = vpop.permute.xlu0 %5868
    %5870 = vrot.lane.b32.xlu0 %v5803, 104
    %v5871 = vpop.permute.xlu0 %5870
    %v5874 = vpack.c.bf16 %v5795, %v5792
    %v5875 = vpack.c.bf16 %v5839, %v5837
    %v5876 = vpack.c.bf16 %v5845, %v5843
    %v5877 = vpack.c.bf16 %v5851, %v5849
    %v5878 = vpack.c.bf16 %v5803, %v5800
    %v5879 = vpack.c.bf16 %v5859, %v5857
    %v5880 = vpack.c.bf16 %v5865, %v5863
    %v5881 = vpack.c.bf16 %v5871, %v5869
    %v5883 = vsel %vm242, %v5826, 0
    %v5886 = vsel %vm242, %v5874, 0
    %5888 = vmatprep.subr.bf16.mxu0 0
    %5889 = vmatpush1.bf16.xpose.msra.mxu0 %v5886
    %5890 = vmatprep.subr.bf16.mxu0 0
    %5891 = vmatpush1.bf16.xpose.msra.mxu0 0
    %5892 = vmatprep.subr.bf16.mxu0 0
    %5893 = vmatpush1.bf16.xpose.msra.mxu0 0
    %5894 = vmatprep.subr.bf16.mxu0 0
    %5895 = vmatpush1.bf16.xpose.msra.mxu0 0
    %5896 = vmatprep.subr.bf16.mxu0 0
    %5897 = vmatpush1.bf16.xpose.msra.mxu0 0
    %5898 = vmatprep.subr.bf16.mxu0 0
    %5899 = vmatpush1.bf16.xpose.msra.mxu0 0
    %5900 = vmatprep.subr.bf16.mxu0 0
    %5901 = vmatpush1.bf16.xpose.msra.mxu0 0
    %5902 = vmatprep.subr.bf16.mxu0 0
    %5903 = vmatpush1.bf16.xpose.msra.mxu0 0
    %5904 = vmatprep.subr.bf16.mxu0 0
    %5905 = vmatpush1.bf16.xpose.msra.mxu0 0
    %5906 = vmatprep.subr.bf16.mxu0 0
    %5907 = vmatpush1.bf16.xpose.msra.mxu0 0
    %5908 = vmatprep.subr.bf16.mxu0 0
    %5909 = vmatpush1.bf16.xpose.msra.mxu0 0
    %5910 = vmatprep.subr.bf16.mxu0 0
    %5911 = vmatpush1.bf16.xpose.msra.mxu0 0
    %5912 = vmatprep.subr.bf16.mxu0 0
    %5913 = vmatpush1.bf16.xpose.msra.mxu0 0
    %5914 = vmatprep.subr.bf16.mxu0 0
    %5915 = vmatpush1.bf16.xpose.msra.mxu0 0
    %5916 = vmatprep.subr.bf16.mxu0 0
    %5917 = vmatpush1.bf16.xpose.msra.mxu0 0
    %5918 = vmatprep.subr.bf16.mxu0 0
    %5919 = vmatpush1.bf16.xpose.msra.mxu0 0
    %5920 = vmatprep.mubr.bf16.mxu0 0
    %5921 = vmatmul.mubr.bf16.gmra.mrb[0].mxu0 %v5883
    %v5922 = vpop.f32.mrb[0].mxu0
    %v5923 = vadd.f32 %v89, %v5922
    %v5924 = vpop.f32.mrb[0].mxu0
    %v5925 = vpop.f32.mrb[0].mxu0
    %v5926 = vpop.f32.mrb[0].mxu0
    %5927 = vdwg.mxu0
    %v5929 = vsel %vm242, %v5827, 0
    %v5932 = vsel %vm242, %v5875, 0
    %5934 = vmatprep.subr.bf16.mxu0 0
    %5935 = vmatpush1.bf16.xpose.msra.mxu0 %v5932
    %5936 = vmatprep.subr.bf16.mxu0 0
    %5937 = vmatpush1.bf16.xpose.msra.mxu0 0
    %5938 = vmatprep.subr.bf16.mxu0 0
    %5939 = vmatpush1.bf16.xpose.msra.mxu0 0
    %5940 = vmatprep.subr.bf16.mxu0 0
    %5941 = vmatpush1.bf16.xpose.msra.mxu0 0
    %5942 = vmatprep.subr.bf16.mxu0 0
    %5943 = vmatpush1.bf16.xpose.msra.mxu0 0
    %5944 = vmatprep.subr.bf16.mxu0 0
    %5945 = vmatpush1.bf16.xpose.msra.mxu0 0
    %5946 = vmatprep.subr.bf16.mxu0 0
    %5947 = vmatpush1.bf16.xpose.msra.mxu0 0
    %5948 = vmatprep.subr.bf16.mxu0 0
    %5949 = vmatpush1.bf16.xpose.msra.mxu0 0
    %5950 = vmatprep.subr.bf16.mxu0 0
    %5951 = vmatpush1.bf16.xpose.msra.mxu0 0
    %5952 = vmatprep.subr.bf16.mxu0 0
    %5953 = vmatpush1.bf16.xpose.msra.mxu0 0
    %5954 = vmatprep.subr.bf16.mxu0 0
    %5955 = vmatpush1.bf16.xpose.msra.mxu0 0
    %5956 = vmatprep.subr.bf16.mxu0 0
    %5957 = vmatpush1.bf16.xpose.msra.mxu0 0
    %5958 = vmatprep.subr.bf16.mxu0 0
    %5959 = vmatpush1.bf16.xpose.msra.mxu0 0
    %5960 = vmatprep.subr.bf16.mxu0 0
    %5961 = vmatpush1.bf16.xpose.msra.mxu0 0
    %5962 = vmatprep.subr.bf16.mxu0 0
    %5963 = vmatpush1.bf16.xpose.msra.mxu0 0
    %5964 = vmatprep.subr.bf16.mxu0 0
    %5965 = vmatpush1.bf16.xpose.msra.mxu0 0
    %5966 = vmatprep.mubr.bf16.mxu0 0
    %5967 = vmatmul.mubr.bf16.gmra.mrb[0].mxu0 %v5929
    %v5968 = vpop.f32.mrb[0].mxu0
    %v5969 = vadd.f32 %v89, %v5968
    %v5970 = vpop.f32.mrb[0].mxu0
    %v5971 = vpop.f32.mrb[0].mxu0
    %v5972 = vpop.f32.mrb[0].mxu0
    %5973 = vdwg.mxu0
    %v5975 = vsel %vm242, %v5828, 0
    %v5978 = vsel %vm242, %v5876, 0
    %5980 = vmatprep.subr.bf16.mxu0 0
    %5981 = vmatpush1.bf16.xpose.msra.mxu0 %v5978
    %5982 = vmatprep.subr.bf16.mxu0 0
    %5983 = vmatpush1.bf16.xpose.msra.mxu0 0
    %5984 = vmatprep.subr.bf16.mxu0 0
    %5985 = vmatpush1.bf16.xpose.msra.mxu0 0
    %5986 = vmatprep.subr.bf16.mxu0 0
    %5987 = vmatpush1.bf16.xpose.msra.mxu0 0
    %5988 = vmatprep.subr.bf16.mxu0 0
    %5989 = vmatpush1.bf16.xpose.msra.mxu0 0
    %5990 = vmatprep.subr.bf16.mxu0 0
    %5991 = vmatpush1.bf16.xpose.msra.mxu0 0
    %5992 = vmatprep.subr.bf16.mxu0 0
    %5993 = vmatpush1.bf16.xpose.msra.mxu0 0
    %5994 = vmatprep.subr.bf16.mxu0 0
    %5995 = vmatpush1.bf16.xpose.msra.mxu0 0
    %5996 = vmatprep.subr.bf16.mxu0 0
    %5997 = vmatpush1.bf16.xpose.msra.mxu0 0
    %5998 = vmatprep.subr.bf16.mxu0 0
    %5999 = vmatpush1.bf16.xpose.msra.mxu0 0
    %6000 = vmatprep.subr.bf16.mxu0 0
    %6001 = vmatpush1.bf16.xpose.msra.mxu0 0
    %6002 = vmatprep.subr.bf16.mxu0 0
    %6003 = vmatpush1.bf16.xpose.msra.mxu0 0
    %6004 = vmatprep.subr.bf16.mxu0 0
    %6005 = vmatpush1.bf16.xpose.msra.mxu0 0
    %6006 = vmatprep.subr.bf16.mxu0 0
    %6007 = vmatpush1.bf16.xpose.msra.mxu0 0
    %6008 = vmatprep.subr.bf16.mxu0 0
    %6009 = vmatpush1.bf16.xpose.msra.mxu0 0
    %6010 = vmatprep.subr.bf16.mxu0 0
    %6011 = vmatpush1.bf16.xpose.msra.mxu0 0
    %6012 = vmatprep.mubr.bf16.mxu0 0
    %6013 = vmatmul.mubr.bf16.gmra.mrb[0].mxu0 %v5975
    %v6014 = vpop.f32.mrb[0].mxu0
    %v6015 = vadd.f32 %v89, %v6014
    %v6016 = vpop.f32.mrb[0].mxu0
    %v6017 = vpop.f32.mrb[0].mxu0
    %v6018 = vpop.f32.mrb[0].mxu0
    %6019 = vdwg.mxu0
    %v6021 = vsel %vm242, %v5829, 0
    %v6024 = vsel %vm242, %v5877, 0
    %6026 = vmatprep.subr.bf16.mxu0 0
    %6027 = vmatpush1.bf16.xpose.msra.mxu0 %v6024
    %6028 = vmatprep.subr.bf16.mxu0 0
    %6029 = vmatpush1.bf16.xpose.msra.mxu0 0
    %6030 = vmatprep.subr.bf16.mxu0 0
    %6031 = vmatpush1.bf16.xpose.msra.mxu0 0
    %6032 = vmatprep.subr.bf16.mxu0 0
    %6033 = vmatpush1.bf16.xpose.msra.mxu0 0
    %6034 = vmatprep.subr.bf16.mxu0 0
    %6035 = vmatpush1.bf16.xpose.msra.mxu0 0
    %6036 = vmatprep.subr.bf16.mxu0 0
    %6037 = vmatpush1.bf16.xpose.msra.mxu0 0
    %6038 = vmatprep.subr.bf16.mxu0 0
    %6039 = vmatpush1.bf16.xpose.msra.mxu0 0
    %6040 = vmatprep.subr.bf16.mxu0 0
    %6041 = vmatpush1.bf16.xpose.msra.mxu0 0
    %6042 = vmatprep.subr.bf16.mxu0 0
    %6043 = vmatpush1.bf16.xpose.msra.mxu0 0
    %6044 = vmatprep.subr.bf16.mxu0 0
    %6045 = vmatpush1.bf16.xpose.msra.mxu0 0
    %6046 = vmatprep.subr.bf16.mxu0 0
    %6047 = vmatpush1.bf16.xpose.msra.mxu0 0
    %6048 = vmatprep.subr.bf16.mxu0 0
    %6049 = vmatpush1.bf16.xpose.msra.mxu0 0
    %6050 = vmatprep.subr.bf16.mxu0 0
    %6051 = vmatpush1.bf16.xpose.msra.mxu0 0
    %6052 = vmatprep.subr.bf16.mxu0 0
    %6053 = vmatpush1.bf16.xpose.msra.mxu0 0
    %6054 = vmatprep.subr.bf16.mxu0 0
    %6055 = vmatpush1.bf16.xpose.msra.mxu0 0
    %6056 = vmatprep.subr.bf16.mxu0 0
    %6057 = vmatpush1.bf16.xpose.msra.mxu0 0
    %6058 = vmatprep.mubr.bf16.mxu0 0
    %6059 = vmatmul.mubr.bf16.gmra.mrb[0].mxu0 %v6021
    %v6060 = vpop.f32.mrb[0].mxu0
    %v6061 = vadd.f32 %v89, %v6060
    %v6062 = vpop.f32.mrb[0].mxu0
    %v6063 = vpop.f32.mrb[0].mxu0
    %v6064 = vpop.f32.mrb[0].mxu0
    %6065 = vdwg.mxu0
    %v6067 = vsel %vm242, %v5830, 0
    %v6070 = vsel %vm242, %v5878, 0
    %6072 = vmatprep.subr.bf16.mxu0 0
    %6073 = vmatpush1.bf16.xpose.msra.mxu0 %v6070
    %6074 = vmatprep.subr.bf16.mxu0 0
    %6075 = vmatpush1.bf16.xpose.msra.mxu0 0
    %6076 = vmatprep.subr.bf16.mxu0 0
    %6077 = vmatpush1.bf16.xpose.msra.mxu0 0
    %6078 = vmatprep.subr.bf16.mxu0 0
    %6079 = vmatpush1.bf16.xpose.msra.mxu0 0
    %6080 = vmatprep.subr.bf16.mxu0 0
    %6081 = vmatpush1.bf16.xpose.msra.mxu0 0
    %6082 = vmatprep.subr.bf16.mxu0 0
    %6083 = vmatpush1.bf16.xpose.msra.mxu0 0
    %6084 = vmatprep.subr.bf16.mxu0 0
    %6085 = vmatpush1.bf16.xpose.msra.mxu0 0
    %6086 = vmatprep.subr.bf16.mxu0 0
    %6087 = vmatpush1.bf16.xpose.msra.mxu0 0
    %6088 = vmatprep.subr.bf16.mxu0 0
    %6089 = vmatpush1.bf16.xpose.msra.mxu0 0
    %6090 = vmatprep.subr.bf16.mxu0 0
    %6091 = vmatpush1.bf16.xpose.msra.mxu0 0
    %6092 = vmatprep.subr.bf16.mxu0 0
    %6093 = vmatpush1.bf16.xpose.msra.mxu0 0
    %6094 = vmatprep.subr.bf16.mxu0 0
    %6095 = vmatpush1.bf16.xpose.msra.mxu0 0
    %6096 = vmatprep.subr.bf16.mxu0 0
    %6097 = vmatpush1.bf16.xpose.msra.mxu0 0
    %6098 = vmatprep.subr.bf16.mxu0 0
    %6099 = vmatpush1.bf16.xpose.msra.mxu0 0
    %6100 = vmatprep.subr.bf16.mxu0 0
    %6101 = vmatpush1.bf16.xpose.msra.mxu0 0
    %6102 = vmatprep.subr.bf16.mxu0 0
    %6103 = vmatpush1.bf16.xpose.msra.mxu0 0
    %6104 = vmatprep.mubr.bf16.mxu0 0
    %6105 = vmatmul.mubr.bf16.gmra.mrb[0].mxu0 %v6067
    %v6106 = vpop.f32.mrb[0].mxu0
    %v6107 = vadd.f32 %v90, %v6106
    %v6108 = vpop.f32.mrb[0].mxu0
    %v6109 = vpop.f32.mrb[0].mxu0
    %v6110 = vpop.f32.mrb[0].mxu0
    %6111 = vdwg.mxu0
    %v6113 = vsel %vm242, %v5831, 0
    %v6116 = vsel %vm242, %v5879, 0
    %6118 = vmatprep.subr.bf16.mxu0 0
    %6119 = vmatpush1.bf16.xpose.msra.mxu0 %v6116
    %6120 = vmatprep.subr.bf16.mxu0 0
    %6121 = vmatpush1.bf16.xpose.msra.mxu0 0
    %6122 = vmatprep.subr.bf16.mxu0 0
    %6123 = vmatpush1.bf16.xpose.msra.mxu0 0
    %6124 = vmatprep.subr.bf16.mxu0 0
    %6125 = vmatpush1.bf16.xpose.msra.mxu0 0
    %6126 = vmatprep.subr.bf16.mxu0 0
    %6127 = vmatpush1.bf16.xpose.msra.mxu0 0
    %6128 = vmatprep.subr.bf16.mxu0 0
    %6129 = vmatpush1.bf16.xpose.msra.mxu0 0
    %6130 = vmatprep.subr.bf16.mxu0 0
    %6131 = vmatpush1.bf16.xpose.msra.mxu0 0
    %6132 = vmatprep.subr.bf16.mxu0 0
    %6133 = vmatpush1.bf16.xpose.msra.mxu0 0
    %6134 = vmatprep.subr.bf16.mxu0 0
    %6135 = vmatpush1.bf16.xpose.msra.mxu0 0
    %6136 = vmatprep.subr.bf16.mxu0 0
    %6137 = vmatpush1.bf16.xpose.msra.mxu0 0
    %6138 = vmatprep.subr.bf16.mxu0 0
    %6139 = vmatpush1.bf16.xpose.msra.mxu0 0
    %6140 = vmatprep.subr.bf16.mxu0 0
    %6141 = vmatpush1.bf16.xpose.msra.mxu0 0
    %6142 = vmatprep.subr.bf16.mxu0 0
    %6143 = vmatpush1.bf16.xpose.msra.mxu0 0
    %6144 = vmatprep.subr.bf16.mxu0 0
    %6145 = vmatpush1.bf16.xpose.msra.mxu0 0
    %6146 = vmatprep.subr.bf16.mxu0 0
    %6147 = vmatpush1.bf16.xpose.msra.mxu0 0
    %6148 = vmatprep.subr.bf16.mxu0 0
    %6149 = vmatpush1.bf16.xpose.msra.mxu0 0
    %6150 = vmatprep.mubr.bf16.mxu0 0
    %6151 = vmatmul.mubr.bf16.gmra.mrb[0].mxu0 %v6113
    %v6152 = vpop.f32.mrb[0].mxu0
    %v6153 = vadd.f32 %v90, %v6152
    %v6154 = vpop.f32.mrb[0].mxu0
    %v6155 = vpop.f32.mrb[0].mxu0
    %v6156 = vpop.f32.mrb[0].mxu0
    %6157 = vdwg.mxu0
    %v6159 = vsel %vm242, %v5832, 0
    %v6162 = vsel %vm242, %v5880, 0
    %6164 = vmatprep.subr.bf16.mxu0 0
    %6165 = vmatpush1.bf16.xpose.msra.mxu0 %v6162
    %6166 = vmatprep.subr.bf16.mxu0 0
    %6167 = vmatpush1.bf16.xpose.msra.mxu0 0
    %6168 = vmatprep.subr.bf16.mxu0 0
    %6169 = vmatpush1.bf16.xpose.msra.mxu0 0
    %6170 = vmatprep.subr.bf16.mxu0 0
    %6171 = vmatpush1.bf16.xpose.msra.mxu0 0
    %6172 = vmatprep.subr.bf16.mxu0 0
    %6173 = vmatpush1.bf16.xpose.msra.mxu0 0
    %6174 = vmatprep.subr.bf16.mxu0 0
    %6175 = vmatpush1.bf16.xpose.msra.mxu0 0
    %6176 = vmatprep.subr.bf16.mxu0 0
    %6177 = vmatpush1.bf16.xpose.msra.mxu0 0
    %6178 = vmatprep.subr.bf16.mxu0 0
    %6179 = vmatpush1.bf16.xpose.msra.mxu0 0
    %6180 = vmatprep.subr.bf16.mxu0 0
    %6181 = vmatpush1.bf16.xpose.msra.mxu0 0
    %6182 = vmatprep.subr.bf16.mxu0 0
    %6183 = vmatpush1.bf16.xpose.msra.mxu0 0
    %6184 = vmatprep.subr.bf16.mxu0 0
    %6185 = vmatpush1.bf16.xpose.msra.mxu0 0
    %6186 = vmatprep.subr.bf16.mxu0 0
    %6187 = vmatpush1.bf16.xpose.msra.mxu0 0
    %6188 = vmatprep.subr.bf16.mxu0 0
    %6189 = vmatpush1.bf16.xpose.msra.mxu0 0
    %6190 = vmatprep.subr.bf16.mxu0 0
    %6191 = vmatpush1.bf16.xpose.msra.mxu0 0
    %6192 = vmatprep.subr.bf16.mxu0 0
    %6193 = vmatpush1.bf16.xpose.msra.mxu0 0
    %6194 = vmatprep.subr.bf16.mxu0 0
    %6195 = vmatpush1.bf16.xpose.msra.mxu0 0
    %6196 = vmatprep.mubr.bf16.mxu0 0
    %6197 = vmatmul.mubr.bf16.gmra.mrb[0].mxu0 %v6159
    %v6198 = vpop.f32.mrb[0].mxu0
    %v6199 = vadd.f32 %v90, %v6198
    %v6200 = vpop.f32.mrb[0].mxu0
    %v6201 = vpop.f32.mrb[0].mxu0
    %v6202 = vpop.f32.mrb[0].mxu0
    %6203 = vdwg.mxu0
    %v6205 = vsel %vm242, %v5833, 0
    %v6208 = vsel %vm242, %v5881, 0
    %6210 = vmatprep.subr.bf16.mxu0 0
    %6211 = vmatpush1.bf16.xpose.msra.mxu0 %v6208
    %6212 = vmatprep.subr.bf16.mxu0 0
    %6213 = vmatpush1.bf16.xpose.msra.mxu0 0
    %6214 = vmatprep.subr.bf16.mxu0 0
    %6215 = vmatpush1.bf16.xpose.msra.mxu0 0
    %6216 = vmatprep.subr.bf16.mxu0 0
    %6217 = vmatpush1.bf16.xpose.msra.mxu0 0
    %6218 = vmatprep.subr.bf16.mxu0 0
    %6219 = vmatpush1.bf16.xpose.msra.mxu0 0
    %6220 = vmatprep.subr.bf16.mxu0 0
    %6221 = vmatpush1.bf16.xpose.msra.mxu0 0
    %6222 = vmatprep.subr.bf16.mxu0 0
    %6223 = vmatpush1.bf16.xpose.msra.mxu0 0
    %6224 = vmatprep.subr.bf16.mxu0 0
    %6225 = vmatpush1.bf16.xpose.msra.mxu0 0
    %6226 = vmatprep.subr.bf16.mxu0 0
    %6227 = vmatpush1.bf16.xpose.msra.mxu0 0
    %6228 = vmatprep.subr.bf16.mxu0 0
    %6229 = vmatpush1.bf16.xpose.msra.mxu0 0
    %6230 = vmatprep.subr.bf16.mxu0 0
    %6231 = vmatpush1.bf16.xpose.msra.mxu0 0
    %6232 = vmatprep.subr.bf16.mxu0 0
    %6233 = vmatpush1.bf16.xpose.msra.mxu0 0
    %6234 = vmatprep.subr.bf16.mxu0 0
    %6235 = vmatpush1.bf16.xpose.msra.mxu0 0
    %6236 = vmatprep.subr.bf16.mxu0 0
    %6237 = vmatpush1.bf16.xpose.msra.mxu0 0
    %6238 = vmatprep.subr.bf16.mxu0 0
    %6239 = vmatpush1.bf16.xpose.msra.mxu0 0
    %6240 = vmatprep.subr.bf16.mxu0 0
    %6241 = vmatpush1.bf16.xpose.msra.mxu0 0
    %6242 = vmatprep.mubr.bf16.mxu0 0
    %6243 = vmatmul.mubr.bf16.gmra.mrb[0].mxu0 %v6205
    %v6244 = vpop.f32.mrb[0].mxu0
    %v6245 = vadd.f32 %v90, %v6244
    %v6246 = vpop.f32.mrb[0].mxu0
    %v6247 = vpop.f32.mrb[0].mxu0
    %v6248 = vpop.f32.mrb[0].mxu0
    %6249 = vdwg.mxu0
    %v6250 = vsel %vm1126, %v5923, -inf
    %6251 = vmax.xlane.f32.xlu0 %v6250
    %v6252 = vpop.xlane.xlu0 %6251
    %v6253 = vsel %vm1126, %v5969, -inf
    %6254 = vmax.xlane.f32.xlu0 %v6253
    %v6255 = vpop.xlane.xlu0 %6254
    %v6256 = vsel %vm1126, %v6015, -inf
    %6257 = vmax.xlane.f32.xlu0 %v6256
    %v6258 = vpop.xlane.xlu0 %6257
    %v6259 = vsel %vm1126, %v6061, -inf
    %6260 = vmax.xlane.f32.xlu0 %v6259
    %v6261 = vpop.xlane.xlu0 %6260
    %v6262 = vsel %vm1126, %v6107, -inf
    %6263 = vmax.xlane.f32.xlu0 %v6262
    %v6264 = vpop.xlane.xlu0 %6263
    %v6265 = vsel %vm1126, %v6153, -inf
    %6266 = vmax.xlane.f32.xlu0 %v6265
    %v6267 = vpop.xlane.xlu0 %6266
    %v6268 = vsel %vm1126, %v6199, -inf
    %6269 = vmax.xlane.f32.xlu0 %v6268
    %v6270 = vpop.xlane.xlu0 %6269
    %v6271 = vsel %vm1126, %v6245, -inf
    %6272 = vmax.xlane.f32.xlu0 %v6271
    %v6273 = vpop.xlane.xlu0 %6272
    %v6274 = vsub.f32 %v5923, %v6252
    %v6275 = vsub.f32 %v5969, %v6255
    %v6276 = vsub.f32 %v6015, %v6258
    %v6277 = vsub.f32 %v6061, %v6261
    %v6278 = vsub.f32 %v6107, %v6264
    %v6279 = vsub.f32 %v6153, %v6267
    %v6280 = vsub.f32 %v6199, %v6270
    %v6281 = vsub.f32 %v6245, %v6273
    %v6282 = vmul.f32 %v6274, 1.442695
    %v6283 = vpow.pop %v6282
    %v6284 = vmul.f32 %v6275, 1.442695
    %v6285 = vpow.pop %v6284
    %v6286 = vmul.f32 %v6276, 1.442695
    %v6287 = vpow.pop %v6286
    %v6288 = vmul.f32 %v6277, 1.442695
    %v6289 = vpow.pop %v6288
    %v6290 = vmul.f32 %v6278, 1.442695
    %v6291 = vpow.pop %v6290
    %v6292 = vmul.f32 %v6279, 1.442695
    %v6293 = vpow.pop %v6292
    %v6294 = vmul.f32 %v6280, 1.442695
    %v6295 = vpow.pop %v6294
    %v6296 = vmul.f32 %v6281, 1.442695
    %v6297 = vpow.pop %v6296
    %v6298 = vsel %vm1126, %v6283, 0.0
    %6299 = vadd.xlane.f32.xlu0 %v6298
    %v6300 = vpop.xlane.xlu0 %6299
    %v6301 = vsel %vm1126, %v6285, 0.0
    %6302 = vadd.xlane.f32.xlu0 %v6301
    %v6303 = vpop.xlane.xlu0 %6302
    %v6304 = vsel %vm1126, %v6287, 0.0
    %6305 = vadd.xlane.f32.xlu0 %v6304
    %v6306 = vpop.xlane.xlu0 %6305
    %v6307 = vsel %vm1126, %v6289, 0.0
    %6308 = vadd.xlane.f32.xlu0 %v6307
    %v6309 = vpop.xlane.xlu0 %6308
    %v6310 = vsel %vm1126, %v6291, 0.0
    %6311 = vadd.xlane.f32.xlu0 %v6310
    %v6312 = vpop.xlane.xlu0 %6311
    %v6313 = vsel %vm1126, %v6293, 0.0
    %6314 = vadd.xlane.f32.xlu0 %v6313
    %v6315 = vpop.xlane.xlu0 %6314
    %v6316 = vsel %vm1126, %v6295, 0.0
    %6317 = vadd.xlane.f32.xlu0 %v6316
    %v6318 = vpop.xlane.xlu0 %6317
    %v6319 = vsel %vm1126, %v6297, 0.0
    %6320 = vadd.xlane.f32.xlu0 %v6319
    %v6321 = vpop.xlane.xlu0 %6320
    %v6322 = vrcp.pop %v6300
    %v6323 = vrcp.pop %v6303
    %v6324 = vrcp.pop %v6306
    %v6325 = vrcp.pop %v6309
    %v6326 = vrcp.pop %v6312
    %v6327 = vrcp.pop %v6315
    %v6328 = vrcp.pop %v6318
    %v6329 = vrcp.pop %v6321
    %v6330 = vmul.f32 %v6283, %v6322
    %v6331 = vmul.f32 %v6285, %v6323
    %v6332 = vmul.f32 %v6287, %v6324
    %v6333 = vmul.f32 %v6289, %v6325
    %v6334 = vmul.f32 %v6291, %v6326
    %v6335 = vmul.f32 %v6293, %v6327
    %v6336 = vmul.f32 %v6295, %v6328
    %v6337 = vmul.f32 %v6297, %v6329
    %v6338 = vpack.c.bf16 %v6330, %v6330
    %v6339 = vpack.c.bf16 %v6331, %v6331
    %v6340 = vpack.c.bf16 %v6332, %v6332
    %v6341 = vpack.c.bf16 %v6333, %v6333
    %v6342 = vpack.c.bf16 %v6334, %v6334
    %v6343 = vpack.c.bf16 %v6335, %v6335
    %v6344 = vpack.c.bf16 %v6336, %v6336
    %v6345 = vpack.c.bf16 %v6337, %v6337
    %6347 = vrot.lane.b32.xlu0 %v5874, 96
    %v6348 = vpop.permute.xlu0 %6347
    %v6351 = vsel %vm1126, %v6338, 0
    %6353 = vmatprep.subr.bf16.mxu0 0
    %6354 = vmatpush1.bf16.msra.mxu0 %v6348
    %6355 = vmatprep.subr.bf16.mxu0 0
    %6356 = vmatpush1.bf16.msra.mxu0 0
    %6357 = vmatprep.subr.bf16.mxu0 0
    %6358 = vmatpush1.bf16.msra.mxu0 0
    %6359 = vmatprep.subr.bf16.mxu0 0
    %6360 = vmatpush1.bf16.msra.mxu0 0
    %6361 = vmatprep.subr.bf16.mxu0 0
    %6362 = vmatpush1.bf16.msra.mxu0 0
    %6363 = vmatprep.subr.bf16.mxu0 0
    %6364 = vmatpush1.bf16.msra.mxu0 0
    %6365 = vmatprep.subr.bf16.mxu0 0
    %6366 = vmatpush1.bf16.msra.mxu0 0
    %6367 = vmatprep.subr.bf16.mxu0 0
    %6368 = vmatpush1.bf16.msra.mxu0 0
    %6369 = vmatprep.subr.bf16.mxu0 0
    %6370 = vmatpush1.bf16.msra.mxu0 0
    %6371 = vmatprep.subr.bf16.mxu0 0
    %6372 = vmatpush1.bf16.msra.mxu0 0
    %6373 = vmatprep.subr.bf16.mxu0 0
    %6374 = vmatpush1.bf16.msra.mxu0 0
    %6375 = vmatprep.subr.bf16.mxu0 0
    %6376 = vmatpush1.bf16.msra.mxu0 0
    %6377 = vmatprep.subr.bf16.mxu0 0
    %6378 = vmatpush1.bf16.msra.mxu0 0
    %6379 = vmatprep.subr.bf16.mxu0 0
    %6380 = vmatpush1.bf16.msra.mxu0 0
    %6381 = vmatprep.subr.bf16.mxu0 0
    %6382 = vmatpush1.bf16.msra.mxu0 0
    %6383 = vmatprep.subr.bf16.mxu0 0
    %6384 = vmatpush1.bf16.msra.mxu0 0
    %6385 = vmatprep.mubr.bf16.mxu0 0
    %6386 = vmatmul.mubr.bf16.gmra.mrb[0].mxu0 %v6351
    %v6387 = vpop.f32.mrb[0].mxu0
    %v6388 = vadd.f32 0.0, %v6387
    %v6389 = vpop.f32.mrb[0].mxu0
    %v6390 = vpop.f32.mrb[0].mxu0
    %v6391 = vpop.f32.mrb[0].mxu0
    %6392 = vdwg.mxu0
    %6394 = vrot.lane.b32.xlu0 %v5875, 96
    %v6395 = vpop.permute.xlu0 %6394
    %v6398 = vsel %vm1126, %v6339, 0
    %6400 = vmatprep.subr.bf16.mxu0 0
    %6401 = vmatpush1.bf16.msra.mxu0 %v6395
    %6402 = vmatprep.subr.bf16.mxu0 0
    %6403 = vmatpush1.bf16.msra.mxu0 0
    %6404 = vmatprep.subr.bf16.mxu0 0
    %6405 = vmatpush1.bf16.msra.mxu0 0
    %6406 = vmatprep.subr.bf16.mxu0 0
    %6407 = vmatpush1.bf16.msra.mxu0 0
    %6408 = vmatprep.subr.bf16.mxu0 0
    %6409 = vmatpush1.bf16.msra.mxu0 0
    %6410 = vmatprep.subr.bf16.mxu0 0
    %6411 = vmatpush1.bf16.msra.mxu0 0
    %6412 = vmatprep.subr.bf16.mxu0 0
    %6413 = vmatpush1.bf16.msra.mxu0 0
    %6414 = vmatprep.subr.bf16.mxu0 0
    %6415 = vmatpush1.bf16.msra.mxu0 0
    %6416 = vmatprep.subr.bf16.mxu0 0
    %6417 = vmatpush1.bf16.msra.mxu0 0
    %6418 = vmatprep.subr.bf16.mxu0 0
    %6419 = vmatpush1.bf16.msra.mxu0 0
    %6420 = vmatprep.subr.bf16.mxu0 0
    %6421 = vmatpush1.bf16.msra.mxu0 0
    %6422 = vmatprep.subr.bf16.mxu0 0
    %6423 = vmatpush1.bf16.msra.mxu0 0
    %6424 = vmatprep.subr.bf16.mxu0 0
    %6425 = vmatpush1.bf16.msra.mxu0 0
    %6426 = vmatprep.subr.bf16.mxu0 0
    %6427 = vmatpush1.bf16.msra.mxu0 0
    %6428 = vmatprep.subr.bf16.mxu0 0
    %6429 = vmatpush1.bf16.msra.mxu0 0
    %6430 = vmatprep.subr.bf16.mxu0 0
    %6431 = vmatpush1.bf16.msra.mxu0 0
    %6432 = vmatprep.mubr.bf16.mxu0 0
    %6433 = vmatmul.mubr.bf16.gmra.mrb[0].mxu0 %v6398
    %v6434 = vpop.f32.mrb[0].mxu0
    %v6435 = vadd.f32 0.0, %v6434
    %v6436 = vpop.f32.mrb[0].mxu0
    %v6437 = vpop.f32.mrb[0].mxu0
    %v6438 = vpop.f32.mrb[0].mxu0
    %6439 = vdwg.mxu0
    %6441 = vrot.lane.b32.xlu0 %v5876, 96
    %v6442 = vpop.permute.xlu0 %6441
    %v6445 = vsel %vm1126, %v6340, 0
    %6447 = vmatprep.subr.bf16.mxu0 0
    %6448 = vmatpush1.bf16.msra.mxu0 %v6442
    %6449 = vmatprep.subr.bf16.mxu0 0
    %6450 = vmatpush1.bf16.msra.mxu0 0
    %6451 = vmatprep.subr.bf16.mxu0 0
    %6452 = vmatpush1.bf16.msra.mxu0 0
    %6453 = vmatprep.subr.bf16.mxu0 0
    %6454 = vmatpush1.bf16.msra.mxu0 0
    %6455 = vmatprep.subr.bf16.mxu0 0
    %6456 = vmatpush1.bf16.msra.mxu0 0
    %6457 = vmatprep.subr.bf16.mxu0 0
    %6458 = vmatpush1.bf16.msra.mxu0 0
    %6459 = vmatprep.subr.bf16.mxu0 0
    %6460 = vmatpush1.bf16.msra.mxu0 0
    %6461 = vmatprep.subr.bf16.mxu0 0
    %6462 = vmatpush1.bf16.msra.mxu0 0
    %6463 = vmatprep.subr.bf16.mxu0 0
    %6464 = vmatpush1.bf16.msra.mxu0 0
    %6465 = vmatprep.subr.bf16.mxu0 0
    %6466 = vmatpush1.bf16.msra.mxu0 0
    %6467 = vmatprep.subr.bf16.mxu0 0
    %6468 = vmatpush1.bf16.msra.mxu0 0
    %6469 = vmatprep.subr.bf16.mxu0 0
    %6470 = vmatpush1.bf16.msra.mxu0 0
    %6471 = vmatprep.subr.bf16.mxu0 0
    %6472 = vmatpush1.bf16.msra.mxu0 0
    %6473 = vmatprep.subr.bf16.mxu0 0
    %6474 = vmatpush1.bf16.msra.mxu0 0
    %6475 = vmatprep.subr.bf16.mxu0 0
    %6476 = vmatpush1.bf16.msra.mxu0 0
    %6477 = vmatprep.subr.bf16.mxu0 0
    %6478 = vmatpush1.bf16.msra.mxu0 0
    %6479 = vmatprep.mubr.bf16.mxu0 0
    %6480 = vmatmul.mubr.bf16.gmra.mrb[0].mxu0 %v6445
    %v6481 = vpop.f32.mrb[0].mxu0
    %v6482 = vadd.f32 0.0, %v6481
    %v6483 = vpop.f32.mrb[0].mxu0
    %v6484 = vpop.f32.mrb[0].mxu0
    %v6485 = vpop.f32.mrb[0].mxu0
    %6486 = vdwg.mxu0
    %6488 = vrot.lane.b32.xlu0 %v5877, 96
    %v6489 = vpop.permute.xlu0 %6488
    %v6492 = vsel %vm1126, %v6341, 0
    %6494 = vmatprep.subr.bf16.mxu0 0
    %6495 = vmatpush1.bf16.msra.mxu0 %v6489
    %6496 = vmatprep.subr.bf16.mxu0 0
    %6497 = vmatpush1.bf16.msra.mxu0 0
    %6498 = vmatprep.subr.bf16.mxu0 0
    %6499 = vmatpush1.bf16.msra.mxu0 0
    %6500 = vmatprep.subr.bf16.mxu0 0
    %6501 = vmatpush1.bf16.msra.mxu0 0
    %6502 = vmatprep.subr.bf16.mxu0 0
    %6503 = vmatpush1.bf16.msra.mxu0 0
    %6504 = vmatprep.subr.bf16.mxu0 0
    %6505 = vmatpush1.bf16.msra.mxu0 0
    %6506 = vmatprep.subr.bf16.mxu0 0
    %6507 = vmatpush1.bf16.msra.mxu0 0
    %6508 = vmatprep.subr.bf16.mxu0 0
    %6509 = vmatpush1.bf16.msra.mxu0 0
    %6510 = vmatprep.subr.bf16.mxu0 0
    %6511 = vmatpush1.bf16.msra.mxu0 0
    %6512 = vmatprep.subr.bf16.mxu0 0
    %6513 = vmatpush1.bf16.msra.mxu0 0
    %6514 = vmatprep.subr.bf16.mxu0 0
    %6515 = vmatpush1.bf16.msra.mxu0 0
    %6516 = vmatprep.subr.bf16.mxu0 0
    %6517 = vmatpush1.bf16.msra.mxu0 0
    %6518 = vmatprep.subr.bf16.mxu0 0
    %6519 = vmatpush1.bf16.msra.mxu0 0
    %6520 = vmatprep.subr.bf16.mxu0 0
    %6521 = vmatpush1.bf16.msra.mxu0 0
    %6522 = vmatprep.subr.bf16.mxu0 0
    %6523 = vmatpush1.bf16.msra.mxu0 0
    %6524 = vmatprep.subr.bf16.mxu0 0
    %6525 = vmatpush1.bf16.msra.mxu0 0
    %6526 = vmatprep.mubr.bf16.mxu0 0
    %6527 = vmatmul.mubr.bf16.gmra.mrb[0].mxu0 %v6492
    %v6528 = vpop.f32.mrb[0].mxu0
    %v6529 = vadd.f32 0.0, %v6528
    %v6530 = vpop.f32.mrb[0].mxu0
    %v6531 = vpop.f32.mrb[0].mxu0
    %v6532 = vpop.f32.mrb[0].mxu0
    %6533 = vdwg.mxu0
    %6535 = vrot.lane.b32.xlu0 %v5878, 96
    %v6536 = vpop.permute.xlu0 %6535
    %v6539 = vsel %vm1126, %v6342, 0
    %6541 = vmatprep.subr.bf16.mxu0 0
    %6542 = vmatpush1.bf16.msra.mxu0 %v6536
    %6543 = vmatprep.subr.bf16.mxu0 0
    %6544 = vmatpush1.bf16.msra.mxu0 0
    %6545 = vmatprep.subr.bf16.mxu0 0
    %6546 = vmatpush1.bf16.msra.mxu0 0
    %6547 = vmatprep.subr.bf16.mxu0 0
    %6548 = vmatpush1.bf16.msra.mxu0 0
    %6549 = vmatprep.subr.bf16.mxu0 0
    %6550 = vmatpush1.bf16.msra.mxu0 0
    %6551 = vmatprep.subr.bf16.mxu0 0
    %6552 = vmatpush1.bf16.msra.mxu0 0
    %6553 = vmatprep.subr.bf16.mxu0 0
    %6554 = vmatpush1.bf16.msra.mxu0 0
    %6555 = vmatprep.subr.bf16.mxu0 0
    %6556 = vmatpush1.bf16.msra.mxu0 0
    %6557 = vmatprep.subr.bf16.mxu0 0
    %6558 = vmatpush1.bf16.msra.mxu0 0
    %6559 = vmatprep.subr.bf16.mxu0 0
    %6560 = vmatpush1.bf16.msra.mxu0 0
    %6561 = vmatprep.subr.bf16.mxu0 0
    %6562 = vmatpush1.bf16.msra.mxu0 0
    %6563 = vmatprep.subr.bf16.mxu0 0
    %6564 = vmatpush1.bf16.msra.mxu0 0
    %6565 = vmatprep.subr.bf16.mxu0 0
    %6566 = vmatpush1.bf16.msra.mxu0 0
    %6567 = vmatprep.subr.bf16.mxu0 0
    %6568 = vmatpush1.bf16.msra.mxu0 0
    %6569 = vmatprep.subr.bf16.mxu0 0
    %6570 = vmatpush1.bf16.msra.mxu0 0
    %6571 = vmatprep.subr.bf16.mxu0 0
    %6572 = vmatpush1.bf16.msra.mxu0 0
    %6573 = vmatprep.mubr.bf16.mxu0 0
    %6574 = vmatmul.mubr.bf16.gmra.mrb[0].mxu0 %v6539
    %v6575 = vpop.f32.mrb[0].mxu0
    %v6576 = vadd.f32 0.0, %v6575
    %v6577 = vpop.f32.mrb[0].mxu0
    %v6578 = vpop.f32.mrb[0].mxu0
    %v6579 = vpop.f32.mrb[0].mxu0
    %6580 = vdwg.mxu0
    %6582 = vrot.lane.b32.xlu0 %v5879, 96
    %v6583 = vpop.permute.xlu0 %6582
    %v6586 = vsel %vm1126, %v6343, 0
    %6588 = vmatprep.subr.bf16.mxu0 0
    %6589 = vmatpush1.bf16.msra.mxu0 %v6583
    %6590 = vmatprep.subr.bf16.mxu0 0
    %6591 = vmatpush1.bf16.msra.mxu0 0
    %6592 = vmatprep.subr.bf16.mxu0 0
    %6593 = vmatpush1.bf16.msra.mxu0 0
    %6594 = vmatprep.subr.bf16.mxu0 0
    %6595 = vmatpush1.bf16.msra.mxu0 0
    %6596 = vmatprep.subr.bf16.mxu0 0
    %6597 = vmatpush1.bf16.msra.mxu0 0
    %6598 = vmatprep.subr.bf16.mxu0 0
    %6599 = vmatpush1.bf16.msra.mxu0 0
    %6600 = vmatprep.subr.bf16.mxu0 0
    %6601 = vmatpush1.bf16.msra.mxu0 0
    %6602 = vmatprep.subr.bf16.mxu0 0
    %6603 = vmatpush1.bf16.msra.mxu0 0
    %6604 = vmatprep.subr.bf16.mxu0 0
    %6605 = vmatpush1.bf16.msra.mxu0 0
    %6606 = vmatprep.subr.bf16.mxu0 0
    %6607 = vmatpush1.bf16.msra.mxu0 0
    %6608 = vmatprep.subr.bf16.mxu0 0
    %6609 = vmatpush1.bf16.msra.mxu0 0
    %6610 = vmatprep.subr.bf16.mxu0 0
    %6611 = vmatpush1.bf16.msra.mxu0 0
    %6612 = vmatprep.subr.bf16.mxu0 0
    %6613 = vmatpush1.bf16.msra.mxu0 0
    %6614 = vmatprep.subr.bf16.mxu0 0
    %6615 = vmatpush1.bf16.msra.mxu0 0
    %6616 = vmatprep.subr.bf16.mxu0 0
    %6617 = vmatpush1.bf16.msra.mxu0 0
    %6618 = vmatprep.subr.bf16.mxu0 0
    %6619 = vmatpush1.bf16.msra.mxu0 0
    %6620 = vmatprep.mubr.bf16.mxu0 0
    %6621 = vmatmul.mubr.bf16.gmra.mrb[0].mxu0 %v6586
    %v6622 = vpop.f32.mrb[0].mxu0
    %v6623 = vadd.f32 0.0, %v6622
    %v6624 = vpop.f32.mrb[0].mxu0
    %v6625 = vpop.f32.mrb[0].mxu0
    %v6626 = vpop.f32.mrb[0].mxu0
    %6627 = vdwg.mxu0
    %6629 = vrot.lane.b32.xlu0 %v5880, 96
    %v6630 = vpop.permute.xlu0 %6629
    %v6633 = vsel %vm1126, %v6344, 0
    %6635 = vmatprep.subr.bf16.mxu0 0
    %6636 = vmatpush1.bf16.msra.mxu0 %v6630
    %6637 = vmatprep.subr.bf16.mxu0 0
    %6638 = vmatpush1.bf16.msra.mxu0 0
    %6639 = vmatprep.subr.bf16.mxu0 0
    %6640 = vmatpush1.bf16.msra.mxu0 0
    %6641 = vmatprep.subr.bf16.mxu0 0
    %6642 = vmatpush1.bf16.msra.mxu0 0
    %6643 = vmatprep.subr.bf16.mxu0 0
    %6644 = vmatpush1.bf16.msra.mxu0 0
    %6645 = vmatprep.subr.bf16.mxu0 0
    %6646 = vmatpush1.bf16.msra.mxu0 0
    %6647 = vmatprep.subr.bf16.mxu0 0
    %6648 = vmatpush1.bf16.msra.mxu0 0
    %6649 = vmatprep.subr.bf16.mxu0 0
    %6650 = vmatpush1.bf16.msra.mxu0 0
    %6651 = vmatprep.subr.bf16.mxu0 0
    %6652 = vmatpush1.bf16.msra.mxu0 0
    %6653 = vmatprep.subr.bf16.mxu0 0
    %6654 = vmatpush1.bf16.msra.mxu0 0
    %6655 = vmatprep.subr.bf16.mxu0 0
    %6656 = vmatpush1.bf16.msra.mxu0 0
    %6657 = vmatprep.subr.bf16.mxu0 0
    %6658 = vmatpush1.bf16.msra.mxu0 0
    %6659 = vmatprep.subr.bf16.mxu0 0
    %6660 = vmatpush1.bf16.msra.mxu0 0
    %6661 = vmatprep.subr.bf16.mxu0 0
    %6662 = vmatpush1.bf16.msra.mxu0 0
    %6663 = vmatprep.subr.bf16.mxu0 0
    %6664 = vmatpush1.bf16.msra.mxu0 0
    %6665 = vmatprep.subr.bf16.mxu0 0
    %6666 = vmatpush1.bf16.msra.mxu0 0
    %6667 = vmatprep.mubr.bf16.mxu0 0
    %6668 = vmatmul.mubr.bf16.gmra.mrb[0].mxu0 %v6633
    %v6669 = vpop.f32.mrb[0].mxu0
    %v6670 = vadd.f32 0.0, %v6669
    %v6671 = vpop.f32.mrb[0].mxu0
    %v6672 = vpop.f32.mrb[0].mxu0
    %v6673 = vpop.f32.mrb[0].mxu0
    %6674 = vdwg.mxu0
    %6676 = vrot.lane.b32.xlu0 %v5881, 96
    %v6677 = vpop.permute.xlu0 %6676
    %v6680 = vsel %vm1126, %v6345, 0
    %6682 = vmatprep.subr.bf16.mxu0 0
    %6683 = vmatpush1.bf16.msra.mxu0 %v6677
    %6684 = vmatprep.subr.bf16.mxu0 0
    %6685 = vmatpush1.bf16.msra.mxu0 0
    %6686 = vmatprep.subr.bf16.mxu0 0
    %6687 = vmatpush1.bf16.msra.mxu0 0
    %6688 = vmatprep.subr.bf16.mxu0 0
    %6689 = vmatpush1.bf16.msra.mxu0 0
    %6690 = vmatprep.subr.bf16.mxu0 0
    %6691 = vmatpush1.bf16.msra.mxu0 0
    %6692 = vmatprep.subr.bf16.mxu0 0
    %6693 = vmatpush1.bf16.msra.mxu0 0
    %6694 = vmatprep.subr.bf16.mxu0 0
    %6695 = vmatpush1.bf16.msra.mxu0 0
    %6696 = vmatprep.subr.bf16.mxu0 0
    %6697 = vmatpush1.bf16.msra.mxu0 0
    %6698 = vmatprep.subr.bf16.mxu0 0
    %6699 = vmatpush1.bf16.msra.mxu0 0
    %6700 = vmatprep.subr.bf16.mxu0 0
    %6701 = vmatpush1.bf16.msra.mxu0 0
    %6702 = vmatprep.subr.bf16.mxu0 0
    %6703 = vmatpush1.bf16.msra.mxu0 0
    %6704 = vmatprep.subr.bf16.mxu0 0
    %6705 = vmatpush1.bf16.msra.mxu0 0
    %6706 = vmatprep.subr.bf16.mxu0 0
    %6707 = vmatpush1.bf16.msra.mxu0 0
    %6708 = vmatprep.subr.bf16.mxu0 0
    %6709 = vmatpush1.bf16.msra.mxu0 0
    %6710 = vmatprep.subr.bf16.mxu0 0
    %6711 = vmatpush1.bf16.msra.mxu0 0
    %6712 = vmatprep.subr.bf16.mxu0 0
    %6713 = vmatpush1.bf16.msra.mxu0 0
    %6714 = vmatprep.mubr.bf16.mxu0 0
    %6715 = vmatmul.mubr.bf16.gmra.mrb[0].mxu0 %v6680
    %v6716 = vpop.f32.mrb[0].mxu0
    %v6717 = vadd.f32 0.0, %v6716
    %v6718 = vpop.f32.mrb[0].mxu0
    %v6719 = vpop.f32.mrb[0].mxu0
    %v6720 = vpop.f32.mrb[0].mxu0
    %6721 = vdwg.mxu0
    %6723 = vrot.lane.b32.xlu0 %v6435, 8
    %v6724 = vpop.permute.xlu0 %6723
    %6727 = vrot.lane.b32.xlu0 %v6482, 16
    %v6728 = vpop.permute.xlu0 %6727
    %6731 = vrot.lane.b32.xlu0 %v6529, 24
    %v6732 = vpop.permute.xlu0 %6731
    %v6734 = vsel %vm242, %v6388, %v6724
    %v6735 = vsel %vm1126, %v6734, %v6728
    %v6736 = vsel %vm1128, %v6735, %v6732
    %6738 = vrot.lane.b32.xlu0 %v6623, 8
    %v6739 = vpop.permute.xlu0 %6738
    %6742 = vrot.lane.b32.xlu0 %v6670, 16
    %v6743 = vpop.permute.xlu0 %6742
    %6746 = vrot.lane.b32.xlu0 %v6717, 24
    %v6747 = vpop.permute.xlu0 %6746
    %v6749 = vsel %vm242, %v6576, %v6739
    %v6750 = vsel %vm1126, %v6749, %v6743
    %v6751 = vsel %vm1128, %v6750, %v6747
    %v6752 = vpack.c.bf16 %v6751, %v6736
    %s6753 = scalar_lea.vmem %s12, 16
    %v6754 = vld [vmem:[%s6753] sm:$0xf]
    %v6755 = vld [vmem:[%s6753 + $0x4] sm:$0xf]
    %v6756 = vld [vmem:[%s6753 + $0x8] sm:$0xf]
    %v6757 = vld [vmem:[%s6753 + $0xc] sm:$0xf]
    %s6758 = scalar_lea.vmem %s13, 1
    %v6759 = vld [vmem:[%s6758] sm:$0x1]
    %v6761 = vlaneseq
    %v6762 = vshrl.u32 %v6761, 7
    %v6763 = vsub.s32 0, %v6762
    %v6764 = vrot.slane %v6759, %v6763
    %v6770 = vunpack.c.l.b16 %v6754
    %v6771 = vunpack.c.l.b16 %v6755
    %v6772 = vunpack.c.l.b16 %v6756
    %v6773 = vunpack.c.l.b16 %v6757
    %v6774 = vpack.c.b16 %v6771, %v6770
    %v6775 = vpack.c.b16 %v6773, %v6772
    %v6779 = vsel %vm99, %v6752, 0
    %6781 = vmatprep.subr.bf16.mxu0 0
    %6782 = vmatpush1.bf16.msra.mxu0 %v6774
    %6783 = vmatprep.subr.bf16.mxu0 0
    %6784 = vmatpush1.bf16.msra.mxu0 %v6775
    %6785 = vmatprep.subr.bf16.mxu0 0
    %6786 = vmatpush1.bf16.msra.mxu0 0
    %6787 = vmatprep.subr.bf16.mxu0 0
    %6788 = vmatpush1.bf16.msra.mxu0 0
    %6789 = vmatprep.subr.bf16.mxu0 0
    %6790 = vmatpush1.bf16.msra.mxu0 0
    %6791 = vmatprep.subr.bf16.mxu0 0
    %6792 = vmatpush1.bf16.msra.mxu0 0
    %6793 = vmatprep.subr.bf16.mxu0 0
    %6794 = vmatpush1.bf16.msra.mxu0 0
    %6795 = vmatprep.subr.bf16.mxu0 0
    %6796 = vmatpush1.bf16.msra.mxu0 0
    %6797 = vmatprep.subr.bf16.mxu0 0
    %6798 = vmatpush1.bf16.msra.mxu0 0
    %6799 = vmatprep.subr.bf16.mxu0 0
    %6800 = vmatpush1.bf16.msra.mxu0 0
    %6801 = vmatprep.subr.bf16.mxu0 0
    %6802 = vmatpush1.bf16.msra.mxu0 0
    %6803 = vmatprep.subr.bf16.mxu0 0
    %6804 = vmatpush1.bf16.msra.mxu0 0
    %6805 = vmatprep.subr.bf16.mxu0 0
    %6806 = vmatpush1.bf16.msra.mxu0 0
    %6807 = vmatprep.subr.bf16.mxu0 0
    %6808 = vmatpush1.bf16.msra.mxu0 0
    %6809 = vmatprep.subr.bf16.mxu0 0
    %6810 = vmatpush1.bf16.msra.mxu0 0
    %6811 = vmatprep.subr.bf16.mxu0 0
    %6812 = vmatpush1.bf16.msra.mxu0 0
    %6813 = vmatprep.mubr.bf16.mxu0 0
    %6814 = vmatmul.mubr.bf16.gmra.mrb[0].mxu0 %v6779
    %v6815 = vpop.f32.mrb[0].mxu0
    %v6816 = vadd.f32 %v6764, %v6815
    %v6817 = vpop.f32.mrb[0].mxu0
    %v6818 = vpop.f32.mrb[0].mxu0
    %v6819 = vadd.f32 %v6764, %v6818
    %v6820 = vpop.f32.mrb[0].mxu0
    %6821 = vdwg.mxu0
    %v6822 = vadd.f32 %v5614, %v6816
    %v6823 = vadd.f32 %v5615, %v6819
    %s6824 = scalar_lea.vmem %s22, 1
    %v6825 = vld [vmem:[%s6824] sm:$0x1]
    %s6826 = scalar_lea.vmem %s23, 1
    %v6827 = vld [vmem:[%s6826] sm:$0x1]
    %v6828 = vsel %vm99, %v6822, 0.0
    %6829 = vadd.xlane.f32.xlu0 %v6828
    %v6830 = vpop.xlane.xlu0 %6829
    %v6831 = vsel %vm99, %v6823, 0.0
    %6832 = vadd.xlane.f32.xlu0 %v6831
    %v6833 = vpop.xlane.xlu0 %6832
    %v6834 = vmul.f32 %v6830, %v106
    %v6835 = vmul.f32 %v6833, %v106
    %v6836 = vsub.f32 %v6822, %v6834
    %v6837 = vsub.f32 %v6823, %v6835
    %v6838 = vmul.f32 %v6836, %v6836
    %v6839 = vmul.f32 %v6837, %v6837
    %v6840 = vsel %vm99, %v6838, 0.0
    %6841 = vadd.xlane.f32.xlu0 %v6840
    %v6842 = vpop.xlane.xlu0 %6841
    %v6843 = vsel %vm99, %v6839, 0.0
    %6844 = vadd.xlane.f32.xlu0 %v6843
    %v6845 = vpop.xlane.xlu0 %6844
    %v6846 = vmul.f32 %v6842, 0.032258064
    %v6847 = vmul.f32 %v6845, 0.032258064
    %v6848 = vadd.f32 %v6846, 1e-12
    %v6849 = vadd.f32 %v6847, 1e-12
    %v6850 = vrsqrt.pop %v6848
    %v6851 = vrsqrt.pop %v6849
    %v6852 = vmul.f32 %v6836, %v6850
    %v6853 = vmul.f32 %v6837, %v6851
    %v6855 = vlaneseq
    %v6856 = vshrl.u32 %v6855, 7
    %v6857 = vsub.s32 0, %v6856
    %v6858 = vrot.slane %v6825, %v6857
    %v6860 = vmul.f32 %v6858, %v6852
    %v6861 = vmul.f32 %v6858, %v6853
    %v6863 = vlaneseq
    %v6864 = vshrl.u32 %v6863, 7
    %v6865 = vsub.s32 0, %v6864
    %v6866 = vrot.slane %v6827, %v6865
    %v6868 = vadd.f32 %v6860, %v6866
    %v6869 = vadd.f32 %v6861, %v6866
    %s6870 = scalar_lea.vmem %s14, 256
    %v6871 = vld [vmem:[%s6870] sm:$0xff]
    %v6872 = vld [vmem:[%s6870 + $0x8] sm:$0xff]
    %v6873 = vld [vmem:[%s6870 + $0x10] sm:$0xff]
    %v6874 = vld [vmem:[%s6870 + $0x18] sm:$0xff]
    %v6875 = vld [vmem:[%s6870 + $0x20] sm:$0xff]
    %v6876 = vld [vmem:[%s6870 + $0x28] sm:$0xff]
    %v6877 = vld [vmem:[%s6870 + $0x30] sm:$0xff]
    %v6878 = vld [vmem:[%s6870 + $0x38] sm:$0xff]
    %v6879 = vld [vmem:[%s6870 + $0x40] sm:$0xff]
    %v6880 = vld [vmem:[%s6870 + $0x48] sm:$0xff]
    %v6881 = vld [vmem:[%s6870 + $0x50] sm:$0xff]
    %v6882 = vld [vmem:[%s6870 + $0x58] sm:$0xff]
    %v6883 = vld [vmem:[%s6870 + $0x60] sm:$0xff]
    %v6884 = vld [vmem:[%s6870 + $0x68] sm:$0xff]
    %v6885 = vld [vmem:[%s6870 + $0x70] sm:$0xff]
    %v6886 = vld [vmem:[%s6870 + $0x78] sm:$0xff]
    %v6887 = vld [vmem:[%s6870 + $0x80] sm:$0xff]
    %v6888 = vld [vmem:[%s6870 + $0x88] sm:$0xff]
    %v6889 = vld [vmem:[%s6870 + $0x90] sm:$0xff]
    %v6890 = vld [vmem:[%s6870 + $0x98] sm:$0xff]
    %v6891 = vld [vmem:[%s6870 + $0xa0] sm:$0xff]
    %v6892 = vld [vmem:[%s6870 + $0xa8] sm:$0xff]
    %v6893 = vld [vmem:[%s6870 + $0xb0] sm:$0xff]
    %v6894 = vld [vmem:[%s6870 + $0xb8] sm:$0xff]
    %v6895 = vld [vmem:[%s6870 + $0xc0] sm:$0xff]
    %v6896 = vld [vmem:[%s6870 + $0xc8] sm:$0xff]
    %v6897 = vld [vmem:[%s6870 + $0xd0] sm:$0xff]
    %v6898 = vld [vmem:[%s6870 + $0xd8] sm:$0xff]
    %v6899 = vld [vmem:[%s6870 + $0xe0] sm:$0xff]
    %v6900 = vld [vmem:[%s6870 + $0xe8] sm:$0xff]
    %v6901 = vld [vmem:[%s6870 + $0xf0] sm:$0xff]
    %v6902 = vld [vmem:[%s6870 + $0xf8] sm:$0xff]
    %s6903 = scalar_lea.vmem %s15, 16
    %v6904 = vld [vmem:[%s6903] sm:$0xff]
    %v6905 = vld [vmem:[%s6903 + $0x8] sm:$0xff]
    %s6906 = scalar_lea.vmem %s16, 1024
    %v6907 = vld [vmem:[%s6906] sm:$0xf]
    %v6908 = vld [vmem:[%s6906 + $0x4] sm:$0xf]
    %v6909 = vld [vmem:[%s6906 + $0x8] sm:$0xf]
    %v6910 = vld [vmem:[%s6906 + $0xc] sm:$0xf]
    %v6911 = vld [vmem:[%s6906 + $0x10] sm:$0xf]
    %v6912 = vld [vmem:[%s6906 + $0x14] sm:$0xf]
    %v6913 = vld [vmem:[%s6906 + $0x18] sm:$0xf]
    %v6914 = vld [vmem:[%s6906 + $0x1c] sm:$0xf]
    %v6915 = vld [vmem:[%s6906 + $0x20] sm:$0xf]
    %v6916 = vld [vmem:[%s6906 + $0x24] sm:$0xf]
    %v6917 = vld [vmem:[%s6906 + $0x28] sm:$0xf]
    %v6918 = vld [vmem:[%s6906 + $0x2c] sm:$0xf]
    %v6919 = vld [vmem:[%s6906 + $0x30] sm:$0xf]
    %v6920 = vld [vmem:[%s6906 + $0x34] sm:$0xf]
    %v6921 = vld [vmem:[%s6906 + $0x38] sm:$0xf]
    %v6922 = vld [vmem:[%s6906 + $0x3c] sm:$0xf]
    %v6923 = vld [vmem:[%s6906 + $0x40] sm:$0xf]
    %v6924 = vld [vmem:[%s6906 + $0x44] sm:$0xf]
    %v6925 = vld [vmem:[%s6906 + $0x48] sm:$0xf]
    %v6926 = vld [vmem:[%s6906 + $0x4c] sm:$0xf]
    %v6927 = vld [vmem:[%s6906 + $0x50] sm:$0xf]
    %v6928 = vld [vmem:[%s6906 + $0x54] sm:$0xf]
    %v6929 = vld [vmem:[%s6906 + $0x58] sm:$0xf]
    %v6930 = vld [vmem:[%s6906 + $0x5c] sm:$0xf]
    %v6931 = vld [vmem:[%s6906 + $0x60] sm:$0xf]
    %v6932 = vld [vmem:[%s6906 + $0x64] sm:$0xf]
    %v6933 = vld [vmem:[%s6906 + $0x68] sm:$0xf]
    %v6934 = vld [vmem:[%s6906 + $0x6c] sm:$0xf]
    %v6935 = vld [vmem:[%s6906 + $0x70] sm:$0xf]
    %v6936 = vld [vmem:[%s6906 + $0x74] sm:$0xf]
    %v6937 = vld [vmem:[%s6906 + $0x78] sm:$0xf]
    %v6938 = vld [vmem:[%s6906 + $0x7c] sm:$0xf]
    %v6939 = vld [vmem:[%s6906 + $0x80] sm:$0xf]
    %v6940 = vld [vmem:[%s6906 + $0x84] sm:$0xf]
    %v6941 = vld [vmem:[%s6906 + $0x88] sm:$0xf]
    %v6942 = vld [vmem:[%s6906 + $0x8c] sm:$0xf]
    %v6943 = vld [vmem:[%s6906 + $0x90] sm:$0xf]
    %v6944 = vld [vmem:[%s6906 + $0x94] sm:$0xf]
    %v6945 = vld [vmem:[%s6906 + $0x98] sm:$0xf]
    %v6946 = vld [vmem:[%s6906 + $0x9c] sm:$0xf]
    %v6947 = vld [vmem:[%s6906 + $0xa0] sm:$0xf]
    %v6948 = vld [vmem:[%s6906 + $0xa4] sm:$0xf]
    %v6949 = vld [vmem:[%s6906 + $0xa8] sm:$0xf]
    %v6950 = vld [vmem:[%s6906 + $0xac] sm:$0xf]
    %v6951 = vld [vmem:[%s6906 + $0xb0] sm:$0xf]
    %v6952 = vld [vmem:[%s6906 + $0xb4] sm:$0xf]
    %v6953 = vld [vmem:[%s6906 + $0xb8] sm:$0xf]
    %v6954 = vld [vmem:[%s6906 + $0xbc] sm:$0xf]
    %v6955 = vld [vmem:[%s6906 + $0xc0] sm:$0xf]
    %v6956 = vld [vmem:[%s6906 + $0xc4] sm:$0xf]
    %v6957 = vld [vmem:[%s6906 + $0xc8] sm:$0xf]
    %v6958 = vld [vmem:[%s6906 + $0xcc] sm:$0xf]
    %v6959 = vld [vmem:[%s6906 + $0xd0] sm:$0xf]
    %v6960 = vld [vmem:[%s6906 + $0xd4] sm:$0xf]
    %v6961 = vld [vmem:[%s6906 + $0xd8] sm:$0xf]
    %v6962 = vld [vmem:[%s6906 + $0xdc] sm:$0xf]
    %v6963 = vld [vmem:[%s6906 + $0xe0] sm:$0xf]
    %v6964 = vld [vmem:[%s6906 + $0xe4] sm:$0xf]
    %v6965 = vld [vmem:[%s6906 + $0xe8] sm:$0xf]
    %v6966 = vld [vmem:[%s6906 + $0xec] sm:$0xf]
    %v6967 = vld [vmem:[%s6906 + $0xf0] sm:$0xf]
    %v6968 = vld [vmem:[%s6906 + $0xf4] sm:$0xf]
    %v6969 = vld [vmem:[%s6906 + $0xf8] sm:$0xf]
    %v6970 = vld [vmem:[%s6906 + $0xfc] sm:$0xf]
    %v6971 = vld [vmem:[%s6906 + $0x100] sm:$0xf]
    %v6972 = vld [vmem:[%s6906 + $0x104] sm:$0xf]
    %v6973 = vld [vmem:[%s6906 + $0x108] sm:$0xf]
    %v6974 = vld [vmem:[%s6906 + $0x10c] sm:$0xf]
    %v6975 = vld [vmem:[%s6906 + $0x110] sm:$0xf]
    %v6976 = vld [vmem:[%s6906 + $0x114] sm:$0xf]
    %v6977 = vld [vmem:[%s6906 + $0x118] sm:$0xf]
    %v6978 = vld [vmem:[%s6906 + $0x11c] sm:$0xf]
    %v6979 = vld [vmem:[%s6906 + $0x120] sm:$0xf]
    %v6980 = vld [vmem:[%s6906 + $0x124] sm:$0xf]
    %v6981 = vld [vmem:[%s6906 + $0x128] sm:$0xf]
    %v6982 = vld [vmem:[%s6906 + $0x12c] sm:$0xf]
    %v6983 = vld [vmem:[%s6906 + $0x130] sm:$0xf]
    %v6984 = vld [vmem:[%s6906 + $0x134] sm:$0xf]
    %v6985 = vld [vmem:[%s6906 + $0x138] sm:$0xf]
    %v6986 = vld [vmem:[%s6906 + $0x13c] sm:$0xf]
    %v6987 = vld [vmem:[%s6906 + $0x140] sm:$0xf]
    %v6988 = vld [vmem:[%s6906 + $0x144] sm:$0xf]
    %v6989 = vld [vmem:[%s6906 + $0x148] sm:$0xf]
    %v6990 = vld [vmem:[%s6906 + $0x14c] sm:$0xf]
    %v6991 = vld [vmem:[%s6906 + $0x150] sm:$0xf]
    %v6992 = vld [vmem:[%s6906 + $0x154] sm:$0xf]
    %v6993 = vld [vmem:[%s6906 + $0x158] sm:$0xf]
    %v6994 = vld [vmem:[%s6906 + $0x15c] sm:$0xf]
    %v6995 = vld [vmem:[%s6906 + $0x160] sm:$0xf]
    %v6996 = vld [vmem:[%s6906 + $0x164] sm:$0xf]
    %v6997 = vld [vmem:[%s6906 + $0x168] sm:$0xf]
    %v6998 = vld [vmem:[%s6906 + $0x16c] sm:$0xf]
    %v6999 = vld [vmem:[%s6906 + $0x170] sm:$0xf]
    %v7000 = vld [vmem:[%s6906 + $0x174] sm:$0xf]
    %v7001 = vld [vmem:[%s6906 + $0x178] sm:$0xf]
    %v7002 = vld [vmem:[%s6906 + $0x17c] sm:$0xf]
    %v7003 = vld [vmem:[%s6906 + $0x180] sm:$0xf]
    %v7004 = vld [vmem:[%s6906 + $0x184] sm:$0xf]
    %v7005 = vld [vmem:[%s6906 + $0x188] sm:$0xf]
    %v7006 = vld [vmem:[%s6906 + $0x18c] sm:$0xf]
    %v7007 = vld [vmem:[%s6906 + $0x190] sm:$0xf]
    %v7008 = vld [vmem:[%s6906 + $0x194] sm:$0xf]
    %v7009 = vld [vmem:[%s6906 + $0x198] sm:$0xf]
    %v7010 = vld [vmem:[%s6906 + $0x19c] sm:$0xf]
    %v7011 = vld [vmem:[%s6906 + $0x1a0] sm:$0xf]
    %v7012 = vld [vmem:[%s6906 + $0x1a4] sm:$0xf]
    %v7013 = vld [vmem:[%s6906 + $0x1a8] sm:$0xf]
    %v7014 = vld [vmem:[%s6906 + $0x1ac] sm:$0xf]
    %v7015 = vld [vmem:[%s6906 + $0x1b0] sm:$0xf]
    %v7016 = vld [vmem:[%s6906 + $0x1b4] sm:$0xf]
    %v7017 = vld [vmem:[%s6906 + $0x1b8] sm:$0xf]
    %v7018 = vld [vmem:[%s6906 + $0x1bc] sm:$0xf]
    %v7019 = vld [vmem:[%s6906 + $0x1c0] sm:$0xf]
    %v7020 = vld [vmem:[%s6906 + $0x1c4] sm:$0xf]
    %v7021 = vld [vmem:[%s6906 + $0x1c8] sm:$0xf]
    %v7022 = vld [vmem:[%s6906 + $0x1cc] sm:$0xf]
    %v7023 = vld [vmem:[%s6906 + $0x1d0] sm:$0xf]
    %v7024 = vld [vmem:[%s6906 + $0x1d4] sm:$0xf]
    %v7025 = vld [vmem:[%s6906 + $0x1d8] sm:$0xf]
    %v7026 = vld [vmem:[%s6906 + $0x1dc] sm:$0xf]
    %v7027 = vld [vmem:[%s6906 + $0x1e0] sm:$0xf]
    %v7028 = vld [vmem:[%s6906 + $0x1e4] sm:$0xf]
    %v7029 = vld [vmem:[%s6906 + $0x1e8] sm:$0xf]
    %v7030 = vld [vmem:[%s6906 + $0x1ec] sm:$0xf]
    %v7031 = vld [vmem:[%s6906 + $0x1f0] sm:$0xf]
    %v7032 = vld [vmem:[%s6906 + $0x1f4] sm:$0xf]
    %v7033 = vld [vmem:[%s6906 + $0x1f8] sm:$0xf]
    %v7034 = vld [vmem:[%s6906 + $0x1fc] sm:$0xf]
    %v7035 = vld [vmem:[%s6906 + $0x200] sm:$0xf]
    %v7036 = vld [vmem:[%s6906 + $0x204] sm:$0xf]
    %v7037 = vld [vmem:[%s6906 + $0x208] sm:$0xf]
    %v7038 = vld [vmem:[%s6906 + $0x20c] sm:$0xf]
    %v7039 = vld [vmem:[%s6906 + $0x210] sm:$0xf]
    %v7040 = vld [vmem:[%s6906 + $0x214] sm:$0xf]
    %v7041 = vld [vmem:[%s6906 + $0x218] sm:$0xf]
    %v7042 = vld [vmem:[%s6906 + $0x21c] sm:$0xf]
    %v7043 = vld [vmem:[%s6906 + $0x220] sm:$0xf]
    %v7044 = vld [vmem:[%s6906 + $0x224] sm:$0xf]
    %v7045 = vld [vmem:[%s6906 + $0x228] sm:$0xf]
    %v7046 = vld [vmem:[%s6906 + $0x22c] sm:$0xf]
    %v7047 = vld [vmem:[%s6906 + $0x230] sm:$0xf]
    %v7048 = vld [vmem:[%s6906 + $0x234] sm:$0xf]
    %v7049 = vld [vmem:[%s6906 + $0x238] sm:$0xf]
    %v7050 = vld [vmem:[%s6906 + $0x23c] sm:$0xf]
    %v7051 = vld [vmem:[%s6906 + $0x240] sm:$0xf]
    %v7052 = vld [vmem:[%s6906 + $0x244] sm:$0xf]
    %v7053 = vld [vmem:[%s6906 + $0x248] sm:$0xf]
    %v7054 = vld [vmem:[%s6906 + $0x24c] sm:$0xf]
    %v7055 = vld [vmem:[%s6906 + $0x250] sm:$0xf]
    %v7056 = vld [vmem:[%s6906 + $0x254] sm:$0xf]
    %v7057 = vld [vmem:[%s6906 + $0x258] sm:$0xf]
    %v7058 = vld [vmem:[%s6906 + $0x25c] sm:$0xf]
    %v7059 = vld [vmem:[%s6906 + $0x260] sm:$0xf]
    %v7060 = vld [vmem:[%s6906 + $0x264] sm:$0xf]
    %v7061 = vld [vmem:[%s6906 + $0x268] sm:$0xf]
    %v7062 = vld [vmem:[%s6906 + $0x26c] sm:$0xf]
    %v7063 = vld [vmem:[%s6906 + $0x270] sm:$0xf]
    %v7064 = vld [vmem:[%s6906 + $0x274] sm:$0xf]
    %v7065 = vld [vmem:[%s6906 + $0x278] sm:$0xf]
    %v7066 = vld [vmem:[%s6906 + $0x27c] sm:$0xf]
    %v7067 = vld [vmem:[%s6906 + $0x280] sm:$0xf]
    %v7068 = vld [vmem:[%s6906 + $0x284] sm:$0xf]
    %v7069 = vld [vmem:[%s6906 + $0x288] sm:$0xf]
    %v7070 = vld [vmem:[%s6906 + $0x28c] sm:$0xf]
    %v7071 = vld [vmem:[%s6906 + $0x290] sm:$0xf]
    %v7072 = vld [vmem:[%s6906 + $0x294] sm:$0xf]
    %v7073 = vld [vmem:[%s6906 + $0x298] sm:$0xf]
    %v7074 = vld [vmem:[%s6906 + $0x29c] sm:$0xf]
    %v7075 = vld [vmem:[%s6906 + $0x2a0] sm:$0xf]
    %v7076 = vld [vmem:[%s6906 + $0x2a4] sm:$0xf]
    %v7077 = vld [vmem:[%s6906 + $0x2a8] sm:$0xf]
    %v7078 = vld [vmem:[%s6906 + $0x2ac] sm:$0xf]
    %v7079 = vld [vmem:[%s6906 + $0x2b0] sm:$0xf]
    %v7080 = vld [vmem:[%s6906 + $0x2b4] sm:$0xf]
    %v7081 = vld [vmem:[%s6906 + $0x2b8] sm:$0xf]
    %v7082 = vld [vmem:[%s6906 + $0x2bc] sm:$0xf]
    %v7083 = vld [vmem:[%s6906 + $0x2c0] sm:$0xf]
    %v7084 = vld [vmem:[%s6906 + $0x2c4] sm:$0xf]
    %v7085 = vld [vmem:[%s6906 + $0x2c8] sm:$0xf]
    %v7086 = vld [vmem:[%s6906 + $0x2cc] sm:$0xf]
    %v7087 = vld [vmem:[%s6906 + $0x2d0] sm:$0xf]
    %v7088 = vld [vmem:[%s6906 + $0x2d4] sm:$0xf]
    %v7089 = vld [vmem:[%s6906 + $0x2d8] sm:$0xf]
    %v7090 = vld [vmem:[%s6906 + $0x2dc] sm:$0xf]
    %v7091 = vld [vmem:[%s6906 + $0x2e0] sm:$0xf]
    %v7092 = vld [vmem:[%s6906 + $0x2e4] sm:$0xf]
    %v7093 = vld [vmem:[%s6906 + $0x2e8] sm:$0xf]
    %v7094 = vld [vmem:[%s6906 + $0x2ec] sm:$0xf]
    %v7095 = vld [vmem:[%s6906 + $0x2f0] sm:$0xf]
    %v7096 = vld [vmem:[%s6906 + $0x2f4] sm:$0xf]
    %v7097 = vld [vmem:[%s6906 + $0x2f8] sm:$0xf]
    %v7098 = vld [vmem:[%s6906 + $0x2fc] sm:$0xf]
    %v7099 = vld [vmem:[%s6906 + $0x300] sm:$0xf]
    %v7100 = vld [vmem:[%s6906 + $0x304] sm:$0xf]
    %v7101 = vld [vmem:[%s6906 + $0x308] sm:$0xf]
    %v7102 = vld [vmem:[%s6906 + $0x30c] sm:$0xf]
    %v7103 = vld [vmem:[%s6906 + $0x310] sm:$0xf]
    %v7104 = vld [vmem:[%s6906 + $0x314] sm:$0xf]
    %v7105 = vld [vmem:[%s6906 + $0x318] sm:$0xf]
    %v7106 = vld [vmem:[%s6906 + $0x31c] sm:$0xf]
    %v7107 = vld [vmem:[%s6906 + $0x320] sm:$0xf]
    %v7108 = vld [vmem:[%s6906 + $0x324] sm:$0xf]
    %v7109 = vld [vmem:[%s6906 + $0x328] sm:$0xf]
    %v7110 = vld [vmem:[%s6906 + $0x32c] sm:$0xf]
    %v7111 = vld [vmem:[%s6906 + $0x330] sm:$0xf]
    %v7112 = vld [vmem:[%s6906 + $0x334] sm:$0xf]
    %v7113 = vld [vmem:[%s6906 + $0x338] sm:$0xf]
    %v7114 = vld [vmem:[%s6906 + $0x33c] sm:$0xf]
    %v7115 = vld [vmem:[%s6906 + $0x340] sm:$0xf]
    %v7116 = vld [vmem:[%s6906 + $0x344] sm:$0xf]
    %v7117 = vld [vmem:[%s6906 + $0x348] sm:$0xf]
    %v7118 = vld [vmem:[%s6906 + $0x34c] sm:$0xf]
    %v7119 = vld [vmem:[%s6906 + $0x350] sm:$0xf]
    %v7120 = vld [vmem:[%s6906 + $0x354] sm:$0xf]
    %v7121 = vld [vmem:[%s6906 + $0x358] sm:$0xf]
    %v7122 = vld [vmem:[%s6906 + $0x35c] sm:$0xf]
    %v7123 = vld [vmem:[%s6906 + $0x360] sm:$0xf]
    %v7124 = vld [vmem:[%s6906 + $0x364] sm:$0xf]
    %v7125 = vld [vmem:[%s6906 + $0x368] sm:$0xf]
    %v7126 = vld [vmem:[%s6906 + $0x36c] sm:$0xf]
    %v7127 = vld [vmem:[%s6906 + $0x370] sm:$0xf]
    %v7128 = vld [vmem:[%s6906 + $0x374] sm:$0xf]
    %v7129 = vld [vmem:[%s6906 + $0x378] sm:$0xf]
    %v7130 = vld [vmem:[%s6906 + $0x37c] sm:$0xf]
    %v7131 = vld [vmem:[%s6906 + $0x380] sm:$0xf]
    %v7132 = vld [vmem:[%s6906 + $0x384] sm:$0xf]
    %v7133 = vld [vmem:[%s6906 + $0x388] sm:$0xf]
    %v7134 = vld [vmem:[%s6906 + $0x38c] sm:$0xf]
    %v7135 = vld [vmem:[%s6906 + $0x390] sm:$0xf]
    %v7136 = vld [vmem:[%s6906 + $0x394] sm:$0xf]
    %v7137 = vld [vmem:[%s6906 + $0x398] sm:$0xf]
    %v7138 = vld [vmem:[%s6906 + $0x39c] sm:$0xf]
    %v7139 = vld [vmem:[%s6906 + $0x3a0] sm:$0xf]
    %v7140 = vld [vmem:[%s6906 + $0x3a4] sm:$0xf]
    %v7141 = vld [vmem:[%s6906 + $0x3a8] sm:$0xf]
    %v7142 = vld [vmem:[%s6906 + $0x3ac] sm:$0xf]
    %v7143 = vld [vmem:[%s6906 + $0x3b0] sm:$0xf]
    %v7144 = vld [vmem:[%s6906 + $0x3b4] sm:$0xf]
    %v7145 = vld [vmem:[%s6906 + $0x3b8] sm:$0xf]
    %v7146 = vld [vmem:[%s6906 + $0x3bc] sm:$0xf]
    %v7147 = vld [vmem:[%s6906 + $0x3c0] sm:$0xf]
    %v7148 = vld [vmem:[%s6906 + $0x3c4] sm:$0xf]
    %v7149 = vld [vmem:[%s6906 + $0x3c8] sm:$0xf]
    %v7150 = vld [vmem:[%s6906 + $0x3cc] sm:$0xf]
    %v7151 = vld [vmem:[%s6906 + $0x3d0] sm:$0xf]
    %v7152 = vld [vmem:[%s6906 + $0x3d4] sm:$0xf]
    %v7153 = vld [vmem:[%s6906 + $0x3d8] sm:$0xf]
    %v7154 = vld [vmem:[%s6906 + $0x3dc] sm:$0xf]
    %v7155 = vld [vmem:[%s6906 + $0x3e0] sm:$0xf]
    %v7156 = vld [vmem:[%s6906 + $0x3e4] sm:$0xf]
    %v7157 = vld [vmem:[%s6906 + $0x3e8] sm:$0xf]
    %v7158 = vld [vmem:[%s6906 + $0x3ec] sm:$0xf]
    %v7159 = vld [vmem:[%s6906 + $0x3f0] sm:$0xf]
    %v7160 = vld [vmem:[%s6906 + $0x3f4] sm:$0xf]
    %v7161 = vld [vmem:[%s6906 + $0x3f8] sm:$0xf]
    %v7162 = vld [vmem:[%s6906 + $0x3fc] sm:$0xf]
    %s7163 = scalar_lea.vmem %s17, 1
    %v7164 = vld [vmem:[%s7163] sm:$0x1]
    %v7165 = vpack.c.bf16 %v6869, %v6868
    %v7168 = vlaneseq
    %v7169 = vshrl.u32 %v7168, 7
    %v7170 = vsub.s32 0, %v7169
    %v7171 = vrot.slane %v6904, %v7170
    %v7172 = vlaneseq
    %v7173 = vshrl.u32 %v7172, 7
    %v7174 = vsub.s32 1, %v7173
    %v7175 = vrot.slane %v6904, %v7174
    %v7176 = vlaneseq
    %v7177 = vshrl.u32 %v7176, 7
    %v7178 = vsub.s32 2, %v7177
    %v7179 = vrot.slane %v6904, %v7178
    %v7180 = vlaneseq
    %v7181 = vshrl.u32 %v7180, 7
    %v7182 = vsub.s32 3, %v7181
    %v7183 = vrot.slane %v6904, %v7182
    %v7184 = vlaneseq
    %v7185 = vshrl.u32 %v7184, 7
    %v7186 = vsub.s32 4, %v7185
    %v7187 = vrot.slane %v6904, %v7186
    %v7188 = vlaneseq
    %v7189 = vshrl.u32 %v7188, 7
    %v7190 = vsub.s32 5, %v7189
    %v7191 = vrot.slane %v6904, %v7190
    %v7192 = vlaneseq
    %v7193 = vshrl.u32 %v7192, 7
    %v7194 = vsub.s32 6, %v7193
    %v7195 = vrot.slane %v6904, %v7194
    %v7196 = vlaneseq
    %v7197 = vshrl.u32 %v7196, 7
    %v7198 = vsub.s32 7, %v7197
    %v7199 = vrot.slane %v6904, %v7198
    %v7200 = vlaneseq
    %v7201 = vshrl.u32 %v7200, 7
    %v7202 = vsub.s32 0, %v7201
    %v7203 = vrot.slane %v6905, %v7202
    %v7204 = vlaneseq
    %v7205 = vshrl.u32 %v7204, 7
    %v7206 = vsub.s32 1, %v7205
    %v7207 = vrot.slane %v6905, %v7206
    %v7208 = vlaneseq
    %v7209 = vshrl.u32 %v7208, 7
    %v7210 = vsub.s32 2, %v7209
    %v7211 = vrot.slane %v6905, %v7210
    %v7212 = vlaneseq
    %v7213 = vshrl.u32 %v7212, 7
    %v7214 = vsub.s32 3, %v7213
    %v7215 = vrot.slane %v6905, %v7214
    %v7216 = vlaneseq
    %v7217 = vshrl.u32 %v7216, 7
    %v7218 = vsub.s32 4, %v7217
    %v7219 = vrot.slane %v6905, %v7218
    %v7220 = vlaneseq
    %v7221 = vshrl.u32 %v7220, 7
    %v7222 = vsub.s32 5, %v7221
    %v7223 = vrot.slane %v6905, %v7222
    %v7224 = vlaneseq
    %v7225 = vshrl.u32 %v7224, 7
    %v7226 = vsub.s32 6, %v7225
    %v7227 = vrot.slane %v6905, %v7226
    %v7228 = vlaneseq
    %v7229 = vshrl.u32 %v7228, 7
    %v7230 = vsub.s32 7, %v7229
    %v7231 = vrot.slane %v6905, %v7230
    %v7280 = vunpack.c.l.b16 %v6871
    %v7281 = vunpack.c.h.b16 %v6871
    %v7282 = vunpack.c.l.b16 %v6872
    %v7283 = vunpack.c.h.b16 %v6872
    %v7284 = vunpack.c.l.b16 %v6873
    %v7285 = vunpack.c.h.b16 %v6873
    %v7286 = vunpack.c.l.b16 %v6874
    %v7287 = vunpack.c.h.b16 %v6874
    %v7288 = vunpack.c.l.b16 %v6875
    %v7289 = vunpack.c.h.b16 %v6875
    %v7290 = vunpack.c.l.b16 %v6876
    %v7291 = vunpack.c.h.b16 %v6876
    %v7292 = vunpack.c.l.b16 %v6877
    %v7293 = vunpack.c.h.b16 %v6877
    %v7294 = vunpack.c.l.b16 %v6878
    %v7295 = vunpack.c.h.b16 %v6878
    %v7296 = vunpack.c.l.b16 %v6879
    %v7297 = vunpack.c.h.b16 %v6879
    %v7298 = vunpack.c.l.b16 %v6880
    %v7299 = vunpack.c.h.b16 %v6880
    %v7300 = vunpack.c.l.b16 %v6881
    %v7301 = vunpack.c.h.b16 %v6881
    %v7302 = vunpack.c.l.b16 %v6882
    %v7303 = vunpack.c.h.b16 %v6882
    %v7304 = vunpack.c.l.b16 %v6883
    %v7305 = vunpack.c.h.b16 %v6883
    %v7306 = vunpack.c.l.b16 %v6884
    %v7307 = vunpack.c.h.b16 %v6884
    %v7308 = vunpack.c.l.b16 %v6885
    %v7309 = vunpack.c.h.b16 %v6885
    %v7310 = vunpack.c.l.b16 %v6886
    %v7311 = vunpack.c.h.b16 %v6886
    %v7312 = vunpack.c.l.b16 %v6887
    %v7313 = vunpack.c.h.b16 %v6887
    %v7314 = vunpack.c.l.b16 %v6888
    %v7315 = vunpack.c.h.b16 %v6888
    %v7316 = vunpack.c.l.b16 %v6889
    %v7317 = vunpack.c.h.b16 %v6889
    %v7318 = vunpack.c.l.b16 %v6890
    %v7319 = vunpack.c.h.b16 %v6890
    %v7320 = vunpack.c.l.b16 %v6891
    %v7321 = vunpack.c.h.b16 %v6891
    %v7322 = vunpack.c.l.b16 %v6892
    %v7323 = vunpack.c.h.b16 %v6892
    %v7324 = vunpack.c.l.b16 %v6893
    %v7325 = vunpack.c.h.b16 %v6893
    %v7326 = vunpack.c.l.b16 %v6894
    %v7327 = vunpack.c.h.b16 %v6894
    %v7328 = vunpack.c.l.b16 %v6895
    %v7329 = vunpack.c.h.b16 %v6895
    %v7330 = vunpack.c.l.b16 %v6896
    %v7331 = vunpack.c.h.b16 %v6896
    %v7332 = vunpack.c.l.b16 %v6897
    %v7333 = vunpack.c.h.b16 %v6897
    %v7334 = vunpack.c.l.b16 %v6898
    %v7335 = vunpack.c.h.b16 %v6898
    %v7336 = vunpack.c.l.b16 %v6899
    %v7337 = vunpack.c.h.b16 %v6899
    %v7338 = vunpack.c.l.b16 %v6900
    %v7339 = vunpack.c.h.b16 %v6900
    %v7340 = vunpack.c.l.b16 %v6901
    %v7341 = vunpack.c.h.b16 %v6901
    %v7342 = vunpack.c.l.b16 %v6902
    %v7343 = vunpack.c.h.b16 %v6902
    %v7344 = vpack.c.b16 %v7296, %v7280
    %v7345 = vpack.c.b16 %v7297, %v7281
    %v7346 = vpack.c.b16 %v7298, %v7282
    %v7347 = vpack.c.b16 %v7299, %v7283
    %v7348 = vpack.c.b16 %v7300, %v7284
    %v7349 = vpack.c.b16 %v7301, %v7285
    %v7350 = vpack.c.b16 %v7302, %v7286
    %v7351 = vpack.c.b16 %v7303, %v7287
    %v7352 = vpack.c.b16 %v7304, %v7288
    %v7353 = vpack.c.b16 %v7305, %v7289
    %v7354 = vpack.c.b16 %v7306, %v7290
    %v7355 = vpack.c.b16 %v7307, %v7291
    %v7356 = vpack.c.b16 %v7308, %v7292
    %v7357 = vpack.c.b16 %v7309, %v7293
    %v7358 = vpack.c.b16 %v7310, %v7294
    %v7359 = vpack.c.b16 %v7311, %v7295
    %v7360 = vpack.c.b16 %v7328, %v7312
    %v7361 = vpack.c.b16 %v7329, %v7313
    %v7362 = vpack.c.b16 %v7330, %v7314
    %v7363 = vpack.c.b16 %v7331, %v7315
    %v7364 = vpack.c.b16 %v7332, %v7316
    %v7365 = vpack.c.b16 %v7333, %v7317
    %v7366 = vpack.c.b16 %v7334, %v7318
    %v7367 = vpack.c.b16 %v7335, %v7319
    %v7368 = vpack.c.b16 %v7336, %v7320
    %v7369 = vpack.c.b16 %v7337, %v7321
    %v7370 = vpack.c.b16 %v7338, %v7322
    %v7371 = vpack.c.b16 %v7339, %v7323
    %v7372 = vpack.c.b16 %v7340, %v7324
    %v7373 = vpack.c.b16 %v7341, %v7325
    %v7374 = vpack.c.b16 %v7342, %v7326
    %v7375 = vpack.c.b16 %v7343, %v7327
    %v7409 = vsel %vm99, %v7165, 0
    %7411 = vmatprep.subr.bf16.mxu0 %v7345
    %7412 = vmatpush1.bf16.msra.mxu0 %v7344
    %7413 = vmatprep.subr.bf16.mxu0 %v7361
    %7414 = vmatpush1.bf16.msra.mxu0 %v7360
    %7415 = vmatprep.subr.bf16.mxu0 0
    %7416 = vmatpush1.bf16.msra.mxu0 0
    %7417 = vmatprep.subr.bf16.mxu0 0
    %7418 = vmatpush1.bf16.msra.mxu0 0
    %7419 = vmatprep.subr.bf16.mxu0 0
    %7420 = vmatpush1.bf16.msra.mxu0 0
    %7421 = vmatprep.subr.bf16.mxu0 0
    %7422 = vmatpush1.bf16.msra.mxu0 0
    %7423 = vmatprep.subr.bf16.mxu0 0
    %7424 = vmatpush1.bf16.msra.mxu0 0
    %7425 = vmatprep.subr.bf16.mxu0 0
    %7426 = vmatpush1.bf16.msra.mxu0 0
    %7427 = vmatprep.subr.bf16.mxu0 0
    %7428 = vmatpush1.bf16.msra.mxu0 0
    %7429 = vmatprep.subr.bf16.mxu0 0
    %7430 = vmatpush1.bf16.msra.mxu0 0
    %7431 = vmatprep.subr.bf16.mxu0 0
    %7432 = vmatpush1.bf16.msra.mxu0 0
    %7433 = vmatprep.subr.bf16.mxu0 0
    %7434 = vmatpush1.bf16.msra.mxu0 0
    %7435 = vmatprep.subr.bf16.mxu0 0
    %7436 = vmatpush1.bf16.msra.mxu0 0
    %7437 = vmatprep.subr.bf16.mxu0 0
    %7438 = vmatpush1.bf16.msra.mxu0 0
    %7439 = vmatprep.subr.bf16.mxu0 0
    %7440 = vmatpush1.bf16.msra.mxu0 0
    %7441 = vmatprep.subr.bf16.mxu0 0
    %7442 = vmatpush1.bf16.msra.mxu0 0
    %7443 = vmatprep.mubr.bf16.mxu0 0
    %7444 = vmatmul.mubr.bf16.gmra.mrb[0].mxu0 %v7409
    %v7445 = vpop.f32.mrb[0].mxu0
    %v7446 = vadd.f32 %v7171, %v7445
    %v7447 = vpop.f32.mrb[0].mxu0
    %v7448 = vadd.f32 %v7175, %v7447
    %v7449 = vpop.f32.mrb[0].mxu0
    %v7450 = vadd.f32 %v7171, %v7449
    %v7451 = vpop.f32.mrb[0].mxu0
    %v7452 = vadd.f32 %v7175, %v7451
    %7453 = vdwg.mxu0
    %7454 = vmatprep.subr.bf16.mxu0 %v7347
    %7455 = vmatpush1.bf16.msra.mxu0 %v7346
    %7456 = vmatprep.subr.bf16.mxu0 %v7363
    %7457 = vmatpush1.bf16.msra.mxu0 %v7362
    %7458 = vmatprep.subr.bf16.mxu0 0
    %7459 = vmatpush1.bf16.msra.mxu0 0
    %7460 = vmatprep.subr.bf16.mxu0 0
    %7461 = vmatpush1.bf16.msra.mxu0 0
    %7462 = vmatprep.subr.bf16.mxu0 0
    %7463 = vmatpush1.bf16.msra.mxu0 0
    %7464 = vmatprep.subr.bf16.mxu0 0
    %7465 = vmatpush1.bf16.msra.mxu0 0
    %7466 = vmatprep.subr.bf16.mxu0 0
    %7467 = vmatpush1.bf16.msra.mxu0 0
    %7468 = vmatprep.subr.bf16.mxu0 0
    %7469 = vmatpush1.bf16.msra.mxu0 0
    %7470 = vmatprep.subr.bf16.mxu0 0
    %7471 = vmatpush1.bf16.msra.mxu0 0
    %7472 = vmatprep.subr.bf16.mxu0 0
    %7473 = vmatpush1.bf16.msra.mxu0 0
    %7474 = vmatprep.subr.bf16.mxu0 0
    %7475 = vmatpush1.bf16.msra.mxu0 0
    %7476 = vmatprep.subr.bf16.mxu0 0
    %7477 = vmatpush1.bf16.msra.mxu0 0
    %7478 = vmatprep.subr.bf16.mxu0 0
    %7479 = vmatpush1.bf16.msra.mxu0 0
    %7480 = vmatprep.subr.bf16.mxu0 0
    %7481 = vmatpush1.bf16.msra.mxu0 0
    %7482 = vmatprep.subr.bf16.mxu0 0
    %7483 = vmatpush1.bf16.msra.mxu0 0
    %7484 = vmatprep.subr.bf16.mxu0 0
    %7485 = vmatpush1.bf16.msra.mxu0 0
    %7486 = vmatprep.mubr.bf16.mxu0 0
    %7487 = vmatmul.mubr.bf16.gmra.mrb[0].mxu0 %v7409
    %v7488 = vpop.f32.mrb[0].mxu0
    %v7489 = vadd.f32 %v7179, %v7488
    %v7490 = vpop.f32.mrb[0].mxu0
    %v7491 = vadd.f32 %v7183, %v7490
    %v7492 = vpop.f32.mrb[0].mxu0
    %v7493 = vadd.f32 %v7179, %v7492
    %v7494 = vpop.f32.mrb[0].mxu0
    %v7495 = vadd.f32 %v7183, %v7494
    %7496 = vdwg.mxu0
    %7497 = vmatprep.subr.bf16.mxu0 %v7349
    %7498 = vmatpush1.bf16.msra.mxu0 %v7348
    %7499 = vmatprep.subr.bf16.mxu0 %v7365
    %7500 = vmatpush1.bf16.msra.mxu0 %v7364
    %7501 = vmatprep.subr.bf16.mxu0 0
    %7502 = vmatpush1.bf16.msra.mxu0 0
    %7503 = vmatprep.subr.bf16.mxu0 0
    %7504 = vmatpush1.bf16.msra.mxu0 0
    %7505 = vmatprep.subr.bf16.mxu0 0
    %7506 = vmatpush1.bf16.msra.mxu0 0
    %7507 = vmatprep.subr.bf16.mxu0 0
    %7508 = vmatpush1.bf16.msra.mxu0 0
    %7509 = vmatprep.subr.bf16.mxu0 0
    %7510 = vmatpush1.bf16.msra.mxu0 0
    %7511 = vmatprep.subr.bf16.mxu0 0
    %7512 = vmatpush1.bf16.msra.mxu0 0
    %7513 = vmatprep.subr.bf16.mxu0 0
    %7514 = vmatpush1.bf16.msra.mxu0 0
    %7515 = vmatprep.subr.bf16.mxu0 0
    %7516 = vmatpush1.bf16.msra.mxu0 0
    %7517 = vmatprep.subr.bf16.mxu0 0
    %7518 = vmatpush1.bf16.msra.mxu0 0
    %7519 = vmatprep.subr.bf16.mxu0 0
    %7520 = vmatpush1.bf16.msra.mxu0 0
    %7521 = vmatprep.subr.bf16.mxu0 0
    %7522 = vmatpush1.bf16.msra.mxu0 0
    %7523 = vmatprep.subr.bf16.mxu0 0
    %7524 = vmatpush1.bf16.msra.mxu0 0
    %7525 = vmatprep.subr.bf16.mxu0 0
    %7526 = vmatpush1.bf16.msra.mxu0 0
    %7527 = vmatprep.subr.bf16.mxu0 0
    %7528 = vmatpush1.bf16.msra.mxu0 0
    %7529 = vmatprep.mubr.bf16.mxu0 0
    %7530 = vmatmul.mubr.bf16.gmra.mrb[0].mxu0 %v7409
    %v7531 = vpop.f32.mrb[0].mxu0
    %v7532 = vadd.f32 %v7187, %v7531
    %v7533 = vpop.f32.mrb[0].mxu0
    %v7534 = vadd.f32 %v7191, %v7533
    %v7535 = vpop.f32.mrb[0].mxu0
    %v7536 = vadd.f32 %v7187, %v7535
    %v7537 = vpop.f32.mrb[0].mxu0
    %v7538 = vadd.f32 %v7191, %v7537
    %7539 = vdwg.mxu0
    %7540 = vmatprep.subr.bf16.mxu0 %v7351
    %7541 = vmatpush1.bf16.msra.mxu0 %v7350
    %7542 = vmatprep.subr.bf16.mxu0 %v7367
    %7543 = vmatpush1.bf16.msra.mxu0 %v7366
    %7544 = vmatprep.subr.bf16.mxu0 0
    %7545 = vmatpush1.bf16.msra.mxu0 0
    %7546 = vmatprep.subr.bf16.mxu0 0
    %7547 = vmatpush1.bf16.msra.mxu0 0
    %7548 = vmatprep.subr.bf16.mxu0 0
    %7549 = vmatpush1.bf16.msra.mxu0 0
    %7550 = vmatprep.subr.bf16.mxu0 0
    %7551 = vmatpush1.bf16.msra.mxu0 0
    %7552 = vmatprep.subr.bf16.mxu0 0
    %7553 = vmatpush1.bf16.msra.mxu0 0
    %7554 = vmatprep.subr.bf16.mxu0 0
    %7555 = vmatpush1.bf16.msra.mxu0 0
    %7556 = vmatprep.subr.bf16.mxu0 0
    %7557 = vmatpush1.bf16.msra.mxu0 0
    %7558 = vmatprep.subr.bf16.mxu0 0
    %7559 = vmatpush1.bf16.msra.mxu0 0
    %7560 = vmatprep.subr.bf16.mxu0 0
    %7561 = vmatpush1.bf16.msra.mxu0 0
    %7562 = vmatprep.subr.bf16.mxu0 0
    %7563 = vmatpush1.bf16.msra.mxu0 0
    %7564 = vmatprep.subr.bf16.mxu0 0
    %7565 = vmatpush1.bf16.msra.mxu0 0
    %7566 = vmatprep.subr.bf16.mxu0 0
    %7567 = vmatpush1.bf16.msra.mxu0 0
    %7568 = vmatprep.subr.bf16.mxu0 0
    %7569 = vmatpush1.bf16.msra.mxu0 0
    %7570 = vmatprep.subr.bf16.mxu0 0
    %7571 = vmatpush1.bf16.msra.mxu0 0
    %7572 = vmatprep.mubr.bf16.mxu0 0
    %7573 = vmatmul.mubr.bf16.gmra.mrb[0].mxu0 %v7409
    %v7574 = vpop.f32.mrb[0].mxu0
    %v7575 = vadd.f32 %v7195, %v7574
    %v7576 = vpop.f32.mrb[0].mxu0
    %v7577 = vadd.f32 %v7199, %v7576
    %v7578 = vpop.f32.mrb[0].mxu0
    %v7579 = vadd.f32 %v7195, %v7578
    %v7580 = vpop.f32.mrb[0].mxu0
    %v7581 = vadd.f32 %v7199, %v7580
    %7582 = vdwg.mxu0
    %7583 = vmatprep.subr.bf16.mxu0 %v7353
    %7584 = vmatpush1.bf16.msra.mxu0 %v7352
    %7585 = vmatprep.subr.bf16.mxu0 %v7369
    %7586 = vmatpush1.bf16.msra.mxu0 %v7368
    %7587 = vmatprep.subr.bf16.mxu0 0
    %7588 = vmatpush1.bf16.msra.mxu0 0
    %7589 = vmatprep.subr.bf16.mxu0 0
    %7590 = vmatpush1.bf16.msra.mxu0 0
    %7591 = vmatprep.subr.bf16.mxu0 0
    %7592 = vmatpush1.bf16.msra.mxu0 0
    %7593 = vmatprep.subr.bf16.mxu0 0
    %7594 = vmatpush1.bf16.msra.mxu0 0
    %7595 = vmatprep.subr.bf16.mxu0 0
    %7596 = vmatpush1.bf16.msra.mxu0 0
    %7597 = vmatprep.subr.bf16.mxu0 0
    %7598 = vmatpush1.bf16.msra.mxu0 0
    %7599 = vmatprep.subr.bf16.mxu0 0
    %7600 = vmatpush1.bf16.msra.mxu0 0
    %7601 = vmatprep.subr.bf16.mxu0 0
    %7602 = vmatpush1.bf16.msra.mxu0 0
    %7603 = vmatprep.subr.bf16.mxu0 0
    %7604 = vmatpush1.bf16.msra.mxu0 0
    %7605 = vmatprep.subr.bf16.mxu0 0
    %7606 = vmatpush1.bf16.msra.mxu0 0
    %7607 = vmatprep.subr.bf16.mxu0 0
    %7608 = vmatpush1.bf16.msra.mxu0 0
    %7609 = vmatprep.subr.bf16.mxu0 0
    %7610 = vmatpush1.bf16.msra.mxu0 0
    %7611 = vmatprep.subr.bf16.mxu0 0
    %7612 = vmatpush1.bf16.msra.mxu0 0
    %7613 = vmatprep.subr.bf16.mxu0 0
    %7614 = vmatpush1.bf16.msra.mxu0 0
    %7615 = vmatprep.mubr.bf16.mxu0 0
    %7616 = vmatmul.mubr.bf16.gmra.mrb[0].mxu0 %v7409
    %v7617 = vpop.f32.mrb[0].mxu0
    %v7618 = vadd.f32 %v7203, %v7617
    %v7619 = vpop.f32.mrb[0].mxu0
    %v7620 = vadd.f32 %v7207, %v7619
    %v7621 = vpop.f32.mrb[0].mxu0
    %v7622 = vadd.f32 %v7203, %v7621
    %v7623 = vpop.f32.mrb[0].mxu0
    %v7624 = vadd.f32 %v7207, %v7623
    %7625 = vdwg.mxu0
    %7626 = vmatprep.subr.bf16.mxu0 %v7355
    %7627 = vmatpush1.bf16.msra.mxu0 %v7354
    %7628 = vmatprep.subr.bf16.mxu0 %v7371
    %7629 = vmatpush1.bf16.msra.mxu0 %v7370
    %7630 = vmatprep.subr.bf16.mxu0 0
    %7631 = vmatpush1.bf16.msra.mxu0 0
    %7632 = vmatprep.subr.bf16.mxu0 0
    %7633 = vmatpush1.bf16.msra.mxu0 0
    %7634 = vmatprep.subr.bf16.mxu0 0
    %7635 = vmatpush1.bf16.msra.mxu0 0
    %7636 = vmatprep.subr.bf16.mxu0 0
    %7637 = vmatpush1.bf16.msra.mxu0 0
    %7638 = vmatprep.subr.bf16.mxu0 0
    %7639 = vmatpush1.bf16.msra.mxu0 0
    %7640 = vmatprep.subr.bf16.mxu0 0
    %7641 = vmatpush1.bf16.msra.mxu0 0
    %7642 = vmatprep.subr.bf16.mxu0 0
    %7643 = vmatpush1.bf16.msra.mxu0 0
    %7644 = vmatprep.subr.bf16.mxu0 0
    %7645 = vmatpush1.bf16.msra.mxu0 0
    %7646 = vmatprep.subr.bf16.mxu0 0
    %7647 = vmatpush1.bf16.msra.mxu0 0
    %7648 = vmatprep.subr.bf16.mxu0 0
    %7649 = vmatpush1.bf16.msra.mxu0 0
    %7650 = vmatprep.subr.bf16.mxu0 0
    %7651 = vmatpush1.bf16.msra.mxu0 0
    %7652 = vmatprep.subr.bf16.mxu0 0
    %7653 = vmatpush1.bf16.msra.mxu0 0
    %7654 = vmatprep.subr.bf16.mxu0 0
    %7655 = vmatpush1.bf16.msra.mxu0 0
    %7656 = vmatprep.subr.bf16.mxu0 0
    %7657 = vmatpush1.bf16.msra.mxu0 0
    %7658 = vmatprep.mubr.bf16.mxu0 0
    %7659 = vmatmul.mubr.bf16.gmra.mrb[0].mxu0 %v7409
    %v7660 = vpop.f32.mrb[0].mxu0
    %v7661 = vadd.f32 %v7211, %v7660
    %v7662 = vpop.f32.mrb[0].mxu0
    %v7663 = vadd.f32 %v7215, %v7662
    %v7664 = vpop.f32.mrb[0].mxu0
    %v7665 = vadd.f32 %v7211, %v7664
    %v7666 = vpop.f32.mrb[0].mxu0
    %v7667 = vadd.f32 %v7215, %v7666
    %7668 = vdwg.mxu0
    %7669 = vmatprep.subr.bf16.mxu0 %v7357
    %7670 = vmatpush1.bf16.msra.mxu0 %v7356
    %7671 = vmatprep.subr.bf16.mxu0 %v7373
    %7672 = vmatpush1.bf16.msra.mxu0 %v7372
    %7673 = vmatprep.subr.bf16.mxu0 0
    %7674 = vmatpush1.bf16.msra.mxu0 0
    %7675 = vmatprep.subr.bf16.mxu0 0
    %7676 = vmatpush1.bf16.msra.mxu0 0
    %7677 = vmatprep.subr.bf16.mxu0 0
    %7678 = vmatpush1.bf16.msra.mxu0 0
    %7679 = vmatprep.subr.bf16.mxu0 0
    %7680 = vmatpush1.bf16.msra.mxu0 0
    %7681 = vmatprep.subr.bf16.mxu0 0
    %7682 = vmatpush1.bf16.msra.mxu0 0
    %7683 = vmatprep.subr.bf16.mxu0 0
    %7684 = vmatpush1.bf16.msra.mxu0 0
    %7685 = vmatprep.subr.bf16.mxu0 0
    %7686 = vmatpush1.bf16.msra.mxu0 0
    %7687 = vmatprep.subr.bf16.mxu0 0
    %7688 = vmatpush1.bf16.msra.mxu0 0
    %7689 = vmatprep.subr.bf16.mxu0 0
    %7690 = vmatpush1.bf16.msra.mxu0 0
    %7691 = vmatprep.subr.bf16.mxu0 0
    %7692 = vmatpush1.bf16.msra.mxu0 0
    %7693 = vmatprep.subr.bf16.mxu0 0
    %7694 = vmatpush1.bf16.msra.mxu0 0
    %7695 = vmatprep.subr.bf16.mxu0 0
    %7696 = vmatpush1.bf16.msra.mxu0 0
    %7697 = vmatprep.subr.bf16.mxu0 0
    %7698 = vmatpush1.bf16.msra.mxu0 0
    %7699 = vmatprep.subr.bf16.mxu0 0
    %7700 = vmatpush1.bf16.msra.mxu0 0
    %7701 = vmatprep.mubr.bf16.mxu0 0
    %7702 = vmatmul.mubr.bf16.gmra.mrb[0].mxu0 %v7409
    %v7703 = vpop.f32.mrb[0].mxu0
    %v7704 = vadd.f32 %v7219, %v7703
    %v7705 = vpop.f32.mrb[0].mxu0
    %v7706 = vadd.f32 %v7223, %v7705
    %v7707 = vpop.f32.mrb[0].mxu0
    %v7708 = vadd.f32 %v7219, %v7707
    %v7709 = vpop.f32.mrb[0].mxu0
    %v7710 = vadd.f32 %v7223, %v7709
    %7711 = vdwg.mxu0
    %7712 = vmatprep.subr.bf16.mxu0 %v7359
    %7713 = vmatpush1.bf16.msra.mxu0 %v7358
    %7714 = vmatprep.subr.bf16.mxu0 %v7375
    %7715 = vmatpush1.bf16.msra.mxu0 %v7374
    %7716 = vmatprep.subr.bf16.mxu0 0
    %7717 = vmatpush1.bf16.msra.mxu0 0
    %7718 = vmatprep.subr.bf16.mxu0 0
    %7719 = vmatpush1.bf16.msra.mxu0 0
    %7720 = vmatprep.subr.bf16.mxu0 0
    %7721 = vmatpush1.bf16.msra.mxu0 0
    %7722 = vmatprep.subr.bf16.mxu0 0
    %7723 = vmatpush1.bf16.msra.mxu0 0
    %7724 = vmatprep.subr.bf16.mxu0 0
    %7725 = vmatpush1.bf16.msra.mxu0 0
    %7726 = vmatprep.subr.bf16.mxu0 0
    %7727 = vmatpush1.bf16.msra.mxu0 0
    %7728 = vmatprep.subr.bf16.mxu0 0
    %7729 = vmatpush1.bf16.msra.mxu0 0
    %7730 = vmatprep.subr.bf16.mxu0 0
    %7731 = vmatpush1.bf16.msra.mxu0 0
    %7732 = vmatprep.subr.bf16.mxu0 0
    %7733 = vmatpush1.bf16.msra.mxu0 0
    %7734 = vmatprep.subr.bf16.mxu0 0
    %7735 = vmatpush1.bf16.msra.mxu0 0
    %7736 = vmatprep.subr.bf16.mxu0 0
    %7737 = vmatpush1.bf16.msra.mxu0 0
    %7738 = vmatprep.subr.bf16.mxu0 0
    %7739 = vmatpush1.bf16.msra.mxu0 0
    %7740 = vmatprep.subr.bf16.mxu0 0
    %7741 = vmatpush1.bf16.msra.mxu0 0
    %7742 = vmatprep.subr.bf16.mxu0 0
    %7743 = vmatpush1.bf16.msra.mxu0 0
    %7744 = vmatprep.mubr.bf16.mxu0 0
    %7745 = vmatmul.mubr.bf16.gmra.mrb[0].mxu0 %v7409
    %v7746 = vpop.f32.mrb[0].mxu0
    %v7747 = vadd.f32 %v7227, %v7746
    %v7748 = vpop.f32.mrb[0].mxu0
    %v7749 = vadd.f32 %v7231, %v7748
    %v7750 = vpop.f32.mrb[0].mxu0
    %v7751 = vadd.f32 %v7227, %v7750
    %v7752 = vpop.f32.mrb[0].mxu0
    %v7753 = vadd.f32 %v7231, %v7752
    %7754 = vdwg.mxu0
    %v7755 = vmax.f32 %v7446, 0.0
    %v7756 = vmax.f32 %v7448, 0.0
    %v7757 = vmax.f32 %v7489, 0.0
    %v7758 = vmax.f32 %v7491, 0.0
    %v7759 = vmax.f32 %v7532, 0.0
    %v7760 = vmax.f32 %v7534, 0.0
    %v7761 = vmax.f32 %v7575, 0.0
    %v7762 = vmax.f32 %v7577, 0.0
    %v7763 = vmax.f32 %v7618, 0.0
    %v7764 = vmax.f32 %v7620, 0.0
    %v7765 = vmax.f32 %v7661, 0.0
    %v7766 = vmax.f32 %v7663, 0.0
    %v7767 = vmax.f32 %v7704, 0.0
    %v7768 = vmax.f32 %v7706, 0.0
    %v7769 = vmax.f32 %v7747, 0.0
    %v7770 = vmax.f32 %v7749, 0.0
    %v7771 = vmax.f32 %v7450, 0.0
    %v7772 = vmax.f32 %v7452, 0.0
    %v7773 = vmax.f32 %v7493, 0.0
    %v7774 = vmax.f32 %v7495, 0.0
    %v7775 = vmax.f32 %v7536, 0.0
    %v7776 = vmax.f32 %v7538, 0.0
    %v7777 = vmax.f32 %v7579, 0.0
    %v7778 = vmax.f32 %v7581, 0.0
    %v7779 = vmax.f32 %v7622, 0.0
    %v7780 = vmax.f32 %v7624, 0.0
    %v7781 = vmax.f32 %v7665, 0.0
    %v7782 = vmax.f32 %v7667, 0.0
    %v7783 = vmax.f32 %v7708, 0.0
    %v7784 = vmax.f32 %v7710, 0.0
    %v7785 = vmax.f32 %v7751, 0.0
    %v7786 = vmax.f32 %v7753, 0.0
    %v7787 = vpack.c.bf16 %v7771, %v7755
    %v7788 = vpack.c.bf16 %v7772, %v7756
    %v7789 = vpack.c.bf16 %v7773, %v7757
    %v7790 = vpack.c.bf16 %v7774, %v7758
    %v7791 = vpack.c.bf16 %v7775, %v7759
    %v7792 = vpack.c.bf16 %v7776, %v7760
    %v7793 = vpack.c.bf16 %v7777, %v7761
    %v7794 = vpack.c.bf16 %v7778, %v7762
    %v7795 = vpack.c.bf16 %v7779, %v7763
    %v7796 = vpack.c.bf16 %v7780, %v7764
    %v7797 = vpack.c.bf16 %v7781, %v7765
    %v7798 = vpack.c.bf16 %v7782, %v7766
    %v7799 = vpack.c.bf16 %v7783, %v7767
    %v7800 = vpack.c.bf16 %v7784, %v7768
    %v7801 = vpack.c.bf16 %v7785, %v7769
    %v7802 = vpack.c.bf16 %v7786, %v7770
    %v7804 = vlaneseq
    %v7805 = vshrl.u32 %v7804, 7
    %v7806 = vsub.s32 0, %v7805
    %v7807 = vrot.slane %v7164, %v7806
    %v8065 = vunpack.c.l.b16 %v6907
    %v8066 = vunpack.c.l.b16 %v6908
    %v8067 = vunpack.c.l.b16 %v6909
    %v8068 = vunpack.c.l.b16 %v6910
    %v8069 = vunpack.c.l.b16 %v6911
    %v8070 = vunpack.c.l.b16 %v6912
    %v8071 = vunpack.c.l.b16 %v6913
    %v8072 = vunpack.c.l.b16 %v6914
    %v8073 = vunpack.c.l.b16 %v6915
    %v8074 = vunpack.c.l.b16 %v6916
    %v8075 = vunpack.c.l.b16 %v6917
    %v8076 = vunpack.c.l.b16 %v6918
    %v8077 = vunpack.c.l.b16 %v6919
    %v8078 = vunpack.c.l.b16 %v6920
    %v8079 = vunpack.c.l.b16 %v6921
    %v8080 = vunpack.c.l.b16 %v6922
    %v8081 = vunpack.c.l.b16 %v6923
    %v8082 = vunpack.c.l.b16 %v6924
    %v8083 = vunpack.c.l.b16 %v6925
    %v8084 = vunpack.c.l.b16 %v6926
    %v8085 = vunpack.c.l.b16 %v6927
    %v8086 = vunpack.c.l.b16 %v6928
    %v8087 = vunpack.c.l.b16 %v6929
    %v8088 = vunpack.c.l.b16 %v6930
    %v8089 = vunpack.c.l.b16 %v6931
    %v8090 = vunpack.c.l.b16 %v6932
    %v8091 = vunpack.c.l.b16 %v6933
    %v8092 = vunpack.c.l.b16 %v6934
    %v8093 = vunpack.c.l.b16 %v6935
    %v8094 = vunpack.c.l.b16 %v6936
    %v8095 = vunpack.c.l.b16 %v6937
    %v8096 = vunpack.c.l.b16 %v6938
    %v8097 = vunpack.c.l.b16 %v6939
    %v8098 = vunpack.c.l.b16 %v6940
    %v8099 = vunpack.c.l.b16 %v6941
    %v8100 = vunpack.c.l.b16 %v6942
    %v8101 = vunpack.c.l.b16 %v6943
    %v8102 = vunpack.c.l.b16 %v6944
    %v8103 = vunpack.c.l.b16 %v6945
    %v8104 = vunpack.c.l.b16 %v6946
    %v8105 = vunpack.c.l.b16 %v6947
    %v8106 = vunpack.c.l.b16 %v6948
    %v8107 = vunpack.c.l.b16 %v6949
    %v8108 = vunpack.c.l.b16 %v6950
    %v8109 = vunpack.c.l.b16 %v6951
    %v8110 = vunpack.c.l.b16 %v6952
    %v8111 = vunpack.c.l.b16 %v6953
    %v8112 = vunpack.c.l.b16 %v6954
    %v8113 = vunpack.c.l.b16 %v6955
    %v8114 = vunpack.c.l.b16 %v6956
    %v8115 = vunpack.c.l.b16 %v6957
    %v8116 = vunpack.c.l.b16 %v6958
    %v8117 = vunpack.c.l.b16 %v6959
    %v8118 = vunpack.c.l.b16 %v6960
    %v8119 = vunpack.c.l.b16 %v6961
    %v8120 = vunpack.c.l.b16 %v6962
    %v8121 = vunpack.c.l.b16 %v6963
    %v8122 = vunpack.c.l.b16 %v6964
    %v8123 = vunpack.c.l.b16 %v6965
    %v8124 = vunpack.c.l.b16 %v6966
    %v8125 = vunpack.c.l.b16 %v6967
    %v8126 = vunpack.c.l.b16 %v6968
    %v8127 = vunpack.c.l.b16 %v6969
    %v8128 = vunpack.c.l.b16 %v6970
    %v8129 = vunpack.c.l.b16 %v6971
    %v8130 = vunpack.c.l.b16 %v6972
    %v8131 = vunpack.c.l.b16 %v6973
    %v8132 = vunpack.c.l.b16 %v6974
    %v8133 = vunpack.c.l.b16 %v6975
    %v8134 = vunpack.c.l.b16 %v6976
    %v8135 = vunpack.c.l.b16 %v6977
    %v8136 = vunpack.c.l.b16 %v6978
    %v8137 = vunpack.c.l.b16 %v6979
    %v8138 = vunpack.c.l.b16 %v6980
    %v8139 = vunpack.c.l.b16 %v6981
    %v8140 = vunpack.c.l.b16 %v6982
    %v8141 = vunpack.c.l.b16 %v6983
    %v8142 = vunpack.c.l.b16 %v6984
    %v8143 = vunpack.c.l.b16 %v6985
    %v8144 = vunpack.c.l.b16 %v6986
    %v8145 = vunpack.c.l.b16 %v6987
    %v8146 = vunpack.c.l.b16 %v6988
    %v8147 = vunpack.c.l.b16 %v6989
    %v8148 = vunpack.c.l.b16 %v6990
    %v8149 = vunpack.c.l.b16 %v6991
    %v8150 = vunpack.c.l.b16 %v6992
    %v8151 = vunpack.c.l.b16 %v6993
    %v8152 = vunpack.c.l.b16 %v6994
    %v8153 = vunpack.c.l.b16 %v6995
    %v8154 = vunpack.c.l.b16 %v6996
    %v8155 = vunpack.c.l.b16 %v6997
    %v8156 = vunpack.c.l.b16 %v6998
    %v8157 = vunpack.c.l.b16 %v6999
    %v8158 = vunpack.c.l.b16 %v7000
    %v8159 = vunpack.c.l.b16 %v7001
    %v8160 = vunpack.c.l.b16 %v7002
    %v8161 = vunpack.c.l.b16 %v7003
    %v8162 = vunpack.c.l.b16 %v7004
    %v8163 = vunpack.c.l.b16 %v7005
    %v8164 = vunpack.c.l.b16 %v7006
    %v8165 = vunpack.c.l.b16 %v7007
    %v8166 = vunpack.c.l.b16 %v7008
    %v8167 = vunpack.c.l.b16 %v7009
    %v8168 = vunpack.c.l.b16 %v7010
    %v8169 = vunpack.c.l.b16 %v7011
    %v8170 = vunpack.c.l.b16 %v7012
    %v8171 = vunpack.c.l.b16 %v7013
    %v8172 = vunpack.c.l.b16 %v7014
    %v8173 = vunpack.c.l.b16 %v7015
    %v8174 = vunpack.c.l.b16 %v7016
    %v8175 = vunpack.c.l.b16 %v7017
    %v8176 = vunpack.c.l.b16 %v7018
    %v8177 = vunpack.c.l.b16 %v7019
    %v8178 = vunpack.c.l.b16 %v7020
    %v8179 = vunpack.c.l.b16 %v7021
    %v8180 = vunpack.c.l.b16 %v7022
    %v8181 = vunpack.c.l.b16 %v7023
    %v8182 = vunpack.c.l.b16 %v7024
    %v8183 = vunpack.c.l.b16 %v7025
    %v8184 = vunpack.c.l.b16 %v7026
    %v8185 = vunpack.c.l.b16 %v7027
    %v8186 = vunpack.c.l.b16 %v7028
    %v8187 = vunpack.c.l.b16 %v7029
    %v8188 = vunpack.c.l.b16 %v7030
    %v8189 = vunpack.c.l.b16 %v7031
    %v8190 = vunpack.c.l.b16 %v7032
    %v8191 = vunpack.c.l.b16 %v7033
    %v8192 = vunpack.c.l.b16 %v7034
    %v8193 = vunpack.c.l.b16 %v7035
    %v8194 = vunpack.c.l.b16 %v7036
    %v8195 = vunpack.c.l.b16 %v7037
    %v8196 = vunpack.c.l.b16 %v7038
    %v8197 = vunpack.c.l.b16 %v7039
    %v8198 = vunpack.c.l.b16 %v7040
    %v8199 = vunpack.c.l.b16 %v7041
    %v8200 = vunpack.c.l.b16 %v7042
    %v8201 = vunpack.c.l.b16 %v7043
    %v8202 = vunpack.c.l.b16 %v7044
    %v8203 = vunpack.c.l.b16 %v7045
    %v8204 = vunpack.c.l.b16 %v7046
    %v8205 = vunpack.c.l.b16 %v7047
    %v8206 = vunpack.c.l.b16 %v7048
    %v8207 = vunpack.c.l.b16 %v7049
    %v8208 = vunpack.c.l.b16 %v7050
    %v8209 = vunpack.c.l.b16 %v7051
    %v8210 = vunpack.c.l.b16 %v7052
    %v8211 = vunpack.c.l.b16 %v7053
    %v8212 = vunpack.c.l.b16 %v7054
    %v8213 = vunpack.c.l.b16 %v7055
    %v8214 = vunpack.c.l.b16 %v7056
    %v8215 = vunpack.c.l.b16 %v7057
    %v8216 = vunpack.c.l.b16 %v7058
    %v8217 = vunpack.c.l.b16 %v7059
    %v8218 = vunpack.c.l.b16 %v7060
    %v8219 = vunpack.c.l.b16 %v7061
    %v8220 = vunpack.c.l.b16 %v7062
    %v8221 = vunpack.c.l.b16 %v7063
    %v8222 = vunpack.c.l.b16 %v7064
    %v8223 = vunpack.c.l.b16 %v7065
    %v8224 = vunpack.c.l.b16 %v7066
    %v8225 = vunpack.c.l.b16 %v7067
    %v8226 = vunpack.c.l.b16 %v7068
    %v8227 = vunpack.c.l.b16 %v7069
    %v8228 = vunpack.c.l.b16 %v7070
    %v8229 = vunpack.c.l.b16 %v7071
    %v8230 = vunpack.c.l.b16 %v7072
    %v8231 = vunpack.c.l.b16 %v7073
    %v8232 = vunpack.c.l.b16 %v7074
    %v8233 = vunpack.c.l.b16 %v7075
    %v8234 = vunpack.c.l.b16 %v7076
    %v8235 = vunpack.c.l.b16 %v7077
    %v8236 = vunpack.c.l.b16 %v7078
    %v8237 = vunpack.c.l.b16 %v7079
    %v8238 = vunpack.c.l.b16 %v7080
    %v8239 = vunpack.c.l.b16 %v7081
    %v8240 = vunpack.c.l.b16 %v7082
    %v8241 = vunpack.c.l.b16 %v7083
    %v8242 = vunpack.c.l.b16 %v7084
    %v8243 = vunpack.c.l.b16 %v7085
    %v8244 = vunpack.c.l.b16 %v7086
    %v8245 = vunpack.c.l.b16 %v7087
    %v8246 = vunpack.c.l.b16 %v7088
    %v8247 = vunpack.c.l.b16 %v7089
    %v8248 = vunpack.c.l.b16 %v7090
    %v8249 = vunpack.c.l.b16 %v7091
    %v8250 = vunpack.c.l.b16 %v7092
    %v8251 = vunpack.c.l.b16 %v7093
    %v8252 = vunpack.c.l.b16 %v7094
    %v8253 = vunpack.c.l.b16 %v7095
    %v8254 = vunpack.c.l.b16 %v7096
    %v8255 = vunpack.c.l.b16 %v7097
    %v8256 = vunpack.c.l.b16 %v7098
    %v8257 = vunpack.c.l.b16 %v7099
    %v8258 = vunpack.c.l.b16 %v7100
    %v8259 = vunpack.c.l.b16 %v7101
    %v8260 = vunpack.c.l.b16 %v7102
    %v8261 = vunpack.c.l.b16 %v7103
    %v8262 = vunpack.c.l.b16 %v7104
    %v8263 = vunpack.c.l.b16 %v7105
    %v8264 = vunpack.c.l.b16 %v7106
    %v8265 = vunpack.c.l.b16 %v7107
    %v8266 = vunpack.c.l.b16 %v7108
    %v8267 = vunpack.c.l.b16 %v7109
    %v8268 = vunpack.c.l.b16 %v7110
    %v8269 = vunpack.c.l.b16 %v7111
    %v8270 = vunpack.c.l.b16 %v7112
    %v8271 = vunpack.c.l.b16 %v7113
    %v8272 = vunpack.c.l.b16 %v7114
    %v8273 = vunpack.c.l.b16 %v7115
    %v8274 = vunpack.c.l.b16 %v7116
    %v8275 = vunpack.c.l.b16 %v7117
    %v8276 = vunpack.c.l.b16 %v7118
    %v8277 = vunpack.c.l.b16 %v7119
    %v8278 = vunpack.c.l.b16 %v7120
    %v8279 = vunpack.c.l.b16 %v7121
    %v8280 = vunpack.c.l.b16 %v7122
    %v8281 = vunpack.c.l.b16 %v7123
    %v8282 = vunpack.c.l.b16 %v7124
    %v8283 = vunpack.c.l.b16 %v7125
    %v8284 = vunpack.c.l.b16 %v7126
    %v8285 = vunpack.c.l.b16 %v7127
    %v8286 = vunpack.c.l.b16 %v7128
    %v8287 = vunpack.c.l.b16 %v7129
    %v8288 = vunpack.c.l.b16 %v7130
    %v8289 = vunpack.c.l.b16 %v7131
    %v8290 = vunpack.c.l.b16 %v7132
    %v8291 = vunpack.c.l.b16 %v7133
    %v8292 = vunpack.c.l.b16 %v7134
    %v8293 = vunpack.c.l.b16 %v7135
    %v8294 = vunpack.c.l.b16 %v7136
    %v8295 = vunpack.c.l.b16 %v7137
    %v8296 = vunpack.c.l.b16 %v7138
    %v8297 = vunpack.c.l.b16 %v7139
    %v8298 = vunpack.c.l.b16 %v7140
    %v8299 = vunpack.c.l.b16 %v7141
    %v8300 = vunpack.c.l.b16 %v7142
    %v8301 = vunpack.c.l.b16 %v7143
    %v8302 = vunpack.c.l.b16 %v7144
    %v8303 = vunpack.c.l.b16 %v7145
    %v8304 = vunpack.c.l.b16 %v7146
    %v8305 = vunpack.c.l.b16 %v7147
    %v8306 = vunpack.c.l.b16 %v7148
    %v8307 = vunpack.c.l.b16 %v7149
    %v8308 = vunpack.c.l.b16 %v7150
    %v8309 = vunpack.c.l.b16 %v7151
    %v8310 = vunpack.c.l.b16 %v7152
    %v8311 = vunpack.c.l.b16 %v7153
    %v8312 = vunpack.c.l.b16 %v7154
    %v8313 = vunpack.c.l.b16 %v7155
    %v8314 = vunpack.c.l.b16 %v7156
    %v8315 = vunpack.c.l.b16 %v7157
    %v8316 = vunpack.c.l.b16 %v7158
    %v8317 = vunpack.c.l.b16 %v7159
    %v8318 = vunpack.c.l.b16 %v7160
    %v8319 = vunpack.c.l.b16 %v7161
    %v8320 = vunpack.c.l.b16 %v7162
    %v8321 = vpack.c.b16 %v8066, %v8065
    %v8322 = vpack.c.b16 %v8068, %v8067
    %v8323 = vpack.c.b16 %v8070, %v8069
    %v8324 = vpack.c.b16 %v8072, %v8071
    %v8325 = vpack.c.b16 %v8074, %v8073
    %v8326 = vpack.c.b16 %v8076, %v8075
    %v8327 = vpack.c.b16 %v8078, %v8077
    %v8328 = vpack.c.b16 %v8080, %v8079
    %v8329 = vpack.c.b16 %v8082, %v8081
    %v8330 = vpack.c.b16 %v8084, %v8083
    %v8331 = vpack.c.b16 %v8086, %v8085
    %v8332 = vpack.c.b16 %v8088, %v8087
    %v8333 = vpack.c.b16 %v8090, %v8089
    %v8334 = vpack.c.b16 %v8092, %v8091
    %v8335 = vpack.c.b16 %v8094, %v8093
    %v8336 = vpack.c.b16 %v8096, %v8095
    %v8337 = vpack.c.b16 %v8098, %v8097
    %v8338 = vpack.c.b16 %v8100, %v8099
    %v8339 = vpack.c.b16 %v8102, %v8101
    %v8340 = vpack.c.b16 %v8104, %v8103
    %v8341 = vpack.c.b16 %v8106, %v8105
    %v8342 = vpack.c.b16 %v8108, %v8107
    %v8343 = vpack.c.b16 %v8110, %v8109
    %v8344 = vpack.c.b16 %v8112, %v8111
    %v8345 = vpack.c.b16 %v8114, %v8113
    %v8346 = vpack.c.b16 %v8116, %v8115
    %v8347 = vpack.c.b16 %v8118, %v8117
    %v8348 = vpack.c.b16 %v8120, %v8119
    %v8349 = vpack.c.b16 %v8122, %v8121
    %v8350 = vpack.c.b16 %v8124, %v8123
    %v8351 = vpack.c.b16 %v8126, %v8125
    %v8352 = vpack.c.b16 %v8128, %v8127
    %v8353 = vpack.c.b16 %v8130, %v8129
    %v8354 = vpack.c.b16 %v8132, %v8131
    %v8355 = vpack.c.b16 %v8134, %v8133
    %v8356 = vpack.c.b16 %v8136, %v8135
    %v8357 = vpack.c.b16 %v8138, %v8137
    %v8358 = vpack.c.b16 %v8140, %v8139
    %v8359 = vpack.c.b16 %v8142, %v8141
    %v8360 = vpack.c.b16 %v8144, %v8143
    %v8361 = vpack.c.b16 %v8146, %v8145
    %v8362 = vpack.c.b16 %v8148, %v8147
    %v8363 = vpack.c.b16 %v8150, %v8149
    %v8364 = vpack.c.b16 %v8152, %v8151
    %v8365 = vpack.c.b16 %v8154, %v8153
    %v8366 = vpack.c.b16 %v8156, %v8155
    %v8367 = vpack.c.b16 %v8158, %v8157
    %v8368 = vpack.c.b16 %v8160, %v8159
    %v8369 = vpack.c.b16 %v8162, %v8161
    %v8370 = vpack.c.b16 %v8164, %v8163
    %v8371 = vpack.c.b16 %v8166, %v8165
    %v8372 = vpack.c.b16 %v8168, %v8167
    %v8373 = vpack.c.b16 %v8170, %v8169
    %v8374 = vpack.c.b16 %v8172, %v8171
    %v8375 = vpack.c.b16 %v8174, %v8173
    %v8376 = vpack.c.b16 %v8176, %v8175
    %v8377 = vpack.c.b16 %v8178, %v8177
    %v8378 = vpack.c.b16 %v8180, %v8179
    %v8379 = vpack.c.b16 %v8182, %v8181
    %v8380 = vpack.c.b16 %v8184, %v8183
    %v8381 = vpack.c.b16 %v8186, %v8185
    %v8382 = vpack.c.b16 %v8188, %v8187
    %v8383 = vpack.c.b16 %v8190, %v8189
    %v8384 = vpack.c.b16 %v8192, %v8191
    %v8385 = vpack.c.b16 %v8194, %v8193
    %v8386 = vpack.c.b16 %v8196, %v8195
    %v8387 = vpack.c.b16 %v8198, %v8197
    %v8388 = vpack.c.b16 %v8200, %v8199
    %v8389 = vpack.c.b16 %v8202, %v8201
    %v8390 = vpack.c.b16 %v8204, %v8203
    %v8391 = vpack.c.b16 %v8206, %v8205
    %v8392 = vpack.c.b16 %v8208, %v8207
    %v8393 = vpack.c.b16 %v8210, %v8209
    %v8394 = vpack.c.b16 %v8212, %v8211
    %v8395 = vpack.c.b16 %v8214, %v8213
    %v8396 = vpack.c.b16 %v8216, %v8215
    %v8397 = vpack.c.b16 %v8218, %v8217
    %v8398 = vpack.c.b16 %v8220, %v8219
    %v8399 = vpack.c.b16 %v8222, %v8221
    %v8400 = vpack.c.b16 %v8224, %v8223
    %v8401 = vpack.c.b16 %v8226, %v8225
    %v8402 = vpack.c.b16 %v8228, %v8227
    %v8403 = vpack.c.b16 %v8230, %v8229
    %v8404 = vpack.c.b16 %v8232, %v8231
    %v8405 = vpack.c.b16 %v8234, %v8233
    %v8406 = vpack.c.b16 %v8236, %v8235
    %v8407 = vpack.c.b16 %v8238, %v8237
    %v8408 = vpack.c.b16 %v8240, %v8239
    %v8409 = vpack.c.b16 %v8242, %v8241
    %v8410 = vpack.c.b16 %v8244, %v8243
    %v8411 = vpack.c.b16 %v8246, %v8245
    %v8412 = vpack.c.b16 %v8248, %v8247
    %v8413 = vpack.c.b16 %v8250, %v8249
    %v8414 = vpack.c.b16 %v8252, %v8251
    %v8415 = vpack.c.b16 %v8254, %v8253
    %v8416 = vpack.c.b16 %v8256, %v8255
    %v8417 = vpack.c.b16 %v8258, %v8257
    %v8418 = vpack.c.b16 %v8260, %v8259
    %v8419 = vpack.c.b16 %v8262, %v8261
    %v8420 = vpack.c.b16 %v8264, %v8263
    %v8421 = vpack.c.b16 %v8266, %v8265
    %v8422 = vpack.c.b16 %v8268, %v8267
    %v8423 = vpack.c.b16 %v8270, %v8269
    %v8424 = vpack.c.b16 %v8272, %v8271
    %v8425 = vpack.c.b16 %v8274, %v8273
    %v8426 = vpack.c.b16 %v8276, %v8275
    %v8427 = vpack.c.b16 %v8278, %v8277
    %v8428 = vpack.c.b16 %v8280, %v8279
    %v8429 = vpack.c.b16 %v8282, %v8281
    %v8430 = vpack.c.b16 %v8284, %v8283
    %v8431 = vpack.c.b16 %v8286, %v8285
    %v8432 = vpack.c.b16 %v8288, %v8287
    %v8433 = vpack.c.b16 %v8290, %v8289
    %v8434 = vpack.c.b16 %v8292, %v8291
    %v8435 = vpack.c.b16 %v8294, %v8293
    %v8436 = vpack.c.b16 %v8296, %v8295
    %v8437 = vpack.c.b16 %v8298, %v8297
    %v8438 = vpack.c.b16 %v8300, %v8299
    %v8439 = vpack.c.b16 %v8302, %v8301
    %v8440 = vpack.c.b16 %v8304, %v8303
    %v8441 = vpack.c.b16 %v8306, %v8305
    %v8442 = vpack.c.b16 %v8308, %v8307
    %v8443 = vpack.c.b16 %v8310, %v8309
    %v8444 = vpack.c.b16 %v8312, %v8311
    %v8445 = vpack.c.b16 %v8314, %v8313
    %v8446 = vpack.c.b16 %v8316, %v8315
    %v8447 = vpack.c.b16 %v8318, %v8317
    %v8448 = vpack.c.b16 %v8320, %v8319
    %8577 = vmatprep.subr.bf16.mxu0 0
    %8578 = vmatpush1.bf16.msra.mxu0 %v8321
    %8579 = vmatprep.subr.bf16.mxu0 0
    %8580 = vmatpush1.bf16.msra.mxu0 %v8322
    %8581 = vmatprep.subr.bf16.mxu0 0
    %8582 = vmatpush1.bf16.msra.mxu0 %v8323
    %8583 = vmatprep.subr.bf16.mxu0 0
    %8584 = vmatpush1.bf16.msra.mxu0 %v8324
    %8585 = vmatprep.subr.bf16.mxu0 0
    %8586 = vmatpush1.bf16.msra.mxu0 %v8325
    %8587 = vmatprep.subr.bf16.mxu0 0
    %8588 = vmatpush1.bf16.msra.mxu0 %v8326
    %8589 = vmatprep.subr.bf16.mxu0 0
    %8590 = vmatpush1.bf16.msra.mxu0 %v8327
    %8591 = vmatprep.subr.bf16.mxu0 0
    %8592 = vmatpush1.bf16.msra.mxu0 %v8328
    %8593 = vmatprep.subr.bf16.mxu0 0
    %8594 = vmatpush1.bf16.msra.mxu0 %v8329
    %8595 = vmatprep.subr.bf16.mxu0 0
    %8596 = vmatpush1.bf16.msra.mxu0 %v8330
    %8597 = vmatprep.subr.bf16.mxu0 0
    %8598 = vmatpush1.bf16.msra.mxu0 %v8331
    %8599 = vmatprep.subr.bf16.mxu0 0
    %8600 = vmatpush1.bf16.msra.mxu0 %v8332
    %8601 = vmatprep.subr.bf16.mxu0 0
    %8602 = vmatpush1.bf16.msra.mxu0 %v8333
    %8603 = vmatprep.subr.bf16.mxu0 0
    %8604 = vmatpush1.bf16.msra.mxu0 %v8334
    %8605 = vmatprep.subr.bf16.mxu0 0
    %8606 = vmatpush1.bf16.msra.mxu0 %v8335
    %8607 = vmatprep.subr.bf16.mxu0 0
    %8608 = vmatpush1.bf16.msra.mxu0 %v8336
    %8609 = vmatprep.mubr.bf16.mxu0 %v7788
    %8610 = vmatmul.mubr.bf16.gmra.mrb[0].mxu0 %v7787
    %v8611 = vpop.f32.mrb[0].mxu0
    %v8612 = vadd.f32 %v7807, %v8611
    %v8613 = vpop.f32.mrb[0].mxu0
    %v8614 = vpop.f32.mrb[0].mxu0
    %v8615 = vadd.f32 %v7807, %v8614
    %v8616 = vpop.f32.mrb[0].mxu0
    %8617 = vdwg.mxu0
    %8618 = vmatprep.subr.bf16.mxu0 0
    %8619 = vmatpush1.bf16.msra.mxu0 %v8337
    %8620 = vmatprep.subr.bf16.mxu0 0
    %8621 = vmatpush1.bf16.msra.mxu0 %v8338
    %8622 = vmatprep.subr.bf16.mxu0 0
    %8623 = vmatpush1.bf16.msra.mxu0 %v8339
    %8624 = vmatprep.subr.bf16.mxu0 0
    %8625 = vmatpush1.bf16.msra.mxu0 %v8340
    %8626 = vmatprep.subr.bf16.mxu0 0
    %8627 = vmatpush1.bf16.msra.mxu0 %v8341
    %8628 = vmatprep.subr.bf16.mxu0 0
    %8629 = vmatpush1.bf16.msra.mxu0 %v8342
    %8630 = vmatprep.subr.bf16.mxu0 0
    %8631 = vmatpush1.bf16.msra.mxu0 %v8343
    %8632 = vmatprep.subr.bf16.mxu0 0
    %8633 = vmatpush1.bf16.msra.mxu0 %v8344
    %8634 = vmatprep.subr.bf16.mxu0 0
    %8635 = vmatpush1.bf16.msra.mxu0 %v8345
    %8636 = vmatprep.subr.bf16.mxu0 0
    %8637 = vmatpush1.bf16.msra.mxu0 %v8346
    %8638 = vmatprep.subr.bf16.mxu0 0
    %8639 = vmatpush1.bf16.msra.mxu0 %v8347
    %8640 = vmatprep.subr.bf16.mxu0 0
    %8641 = vmatpush1.bf16.msra.mxu0 %v8348
    %8642 = vmatprep.subr.bf16.mxu0 0
    %8643 = vmatpush1.bf16.msra.mxu0 %v8349
    %8644 = vmatprep.subr.bf16.mxu0 0
    %8645 = vmatpush1.bf16.msra.mxu0 %v8350
    %8646 = vmatprep.subr.bf16.mxu0 0
    %8647 = vmatpush1.bf16.msra.mxu0 %v8351
    %8648 = vmatprep.subr.bf16.mxu0 0
    %8649 = vmatpush1.bf16.msra.mxu0 %v8352
    %8650 = vmatprep.mubr.bf16.mxu0 %v7790
    %8651 = vmatmul.mubr.bf16.gmra.mrb[0].mxu0 %v7789
    %v8652 = vpop.f32.mrb[0].mxu0
    %v8653 = vadd.f32 %v8612, %v8652
    %v8654 = vpop.f32.mrb[0].mxu0
    %v8655 = vpop.f32.mrb[0].mxu0
    %v8656 = vadd.f32 %v8615, %v8655
    %v8657 = vpop.f32.mrb[0].mxu0
    %8658 = vdwg.mxu0
    %8659 = vmatprep.subr.bf16.mxu0 0
    %8660 = vmatpush1.bf16.msra.mxu0 %v8353
    %8661 = vmatprep.subr.bf16.mxu0 0
    %8662 = vmatpush1.bf16.msra.mxu0 %v8354
    %8663 = vmatprep.subr.bf16.mxu0 0
    %8664 = vmatpush1.bf16.msra.mxu0 %v8355
    %8665 = vmatprep.subr.bf16.mxu0 0
    %8666 = vmatpush1.bf16.msra.mxu0 %v8356
    %8667 = vmatprep.subr.bf16.mxu0 0
    %8668 = vmatpush1.bf16.msra.mxu0 %v8357
    %8669 = vmatprep.subr.bf16.mxu0 0
    %8670 = vmatpush1.bf16.msra.mxu0 %v8358
    %8671 = vmatprep.subr.bf16.mxu0 0
    %8672 = vmatpush1.bf16.msra.mxu0 %v8359
    %8673 = vmatprep.subr.bf16.mxu0 0
    %8674 = vmatpush1.bf16.msra.mxu0 %v8360
    %8675 = vmatprep.subr.bf16.mxu0 0
    %8676 = vmatpush1.bf16.msra.mxu0 %v8361
    %8677 = vmatprep.subr.bf16.mxu0 0
    %8678 = vmatpush1.bf16.msra.mxu0 %v8362
    %8679 = vmatprep.subr.bf16.mxu0 0
    %8680 = vmatpush1.bf16.msra.mxu0 %v8363
    %8681 = vmatprep.subr.bf16.mxu0 0
    %8682 = vmatpush1.bf16.msra.mxu0 %v8364
    %8683 = vmatprep.subr.bf16.mxu0 0
    %8684 = vmatpush1.bf16.msra.mxu0 %v8365
    %8685 = vmatprep.subr.bf16.mxu0 0
    %8686 = vmatpush1.bf16.msra.mxu0 %v8366
    %8687 = vmatprep.subr.bf16.mxu0 0
    %8688 = vmatpush1.bf16.msra.mxu0 %v8367
    %8689 = vmatprep.subr.bf16.mxu0 0
    %8690 = vmatpush1.bf16.msra.mxu0 %v8368
    %8691 = vmatprep.mubr.bf16.mxu0 %v7792
    %8692 = vmatmul.mubr.bf16.gmra.mrb[0].mxu0 %v7791
    %v8693 = vpop.f32.mrb[0].mxu0
    %v8694 = vadd.f32 %v8653, %v8693
    %v8695 = vpop.f32.mrb[0].mxu0
    %v8696 = vpop.f32.mrb[0].mxu0
    %v8697 = vadd.f32 %v8656, %v8696
    %v8698 = vpop.f32.mrb[0].mxu0
    %8699 = vdwg.mxu0
    %8700 = vmatprep.subr.bf16.mxu0 0
    %8701 = vmatpush1.bf16.msra.mxu0 %v8369
    %8702 = vmatprep.subr.bf16.mxu0 0
    %8703 = vmatpush1.bf16.msra.mxu0 %v8370
    %8704 = vmatprep.subr.bf16.mxu0 0
    %8705 = vmatpush1.bf16.msra.mxu0 %v8371
    %8706 = vmatprep.subr.bf16.mxu0 0
    %8707 = vmatpush1.bf16.msra.mxu0 %v8372
    %8708 = vmatprep.subr.bf16.mxu0 0
    %8709 = vmatpush1.bf16.msra.mxu0 %v8373
    %8710 = vmatprep.subr.bf16.mxu0 0
    %8711 = vmatpush1.bf16.msra.mxu0 %v8374
    %8712 = vmatprep.subr.bf16.mxu0 0
    %8713 = vmatpush1.bf16.msra.mxu0 %v8375
    %8714 = vmatprep.subr.bf16.mxu0 0
    %8715 = vmatpush1.bf16.msra.mxu0 %v8376
    %8716 = vmatprep.subr.bf16.mxu0 0
    %8717 = vmatpush1.bf16.msra.mxu0 %v8377
    %8718 = vmatprep.subr.bf16.mxu0 0
    %8719 = vmatpush1.bf16.msra.mxu0 %v8378
    %8720 = vmatprep.subr.bf16.mxu0 0
    %8721 = vmatpush1.bf16.msra.mxu0 %v8379
    %8722 = vmatprep.subr.bf16.mxu0 0
    %8723 = vmatpush1.bf16.msra.mxu0 %v8380
    %8724 = vmatprep.subr.bf16.mxu0 0
    %8725 = vmatpush1.bf16.msra.mxu0 %v8381
    %8726 = vmatprep.subr.bf16.mxu0 0
    %8727 = vmatpush1.bf16.msra.mxu0 %v8382
    %8728 = vmatprep.subr.bf16.mxu0 0
    %8729 = vmatpush1.bf16.msra.mxu0 %v8383
    %8730 = vmatprep.subr.bf16.mxu0 0
    %8731 = vmatpush1.bf16.msra.mxu0 %v8384
    %8732 = vmatprep.mubr.bf16.mxu0 %v7794
    %8733 = vmatmul.mubr.bf16.gmra.mrb[0].mxu0 %v7793
    %v8734 = vpop.f32.mrb[0].mxu0
    %v8735 = vadd.f32 %v8694, %v8734
    %v8736 = vpop.f32.mrb[0].mxu0
    %v8737 = vpop.f32.mrb[0].mxu0
    %v8738 = vadd.f32 %v8697, %v8737
    %v8739 = vpop.f32.mrb[0].mxu0
    %8740 = vdwg.mxu0
    %8741 = vmatprep.subr.bf16.mxu0 0
    %8742 = vmatpush1.bf16.msra.mxu0 %v8385
    %8743 = vmatprep.subr.bf16.mxu0 0
    %8744 = vmatpush1.bf16.msra.mxu0 %v8386
    %8745 = vmatprep.subr.bf16.mxu0 0
    %8746 = vmatpush1.bf16.msra.mxu0 %v8387
    %8747 = vmatprep.subr.bf16.mxu0 0
    %8748 = vmatpush1.bf16.msra.mxu0 %v8388
    %8749 = vmatprep.subr.bf16.mxu0 0
    %8750 = vmatpush1.bf16.msra.mxu0 %v8389
    %8751 = vmatprep.subr.bf16.mxu0 0
    %8752 = vmatpush1.bf16.msra.mxu0 %v8390
    %8753 = vmatprep.subr.bf16.mxu0 0
    %8754 = vmatpush1.bf16.msra.mxu0 %v8391
    %8755 = vmatprep.subr.bf16.mxu0 0
    %8756 = vmatpush1.bf16.msra.mxu0 %v8392
    %8757 = vmatprep.subr.bf16.mxu0 0
    %8758 = vmatpush1.bf16.msra.mxu0 %v8393
    %8759 = vmatprep.subr.bf16.mxu0 0
    %8760 = vmatpush1.bf16.msra.mxu0 %v8394
    %8761 = vmatprep.subr.bf16.mxu0 0
    %8762 = vmatpush1.bf16.msra.mxu0 %v8395
    %8763 = vmatprep.subr.bf16.mxu0 0
    %8764 = vmatpush1.bf16.msra.mxu0 %v8396
    %8765 = vmatprep.subr.bf16.mxu0 0
    %8766 = vmatpush1.bf16.msra.mxu0 %v8397
    %8767 = vmatprep.subr.bf16.mxu0 0
    %8768 = vmatpush1.bf16.msra.mxu0 %v8398
    %8769 = vmatprep.subr.bf16.mxu0 0
    %8770 = vmatpush1.bf16.msra.mxu0 %v8399
    %8771 = vmatprep.subr.bf16.mxu0 0
    %8772 = vmatpush1.bf16.msra.mxu0 %v8400
    %8773 = vmatprep.mubr.bf16.mxu0 %v7796
    %8774 = vmatmul.mubr.bf16.gmra.mrb[0].mxu0 %v7795
    %v8775 = vpop.f32.mrb[0].mxu0
    %v8776 = vadd.f32 %v8735, %v8775
    %v8777 = vpop.f32.mrb[0].mxu0
    %v8778 = vpop.f32.mrb[0].mxu0
    %v8779 = vadd.f32 %v8738, %v8778
    %v8780 = vpop.f32.mrb[0].mxu0
    %8781 = vdwg.mxu0
    %8782 = vmatprep.subr.bf16.mxu0 0
    %8783 = vmatpush1.bf16.msra.mxu0 %v8401
    %8784 = vmatprep.subr.bf16.mxu0 0
    %8785 = vmatpush1.bf16.msra.mxu0 %v8402
    %8786 = vmatprep.subr.bf16.mxu0 0
    %8787 = vmatpush1.bf16.msra.mxu0 %v8403
    %8788 = vmatprep.subr.bf16.mxu0 0
    %8789 = vmatpush1.bf16.msra.mxu0 %v8404
    %8790 = vmatprep.subr.bf16.mxu0 0
    %8791 = vmatpush1.bf16.msra.mxu0 %v8405
    %8792 = vmatprep.subr.bf16.mxu0 0
    %8793 = vmatpush1.bf16.msra.mxu0 %v8406
    %8794 = vmatprep.subr.bf16.mxu0 0
    %8795 = vmatpush1.bf16.msra.mxu0 %v8407
    %8796 = vmatprep.subr.bf16.mxu0 0
    %8797 = vmatpush1.bf16.msra.mxu0 %v8408
    %8798 = vmatprep.subr.bf16.mxu0 0
    %8799 = vmatpush1.bf16.msra.mxu0 %v8409
    %8800 = vmatprep.subr.bf16.mxu0 0
    %8801 = vmatpush1.bf16.msra.mxu0 %v8410
    %8802 = vmatprep.subr.bf16.mxu0 0
    %8803 = vmatpush1.bf16.msra.mxu0 %v8411
    %8804 = vmatprep.subr.bf16.mxu0 0
    %8805 = vmatpush1.bf16.msra.mxu0 %v8412
    %8806 = vmatprep.subr.bf16.mxu0 0
    %8807 = vmatpush1.bf16.msra.mxu0 %v8413
    %8808 = vmatprep.subr.bf16.mxu0 0
    %8809 = vmatpush1.bf16.msra.mxu0 %v8414
    %8810 = vmatprep.subr.bf16.mxu0 0
    %8811 = vmatpush1.bf16.msra.mxu0 %v8415
    %8812 = vmatprep.subr.bf16.mxu0 0
    %8813 = vmatpush1.bf16.msra.mxu0 %v8416
    %8814 = vmatprep.mubr.bf16.mxu0 %v7798
    %8815 = vmatmul.mubr.bf16.gmra.mrb[0].mxu0 %v7797
    %v8816 = vpop.f32.mrb[0].mxu0
    %v8817 = vadd.f32 %v8776, %v8816
    %v8818 = vpop.f32.mrb[0].mxu0
    %v8819 = vpop.f32.mrb[0].mxu0
    %v8820 = vadd.f32 %v8779, %v8819
    %v8821 = vpop.f32.mrb[0].mxu0
    %8822 = vdwg.mxu0
    %8823 = vmatprep.subr.bf16.mxu0 0
    %8824 = vmatpush1.bf16.msra.mxu0 %v8417
    %8825 = vmatprep.subr.bf16.mxu0 0
    %8826 = vmatpush1.bf16.msra.mxu0 %v8418
    %8827 = vmatprep.subr.bf16.mxu0 0
    %8828 = vmatpush1.bf16.msra.mxu0 %v8419
    %8829 = vmatprep.subr.bf16.mxu0 0
    %8830 = vmatpush1.bf16.msra.mxu0 %v8420
    %8831 = vmatprep.subr.bf16.mxu0 0
    %8832 = vmatpush1.bf16.msra.mxu0 %v8421
    %8833 = vmatprep.subr.bf16.mxu0 0
    %8834 = vmatpush1.bf16.msra.mxu0 %v8422
    %8835 = vmatprep.subr.bf16.mxu0 0
    %8836 = vmatpush1.bf16.msra.mxu0 %v8423
    %8837 = vmatprep.subr.bf16.mxu0 0
    %8838 = vmatpush1.bf16.msra.mxu0 %v8424
    %8839 = vmatprep.subr.bf16.mxu0 0
    %8840 = vmatpush1.bf16.msra.mxu0 %v8425
    %8841 = vmatprep.subr.bf16.mxu0 0
    %8842 = vmatpush1.bf16.msra.mxu0 %v8426
    %8843 = vmatprep.subr.bf16.mxu0 0
    %8844 = vmatpush1.bf16.msra.mxu0 %v8427
    %8845 = vmatprep.subr.bf16.mxu0 0
    %8846 = vmatpush1.bf16.msra.mxu0 %v8428
    %8847 = vmatprep.subr.bf16.mxu0 0
    %8848 = vmatpush1.bf16.msra.mxu0 %v8429
    %8849 = vmatprep.subr.bf16.mxu0 0
    %8850 = vmatpush1.bf16.msra.mxu0 %v8430
    %8851 = vmatprep.subr.bf16.mxu0 0
    %8852 = vmatpush1.bf16.msra.mxu0 %v8431
    %8853 = vmatprep.subr.bf16.mxu0 0
    %8854 = vmatpush1.bf16.msra.mxu0 %v8432
    %8855 = vmatprep.mubr.bf16.mxu0 %v7800
    %8856 = vmatmul.mubr.bf16.gmra.mrb[0].mxu0 %v7799
    %v8857 = vpop.f32.mrb[0].mxu0
    %v8858 = vadd.f32 %v8817, %v8857
    %v8859 = vpop.f32.mrb[0].mxu0
    %v8860 = vpop.f32.mrb[0].mxu0
    %v8861 = vadd.f32 %v8820, %v8860
    %v8862 = vpop.f32.mrb[0].mxu0
    %8863 = vdwg.mxu0
    %8864 = vmatprep.subr.bf16.mxu0 0
    %8865 = vmatpush1.bf16.msra.mxu0 %v8433
    %8866 = vmatprep.subr.bf16.mxu0 0
    %8867 = vmatpush1.bf16.msra.mxu0 %v8434
    %8868 = vmatprep.subr.bf16.mxu0 0
    %8869 = vmatpush1.bf16.msra.mxu0 %v8435
    %8870 = vmatprep.subr.bf16.mxu0 0
    %8871 = vmatpush1.bf16.msra.mxu0 %v8436
    %8872 = vmatprep.subr.bf16.mxu0 0
    %8873 = vmatpush1.bf16.msra.mxu0 %v8437
    %8874 = vmatprep.subr.bf16.mxu0 0
    %8875 = vmatpush1.bf16.msra.mxu0 %v8438
    %8876 = vmatprep.subr.bf16.mxu0 0
    %8877 = vmatpush1.bf16.msra.mxu0 %v8439
    %8878 = vmatprep.subr.bf16.mxu0 0
    %8879 = vmatpush1.bf16.msra.mxu0 %v8440
    %8880 = vmatprep.subr.bf16.mxu0 0
    %8881 = vmatpush1.bf16.msra.mxu0 %v8441
    %8882 = vmatprep.subr.bf16.mxu0 0
    %8883 = vmatpush1.bf16.msra.mxu0 %v8442
    %8884 = vmatprep.subr.bf16.mxu0 0
    %8885 = vmatpush1.bf16.msra.mxu0 %v8443
    %8886 = vmatprep.subr.bf16.mxu0 0
    %8887 = vmatpush1.bf16.msra.mxu0 %v8444
    %8888 = vmatprep.subr.bf16.mxu0 0
    %8889 = vmatpush1.bf16.msra.mxu0 %v8445
    %8890 = vmatprep.subr.bf16.mxu0 0
    %8891 = vmatpush1.bf16.msra.mxu0 %v8446
    %8892 = vmatprep.subr.bf16.mxu0 0
    %8893 = vmatpush1.bf16.msra.mxu0 %v8447
    %8894 = vmatprep.subr.bf16.mxu0 0
    %8895 = vmatpush1.bf16.msra.mxu0 %v8448
    %8896 = vmatprep.mubr.bf16.mxu0 %v7802
    %8897 = vmatmul.mubr.bf16.gmra.mrb[0].mxu0 %v7801
    %v8898 = vpop.f32.mrb[0].mxu0
    %v8899 = vadd.f32 %v8858, %v8898
    %v8900 = vpop.f32.mrb[0].mxu0
    %v8901 = vpop.f32.mrb[0].mxu0
    %v8902 = vadd.f32 %v8861, %v8901
    %v8903 = vpop.f32.mrb[0].mxu0
    %8904 = vdwg.mxu0
    %v8905 = vadd.f32 %v6822, %v8899
    %v8906 = vadd.f32 %v6823, %v8902
    %v8907 = vld [vmem:[%s24] sm:$0x1]
    %v8908 = vld [vmem:[%s25] sm:$0x1]
    %v8909 = vsel %vm99, %v8905, 0.0
    %8910 = vadd.xlane.f32.xlu0 %v8909
    %v8911 = vpop.xlane.xlu0 %8910
    %v8912 = vsel %vm99, %v8906, 0.0
    %8913 = vadd.xlane.f32.xlu0 %v8912
    %v8914 = vpop.xlane.xlu0 %8913
    %v8915 = vmul.f32 %v8911, %v106
    %v8916 = vmul.f32 %v8914, %v106
    %v8917 = vsub.f32 %v8905, %v8915
    %v8918 = vsub.f32 %v8906, %v8916
    %v8919 = vmul.f32 %v8917, %v8917
    %v8920 = vmul.f32 %v8918, %v8918
    %v8921 = vsel %vm99, %v8919, 0.0
    %8922 = vadd.xlane.f32.xlu0 %v8921
    %v8923 = vpop.xlane.xlu0 %8922
    %v8924 = vsel %vm99, %v8920, 0.0
    %8925 = vadd.xlane.f32.xlu0 %v8924
    %v8926 = vpop.xlane.xlu0 %8925
    %v8927 = vmul.f32 %v8923, 0.032258064
    %v8928 = vmul.f32 %v8926, 0.032258064
    %v8929 = vadd.f32 %v8927, 1e-12
    %v8930 = vadd.f32 %v8928, 1e-12
    %v8931 = vrsqrt.pop %v8929
    %v8932 = vrsqrt.pop %v8930
    %v8933 = vmul.f32 %v8917, %v8931
    %v8934 = vmul.f32 %v8918, %v8932
    %v8936 = vlaneseq
    %v8937 = vshrl.u32 %v8936, 7
    %v8938 = vsub.s32 0, %v8937
    %v8939 = vrot.slane %v8907, %v8938
    %v8941 = vmul.f32 %v8939, %v8933
    %v8942 = vmul.f32 %v8939, %v8934
    %v8944 = vlaneseq
    %v8945 = vshrl.u32 %v8944, 7
    %v8946 = vsub.s32 0, %v8945
    %v8947 = vrot.slane %v8908, %v8946
    %v8949 = vadd.f32 %v8941, %v8947
    %v8950 = vadd.f32 %v8942, %v8947
    %8951 = vst.msk [vmem:[#allocation2] sm:$0xff] %vm99, %v8949
    %8952 = vst.msk [vmem:[#allocation2 + $0x8] sm:$0xff] %vm99, %v8950
    // Predicated region
    $region106: #{tpu_custom_call.1} parent=1 // pred_check
      _
    $region107: #{tpu_custom_call.1} parent=1 // pred_check_branch
      %8954 = sbr.rel (0) target = $region109
    $region108: #{tpu_custom_call.1} parent=1 // pred_region
      %s8956 = ssub.s32 256, 256
      %8957 = vsyncadd [#allocation3], %s8956
      %s8958 = sshll.u32 [#allocation2], 4
      %s8959 = int_to_ptr.vmem [resolvable:$true] %s8958
      %8964 = dma.vmem_to_hbm [thread:$0]  %s8959, 256, %s26, [#allocation3], 128, 128, 8
    $region109: #{tpu_custom_call.1} parent=1 // pred_fallthru
      _
    // Predicated region
    $region110: #{tpu_custom_call.1} parent=1 // pred_check
      _
    $region111: #{tpu_custom_call.1} parent=1 // pred_check_branch
      %8966 = sbr.rel (0) target = $region113
    $region112: #{tpu_custom_call.1} parent=1 // pred_region
      %8967 = dma.done [#allocation3], 256
    $region113: #{tpu_custom_call.1} parent=1 // pred_fallthru
      _
    %8968 = vsyncpa [#allocation3], 1

</llo_original>
